<compile_context>
chip_gen: v6e
topology: v6e:2x2x1
jax: 0.10.0
libtpu: 0.0.40
codegen_flags: <defaults>
</compile_context>

<pallas_src>
import jax
import jax.numpy as jnp
from jax.experimental import pallas as pl
from jax.experimental.pallas import tpu as pltpu


# ----------------------------- Pallas kernels ------------------------------

def _features_kernel(x_ref, w1_ref, b1_ref, w2_ref, b2_ref, o_ref,
                     xpad_ref, p1_ref, a1pad_ref, p2_ref):
    # x_ref   : (tb, 28, 28)      f32  raw input images (batch tile)
    # w1_ref  : (9, 32)           f32  conv1 taps, tap-major (dh, dw)
    # b1_ref  : (1, 32)           f32
    # w2_ref  : (288, 64)         bf16 conv2 weight, rows = (dh, dw, cin)
    # b2_ref  : (1, 64)           f32
    # o_ref   : (tb, 7, 7, 64)    bf16 pooled layer-2 output (compact)
    # xpad_ref: (tb, 30, 30)      f32  scratch: zero-padded conv1 input
    # p1_ref  : (tb, 14, 28, 32)  f32  scratch: row-pooled conv1 map
    # a1pad_ref:(tb, 16, 18, 32)  f32  scratch: zero-padded pooled1 (2 spare cols)
    # p2_ref  : (tb, 7, 16, 64)   f32  scratch: row-pooled conv2 map
    tb = x_ref.shape[0]

    # In-kernel zero padding (scratches are re-zeroed every step: correct under
    # megacore grid splitting, and the cost is negligible).
    xpad_ref[...] = jnp.zeros_like(xpad_ref)
    a1pad_ref[...] = jnp.zeros_like(a1pad_ref)
    xpad_ref[:, 1:29, 1:29] = x_ref[...]

    # ---- conv1 (1->32, 3x3): nine VPU multiply-adds (MXU would be ~96% pad
    # for K=9).  dw (sublane) shifts hoisted: 3 relayouts instead of 9.
    xp = xpad_ref[...].reshape(tb, 30, 30, 1)
    w1 = w1_ref[...]
    acc1 = jnp.zeros((tb, 28, 28, 32), jnp.float32)
    for dw in range(3):
        col = xp[:, :, dw:dw + 28, :]                     # (tb,30,28,1)
        for dh in range(3):
            t = dh * 3 + dw
            acc1 = acc1 + col[:, dh:dh + 28] * w1[t:t + 1, :]
    y1 = jnp.maximum(acc1 + b1_ref[...], 0.0)             # (tb,28,28,32)

    # ---- 2x2 max-pool: rows via free major-dim split+max, columns via one
    # bulk scratch store + two stride-2 sublane reads (no per-row stores).
    y1r = jnp.max(y1.reshape(tb, 14, 2, 28, 32), axis=2)  # (tb,14,28,32)
    p1_ref[...] = y1r
    pooled1 = jnp.maximum(p1_ref[:, :, pl.ds(0, 14, stride=2), :],
                          p1_ref[:, :, pl.ds(1, 14, stride=2), :])

    # Padded layer-2 input (valid region [1:15, 1:15]; columns 15..17 stay 0
    # so the im2col slabs below can keep a full 16-wide sublane extent).
    a1pad_ref[:, 1:15, 1:15, :] = pooled1

    # ---- conv2 (32->64, 3x3): in-VMEM im2col + a single K=288 MXU dot.
    a1 = a1pad_ref[...]                                    # (tb,16,18,32) f32
    slabs = []
    for dh in range(3):
        for dw in range(3):
            slabs.append(a1[:, dh:dh + 14, dw:dw + 16, :])     # (tb,14,16,32)
    patches = jnp.concatenate(slabs, axis=3)                   # (tb,14,16,288)
    z = jnp.dot(patches.astype(jnp.bfloat16).reshape(tb * 14 * 16, 288),
                w2_ref[...], preferred_element_type=jnp.float32)
    z = z.reshape(tb, 14, 16, 64)
    z = jnp.maximum(z + b2_ref[...], 0.0)      # output cols 14,15 are junk and
                                               # are discarded by the pooling.

    # ---- 2x2 max-pool + compaction -> (tb,7,7,64).
    zr = jnp.max(z.reshape(tb, 7, 2, 16, 64), axis=2)          # (tb,7,16,64)
    p2_ref[...] = zr
    pooled2 = jnp.maximum(p2_ref[:, :, pl.ds(0, 7, stride=2), :],
                          p2_ref[:, :, pl.ds(1, 7, stride=2), :])
    o_ref[...] = pooled2.astype(o_ref.dtype)


def _fc_kernel(x_ref, w_ref, b_ref, o_ref):
    # x_ref: (tbf, 3136) bf16, w_ref: (3136, 10) bf16, b_ref: (1, 10) f32
    acc = jnp.dot(x_ref[...], w_ref[...], preferred_element_type=jnp.float32)
    o_ref[...] = (acc + b_ref[...]).astype(o_ref.dtype)


# ----------------------------- kernel wrappers ------------------------------

_CPARAMS = pltpu.CompilerParams(
    dimension_semantics=("parallel",),
    vmem_limit_bytes=48 * 1024 * 1024,   # fits v7x's 64 MiB, ample on v5e/v6e
)


def _pick_tb(batch, cap=8):
    # Largest tile (<= cap) dividing B; prefer >=2 grid steps when possible so
    # both v7x TensorCores get work and the pipeline has something to overlap.
    tb = 1
    for cand in (8, 4, 2, 1):
        if cand <= cap and batch % cand == 0:
            tb = cand
            break
    while tb > 1 and batch // tb < 2:
        tb //= 2
    return tb


def conv_stack(x, w1, b1, w2, b2, *, tb):
    # x: (B, 28, 28) f32 -> (B, 7, 7, 64) bf16 pooled layer-2 activations.
    B = x.shape[0]
    return pl.pallas_call(
        _features_kernel,
        out_shape=jax.ShapeDtypeStruct((B, 7, 7, 64), jnp.bfloat16),
        grid_spec=pltpu.PrefetchScalarGridSpec(
            num_scalar_prefetch=0,
            grid=(B // tb,),
            in_specs=[
                pl.BlockSpec((tb, 28, 28), lambda i: (i, 0, 0)),
                pl.BlockSpec((9, 32), lambda i: (0, 0)),
                pl.BlockSpec((1, 32), lambda i: (0, 0)),
                pl.BlockSpec((288, 64), lambda i: (0, 0)),
                pl.BlockSpec((1, 64), lambda i: (0, 0)),
            ],
            out_specs=pl.BlockSpec((tb, 7, 7, 64), lambda i: (i, 0, 0, 0)),
            scratch_shapes=[
                pltpu.VMEM((tb, 30, 30), jnp.float32),      # padded conv1 input
                pltpu.VMEM((tb, 14, 28, 32), jnp.float32),  # row-pooled conv1
                pltpu.VMEM((tb, 16, 18, 32), jnp.float32),  # padded pooled1
                pltpu.VMEM((tb, 7, 16, 64), jnp.float32),   # row-pooled conv2
            ],
        ),
        compiler_params=_CPARAMS,
    )(x, w1, b1, w2, b2)


def fc_layer(flat, wfc, bfc):
    B, K = flat.shape
    N = wfc.shape[1]
    tbf = 8 if B % 8 == 0 else B
    return pl.pallas_call(
        _fc_kernel,
        out_shape=jax.ShapeDtypeStruct((B, N), jnp.float32),
        grid_spec=pltpu.PrefetchScalarGridSpec(
            num_scalar_prefetch=0,
            grid=(B // tbf,),
            in_specs=[
                pl.BlockSpec((tbf, K), lambda i: (i, 0)),
                pl.BlockSpec((K, N), lambda i: (0, 0)),
                pl.BlockSpec((1, N), lambda i: (0, 0)),
            ],
            out_specs=pl.BlockSpec((tbf, N), lambda i: (i, 0)),
        ),
        compiler_params=_CPARAMS,
    )(flat, wfc, bfc)


# ---------------------------- parameter init --------------------------------

def init_params(key):
    k1, k2, k3, k4, k5, k6 = jax.random.split(key, 6)

    def conv_init(kw, kb, cin, cout):
        fan_in = 9 * cin
        bound = 1.0 / jnp.sqrt(fan_in)
        w = jax.random.uniform(kw, (3, 3, cin, cout), jnp.float32, -bound, bound)
        b = jax.random.uniform(kb, (cout,), jnp.float32, -bound, bound)
        return w.reshape(9 * cin, cout), b     # rows ordered (dh, dw, cin)

    w1, b1 = conv_init(k1, k2, 1, 32)          # (9, 32),  (32,)
    w2, b2 = conv_init(k3, k4, 32, 64)         # (288, 64), (64,)

    # fc: xavier_uniform_ weight (as in the PyTorch module), default-style bias.
    # TODO(synk): weight is defined for the NHWC flatten order (h, w, c); since
    # weights are synthetic this is equivalent to PyTorch's NCHW flatten.
    fan_in, fan_out = 7 * 7 * 64, 10
    xbound = jnp.sqrt(6.0 / (fan_in + fan_out))
    wfc = jax.random.uniform(k5, (7, 7, 64, fan_out), jnp.float32, -xbound, xbound)
    bbound = 1.0 / jnp.sqrt(fan_in)
    bfc = jax.random.uniform(k6, (fan_out,), jnp.float32, -bbound, bbound)
    wfc = wfc.reshape(fan_in, fan_out)         # true (3136, 10) weight

    return dict(w1=w1, b1=b1, w2=w2, b2=b2, wfc=wfc, bfc=bfc)


# ------------------------------- forward pass --------------------------------

def cnn_forward(params, x_nchw):
    # x_nchw: (B, 1, 28, 28) f32 (PyTorch NCHW convention at the boundary).
    B = x_nchw.shape[0]
    # With Cin=1 the NCHW->NHWC transpose is a free reshape; zero-padding
    # happens inside the fused kernel.
    x = x_nchw.reshape(B, 28, 28).astype(jnp.float32)
    tb = _pick_tb(B)

    # Fused conv1+ReLU+pool -> conv2+ReLU+pool (one pallas_call, VMEM-resident
    # intermediates), bf16 MXU operands with f32 accumulation.
    o2 = conv_stack(x, params["w1"], params["b1"].reshape(1, 32),
                    params["w2"].astype(jnp.bfloat16),
                    params["b2"].reshape(1, 64), tb=tb)        # (B,7,7,64) bf16

    # Row-major flatten is a free XLA reshape; FC uses the true (3136,10) weight.
    flat = o2.reshape(B, 7 * 7 * 64)
    logits = fc_layer(flat, params["wfc"].astype(jnp.bfloat16),
                      params["bfc"].reshape(1, 10))            # (B,10) f32
    return logits


# ----------------------------------- main ------------------------------------

if __name__ == "__main__":
    key = jax.random.PRNGKey(0)
    k_params, k_x = jax.random.split(key)
    params = init_params(k_params)

    # MNIST-like input implied by the module: (B, 1, 28, 28)
    x = jax.random.normal(k_x, (2, 1, 28, 28), jnp.float32)

    out = jax.jit(cnn_forward)(params, x)
    out = jax.block_until_ready(out)
    assert out.shape == (2, 10) and out.dtype == jnp.float32
    print("KERNEL_OK")
</pallas_src>

<mosaic_0001>
module attributes {stable_mosaic.version = 11 : i64} {
  func.func @_fc_kernel(%arg0: i32, %arg1: memref<2x3136xbf16, #tpu.memory_space<vmem>>, %arg2: memref<3136x10xbf16, #tpu.memory_space<vmem>>, %arg3: memref<1x10xf32, #tpu.memory_space<vmem>>, %arg4: memref<2x10xf32, #tpu.memory_space<vmem>>) attributes {dimension_semantics = [#tpu.dimension_semantics<parallel>], iteration_bounds = array<i64: 1>, scalar_prefetch = 0 : i64, scratch_operands = 0 : i64, tpu.core_type = #tpu.core_type<tc>, window_params = [{transform_indices = @transform_0, window_bounds = array<i64: 2, 3136>}, {pipeline_mode = #tpu.pipeline_mode<synchronous>, transform_indices = @transform_1, window_bounds = array<i64: 3136, 10>}, {pipeline_mode = #tpu.pipeline_mode<synchronous>, transform_indices = @transform_2, window_bounds = array<i64: 1, 10>}, {transform_indices = @transform_3, window_bounds = array<i64: 2, 10>}]} {
    %c0 = arith.constant 0 : index
    %c0_0 = arith.constant 0 : index
    %0 = vector.load %arg1[%c0, %c0_0] : memref<2x3136xbf16, #tpu.memory_space<vmem>>, vector<2x3136xbf16>
    %c0_1 = arith.constant 0 : index
    %c0_2 = arith.constant 0 : index
    %1 = vector.load %arg2[%c0_1, %c0_2] : memref<3136x10xbf16, #tpu.memory_space<vmem>>, vector<3136x10xbf16>
    %cst = arith.constant dense<0.000000e+00> : vector<2x10xf32>
    %2 = tpu.matmul %0, %1, %cst {dimension_numbers = #tpu.dot_dimension_numbers<[1], [0], [0], [1], [0, 0, 1, 1], [], []>} : vector<2x3136xbf16>, vector<3136x10xbf16>, vector<2x10xf32> -> vector<2x10xf32>
    %c0_3 = arith.constant 0 : index
    %c0_4 = arith.constant 0 : index
    %3 = vector.load %arg3[%c0_3, %c0_4] : memref<1x10xf32, #tpu.memory_space<vmem>>, vector<1x10xf32>
    %4 = vector.broadcast %3 : vector<1x10xf32> to vector<2x10xf32>
    %5 = arith.addf %2, %4 : vector<2x10xf32>
    %c0_5 = arith.constant 0 : index
    %c0_6 = arith.constant 0 : index
    %6 = vector.load %arg4[%c0_5, %c0_6] : memref<2x10xf32, #tpu.memory_space<vmem>>, vector<2x10xf32>
    tpu.vector_store %arg4[%c0_5, %c0_6], %5 {strides = array<i32>} : memref<2x10xf32, #tpu.memory_space<vmem>>, vector<2x10xf32>,
    return
  }
  func.func @transform_0(%arg0: i32) -> (i32, i32) {
    %c0_i32 = arith.constant 0 : i32
    %c0_i32_0 = arith.constant 0 : i32
    return %arg0, %c0_i32 : i32, i32
  }
  func.func @transform_1(%arg0: i32) -> (i32, i32) {
    %c0_i32 = arith.constant 0 : i32
    %c0_i32_0 = arith.constant 0 : i32
    %c0_i32_1 = arith.constant 0 : i32
    return %c0_i32, %c0_i32_0 : i32, i32
  }
  func.func @transform_2(%arg0: i32) -> (i32, i32) {
    %c0_i32 = arith.constant 0 : i32
    %c0_i32_0 = arith.constant 0 : i32
    %c0_i32_1 = arith.constant 0 : i32
    return %c0_i32, %c0_i32_0 : i32, i32
  }
  func.func @transform_3(%arg0: i32) -> (i32, i32) {
    %c0_i32 = arith.constant 0 : i32
    %c0_i32_0 = arith.constant 0 : i32
    return %arg0, %c0_i32 : i32, i32
  }
}

module attributes {stable_mosaic.version = 11 : i64} {
  func.func @_features_kernel(%arg0: i32, %arg1: memref<1x28x28xf32, #tpu.memory_space<vmem>>, %arg2: memref<9x32xf32, #tpu.memory_space<vmem>>, %arg3: memref<1x32xf32, #tpu.memory_space<vmem>>, %arg4: memref<288x64xbf16, #tpu.memory_space<vmem>>, %arg5: memref<1x64xf32, #tpu.memory_space<vmem>>, %arg6: memref<1x7x7x64xbf16, #tpu.memory_space<vmem>>, %arg7: memref<1x30x30xf32, #tpu.memory_space<vmem>>, %arg8: memref<1x14x28x32xf32, #tpu.memory_space<vmem>>, %arg9: memref<1x16x18x32xf32, #tpu.memory_space<vmem>>, %arg10: memref<1x7x16x64xf32, #tpu.memory_space<vmem>>) attributes {dimension_semantics = [#tpu.dimension_semantics<parallel>], iteration_bounds = array<i64: 2>, scalar_prefetch = 0 : i64, scratch_operands = 4 : i64, tpu.core_type = #tpu.core_type<tc>, window_params = [{transform_indices = @transform_0, window_bounds = array<i64: 1, 28, 28>}, {pipeline_mode = #tpu.pipeline_mode<synchronous>, transform_indices = @transform_1, window_bounds = array<i64: 9, 32>}, {pipeline_mode = #tpu.pipeline_mode<synchronous>, transform_indices = @transform_2, window_bounds = array<i64: 1, 32>}, {pipeline_mode = #tpu.pipeline_mode<synchronous>, transform_indices = @transform_3, window_bounds = array<i64: 288, 64>}, {pipeline_mode = #tpu.pipeline_mode<synchronous>, transform_indices = @transform_4, window_bounds = array<i64: 1, 64>}, {transform_indices = @transform_5, window_bounds = array<i64: 1, 7, 7, 64>}]} {
    %cst = arith.constant 0.000000e+00 : f32
    %0 = vector.broadcast %cst : f32 to vector<1x30x30xf32>
    %c0 = arith.constant 0 : index
    %c0_0 = arith.constant 0 : index
    %c0_1 = arith.constant 0 : index
    %1 = vector.load %arg7[%c0, %c0_0, %c0_1] : memref<1x30x30xf32, #tpu.memory_space<vmem>>, vector<1x30x30xf32>
    tpu.vector_store %arg7[%c0, %c0_0, %c0_1], %0 {strides = array<i32>} : memref<1x30x30xf32, #tpu.memory_space<vmem>>, vector<1x30x30xf32>,
    %cst_2 = arith.constant 0.000000e+00 : f32
    %2 = vector.broadcast %cst_2 : f32 to vector<1x16x18x32xf32>
    %c0_3 = arith.constant 0 : index
    %c0_4 = arith.constant 0 : index
    %c0_5 = arith.constant 0 : index
    %c0_6 = arith.constant 0 : index
    %3 = vector.load %arg9[%c0_3, %c0_4, %c0_5, %c0_6] : memref<1x16x18x32xf32, #tpu.memory_space<vmem>>, vector<1x16x18x32xf32>
    tpu.vector_store %arg9[%c0_3, %c0_4, %c0_5, %c0_6], %2 {strides = array<i32>} : memref<1x16x18x32xf32, #tpu.memory_space<vmem>>, vector<1x16x18x32xf32>,
    %c0_7 = arith.constant 0 : index
    %c0_8 = arith.constant 0 : index
    %c0_9 = arith.constant 0 : index
    %4 = vector.load %arg1[%c0_7, %c0_8, %c0_9] : memref<1x28x28xf32, #tpu.memory_space<vmem>>, vector<1x28x28xf32>
    %c0_10 = arith.constant 0 : index
    %c1 = arith.constant 1 : index
    %c1_11 = arith.constant 1 : index
    %5 = vector.load %arg7[%c0_10, %c1, %c1_11] : memref<1x30x30xf32, #tpu.memory_space<vmem>>, vector<1x28x28xf32>
    tpu.vector_store %arg7[%c0_10, %c1, %c1_11], %4 {strides = array<i32>} : memref<1x30x30xf32, #tpu.memory_space<vmem>>, vector<1x28x28xf32>,
    %c0_12 = arith.constant 0 : index
    %c0_13 = arith.constant 0 : index
    %c0_14 = arith.constant 0 : index
    %6 = vector.load %arg7[%c0_12, %c0_13, %c0_14] : memref<1x30x30xf32, #tpu.memory_space<vmem>>, vector<1x30x30xf32>
    %7 = vector.shape_cast %6 : vector<1x30x30xf32> to vector<1x30x30x1xf32>
    %c0_15 = arith.constant 0 : index
    %c0_16 = arith.constant 0 : index
    %8 = vector.load %arg2[%c0_15, %c0_16] : memref<9x32xf32, #tpu.memory_space<vmem>>, vector<9x32xf32>
    %cst_17 = arith.constant 0.000000e+00 : f32
    %9 = vector.broadcast %cst_17 : f32 to vector<1x28x28x32xf32>
    %10 = vector.extract_strided_slice %7 {offsets = [0, 0, 0, 0], sizes = [1, 30, 28, 1], strides = [1, 1, 1, 1]} : vector<1x30x30x1xf32> to vector<1x30x28x1xf32>
    %11 = vector.extract_strided_slice %10 {offsets = [0, 0, 0, 0], sizes = [1, 28, 28, 1], strides = [1, 1, 1, 1]} : vector<1x30x28x1xf32> to vector<1x28x28x1xf32>
    %12 = vector.extract_strided_slice %8 {offsets = [0, 0], sizes = [1, 32], strides = [1, 1]} : vector<9x32xf32> to vector<1x32xf32>
    %13 = vector.shape_cast %12 : vector<1x32xf32> to vector<1x1x1x32xf32>
    %14 = vector.broadcast %11 : vector<1x28x28x1xf32> to vector<1x28x28x32xf32>
    %15 = vector.broadcast %13 : vector<1x1x1x32xf32> to vector<1x28x28x32xf32>
    %16 = arith.mulf %14, %15 : vector<1x28x28x32xf32>
    %17 = arith.addf %9, %16 : vector<1x28x28x32xf32>
    %18 = vector.extract_strided_slice %10 {offsets = [0, 1, 0, 0], sizes = [1, 28, 28, 1], strides = [1, 1, 1, 1]} : vector<1x30x28x1xf32> to vector<1x28x28x1xf32>
    %19 = vector.extract_strided_slice %8 {offsets = [3, 0], sizes = [1, 32], strides = [1, 1]} : vector<9x32xf32> to vector<1x32xf32>
    %20 = vector.shape_cast %19 : vector<1x32xf32> to vector<1x1x1x32xf32>
    %21 = vector.broadcast %18 : vector<1x28x28x1xf32> to vector<1x28x28x32xf32>
    %22 = vector.broadcast %20 : vector<1x1x1x32xf32> to vector<1x28x28x32xf32>
    %23 = arith.mulf %21, %22 : vector<1x28x28x32xf32>
    %24 = arith.addf %17, %23 : vector<1x28x28x32xf32>
    %25 = vector.extract_strided_slice %10 {offsets = [0, 2, 0, 0], sizes = [1, 28, 28, 1], strides = [1, 1, 1, 1]} : vector<1x30x28x1xf32> to vector<1x28x28x1xf32>
    %26 = vector.extract_strided_slice %8 {offsets = [6, 0], sizes = [1, 32], strides = [1, 1]} : vector<9x32xf32> to vector<1x32xf32>
    %27 = vector.shape_cast %26 : vector<1x32xf32> to vector<1x1x1x32xf32>
    %28 = vector.broadcast %25 : vector<1x28x28x1xf32> to vector<1x28x28x32xf32>
    %29 = vector.broadcast %27 : vector<1x1x1x32xf32> to vector<1x28x28x32xf32>
    %30 = arith.mulf %28, %29 : vector<1x28x28x32xf32>
    %31 = arith.addf %24, %30 : vector<1x28x28x32xf32>
    %32 = vector.extract_strided_slice %7 {offsets = [0, 0, 1, 0], sizes = [1, 30, 28, 1], strides = [1, 1, 1, 1]} : vector<1x30x30x1xf32> to vector<1x30x28x1xf32>
    %33 = vector.extract_strided_slice %32 {offsets = [0, 0, 0, 0], sizes = [1, 28, 28, 1], strides = [1, 1, 1, 1]} : vector<1x30x28x1xf32> to vector<1x28x28x1xf32>
    %34 = vector.extract_strided_slice %8 {offsets = [1, 0], sizes = [1, 32], strides = [1, 1]} : vector<9x32xf32> to vector<1x32xf32>
    %35 = vector.shape_cast %34 : vector<1x32xf32> to vector<1x1x1x32xf32>
    %36 = vector.broadcast %33 : vector<1x28x28x1xf32> to vector<1x28x28x32xf32>
    %37 = vector.broadcast %35 : vector<1x1x1x32xf32> to vector<1x28x28x32xf32>
    %38 = arith.mulf %36, %37 : vector<1x28x28x32xf32>
    %39 = arith.addf %31, %38 : vector<1x28x28x32xf32>
    %40 = vector.extract_strided_slice %32 {offsets = [0, 1, 0, 0], sizes = [1, 28, 28, 1], strides = [1, 1, 1, 1]} : vector<1x30x28x1xf32> to vector<1x28x28x1xf32>
    %41 = vector.extract_strided_slice %8 {offsets = [4, 0], sizes = [1, 32], strides = [1, 1]} : vector<9x32xf32> to vector<1x32xf32>
    %42 = vector.shape_cast %41 : vector<1x32xf32> to vector<1x1x1x32xf32>
    %43 = vector.broadcast %40 : vector<1x28x28x1xf32> to vector<1x28x28x32xf32>
    %44 = vector.broadcast %42 : vector<1x1x1x32xf32> to vector<1x28x28x32xf32>
    %45 = arith.mulf %43, %44 : vector<1x28x28x32xf32>
    %46 = arith.addf %39, %45 : vector<1x28x28x32xf32>
    %47 = vector.extract_strided_slice %32 {offsets = [0, 2, 0, 0], sizes = [1, 28, 28, 1], strides = [1, 1, 1, 1]} : vector<1x30x28x1xf32> to vector<1x28x28x1xf32>
    %48 = vector.extract_strided_slice %8 {offsets = [7, 0], sizes = [1, 32], strides = [1, 1]} : vector<9x32xf32> to vector<1x32xf32>
    %49 = vector.shape_cast %48 : vector<1x32xf32> to vector<1x1x1x32xf32>
    %50 = vector.broadcast %47 : vector<1x28x28x1xf32> to vector<1x28x28x32xf32>
    %51 = vector.broadcast %49 : vector<1x1x1x32xf32> to vector<1x28x28x32xf32>
    %52 = arith.mulf %50, %51 : vector<1x28x28x32xf32>
    %53 = arith.addf %46, %52 : vector<1x28x28x32xf32>
    %54 = vector.extract_strided_slice %7 {offsets = [0, 0, 2, 0], sizes = [1, 30, 28, 1], strides = [1, 1, 1, 1]} : vector<1x30x30x1xf32> to vector<1x30x28x1xf32>
    %55 = vector.extract_strided_slice %54 {offsets = [0, 0, 0, 0], sizes = [1, 28, 28, 1], strides = [1, 1, 1, 1]} : vector<1x30x28x1xf32> to vector<1x28x28x1xf32>
    %56 = vector.extract_strided_slice %8 {offsets = [2, 0], sizes = [1, 32], strides = [1, 1]} : vector<9x32xf32> to vector<1x32xf32>
    %57 = vector.shape_cast %56 : vector<1x32xf32> to vector<1x1x1x32xf32>
    %58 = vector.broadcast %55 : vector<1x28x28x1xf32> to vector<1x28x28x32xf32>
    %59 = vector.broadcast %57 : vector<1x1x1x32xf32> to vector<1x28x28x32xf32>
    %60 = arith.mulf %58, %59 : vector<1x28x28x32xf32>
    %61 = arith.addf %53, %60 : vector<1x28x28x32xf32>
    %62 = vector.extract_strided_slice %54 {offsets = [0, 1, 0, 0], sizes = [1, 28, 28, 1], strides = [1, 1, 1, 1]} : vector<1x30x28x1xf32> to vector<1x28x28x1xf32>
    %63 = vector.extract_strided_slice %8 {offsets = [5, 0], sizes = [1, 32], strides = [1, 1]} : vector<9x32xf32> to vector<1x32xf32>
    %64 = vector.shape_cast %63 : vector<1x32xf32> to vector<1x1x1x32xf32>
    %65 = vector.broadcast %62 : vector<1x28x28x1xf32> to vector<1x28x28x32xf32>
    %66 = vector.broadcast %64 : vector<1x1x1x32xf32> to vector<1x28x28x32xf32>
    %67 = arith.mulf %65, %66 : vector<1x28x28x32xf32>
    %68 = arith.addf %61, %67 : vector<1x28x28x32xf32>
    %69 = vector.extract_strided_slice %54 {offsets = [0, 2, 0, 0], sizes = [1, 28, 28, 1], strides = [1, 1, 1, 1]} : vector<1x30x28x1xf32> to vector<1x28x28x1xf32>
    %70 = vector.extract_strided_slice %8 {offsets = [8, 0], sizes = [1, 32], strides = [1, 1]} : vector<9x32xf32> to vector<1x32xf32>
    %71 = vector.shape_cast %70 : vector<1x32xf32> to vector<1x1x1x32xf32>
    %72 = vector.broadcast %69 : vector<1x28x28x1xf32> to vector<1x28x28x32xf32>
    %73 = vector.broadcast %71 : vector<1x1x1x32xf32> to vector<1x28x28x32xf32>
    %74 = arith.mulf %72, %73 : vector<1x28x28x32xf32>
    %75 = arith.addf %68, %74 : vector<1x28x28x32xf32>
    %c0_18 = arith.constant 0 : index
    %c0_19 = arith.constant 0 : index
    %76 = vector.load %arg3[%c0_18, %c0_19] : memref<1x32xf32, #tpu.memory_space<vmem>>, vector<1x32xf32>
    %77 = vector.shape_cast %76 : vector<1x32xf32> to vector<1x1x1x32xf32>
    %78 = vector.broadcast %77 : vector<1x1x1x32xf32> to vector<1x28x28x32xf32>
    %79 = arith.addf %75, %78 : vector<1x28x28x32xf32>
    %cst_20 = arith.constant 0.000000e+00 : f32
    %80 = vector.broadcast %cst_20 : f32 to vector<1x28x28x32xf32>
    %81 = arith.maximumf %79, %80 : vector<1x28x28x32xf32>
    %82 = vector.shape_cast %81 : vector<1x28x28x32xf32> to vector<1x14x2x28x32xf32>
    %cst_21 = arith.constant dense<0xFF800000> : vector<1x14x28x32xf32>
    %83 = vector.multi_reduction <maximumf>, %82, %cst_21 [2] : vector<1x14x2x28x32xf32> to vector<1x14x28x32xf32>
    %c0_22 = arith.constant 0 : index
    %c0_23 = arith.constant 0 : index
    %c0_24 = arith.constant 0 : index
    %c0_25 = arith.constant 0 : index
    %84 = vector.load %arg8[%c0_22, %c0_23, %c0_24, %c0_25] : memref<1x14x28x32xf32, #tpu.memory_space<vmem>>, vector<1x14x28x32xf32>
    tpu.vector_store %arg8[%c0_22, %c0_23, %c0_24, %c0_25], %83 {strides = array<i32>} : memref<1x14x28x32xf32, #tpu.memory_space<vmem>>, vector<1x14x28x32xf32>,
    %c0_26 = arith.constant 0 : index
    %c0_27 = arith.constant 0 : index
    %c0_28 = arith.constant 0 : index
    %c0_29 = arith.constant 0 : index
    %85 = tpu.strided_load %arg8[%c0_26, %c0_27, %c0_28, %c0_29] {strides = array<i32: 1, 1, 2, 1>} : memref<1x14x28x32xf32, #tpu.memory_space<vmem>>, vector<1x14x14x32xf32>
    %c0_30 = arith.constant 0 : index
    %c0_31 = arith.constant 0 : index
    %c1_32 = arith.constant 1 : index
    %c0_33 = arith.constant 0 : index
    %86 = tpu.strided_load %arg8[%c0_30, %c0_31, %c1_32, %c0_33] {strides = array<i32: 1, 1, 2, 1>} : memref<1x14x28x32xf32, #tpu.memory_space<vmem>>, vector<1x14x14x32xf32>
    %87 = arith.maximumf %85, %86 : vector<1x14x14x32xf32>
    %c0_34 = arith.constant 0 : index
    %c1_35 = arith.constant 1 : index
    %c1_36 = arith.constant 1 : index
    %c0_37 = arith.constant 0 : index
    %88 = vector.load %arg9[%c0_34, %c1_35, %c1_36, %c0_37] : memref<1x16x18x32xf32, #tpu.memory_space<vmem>>, vector<1x14x14x32xf32>
    tpu.vector_store %arg9[%c0_34, %c1_35, %c1_36, %c0_37], %87 {strides = array<i32>} : memref<1x16x18x32xf32, #tpu.memory_space<vmem>>, vector<1x14x14x32xf32>,
    %c0_38 = arith.constant 0 : index
    %c0_39 = arith.constant 0 : index
    %c0_40 = arith.constant 0 : index
    %c0_41 = arith.constant 0 : index
    %89 = vector.load %arg9[%c0_38, %c0_39, %c0_40, %c0_41] : memref<1x16x18x32xf32, #tpu.memory_space<vmem>>, vector<1x16x18x32xf32>
    %90 = vector.extract_strided_slice %89 {offsets = [0, 0, 0, 0], sizes = [1, 14, 16, 32], strides = [1, 1, 1, 1]} : vector<1x16x18x32xf32> to vector<1x14x16x32xf32>
    %91 = vector.extract_strided_slice %89 {offsets = [0, 0, 1, 0], sizes = [1, 14, 16, 32], strides = [1, 1, 1, 1]} : vector<1x16x18x32xf32> to vector<1x14x16x32xf32>
    %92 = vector.extract_strided_slice %89 {offsets = [0, 0, 2, 0], sizes = [1, 14, 16, 32], strides = [1, 1, 1, 1]} : vector<1x16x18x32xf32> to vector<1x14x16x32xf32>
    %93 = vector.extract_strided_slice %89 {offsets = [0, 1, 0, 0], sizes = [1, 14, 16, 32], strides = [1, 1, 1, 1]} : vector<1x16x18x32xf32> to vector<1x14x16x32xf32>
    %94 = vector.extract_strided_slice %89 {offsets = [0, 1, 1, 0], sizes = [1, 14, 16, 32], strides = [1, 1, 1, 1]} : vector<1x16x18x32xf32> to vector<1x14x16x32xf32>
    %95 = vector.extract_strided_slice %89 {offsets = [0, 1, 2, 0], sizes = [1, 14, 16, 32], strides = [1, 1, 1, 1]} : vector<1x16x18x32xf32> to vector<1x14x16x32xf32>
    %96 = vector.extract_strided_slice %89 {offsets = [0, 2, 0, 0], sizes = [1, 14, 16, 32], strides = [1, 1, 1, 1]} : vector<1x16x18x32xf32> to vector<1x14x16x32xf32>
    %97 = vector.extract_strided_slice %89 {offsets = [0, 2, 1, 0], sizes = [1, 14, 16, 32], strides = [1, 1, 1, 1]} : vector<1x16x18x32xf32> to vector<1x14x16x32xf32>
    %98 = vector.extract_strided_slice %89 {offsets = [0, 2, 2, 0], sizes = [1, 14, 16, 32], strides = [1, 1, 1, 1]} : vector<1x16x18x32xf32> to vector<1x14x16x32xf32>
    %99 = tpu.concatenate %90, %91, %92, %93, %94, %95, %96, %97, %98 in 3 : vector<1x14x16x32xf32>, vector<1x14x16x32xf32>, vector<1x14x16x32xf32>, vector<1x14x16x32xf32>, vector<1x14x16x32xf32>, vector<1x14x16x32xf32>, vector<1x14x16x32xf32>, vector<1x14x16x32xf32>, vector<1x14x16x32xf32> -> vector<1x14x16x288xf32>
    %100 = arith.truncf %99 : vector<1x14x16x288xf32> to vector<1x14x16x288xbf16>
    %101 = vector.shape_cast %100 : vector<1x14x16x288xbf16> to vector<224x288xbf16>
    %c0_42 = arith.constant 0 : index
    %c0_43 = arith.constant 0 : index
    %102 = vector.load %arg4[%c0_42, %c0_43] : memref<288x64xbf16, #tpu.memory_space<vmem>>, vector<288x64xbf16>
    %cst_44 = arith.constant dense<0.000000e+00> : vector<224x64xf32>
    %103 = tpu.matmul %101, %102, %cst_44 {dimension_numbers = #tpu.dot_dimension_numbers<[1], [0], [0], [1], [0, 0, 1, 1], [], []>} : vector<224x288xbf16>, vector<288x64xbf16>, vector<224x64xf32> -> vector<224x64xf32>
    %104 = vector.shape_cast %103 : vector<224x64xf32> to vector<1x14x16x64xf32>
    %c0_45 = arith.constant 0 : index
    %c0_46 = arith.constant 0 : index
    %105 = vector.load %arg5[%c0_45, %c0_46] : memref<1x64xf32, #tpu.memory_space<vmem>>, vector<1x64xf32>
    %106 = vector.shape_cast %105 : vector<1x64xf32> to vector<1x1x1x64xf32>
    %107 = vector.broadcast %106 : vector<1x1x1x64xf32> to vector<1x14x16x64xf32>
    %108 = arith.addf %104, %107 : vector<1x14x16x64xf32>
    %cst_47 = arith.constant 0.000000e+00 : f32
    %109 = vector.broadcast %cst_47 : f32 to vector<1x14x16x64xf32>
    %110 = arith.maximumf %108, %109 : vector<1x14x16x64xf32>
    %111 = vector.shape_cast %110 : vector<1x14x16x64xf32> to vector<1x7x2x16x64xf32>
    %cst_48 = arith.constant dense<0xFF800000> : vector<1x7x16x64xf32>
    %112 = vector.multi_reduction <maximumf>, %111, %cst_48 [2] : vector<1x7x2x16x64xf32> to vector<1x7x16x64xf32>
    %c0_49 = arith.constant 0 : index
    %c0_50 = arith.constant 0 : index
    %c0_51 = arith.constant 0 : index
    %c0_52 = arith.constant 0 : index
    %113 = vector.load %arg10[%c0_49, %c0_50, %c0_51, %c0_52] : memref<1x7x16x64xf32, #tpu.memory_space<vmem>>, vector<1x7x16x64xf32>
    tpu.vector_store %arg10[%c0_49, %c0_50, %c0_51, %c0_52], %112 {strides = array<i32>} : memref<1x7x16x64xf32, #tpu.memory_space<vmem>>, vector<1x7x16x64xf32>,
    %c0_53 = arith.constant 0 : index
    %c0_54 = arith.constant 0 : index
    %c0_55 = arith.constant 0 : index
    %c0_56 = arith.constant 0 : index
    %114 = tpu.strided_load %arg10[%c0_53, %c0_54, %c0_55, %c0_56] {strides = array<i32: 1, 1, 2, 1>} : memref<1x7x16x64xf32, #tpu.memory_space<vmem>>, vector<1x7x7x64xf32>
    %c0_57 = arith.constant 0 : index
    %c0_58 = arith.constant 0 : index
    %c1_59 = arith.constant 1 : index
    %c0_60 = arith.constant 0 : index
    %115 = tpu.strided_load %arg10[%c0_57, %c0_58, %c1_59, %c0_60] {strides = array<i32: 1, 1, 2, 1>} : memref<1x7x16x64xf32, #tpu.memory_space<vmem>>, vector<1x7x7x64xf32>
    %116 = arith.maximumf %114, %115 : vector<1x7x7x64xf32>
    %117 = arith.truncf %116 : vector<1x7x7x64xf32> to vector<1x7x7x64xbf16>
    %c0_61 = arith.constant 0 : index
    %c0_62 = arith.constant 0 : index
    %c0_63 = arith.constant 0 : index
    %c0_64 = arith.constant 0 : index
    %118 = vector.load %arg6[%c0_61, %c0_62, %c0_63, %c0_64] : memref<1x7x7x64xbf16, #tpu.memory_space<vmem>>, vector<1x7x7x64xbf16>
    tpu.vector_store %arg6[%c0_61, %c0_62, %c0_63, %c0_64], %117 {strides = array<i32>} : memref<1x7x7x64xbf16, #tpu.memory_space<vmem>>, vector<1x7x7x64xbf16>,
    return
  }
  func.func @transform_0(%arg0: i32) -> (i32, i32, i32) {
    %c0_i32 = arith.constant 0 : i32
    %c0_i32_0 = arith.constant 0 : i32
    %c0_i32_1 = arith.constant 0 : i32
    return %arg0, %c0_i32, %c0_i32_0 : i32, i32, i32
  }
  func.func @transform_1(%arg0: i32) -> (i32, i32) {
    %c0_i32 = arith.constant 0 : i32
    %c0_i32_0 = arith.constant 0 : i32
    %c0_i32_1 = arith.constant 0 : i32
    return %c0_i32, %c0_i32_0 : i32, i32
  }
  func.func @transform_2(%arg0: i32) -> (i32, i32) {
    %c0_i32 = arith.constant 0 : i32
    %c0_i32_0 = arith.constant 0 : i32
    %c0_i32_1 = arith.constant 0 : i32
    return %c0_i32, %c0_i32_0 : i32, i32
  }
  func.func @transform_3(%arg0: i32) -> (i32, i32) {
    %c0_i32 = arith.constant 0 : i32
    %c0_i32_0 = arith.constant 0 : i32
    %c0_i32_1 = arith.constant 0 : i32
    return %c0_i32, %c0_i32_0 : i32, i32
  }
  func.func @transform_4(%arg0: i32) -> (i32, i32) {
    %c0_i32 = arith.constant 0 : i32
    %c0_i32_0 = arith.constant 0 : i32
    %c0_i32_1 = arith.constant 0 : i32
    return %c0_i32, %c0_i32_0 : i32, i32
  }
  func.func @transform_5(%arg0: i32) -> (i32, i32, i32, i32) {
    %c0_i32 = arith.constant 0 : i32
    %c0_i32_0 = arith.constant 0 : i32
    %c0_i32_1 = arith.constant 0 : i32
    %c0_i32_2 = arith.constant 0 : i32
    return %arg0, %c0_i32, %c0_i32_0, %c0_i32_1 : i32, i32, i32, i32
  }
}

</mosaic_0001>

<llo_original>
// kernel: cnn_forward.3
$region0: #{cnn_forward.3}
  #allocation0 [shape = 'u32[]', space=smem, size = 0x4, offset = 0x4, fixed_abs, tag = 'smem constant byte address 0x4 - core index']
  #allocation1 [shape = 'u32[144,128]{1,0:T(1,128)}', space=vmem, size = 0x12000, scoped, tag = 'internal scratch']
  %s0 = inlined_call_operand.vmem [shape: bf16[2,3136], index: 0, kind: input, shape index: {}]
  %s1 = inlined_call_operand.vmem [shape: bf16[3136,10], index: 1, kind: input, shape index: {}]
  %s2 = inlined_call_operand.vmem [shape: f32[1,10], index: 2, kind: input, shape index: {}]
  %s3 = inlined_call_operand.hbm [shape: f32[2,10], index: 3, kind: output, shape index: {}]
  %s4 = sld [smem:[#allocation0]]
  $region22: #{cnn_forward.3} parent=0
    _
  %s6 = ssub.s32 1, %s4
  %s7 = scalar_select 0, %s6, %s4
  $region1: #{cnn_forward.3} parent=0
    #allocation2 [shape = 'u8[1024]{0}', space=vmem, size = 0x400, scoped, tag = 'output window, operand 0, single buffered']
    #allocation3 [shape = 's32[1]{0}', space=sflag, size = 0x4, scoped, tag = 'scoped memory for cnn_forward.3']
    %8 = vsyncpa [#allocation3], 0
    // Predicated region
    $region2: #{cnn_forward.3} parent=1 // pred_check
      _
    $region3: #{cnn_forward.3} parent=1 // pred_check_branch
      %10 = sbr.rel (0) target = $region5
    $region4: #{cnn_forward.3} parent=1 // pred_region
      _
    $region5: #{cnn_forward.3} parent=1 // pred_fallthru
      _
    // Predicated region
    $region6: #{cnn_forward.3} parent=1 // pred_check
      _
    $region7: #{cnn_forward.3} parent=1 // pred_check_branch
      %12 = sbr.rel (0) target = $region9
    $region8: #{cnn_forward.3} parent=1 // pred_region
      _
    $region9: #{cnn_forward.3} parent=1 // pred_fallthru
      _
    // Predicated region
    $region10: #{cnn_forward.3} parent=1 // pred_check
      _
    $region11: #{cnn_forward.3} parent=1 // pred_check_branch
      %14 = sbr.rel (0) target = $region13
    $region12: #{cnn_forward.3} parent=1 // pred_region
      _
    $region13: #{cnn_forward.3} parent=1 // pred_fallthru
      _
    %v16 = vld [vmem:[%s0] sm:$0xff]
    %v17 = vld [vmem:[%s0 + $0x8] sm:$0xff]
    %v18 = vld [vmem:[%s0 + $0x10] sm:$0xff]
    %v19 = vld [vmem:[%s0 + $0x18] sm:$0x1]
    %v20 = vld [vmem:[%s1] sm:$0xf]
    %v21 = vld [vmem:[%s1 + $0x4] sm:$0xf]
    %v22 = vld [vmem:[%s1 + $0x8] sm:$0xf]
    %v23 = vld [vmem:[%s1 + $0xc] sm:$0xf]
    %v24 = vld [vmem:[%s1 + $0x10] sm:$0xf]
    %v25 = vld [vmem:[%s1 + $0x14] sm:$0xf]
    %v26 = vld [vmem:[%s1 + $0x18] sm:$0xf]
    %v27 = vld [vmem:[%s1 + $0x1c] sm:$0xf]
    %v28 = vld [vmem:[%s1 + $0x20] sm:$0xf]
    %v29 = vld [vmem:[%s1 + $0x24] sm:$0xf]
    %v30 = vld [vmem:[%s1 + $0x28] sm:$0xf]
    %v31 = vld [vmem:[%s1 + $0x2c] sm:$0xf]
    %v32 = vld [vmem:[%s1 + $0x30] sm:$0xf]
    %v33 = vld [vmem:[%s1 + $0x34] sm:$0xf]
    %v34 = vld [vmem:[%s1 + $0x38] sm:$0xf]
    %v35 = vld [vmem:[%s1 + $0x3c] sm:$0xf]
    %v36 = vld [vmem:[%s1 + $0x40] sm:$0xf]
    %v37 = vld [vmem:[%s1 + $0x44] sm:$0xf]
    %v38 = vld [vmem:[%s1 + $0x48] sm:$0xf]
    %v39 = vld [vmem:[%s1 + $0x4c] sm:$0xf]
    %v40 = vld [vmem:[%s1 + $0x50] sm:$0xf]
    %v41 = vld [vmem:[%s1 + $0x54] sm:$0xf]
    %v42 = vld [vmem:[%s1 + $0x58] sm:$0xf]
    %v43 = vld [vmem:[%s1 + $0x5c] sm:$0xf]
    %v44 = vld [vmem:[%s1 + $0x60] sm:$0xf]
    %v45 = vld [vmem:[%s1 + $0x64] sm:$0xf]
    %v46 = vld [vmem:[%s1 + $0x68] sm:$0xf]
    %v47 = vld [vmem:[%s1 + $0x6c] sm:$0xf]
    %v48 = vld [vmem:[%s1 + $0x70] sm:$0xf]
    %v49 = vld [vmem:[%s1 + $0x74] sm:$0xf]
    %v50 = vld [vmem:[%s1 + $0x78] sm:$0xf]
    %v51 = vld [vmem:[%s1 + $0x7c] sm:$0xf]
    %v52 = vld [vmem:[%s1 + $0x80] sm:$0xf]
    %v53 = vld [vmem:[%s1 + $0x84] sm:$0xf]
    %v54 = vld [vmem:[%s1 + $0x88] sm:$0xf]
    %v55 = vld [vmem:[%s1 + $0x8c] sm:$0xf]
    %v56 = vld [vmem:[%s1 + $0x90] sm:$0xf]
    %v57 = vld [vmem:[%s1 + $0x94] sm:$0xf]
    %v58 = vld [vmem:[%s1 + $0x98] sm:$0xf]
    %v59 = vld [vmem:[%s1 + $0x9c] sm:$0xf]
    %v60 = vld [vmem:[%s1 + $0xa0] sm:$0xf]
    %v61 = vld [vmem:[%s1 + $0xa4] sm:$0xf]
    %v62 = vld [vmem:[%s1 + $0xa8] sm:$0xf]
    %v63 = vld [vmem:[%s1 + $0xac] sm:$0xf]
    %v64 = vld [vmem:[%s1 + $0xb0] sm:$0xf]
    %v65 = vld [vmem:[%s1 + $0xb4] sm:$0xf]
    %v66 = vld [vmem:[%s1 + $0xb8] sm:$0xf]
    %v67 = vld [vmem:[%s1 + $0xbc] sm:$0xf]
    %v68 = vld [vmem:[%s1 + $0xc0] sm:$0xf]
    %v69 = vld [vmem:[%s1 + $0xc4] sm:$0xf]
    %v70 = vld [vmem:[%s1 + $0xc8] sm:$0xf]
    %v71 = vld [vmem:[%s1 + $0xcc] sm:$0xf]
    %v72 = vld [vmem:[%s1 + $0xd0] sm:$0xf]
    %v73 = vld [vmem:[%s1 + $0xd4] sm:$0xf]
    %v74 = vld [vmem:[%s1 + $0xd8] sm:$0xf]
    %v75 = vld [vmem:[%s1 + $0xdc] sm:$0xf]
    %v76 = vld [vmem:[%s1 + $0xe0] sm:$0xf]
    %v77 = vld [vmem:[%s1 + $0xe4] sm:$0xf]
    %v78 = vld [vmem:[%s1 + $0xe8] sm:$0xf]
    %v79 = vld [vmem:[%s1 + $0xec] sm:$0xf]
    %v80 = vld [vmem:[%s1 + $0xf0] sm:$0xf]
    %v81 = vld [vmem:[%s1 + $0xf4] sm:$0xf]
    %v82 = vld [vmem:[%s1 + $0xf8] sm:$0xf]
    %v83 = vld [vmem:[%s1 + $0xfc] sm:$0xf]
    %v84 = vld [vmem:[%s1 + $0x100] sm:$0xf]
    %v85 = vld [vmem:[%s1 + $0x104] sm:$0xf]
    %v86 = vld [vmem:[%s1 + $0x108] sm:$0xf]
    %v87 = vld [vmem:[%s1 + $0x10c] sm:$0xf]
    %v88 = vld [vmem:[%s1 + $0x110] sm:$0xf]
    %v89 = vld [vmem:[%s1 + $0x114] sm:$0xf]
    %v90 = vld [vmem:[%s1 + $0x118] sm:$0xf]
    %v91 = vld [vmem:[%s1 + $0x11c] sm:$0xf]
    %v92 = vld [vmem:[%s1 + $0x120] sm:$0xf]
    %v93 = vld [vmem:[%s1 + $0x124] sm:$0xf]
    %v94 = vld [vmem:[%s1 + $0x128] sm:$0xf]
    %v95 = vld [vmem:[%s1 + $0x12c] sm:$0xf]
    %v96 = vld [vmem:[%s1 + $0x130] sm:$0xf]
    %v97 = vld [vmem:[%s1 + $0x134] sm:$0xf]
    %v98 = vld [vmem:[%s1 + $0x138] sm:$0xf]
    %v99 = vld [vmem:[%s1 + $0x13c] sm:$0xf]
    %v100 = vld [vmem:[%s1 + $0x140] sm:$0xf]
    %v101 = vld [vmem:[%s1 + $0x144] sm:$0xf]
    %v102 = vld [vmem:[%s1 + $0x148] sm:$0xf]
    %v103 = vld [vmem:[%s1 + $0x14c] sm:$0xf]
    %v104 = vld [vmem:[%s1 + $0x150] sm:$0xf]
    %v105 = vld [vmem:[%s1 + $0x154] sm:$0xf]
    %v106 = vld [vmem:[%s1 + $0x158] sm:$0xf]
    %v107 = vld [vmem:[%s1 + $0x15c] sm:$0xf]
    %v108 = vld [vmem:[%s1 + $0x160] sm:$0xf]
    %v109 = vld [vmem:[%s1 + $0x164] sm:$0xf]
    %v110 = vld [vmem:[%s1 + $0x168] sm:$0xf]
    %v111 = vld [vmem:[%s1 + $0x16c] sm:$0xf]
    %v112 = vld [vmem:[%s1 + $0x170] sm:$0xf]
    %v113 = vld [vmem:[%s1 + $0x174] sm:$0xf]
    %v114 = vld [vmem:[%s1 + $0x178] sm:$0xf]
    %v115 = vld [vmem:[%s1 + $0x17c] sm:$0xf]
    %v116 = vld [vmem:[%s1 + $0x180] sm:$0xf]
    %v117 = vld [vmem:[%s1 + $0x184] sm:$0xf]
    %v118 = vld [vmem:[%s1 + $0x188] sm:$0xf]
    %v119 = vld [vmem:[%s1 + $0x18c] sm:$0xf]
    %v120 = vld [vmem:[%s1 + $0x190] sm:$0xf]
    %v121 = vld [vmem:[%s1 + $0x194] sm:$0xf]
    %v122 = vld [vmem:[%s1 + $0x198] sm:$0xf]
    %v123 = vld [vmem:[%s1 + $0x19c] sm:$0xf]
    %v124 = vld [vmem:[%s1 + $0x1a0] sm:$0xf]
    %v125 = vld [vmem:[%s1 + $0x1a4] sm:$0xf]
    %v126 = vld [vmem:[%s1 + $0x1a8] sm:$0xf]
    %v127 = vld [vmem:[%s1 + $0x1ac] sm:$0xf]
    %v128 = vld [vmem:[%s1 + $0x1b0] sm:$0xf]
    %v129 = vld [vmem:[%s1 + $0x1b4] sm:$0xf]
    %v130 = vld [vmem:[%s1 + $0x1b8] sm:$0xf]
    %v131 = vld [vmem:[%s1 + $0x1bc] sm:$0xf]
    %v132 = vld [vmem:[%s1 + $0x1c0] sm:$0xf]
    %v133 = vld [vmem:[%s1 + $0x1c4] sm:$0xf]
    %v134 = vld [vmem:[%s1 + $0x1c8] sm:$0xf]
    %v135 = vld [vmem:[%s1 + $0x1cc] sm:$0xf]
    %v136 = vld [vmem:[%s1 + $0x1d0] sm:$0xf]
    %v137 = vld [vmem:[%s1 + $0x1d4] sm:$0xf]
    %v138 = vld [vmem:[%s1 + $0x1d8] sm:$0xf]
    %v139 = vld [vmem:[%s1 + $0x1dc] sm:$0xf]
    %v140 = vld [vmem:[%s1 + $0x1e0] sm:$0xf]
    %v141 = vld [vmem:[%s1 + $0x1e4] sm:$0xf]
    %v142 = vld [vmem:[%s1 + $0x1e8] sm:$0xf]
    %v143 = vld [vmem:[%s1 + $0x1ec] sm:$0xf]
    %v144 = vld [vmem:[%s1 + $0x1f0] sm:$0xf]
    %v145 = vld [vmem:[%s1 + $0x1f4] sm:$0xf]
    %v146 = vld [vmem:[%s1 + $0x1f8] sm:$0xf]
    %v147 = vld [vmem:[%s1 + $0x1fc] sm:$0xf]
    %v148 = vld [vmem:[%s1 + $0x200] sm:$0xf]
    %v149 = vld [vmem:[%s1 + $0x204] sm:$0xf]
    %v150 = vld [vmem:[%s1 + $0x208] sm:$0xf]
    %v151 = vld [vmem:[%s1 + $0x20c] sm:$0xf]
    %v152 = vld [vmem:[%s1 + $0x210] sm:$0xf]
    %v153 = vld [vmem:[%s1 + $0x214] sm:$0xf]
    %v154 = vld [vmem:[%s1 + $0x218] sm:$0xf]
    %v155 = vld [vmem:[%s1 + $0x21c] sm:$0xf]
    %v156 = vld [vmem:[%s1 + $0x220] sm:$0xf]
    %v157 = vld [vmem:[%s1 + $0x224] sm:$0xf]
    %v158 = vld [vmem:[%s1 + $0x228] sm:$0xf]
    %v159 = vld [vmem:[%s1 + $0x22c] sm:$0xf]
    %v160 = vld [vmem:[%s1 + $0x230] sm:$0xf]
    %v161 = vld [vmem:[%s1 + $0x234] sm:$0xf]
    %v162 = vld [vmem:[%s1 + $0x238] sm:$0xf]
    %v163 = vld [vmem:[%s1 + $0x23c] sm:$0xf]
    %v164 = vld [vmem:[%s1 + $0x240] sm:$0xf]
    %v165 = vld [vmem:[%s1 + $0x244] sm:$0xf]
    %v166 = vld [vmem:[%s1 + $0x248] sm:$0xf]
    %v167 = vld [vmem:[%s1 + $0x24c] sm:$0xf]
    %v168 = vld [vmem:[%s1 + $0x250] sm:$0xf]
    %v169 = vld [vmem:[%s1 + $0x254] sm:$0xf]
    %v170 = vld [vmem:[%s1 + $0x258] sm:$0xf]
    %v171 = vld [vmem:[%s1 + $0x25c] sm:$0xf]
    %v172 = vld [vmem:[%s1 + $0x260] sm:$0xf]
    %v173 = vld [vmem:[%s1 + $0x264] sm:$0xf]
    %v174 = vld [vmem:[%s1 + $0x268] sm:$0xf]
    %v175 = vld [vmem:[%s1 + $0x26c] sm:$0xf]
    %v176 = vld [vmem:[%s1 + $0x270] sm:$0xf]
    %v177 = vld [vmem:[%s1 + $0x274] sm:$0xf]
    %v178 = vld [vmem:[%s1 + $0x278] sm:$0xf]
    %v179 = vld [vmem:[%s1 + $0x27c] sm:$0xf]
    %v180 = vld [vmem:[%s1 + $0x280] sm:$0xf]
    %v181 = vld [vmem:[%s1 + $0x284] sm:$0xf]
    %v182 = vld [vmem:[%s1 + $0x288] sm:$0xf]
    %v183 = vld [vmem:[%s1 + $0x28c] sm:$0xf]
    %v184 = vld [vmem:[%s1 + $0x290] sm:$0xf]
    %v185 = vld [vmem:[%s1 + $0x294] sm:$0xf]
    %v186 = vld [vmem:[%s1 + $0x298] sm:$0xf]
    %v187 = vld [vmem:[%s1 + $0x29c] sm:$0xf]
    %v188 = vld [vmem:[%s1 + $0x2a0] sm:$0xf]
    %v189 = vld [vmem:[%s1 + $0x2a4] sm:$0xf]
    %v190 = vld [vmem:[%s1 + $0x2a8] sm:$0xf]
    %v191 = vld [vmem:[%s1 + $0x2ac] sm:$0xf]
    %v192 = vld [vmem:[%s1 + $0x2b0] sm:$0xf]
    %v193 = vld [vmem:[%s1 + $0x2b4] sm:$0xf]
    %v194 = vld [vmem:[%s1 + $0x2b8] sm:$0xf]
    %v195 = vld [vmem:[%s1 + $0x2bc] sm:$0xf]
    %v196 = vld [vmem:[%s1 + $0x2c0] sm:$0xf]
    %v197 = vld [vmem:[%s1 + $0x2c4] sm:$0xf]
    %v198 = vld [vmem:[%s1 + $0x2c8] sm:$0xf]
    %v199 = vld [vmem:[%s1 + $0x2cc] sm:$0xf]
    %v200 = vld [vmem:[%s1 + $0x2d0] sm:$0xf]
    %v201 = vld [vmem:[%s1 + $0x2d4] sm:$0xf]
    %v202 = vld [vmem:[%s1 + $0x2d8] sm:$0xf]
    %v203 = vld [vmem:[%s1 + $0x2dc] sm:$0xf]
    %v204 = vld [vmem:[%s1 + $0x2e0] sm:$0xf]
    %v205 = vld [vmem:[%s1 + $0x2e4] sm:$0xf]
    %v206 = vld [vmem:[%s1 + $0x2e8] sm:$0xf]
    %v207 = vld [vmem:[%s1 + $0x2ec] sm:$0xf]
    %v208 = vld [vmem:[%s1 + $0x2f0] sm:$0xf]
    %v209 = vld [vmem:[%s1 + $0x2f4] sm:$0xf]
    %v210 = vld [vmem:[%s1 + $0x2f8] sm:$0xf]
    %v211 = vld [vmem:[%s1 + $0x2fc] sm:$0xf]
    %v212 = vld [vmem:[%s1 + $0x300] sm:$0xf]
    %v213 = vld [vmem:[%s1 + $0x304] sm:$0xf]
    %v214 = vld [vmem:[%s1 + $0x308] sm:$0xf]
    %v215 = vld [vmem:[%s1 + $0x30c] sm:$0xf]
    %v216 = vld [vmem:[%s1 + $0x310] sm:$0xf]
    %v217 = vld [vmem:[%s1 + $0x314] sm:$0xf]
    %v218 = vld [vmem:[%s1 + $0x318] sm:$0xf]
    %v219 = vld [vmem:[%s1 + $0x31c] sm:$0xf]
    %v220 = vld [vmem:[%s1 + $0x320] sm:$0xf]
    %v221 = vld [vmem:[%s1 + $0x324] sm:$0xf]
    %v222 = vld [vmem:[%s1 + $0x328] sm:$0xf]
    %v223 = vld [vmem:[%s1 + $0x32c] sm:$0xf]
    %v224 = vld [vmem:[%s1 + $0x330] sm:$0xf]
    %v225 = vld [vmem:[%s1 + $0x334] sm:$0xf]
    %v226 = vld [vmem:[%s1 + $0x338] sm:$0xf]
    %v227 = vld [vmem:[%s1 + $0x33c] sm:$0xf]
    %v228 = vld [vmem:[%s1 + $0x340] sm:$0xf]
    %v229 = vld [vmem:[%s1 + $0x344] sm:$0xf]
    %v230 = vld [vmem:[%s1 + $0x348] sm:$0xf]
    %v231 = vld [vmem:[%s1 + $0x34c] sm:$0xf]
    %v232 = vld [vmem:[%s1 + $0x350] sm:$0xf]
    %v233 = vld [vmem:[%s1 + $0x354] sm:$0xf]
    %v234 = vld [vmem:[%s1 + $0x358] sm:$0xf]
    %v235 = vld [vmem:[%s1 + $0x35c] sm:$0xf]
    %v236 = vld [vmem:[%s1 + $0x360] sm:$0xf]
    %v237 = vld [vmem:[%s1 + $0x364] sm:$0xf]
    %v238 = vld [vmem:[%s1 + $0x368] sm:$0xf]
    %v239 = vld [vmem:[%s1 + $0x36c] sm:$0xf]
    %v240 = vld [vmem:[%s1 + $0x370] sm:$0xf]
    %v241 = vld [vmem:[%s1 + $0x374] sm:$0xf]
    %v242 = vld [vmem:[%s1 + $0x378] sm:$0xf]
    %v243 = vld [vmem:[%s1 + $0x37c] sm:$0xf]
    %v244 = vld [vmem:[%s1 + $0x380] sm:$0xf]
    %v245 = vld [vmem:[%s1 + $0x384] sm:$0xf]
    %v246 = vld [vmem:[%s1 + $0x388] sm:$0xf]
    %v247 = vld [vmem:[%s1 + $0x38c] sm:$0xf]
    %v248 = vld [vmem:[%s1 + $0x390] sm:$0xf]
    %v249 = vld [vmem:[%s1 + $0x394] sm:$0xf]
    %v250 = vld [vmem:[%s1 + $0x398] sm:$0xf]
    %v251 = vld [vmem:[%s1 + $0x39c] sm:$0xf]
    %v252 = vld [vmem:[%s1 + $0x3a0] sm:$0xf]
    %v253 = vld [vmem:[%s1 + $0x3a4] sm:$0xf]
    %v254 = vld [vmem:[%s1 + $0x3a8] sm:$0xf]
    %v255 = vld [vmem:[%s1 + $0x3ac] sm:$0xf]
    %v256 = vld [vmem:[%s1 + $0x3b0] sm:$0xf]
    %v257 = vld [vmem:[%s1 + $0x3b4] sm:$0xf]
    %v258 = vld [vmem:[%s1 + $0x3b8] sm:$0xf]
    %v259 = vld [vmem:[%s1 + $0x3bc] sm:$0xf]
    %v260 = vld [vmem:[%s1 + $0x3c0] sm:$0xf]
    %v261 = vld [vmem:[%s1 + $0x3c4] sm:$0xf]
    %v262 = vld [vmem:[%s1 + $0x3c8] sm:$0xf]
    %v263 = vld [vmem:[%s1 + $0x3cc] sm:$0xf]
    %v264 = vld [vmem:[%s1 + $0x3d0] sm:$0xf]
    %v265 = vld [vmem:[%s1 + $0x3d4] sm:$0xf]
    %v266 = vld [vmem:[%s1 + $0x3d8] sm:$0xf]
    %v267 = vld [vmem:[%s1 + $0x3dc] sm:$0xf]
    %v268 = vld [vmem:[%s1 + $0x3e0] sm:$0xf]
    %v269 = vld [vmem:[%s1 + $0x3e4] sm:$0xf]
    %v270 = vld [vmem:[%s1 + $0x3e8] sm:$0xf]
    %v271 = vld [vmem:[%s1 + $0x3ec] sm:$0xf]
    %v272 = vld [vmem:[%s1 + $0x3f0] sm:$0xf]
    %v273 = vld [vmem:[%s1 + $0x3f4] sm:$0xf]
    %v274 = vld [vmem:[%s1 + $0x3f8] sm:$0xf]
    %v275 = vld [vmem:[%s1 + $0x3fc] sm:$0xf]
    %v276 = vld [vmem:[%s1 + $0x400] sm:$0xf]
    %v277 = vld [vmem:[%s1 + $0x404] sm:$0xf]
    %v278 = vld [vmem:[%s1 + $0x408] sm:$0xf]
    %v279 = vld [vmem:[%s1 + $0x40c] sm:$0xf]
    %v280 = vld [vmem:[%s1 + $0x410] sm:$0xf]
    %v281 = vld [vmem:[%s1 + $0x414] sm:$0xf]
    %v282 = vld [vmem:[%s1 + $0x418] sm:$0xf]
    %v283 = vld [vmem:[%s1 + $0x41c] sm:$0xf]
    %v284 = vld [vmem:[%s1 + $0x420] sm:$0xf]
    %v285 = vld [vmem:[%s1 + $0x424] sm:$0xf]
    %v286 = vld [vmem:[%s1 + $0x428] sm:$0xf]
    %v287 = vld [vmem:[%s1 + $0x42c] sm:$0xf]
    %v288 = vld [vmem:[%s1 + $0x430] sm:$0xf]
    %v289 = vld [vmem:[%s1 + $0x434] sm:$0xf]
    %v290 = vld [vmem:[%s1 + $0x438] sm:$0xf]
    %v291 = vld [vmem:[%s1 + $0x43c] sm:$0xf]
    %v292 = vld [vmem:[%s1 + $0x440] sm:$0xf]
    %v293 = vld [vmem:[%s1 + $0x444] sm:$0xf]
    %v294 = vld [vmem:[%s1 + $0x448] sm:$0xf]
    %v295 = vld [vmem:[%s1 + $0x44c] sm:$0xf]
    %v296 = vld [vmem:[%s1 + $0x450] sm:$0xf]
    %v297 = vld [vmem:[%s1 + $0x454] sm:$0xf]
    %v298 = vld [vmem:[%s1 + $0x458] sm:$0xf]
    %v299 = vld [vmem:[%s1 + $0x45c] sm:$0xf]
    %v300 = vld [vmem:[%s1 + $0x460] sm:$0xf]
    %v301 = vld [vmem:[%s1 + $0x464] sm:$0xf]
    %v302 = vld [vmem:[%s1 + $0x468] sm:$0xf]
    %v303 = vld [vmem:[%s1 + $0x46c] sm:$0xf]
    %v304 = vld [vmem:[%s1 + $0x470] sm:$0xf]
    %v305 = vld [vmem:[%s1 + $0x474] sm:$0xf]
    %v306 = vld [vmem:[%s1 + $0x478] sm:$0xf]
    %v307 = vld [vmem:[%s1 + $0x47c] sm:$0xf]
    %v308 = vld [vmem:[%s1 + $0x480] sm:$0xf]
    %v309 = vld [vmem:[%s1 + $0x484] sm:$0xf]
    %v310 = vld [vmem:[%s1 + $0x488] sm:$0xf]
    %v311 = vld [vmem:[%s1 + $0x48c] sm:$0xf]
    %v312 = vld [vmem:[%s1 + $0x490] sm:$0xf]
    %v313 = vld [vmem:[%s1 + $0x494] sm:$0xf]
    %v314 = vld [vmem:[%s1 + $0x498] sm:$0xf]
    %v315 = vld [vmem:[%s1 + $0x49c] sm:$0xf]
    %v316 = vld [vmem:[%s1 + $0x4a0] sm:$0xf]
    %v317 = vld [vmem:[%s1 + $0x4a4] sm:$0xf]
    %v318 = vld [vmem:[%s1 + $0x4a8] sm:$0xf]
    %v319 = vld [vmem:[%s1 + $0x4ac] sm:$0xf]
    %v320 = vld [vmem:[%s1 + $0x4b0] sm:$0xf]
    %v321 = vld [vmem:[%s1 + $0x4b4] sm:$0xf]
    %v322 = vld [vmem:[%s1 + $0x4b8] sm:$0xf]
    %v323 = vld [vmem:[%s1 + $0x4bc] sm:$0xf]
    %v324 = vld [vmem:[%s1 + $0x4c0] sm:$0xf]
    %v325 = vld [vmem:[%s1 + $0x4c4] sm:$0xf]
    %v326 = vld [vmem:[%s1 + $0x4c8] sm:$0xf]
    %v327 = vld [vmem:[%s1 + $0x4cc] sm:$0xf]
    %v328 = vld [vmem:[%s1 + $0x4d0] sm:$0xf]
    %v329 = vld [vmem:[%s1 + $0x4d4] sm:$0xf]
    %v330 = vld [vmem:[%s1 + $0x4d8] sm:$0xf]
    %v331 = vld [vmem:[%s1 + $0x4dc] sm:$0xf]
    %v332 = vld [vmem:[%s1 + $0x4e0] sm:$0xf]
    %v333 = vld [vmem:[%s1 + $0x4e4] sm:$0xf]
    %v334 = vld [vmem:[%s1 + $0x4e8] sm:$0xf]
    %v335 = vld [vmem:[%s1 + $0x4ec] sm:$0xf]
    %v336 = vld [vmem:[%s1 + $0x4f0] sm:$0xf]
    %v337 = vld [vmem:[%s1 + $0x4f4] sm:$0xf]
    %v338 = vld [vmem:[%s1 + $0x4f8] sm:$0xf]
    %v339 = vld [vmem:[%s1 + $0x4fc] sm:$0xf]
    %v340 = vld [vmem:[%s1 + $0x500] sm:$0xf]
    %v341 = vld [vmem:[%s1 + $0x504] sm:$0xf]
    %v342 = vld [vmem:[%s1 + $0x508] sm:$0xf]
    %v343 = vld [vmem:[%s1 + $0x50c] sm:$0xf]
    %v344 = vld [vmem:[%s1 + $0x510] sm:$0xf]
    %v345 = vld [vmem:[%s1 + $0x514] sm:$0xf]
    %v346 = vld [vmem:[%s1 + $0x518] sm:$0xf]
    %v347 = vld [vmem:[%s1 + $0x51c] sm:$0xf]
    %v348 = vld [vmem:[%s1 + $0x520] sm:$0xf]
    %v349 = vld [vmem:[%s1 + $0x524] sm:$0xf]
    %v350 = vld [vmem:[%s1 + $0x528] sm:$0xf]
    %v351 = vld [vmem:[%s1 + $0x52c] sm:$0xf]
    %v352 = vld [vmem:[%s1 + $0x530] sm:$0xf]
    %v353 = vld [vmem:[%s1 + $0x534] sm:$0xf]
    %v354 = vld [vmem:[%s1 + $0x538] sm:$0xf]
    %v355 = vld [vmem:[%s1 + $0x53c] sm:$0xf]
    %v356 = vld [vmem:[%s1 + $0x540] sm:$0xf]
    %v357 = vld [vmem:[%s1 + $0x544] sm:$0xf]
    %v358 = vld [vmem:[%s1 + $0x548] sm:$0xf]
    %v359 = vld [vmem:[%s1 + $0x54c] sm:$0xf]
    %v360 = vld [vmem:[%s1 + $0x550] sm:$0xf]
    %v361 = vld [vmem:[%s1 + $0x554] sm:$0xf]
    %v362 = vld [vmem:[%s1 + $0x558] sm:$0xf]
    %v363 = vld [vmem:[%s1 + $0x55c] sm:$0xf]
    %v364 = vld [vmem:[%s1 + $0x560] sm:$0xf]
    %v365 = vld [vmem:[%s1 + $0x564] sm:$0xf]
    %v366 = vld [vmem:[%s1 + $0x568] sm:$0xf]
    %v367 = vld [vmem:[%s1 + $0x56c] sm:$0xf]
    %v368 = vld [vmem:[%s1 + $0x570] sm:$0xf]
    %v369 = vld [vmem:[%s1 + $0x574] sm:$0xf]
    %v370 = vld [vmem:[%s1 + $0x578] sm:$0xf]
    %v371 = vld [vmem:[%s1 + $0x57c] sm:$0xf]
    %v372 = vld [vmem:[%s1 + $0x580] sm:$0xf]
    %v373 = vld [vmem:[%s1 + $0x584] sm:$0xf]
    %v374 = vld [vmem:[%s1 + $0x588] sm:$0xf]
    %v375 = vld [vmem:[%s1 + $0x58c] sm:$0xf]
    %v376 = vld [vmem:[%s1 + $0x590] sm:$0xf]
    %v377 = vld [vmem:[%s1 + $0x594] sm:$0xf]
    %v378 = vld [vmem:[%s1 + $0x598] sm:$0xf]
    %v379 = vld [vmem:[%s1 + $0x59c] sm:$0xf]
    %v380 = vld [vmem:[%s1 + $0x5a0] sm:$0xf]
    %v381 = vld [vmem:[%s1 + $0x5a4] sm:$0xf]
    %v382 = vld [vmem:[%s1 + $0x5a8] sm:$0xf]
    %v383 = vld [vmem:[%s1 + $0x5ac] sm:$0xf]
    %v384 = vld [vmem:[%s1 + $0x5b0] sm:$0xf]
    %v385 = vld [vmem:[%s1 + $0x5b4] sm:$0xf]
    %v386 = vld [vmem:[%s1 + $0x5b8] sm:$0xf]
    %v387 = vld [vmem:[%s1 + $0x5bc] sm:$0xf]
    %v388 = vld [vmem:[%s1 + $0x5c0] sm:$0xf]
    %v389 = vld [vmem:[%s1 + $0x5c4] sm:$0xf]
    %v390 = vld [vmem:[%s1 + $0x5c8] sm:$0xf]
    %v391 = vld [vmem:[%s1 + $0x5cc] sm:$0xf]
    %v392 = vld [vmem:[%s1 + $0x5d0] sm:$0xf]
    %v393 = vld [vmem:[%s1 + $0x5d4] sm:$0xf]
    %v394 = vld [vmem:[%s1 + $0x5d8] sm:$0xf]
    %v395 = vld [vmem:[%s1 + $0x5dc] sm:$0xf]
    %v396 = vld [vmem:[%s1 + $0x5e0] sm:$0xf]
    %v397 = vld [vmem:[%s1 + $0x5e4] sm:$0xf]
    %v398 = vld [vmem:[%s1 + $0x5e8] sm:$0xf]
    %v399 = vld [vmem:[%s1 + $0x5ec] sm:$0xf]
    %v400 = vld [vmem:[%s1 + $0x5f0] sm:$0xf]
    %v401 = vld [vmem:[%s1 + $0x5f4] sm:$0xf]
    %v402 = vld [vmem:[%s1 + $0x5f8] sm:$0xf]
    %v403 = vld [vmem:[%s1 + $0x5fc] sm:$0xf]
    %v404 = vld [vmem:[%s1 + $0x600] sm:$0xf]
    %v405 = vld [vmem:[%s1 + $0x604] sm:$0xf]
    %v406 = vld [vmem:[%s1 + $0x608] sm:$0xf]
    %v407 = vld [vmem:[%s1 + $0x60c] sm:$0xf]
    %v408 = vld [vmem:[%s1 + $0x610] sm:$0xf]
    %v409 = vld [vmem:[%s1 + $0x614] sm:$0xf]
    %v410 = vld [vmem:[%s1 + $0x618] sm:$0xf]
    %v411 = vld [vmem:[%s1 + $0x61c] sm:$0xf]
    %v412 = vld [vmem:[%s2] sm:$0x1]
    %v414 = vlaneseq
    %v415 = vshrl.u32 %v414, 7
    %v416 = vsub.s32 0, %v415
    %v417 = vrot.slane %v412, %v416
    %v423 = vcombine.high %v16, %v16
    %v425 = vunpack.c.l.s4 1966171168
    %v426 = vunpack.c.0.s8 %v425
    %v427 = vlaneseq
    %v428 = vshrl.u32 %v427, 7
    %v429 = vsub.s32 %v426, %v428
    %v430 = vrot.slane %v16, %v429
    %v432 = vunpack.c.l.s4 1966171168
    %v433 = vunpack.c.0.s8 %v432
    %v434 = vlaneseq
    %v435 = vshrl.u32 %v434, 7
    %v436 = vsub.s32 %v433, %v435
    %v437 = vrot.slane %v423, %v436
    %v438 = vcombine.high %v430, %v430
    %v439 = vcombine.high %v437, %v437
    %v441 = vunpack.c.l.s4 1966171168
    %v442 = vunpack.c.0.s8 %v441
    %v443 = vlaneseq
    %v444 = vshrl.u32 %v443, 7
    %v445 = vsub.s32 %v442, %v444
    %v446 = vrot.slane %v430, %v445
    %v448 = vunpack.c.l.s4 1966171168
    %v449 = vunpack.c.0.s8 %v448
    %v450 = vlaneseq
    %v451 = vshrl.u32 %v450, 7
    %v452 = vsub.s32 %v449, %v451
    %v453 = vrot.slane %v437, %v452
    %v455 = vunpack.c.l.s4 1966171168
    %v456 = vunpack.c.0.s8 %v455
    %v457 = vlaneseq
    %v458 = vshrl.u32 %v457, 7
    %v459 = vsub.s32 %v456, %v458
    %v460 = vrot.slane %v438, %v459
    %v462 = vunpack.c.l.s4 1966171168
    %v463 = vunpack.c.0.s8 %v462
    %v464 = vlaneseq
    %v465 = vshrl.u32 %v464, 7
    %v466 = vsub.s32 %v463, %v465
    %v467 = vrot.slane %v439, %v466
    %v468 = vcombine.high %v446, %v446
    %v469 = vcombine.high %v453, %v453
    %v470 = vcombine.high %v460, %v460
    %v471 = vcombine.high %v467, %v467
    %v472 = vcombine.high %v17, %v17
    %v474 = vunpack.c.l.s4 1966171168
    %v475 = vunpack.c.0.s8 %v474
    %v476 = vlaneseq
    %v477 = vshrl.u32 %v476, 7
    %v478 = vsub.s32 %v475, %v477
    %v479 = vrot.slane %v17, %v478
    %v481 = vunpack.c.l.s4 1966171168
    %v482 = vunpack.c.0.s8 %v481
    %v483 = vlaneseq
    %v484 = vshrl.u32 %v483, 7
    %v485 = vsub.s32 %v482, %v484
    %v486 = vrot.slane %v472, %v485
    %v487 = vcombine.high %v479, %v479
    %v488 = vcombine.high %v486, %v486
    %v490 = vunpack.c.l.s4 1966171168
    %v491 = vunpack.c.0.s8 %v490
    %v492 = vlaneseq
    %v493 = vshrl.u32 %v492, 7
    %v494 = vsub.s32 %v491, %v493
    %v495 = vrot.slane %v479, %v494
    %v497 = vunpack.c.l.s4 1966171168
    %v498 = vunpack.c.0.s8 %v497
    %v499 = vlaneseq
    %v500 = vshrl.u32 %v499, 7
    %v501 = vsub.s32 %v498, %v500
    %v502 = vrot.slane %v486, %v501
    %v504 = vunpack.c.l.s4 1966171168
    %v505 = vunpack.c.0.s8 %v504
    %v506 = vlaneseq
    %v507 = vshrl.u32 %v506, 7
    %v508 = vsub.s32 %v505, %v507
    %v509 = vrot.slane %v487, %v508
    %v511 = vunpack.c.l.s4 1966171168
    %v512 = vunpack.c.0.s8 %v511
    %v513 = vlaneseq
    %v514 = vshrl.u32 %v513, 7
    %v515 = vsub.s32 %v512, %v514
    %v516 = vrot.slane %v488, %v515
    %v517 = vcombine.high %v495, %v495
    %v518 = vcombine.high %v502, %v502
    %v519 = vcombine.high %v509, %v509
    %v520 = vcombine.high %v516, %v516
    %v521 = vcombine.high %v18, %v18
    %v523 = vunpack.c.l.s4 1966171168
    %v524 = vunpack.c.0.s8 %v523
    %v525 = vlaneseq
    %v526 = vshrl.u32 %v525, 7
    %v527 = vsub.s32 %v524, %v526
    %v528 = vrot.slane %v18, %v527
    %v530 = vunpack.c.l.s4 1966171168
    %v531 = vunpack.c.0.s8 %v530
    %v532 = vlaneseq
    %v533 = vshrl.u32 %v532, 7
    %v534 = vsub.s32 %v531, %v533
    %v535 = vrot.slane %v521, %v534
    %v536 = vcombine.high %v528, %v528
    %v537 = vcombine.high %v535, %v535
    %v539 = vunpack.c.l.s4 1966171168
    %v540 = vunpack.c.0.s8 %v539
    %v541 = vlaneseq
    %v542 = vshrl.u32 %v541, 7
    %v543 = vsub.s32 %v540, %v542
    %v544 = vrot.slane %v528, %v543
    %v546 = vunpack.c.l.s4 1966171168
    %v547 = vunpack.c.0.s8 %v546
    %v548 = vlaneseq
    %v549 = vshrl.u32 %v548, 7
    %v550 = vsub.s32 %v547, %v549
    %v551 = vrot.slane %v535, %v550
    %v553 = vunpack.c.l.s4 1966171168
    %v554 = vunpack.c.0.s8 %v553
    %v555 = vlaneseq
    %v556 = vshrl.u32 %v555, 7
    %v557 = vsub.s32 %v554, %v556
    %v558 = vrot.slane %v536, %v557
    %v560 = vunpack.c.l.s4 1966171168
    %v561 = vunpack.c.0.s8 %v560
    %v562 = vlaneseq
    %v563 = vshrl.u32 %v562, 7
    %v564 = vsub.s32 %v561, %v563
    %v565 = vrot.slane %v537, %v564
    %v566 = vcombine.high %v544, %v544
    %v567 = vcombine.high %v551, %v551
    %v568 = vcombine.high %v558, %v558
    %v569 = vcombine.high %v565, %v565
    %v571 = vunpack.c.l.s4 1966171168
    %v572 = vunpack.c.0.s8 %v571
    %v573 = vlaneseq
    %v574 = vshrl.u32 %v573, 7
    %v575 = vsub.s32 %v572, %v574
    %v576 = vrot.slane %v19, %v575
    %v578 = vunpack.c.l.s4 1966171168
    %v579 = vunpack.c.0.s8 %v578
    %v580 = vlaneseq
    %v581 = vshrl.u32 %v580, 7
    %v582 = vsub.s32 %v579, %v581
    %v583 = vrot.slane %v576, %v582
    %v1000 = vunpack.c.l.b16 %v20
    %v1001 = vunpack.c.l.b16 %v21
    %v1002 = vunpack.c.l.b16 %v22
    %v1003 = vunpack.c.l.b16 %v23
    %v1004 = vunpack.c.l.b16 %v24
    %v1005 = vunpack.c.l.b16 %v25
    %v1006 = vunpack.c.l.b16 %v26
    %v1007 = vunpack.c.l.b16 %v27
    %v1008 = vunpack.c.l.b16 %v28
    %v1009 = vunpack.c.l.b16 %v29
    %v1010 = vunpack.c.l.b16 %v30
    %v1011 = vunpack.c.l.b16 %v31
    %v1012 = vunpack.c.l.b16 %v32
    %v1013 = vunpack.c.l.b16 %v33
    %v1014 = vunpack.c.l.b16 %v34
    %v1015 = vunpack.c.l.b16 %v35
    %v1016 = vunpack.c.l.b16 %v36
    %v1017 = vunpack.c.l.b16 %v37
    %v1018 = vunpack.c.l.b16 %v38
    %v1019 = vunpack.c.l.b16 %v39
    %v1020 = vunpack.c.l.b16 %v40
    %v1021 = vunpack.c.l.b16 %v41
    %v1022 = vunpack.c.l.b16 %v42
    %v1023 = vunpack.c.l.b16 %v43
    %v1024 = vunpack.c.l.b16 %v44
    %v1025 = vunpack.c.l.b16 %v45
    %v1026 = vunpack.c.l.b16 %v46
    %v1027 = vunpack.c.l.b16 %v47
    %v1028 = vunpack.c.l.b16 %v48
    %v1029 = vunpack.c.l.b16 %v49
    %v1030 = vunpack.c.l.b16 %v50
    %v1031 = vunpack.c.l.b16 %v51
    %v1032 = vunpack.c.l.b16 %v52
    %v1033 = vunpack.c.l.b16 %v53
    %v1034 = vunpack.c.l.b16 %v54
    %v1035 = vunpack.c.l.b16 %v55
    %v1036 = vunpack.c.l.b16 %v56
    %v1037 = vunpack.c.l.b16 %v57
    %v1038 = vunpack.c.l.b16 %v58
    %v1039 = vunpack.c.l.b16 %v59
    %v1040 = vunpack.c.l.b16 %v60
    %v1041 = vunpack.c.l.b16 %v61
    %v1042 = vunpack.c.l.b16 %v62
    %v1043 = vunpack.c.l.b16 %v63
    %v1044 = vunpack.c.l.b16 %v64
    %v1045 = vunpack.c.l.b16 %v65
    %v1046 = vunpack.c.l.b16 %v66
    %v1047 = vunpack.c.l.b16 %v67
    %v1048 = vunpack.c.l.b16 %v68
    %v1049 = vunpack.c.l.b16 %v69
    %v1050 = vunpack.c.l.b16 %v70
    %v1051 = vunpack.c.l.b16 %v71
    %v1052 = vunpack.c.l.b16 %v72
    %v1053 = vunpack.c.l.b16 %v73
    %v1054 = vunpack.c.l.b16 %v74
    %v1055 = vunpack.c.l.b16 %v75
    %v1056 = vunpack.c.l.b16 %v76
    %v1057 = vunpack.c.l.b16 %v77
    %v1058 = vunpack.c.l.b16 %v78
    %v1059 = vunpack.c.l.b16 %v79
    %v1060 = vunpack.c.l.b16 %v80
    %v1061 = vunpack.c.l.b16 %v81
    %v1062 = vunpack.c.l.b16 %v82
    %v1063 = vunpack.c.l.b16 %v83
    %v1064 = vunpack.c.l.b16 %v84
    %v1065 = vunpack.c.l.b16 %v85
    %v1066 = vunpack.c.l.b16 %v86
    %v1067 = vunpack.c.l.b16 %v87
    %v1068 = vunpack.c.l.b16 %v88
    %v1069 = vunpack.c.l.b16 %v89
    %v1070 = vunpack.c.l.b16 %v90
    %v1071 = vunpack.c.l.b16 %v91
    %v1072 = vunpack.c.l.b16 %v92
    %v1073 = vunpack.c.l.b16 %v93
    %v1074 = vunpack.c.l.b16 %v94
    %v1075 = vunpack.c.l.b16 %v95
    %v1076 = vunpack.c.l.b16 %v96
    %v1077 = vunpack.c.l.b16 %v97
    %v1078 = vunpack.c.l.b16 %v98
    %v1079 = vunpack.c.l.b16 %v99
    %v1080 = vunpack.c.l.b16 %v100
    %v1081 = vunpack.c.l.b16 %v101
    %v1082 = vunpack.c.l.b16 %v102
    %v1083 = vunpack.c.l.b16 %v103
    %v1084 = vunpack.c.l.b16 %v104
    %v1085 = vunpack.c.l.b16 %v105
    %v1086 = vunpack.c.l.b16 %v106
    %v1087 = vunpack.c.l.b16 %v107
    %v1088 = vunpack.c.l.b16 %v108
    %v1089 = vunpack.c.l.b16 %v109
    %v1090 = vunpack.c.l.b16 %v110
    %v1091 = vunpack.c.l.b16 %v111
    %v1092 = vunpack.c.l.b16 %v112
    %v1093 = vunpack.c.l.b16 %v113
    %v1094 = vunpack.c.l.b16 %v114
    %v1095 = vunpack.c.l.b16 %v115
    %v1096 = vunpack.c.l.b16 %v116
    %v1097 = vunpack.c.l.b16 %v117
    %v1098 = vunpack.c.l.b16 %v118
    %v1099 = vunpack.c.l.b16 %v119
    %v1100 = vunpack.c.l.b16 %v120
    %v1101 = vunpack.c.l.b16 %v121
    %v1102 = vunpack.c.l.b16 %v122
    %v1103 = vunpack.c.l.b16 %v123
    %v1104 = vunpack.c.l.b16 %v124
    %v1105 = vunpack.c.l.b16 %v125
    %v1106 = vunpack.c.l.b16 %v126
    %v1107 = vunpack.c.l.b16 %v127
    %v1108 = vunpack.c.l.b16 %v128
    %v1109 = vunpack.c.l.b16 %v129
    %v1110 = vunpack.c.l.b16 %v130
    %v1111 = vunpack.c.l.b16 %v131
    %v1112 = vunpack.c.l.b16 %v132
    %v1113 = vunpack.c.l.b16 %v133
    %v1114 = vunpack.c.l.b16 %v134
    %v1115 = vunpack.c.l.b16 %v135
    %v1116 = vunpack.c.l.b16 %v136
    %v1117 = vunpack.c.l.b16 %v137
    %v1118 = vunpack.c.l.b16 %v138
    %v1119 = vunpack.c.l.b16 %v139
    %v1120 = vunpack.c.l.b16 %v140
    %v1121 = vunpack.c.l.b16 %v141
    %v1122 = vunpack.c.l.b16 %v142
    %v1123 = vunpack.c.l.b16 %v143
    %v1124 = vunpack.c.l.b16 %v144
    %v1125 = vunpack.c.l.b16 %v145
    %v1126 = vunpack.c.l.b16 %v146
    %v1127 = vunpack.c.l.b16 %v147
    %v1128 = vunpack.c.l.b16 %v148
    %v1129 = vunpack.c.l.b16 %v149
    %v1130 = vunpack.c.l.b16 %v150
    %v1131 = vunpack.c.l.b16 %v151
    %v1132 = vunpack.c.l.b16 %v152
    %v1133 = vunpack.c.l.b16 %v153
    %v1134 = vunpack.c.l.b16 %v154
    %v1135 = vunpack.c.l.b16 %v155
    %v1136 = vunpack.c.l.b16 %v156
    %v1137 = vunpack.c.l.b16 %v157
    %v1138 = vunpack.c.l.b16 %v158
    %v1139 = vunpack.c.l.b16 %v159
    %v1140 = vunpack.c.l.b16 %v160
    %v1141 = vunpack.c.l.b16 %v161
    %v1142 = vunpack.c.l.b16 %v162
    %v1143 = vunpack.c.l.b16 %v163
    %v1144 = vunpack.c.l.b16 %v164
    %v1145 = vunpack.c.l.b16 %v165
    %v1146 = vunpack.c.l.b16 %v166
    %v1147 = vunpack.c.l.b16 %v167
    %v1148 = vunpack.c.l.b16 %v168
    %v1149 = vunpack.c.l.b16 %v169
    %v1150 = vunpack.c.l.b16 %v170
    %v1151 = vunpack.c.l.b16 %v171
    %v1152 = vunpack.c.l.b16 %v172
    %v1153 = vunpack.c.l.b16 %v173
    %v1154 = vunpack.c.l.b16 %v174
    %v1155 = vunpack.c.l.b16 %v175
    %v1156 = vunpack.c.l.b16 %v176
    %v1157 = vunpack.c.l.b16 %v177
    %v1158 = vunpack.c.l.b16 %v178
    %v1159 = vunpack.c.l.b16 %v179
    %v1160 = vunpack.c.l.b16 %v180
    %v1161 = vunpack.c.l.b16 %v181
    %v1162 = vunpack.c.l.b16 %v182
    %v1163 = vunpack.c.l.b16 %v183
    %v1164 = vunpack.c.l.b16 %v184
    %v1165 = vunpack.c.l.b16 %v185
    %v1166 = vunpack.c.l.b16 %v186
    %v1167 = vunpack.c.l.b16 %v187
    %v1168 = vunpack.c.l.b16 %v188
    %v1169 = vunpack.c.l.b16 %v189
    %v1170 = vunpack.c.l.b16 %v190
    %v1171 = vunpack.c.l.b16 %v191
    %v1172 = vunpack.c.l.b16 %v192
    %v1173 = vunpack.c.l.b16 %v193
    %v1174 = vunpack.c.l.b16 %v194
    %v1175 = vunpack.c.l.b16 %v195
    %v1176 = vunpack.c.l.b16 %v196
    %v1177 = vunpack.c.l.b16 %v197
    %v1178 = vunpack.c.l.b16 %v198
    %v1179 = vunpack.c.l.b16 %v199
    %v1180 = vunpack.c.l.b16 %v200
    %v1181 = vunpack.c.l.b16 %v201
    %v1182 = vunpack.c.l.b16 %v202
    %v1183 = vunpack.c.l.b16 %v203
    %v1184 = vunpack.c.l.b16 %v204
    %v1185 = vunpack.c.l.b16 %v205
    %v1186 = vunpack.c.l.b16 %v206
    %v1187 = vunpack.c.l.b16 %v207
    %v1188 = vunpack.c.l.b16 %v208
    %v1189 = vunpack.c.l.b16 %v209
    %v1190 = vunpack.c.l.b16 %v210
    %v1191 = vunpack.c.l.b16 %v211
    %v1192 = vunpack.c.l.b16 %v212
    %v1193 = vunpack.c.l.b16 %v213
    %v1194 = vunpack.c.l.b16 %v214
    %v1195 = vunpack.c.l.b16 %v215
    %v1196 = vunpack.c.l.b16 %v216
    %v1197 = vunpack.c.l.b16 %v217
    %v1198 = vunpack.c.l.b16 %v218
    %v1199 = vunpack.c.l.b16 %v219
    %v1200 = vunpack.c.l.b16 %v220
    %v1201 = vunpack.c.l.b16 %v221
    %v1202 = vunpack.c.l.b16 %v222
    %v1203 = vunpack.c.l.b16 %v223
    %v1204 = vunpack.c.l.b16 %v224
    %v1205 = vunpack.c.l.b16 %v225
    %v1206 = vunpack.c.l.b16 %v226
    %v1207 = vunpack.c.l.b16 %v227
    %v1208 = vunpack.c.l.b16 %v228
    %v1209 = vunpack.c.l.b16 %v229
    %v1210 = vunpack.c.l.b16 %v230
    %v1211 = vunpack.c.l.b16 %v231
    %v1212 = vunpack.c.l.b16 %v232
    %v1213 = vunpack.c.l.b16 %v233
    %v1214 = vunpack.c.l.b16 %v234
    %v1215 = vunpack.c.l.b16 %v235
    %v1216 = vunpack.c.l.b16 %v236
    %v1217 = vunpack.c.l.b16 %v237
    %v1218 = vunpack.c.l.b16 %v238
    %v1219 = vunpack.c.l.b16 %v239
    %v1220 = vunpack.c.l.b16 %v240
    %v1221 = vunpack.c.l.b16 %v241
    %v1222 = vunpack.c.l.b16 %v242
    %v1223 = vunpack.c.l.b16 %v243
    %v1224 = vunpack.c.l.b16 %v244
    %v1225 = vunpack.c.l.b16 %v245
    %v1226 = vunpack.c.l.b16 %v246
    %v1227 = vunpack.c.l.b16 %v247
    %v1228 = vunpack.c.l.b16 %v248
    %v1229 = vunpack.c.l.b16 %v249
    %v1230 = vunpack.c.l.b16 %v250
    %v1231 = vunpack.c.l.b16 %v251
    %v1232 = vunpack.c.l.b16 %v252
    %v1233 = vunpack.c.l.b16 %v253
    %v1234 = vunpack.c.l.b16 %v254
    %v1235 = vunpack.c.l.b16 %v255
    %v1236 = vunpack.c.l.b16 %v256
    %v1237 = vunpack.c.l.b16 %v257
    %v1238 = vunpack.c.l.b16 %v258
    %v1239 = vunpack.c.l.b16 %v259
    %v1240 = vunpack.c.l.b16 %v260
    %v1241 = vunpack.c.l.b16 %v261
    %v1242 = vunpack.c.l.b16 %v262
    %v1243 = vunpack.c.l.b16 %v263
    %v1244 = vunpack.c.l.b16 %v264
    %v1245 = vunpack.c.l.b16 %v265
    %v1246 = vunpack.c.l.b16 %v266
    %v1247 = vunpack.c.l.b16 %v267
    %v1248 = vunpack.c.l.b16 %v268
    %v1249 = vunpack.c.l.b16 %v269
    %v1250 = vunpack.c.l.b16 %v270
    %v1251 = vunpack.c.l.b16 %v271
    %v1252 = vunpack.c.l.b16 %v272
    %v1253 = vunpack.c.l.b16 %v273
    %v1254 = vunpack.c.l.b16 %v274
    %v1255 = vunpack.c.l.b16 %v275
    %v1256 = vunpack.c.l.b16 %v276
    %v1257 = vunpack.c.l.b16 %v277
    %v1258 = vunpack.c.l.b16 %v278
    %v1259 = vunpack.c.l.b16 %v279
    %v1260 = vunpack.c.l.b16 %v280
    %v1261 = vunpack.c.l.b16 %v281
    %v1262 = vunpack.c.l.b16 %v282
    %v1263 = vunpack.c.l.b16 %v283
    %v1264 = vunpack.c.l.b16 %v284
    %v1265 = vunpack.c.l.b16 %v285
    %v1266 = vunpack.c.l.b16 %v286
    %v1267 = vunpack.c.l.b16 %v287
    %v1268 = vunpack.c.l.b16 %v288
    %v1269 = vunpack.c.l.b16 %v289
    %v1270 = vunpack.c.l.b16 %v290
    %v1271 = vunpack.c.l.b16 %v291
    %v1272 = vunpack.c.l.b16 %v292
    %v1273 = vunpack.c.l.b16 %v293
    %v1274 = vunpack.c.l.b16 %v294
    %v1275 = vunpack.c.l.b16 %v295
    %v1276 = vunpack.c.l.b16 %v296
    %v1277 = vunpack.c.l.b16 %v297
    %v1278 = vunpack.c.l.b16 %v298
    %v1279 = vunpack.c.l.b16 %v299
    %v1280 = vunpack.c.l.b16 %v300
    %v1281 = vunpack.c.l.b16 %v301
    %v1282 = vunpack.c.l.b16 %v302
    %v1283 = vunpack.c.l.b16 %v303
    %v1284 = vunpack.c.l.b16 %v304
    %v1285 = vunpack.c.l.b16 %v305
    %v1286 = vunpack.c.l.b16 %v306
    %v1287 = vunpack.c.l.b16 %v307
    %v1288 = vunpack.c.l.b16 %v308
    %v1289 = vunpack.c.l.b16 %v309
    %v1290 = vunpack.c.l.b16 %v310
    %v1291 = vunpack.c.l.b16 %v311
    %v1292 = vunpack.c.l.b16 %v312
    %v1293 = vunpack.c.l.b16 %v313
    %v1294 = vunpack.c.l.b16 %v314
    %v1295 = vunpack.c.l.b16 %v315
    %v1296 = vunpack.c.l.b16 %v316
    %v1297 = vunpack.c.l.b16 %v317
    %v1298 = vunpack.c.l.b16 %v318
    %v1299 = vunpack.c.l.b16 %v319
    %v1300 = vunpack.c.l.b16 %v320
    %v1301 = vunpack.c.l.b16 %v321
    %v1302 = vunpack.c.l.b16 %v322
    %v1303 = vunpack.c.l.b16 %v323
    %v1304 = vunpack.c.l.b16 %v324
    %v1305 = vunpack.c.l.b16 %v325
    %v1306 = vunpack.c.l.b16 %v326
    %v1307 = vunpack.c.l.b16 %v327
    %v1308 = vunpack.c.l.b16 %v328
    %v1309 = vunpack.c.l.b16 %v329
    %v1310 = vunpack.c.l.b16 %v330
    %v1311 = vunpack.c.l.b16 %v331
    %v1312 = vunpack.c.l.b16 %v332
    %v1313 = vunpack.c.l.b16 %v333
    %v1314 = vunpack.c.l.b16 %v334
    %v1315 = vunpack.c.l.b16 %v335
    %v1316 = vunpack.c.l.b16 %v336
    %v1317 = vunpack.c.l.b16 %v337
    %v1318 = vunpack.c.l.b16 %v338
    %v1319 = vunpack.c.l.b16 %v339
    %v1320 = vunpack.c.l.b16 %v340
    %v1321 = vunpack.c.l.b16 %v341
    %v1322 = vunpack.c.l.b16 %v342
    %v1323 = vunpack.c.l.b16 %v343
    %v1324 = vunpack.c.l.b16 %v344
    %v1325 = vunpack.c.l.b16 %v345
    %v1326 = vunpack.c.l.b16 %v346
    %v1327 = vunpack.c.l.b16 %v347
    %v1328 = vunpack.c.l.b16 %v348
    %v1329 = vunpack.c.l.b16 %v349
    %v1330 = vunpack.c.l.b16 %v350
    %v1331 = vunpack.c.l.b16 %v351
    %v1332 = vunpack.c.l.b16 %v352
    %v1333 = vunpack.c.l.b16 %v353
    %v1334 = vunpack.c.l.b16 %v354
    %v1335 = vunpack.c.l.b16 %v355
    %v1336 = vunpack.c.l.b16 %v356
    %v1337 = vunpack.c.l.b16 %v357
    %v1338 = vunpack.c.l.b16 %v358
    %v1339 = vunpack.c.l.b16 %v359
    %v1340 = vunpack.c.l.b16 %v360
    %v1341 = vunpack.c.l.b16 %v361
    %v1342 = vunpack.c.l.b16 %v362
    %v1343 = vunpack.c.l.b16 %v363
    %v1344 = vunpack.c.l.b16 %v364
    %v1345 = vunpack.c.l.b16 %v365
    %v1346 = vunpack.c.l.b16 %v366
    %v1347 = vunpack.c.l.b16 %v367
    %v1348 = vunpack.c.l.b16 %v368
    %v1349 = vunpack.c.l.b16 %v369
    %v1350 = vunpack.c.l.b16 %v370
    %v1351 = vunpack.c.l.b16 %v371
    %v1352 = vunpack.c.l.b16 %v372
    %v1353 = vunpack.c.l.b16 %v373
    %v1354 = vunpack.c.l.b16 %v374
    %v1355 = vunpack.c.l.b16 %v375
    %v1356 = vunpack.c.l.b16 %v376
    %v1357 = vunpack.c.l.b16 %v377
    %v1358 = vunpack.c.l.b16 %v378
    %v1359 = vunpack.c.l.b16 %v379
    %v1360 = vunpack.c.l.b16 %v380
    %v1361 = vunpack.c.l.b16 %v381
    %v1362 = vunpack.c.l.b16 %v382
    %v1363 = vunpack.c.l.b16 %v383
    %v1364 = vunpack.c.l.b16 %v384
    %v1365 = vunpack.c.l.b16 %v385
    %v1366 = vunpack.c.l.b16 %v386
    %v1367 = vunpack.c.l.b16 %v387
    %v1368 = vunpack.c.l.b16 %v388
    %v1369 = vunpack.c.l.b16 %v389
    %v1370 = vunpack.c.l.b16 %v390
    %v1371 = vunpack.c.l.b16 %v391
    %v1372 = vunpack.c.l.b16 %v392
    %v1373 = vunpack.c.l.b16 %v393
    %v1374 = vunpack.c.l.b16 %v394
    %v1375 = vunpack.c.l.b16 %v395
    %v1376 = vunpack.c.l.b16 %v396
    %v1377 = vunpack.c.l.b16 %v397
    %v1378 = vunpack.c.l.b16 %v398
    %v1379 = vunpack.c.l.b16 %v399
    %v1380 = vunpack.c.l.b16 %v400
    %v1381 = vunpack.c.l.b16 %v401
    %v1382 = vunpack.c.l.b16 %v402
    %v1383 = vunpack.c.l.b16 %v403
    %v1384 = vunpack.c.l.b16 %v404
    %v1385 = vunpack.c.l.b16 %v405
    %v1386 = vunpack.c.l.b16 %v406
    %v1387 = vunpack.c.l.b16 %v407
    %v1388 = vunpack.c.l.b16 %v408
    %v1389 = vunpack.c.l.b16 %v409
    %v1390 = vunpack.c.l.b16 %v410
    %v1391 = vunpack.c.l.b16 %v411
    %v1392 = vpack.c.b16 %v1001, %v1000
    %v1393 = vpack.c.b16 %v1003, %v1002
    %v1394 = vpack.c.b16 %v1005, %v1004
    %v1395 = vpack.c.b16 %v1007, %v1006
    %v1396 = vpack.c.b16 %v1009, %v1008
    %v1397 = vpack.c.b16 %v1011, %v1010
    %v1398 = vpack.c.b16 %v1013, %v1012
    %v1399 = vpack.c.b16 %v1015, %v1014
    %v1400 = vpack.c.b16 %v1017, %v1016
    %v1401 = vpack.c.b16 %v1019, %v1018
    %v1402 = vpack.c.b16 %v1021, %v1020
    %v1403 = vpack.c.b16 %v1023, %v1022
    %v1404 = vpack.c.b16 %v1025, %v1024
    %v1405 = vpack.c.b16 %v1027, %v1026
    %v1406 = vpack.c.b16 %v1029, %v1028
    %v1407 = vpack.c.b16 %v1031, %v1030
    %v1408 = vpack.c.b16 %v1033, %v1032
    %v1409 = vpack.c.b16 %v1035, %v1034
    %v1410 = vpack.c.b16 %v1037, %v1036
    %v1411 = vpack.c.b16 %v1039, %v1038
    %v1412 = vpack.c.b16 %v1041, %v1040
    %v1413 = vpack.c.b16 %v1043, %v1042
    %v1414 = vpack.c.b16 %v1045, %v1044
    %v1415 = vpack.c.b16 %v1047, %v1046
    %v1416 = vpack.c.b16 %v1049, %v1048
    %v1417 = vpack.c.b16 %v1051, %v1050
    %v1418 = vpack.c.b16 %v1053, %v1052
    %v1419 = vpack.c.b16 %v1055, %v1054
    %v1420 = vpack.c.b16 %v1057, %v1056
    %v1421 = vpack.c.b16 %v1059, %v1058
    %v1422 = vpack.c.b16 %v1061, %v1060
    %v1423 = vpack.c.b16 %v1063, %v1062
    %v1424 = vpack.c.b16 %v1065, %v1064
    %v1425 = vpack.c.b16 %v1067, %v1066
    %v1426 = vpack.c.b16 %v1069, %v1068
    %v1427 = vpack.c.b16 %v1071, %v1070
    %v1428 = vpack.c.b16 %v1073, %v1072
    %v1429 = vpack.c.b16 %v1075, %v1074
    %v1430 = vpack.c.b16 %v1077, %v1076
    %v1431 = vpack.c.b16 %v1079, %v1078
    %v1432 = vpack.c.b16 %v1081, %v1080
    %v1433 = vpack.c.b16 %v1083, %v1082
    %v1434 = vpack.c.b16 %v1085, %v1084
    %v1435 = vpack.c.b16 %v1087, %v1086
    %v1436 = vpack.c.b16 %v1089, %v1088
    %v1437 = vpack.c.b16 %v1091, %v1090
    %v1438 = vpack.c.b16 %v1093, %v1092
    %v1439 = vpack.c.b16 %v1095, %v1094
    %v1440 = vpack.c.b16 %v1097, %v1096
    %v1441 = vpack.c.b16 %v1099, %v1098
    %v1442 = vpack.c.b16 %v1101, %v1100
    %v1443 = vpack.c.b16 %v1103, %v1102
    %v1444 = vpack.c.b16 %v1105, %v1104
    %v1445 = vpack.c.b16 %v1107, %v1106
    %v1446 = vpack.c.b16 %v1109, %v1108
    %v1447 = vpack.c.b16 %v1111, %v1110
    %v1448 = vpack.c.b16 %v1113, %v1112
    %v1449 = vpack.c.b16 %v1115, %v1114
    %v1450 = vpack.c.b16 %v1117, %v1116
    %v1451 = vpack.c.b16 %v1119, %v1118
    %v1452 = vpack.c.b16 %v1121, %v1120
    %v1453 = vpack.c.b16 %v1123, %v1122
    %v1454 = vpack.c.b16 %v1125, %v1124
    %v1455 = vpack.c.b16 %v1127, %v1126
    %v1456 = vpack.c.b16 %v1129, %v1128
    %v1457 = vpack.c.b16 %v1131, %v1130
    %v1458 = vpack.c.b16 %v1133, %v1132
    %v1459 = vpack.c.b16 %v1135, %v1134
    %v1460 = vpack.c.b16 %v1137, %v1136
    %v1461 = vpack.c.b16 %v1139, %v1138
    %v1462 = vpack.c.b16 %v1141, %v1140
    %v1463 = vpack.c.b16 %v1143, %v1142
    %v1464 = vpack.c.b16 %v1145, %v1144
    %v1465 = vpack.c.b16 %v1147, %v1146
    %v1466 = vpack.c.b16 %v1149, %v1148
    %v1467 = vpack.c.b16 %v1151, %v1150
    %v1468 = vpack.c.b16 %v1153, %v1152
    %v1469 = vpack.c.b16 %v1155, %v1154
    %v1470 = vpack.c.b16 %v1157, %v1156
    %v1471 = vpack.c.b16 %v1159, %v1158
    %v1472 = vpack.c.b16 %v1161, %v1160
    %v1473 = vpack.c.b16 %v1163, %v1162
    %v1474 = vpack.c.b16 %v1165, %v1164
    %v1475 = vpack.c.b16 %v1167, %v1166
    %v1476 = vpack.c.b16 %v1169, %v1168
    %v1477 = vpack.c.b16 %v1171, %v1170
    %v1478 = vpack.c.b16 %v1173, %v1172
    %v1479 = vpack.c.b16 %v1175, %v1174
    %v1480 = vpack.c.b16 %v1177, %v1176
    %v1481 = vpack.c.b16 %v1179, %v1178
    %v1482 = vpack.c.b16 %v1181, %v1180
    %v1483 = vpack.c.b16 %v1183, %v1182
    %v1484 = vpack.c.b16 %v1185, %v1184
    %v1485 = vpack.c.b16 %v1187, %v1186
    %v1486 = vpack.c.b16 %v1189, %v1188
    %v1487 = vpack.c.b16 %v1191, %v1190
    %v1488 = vpack.c.b16 %v1193, %v1192
    %v1489 = vpack.c.b16 %v1195, %v1194
    %v1490 = vpack.c.b16 %v1197, %v1196
    %v1491 = vpack.c.b16 %v1199, %v1198
    %v1492 = vpack.c.b16 %v1201, %v1200
    %v1493 = vpack.c.b16 %v1203, %v1202
    %v1494 = vpack.c.b16 %v1205, %v1204
    %v1495 = vpack.c.b16 %v1207, %v1206
    %v1496 = vpack.c.b16 %v1209, %v1208
    %v1497 = vpack.c.b16 %v1211, %v1210
    %v1498 = vpack.c.b16 %v1213, %v1212
    %v1499 = vpack.c.b16 %v1215, %v1214
    %v1500 = vpack.c.b16 %v1217, %v1216
    %v1501 = vpack.c.b16 %v1219, %v1218
    %v1502 = vpack.c.b16 %v1221, %v1220
    %v1503 = vpack.c.b16 %v1223, %v1222
    %v1504 = vpack.c.b16 %v1225, %v1224
    %v1505 = vpack.c.b16 %v1227, %v1226
    %v1506 = vpack.c.b16 %v1229, %v1228
    %v1507 = vpack.c.b16 %v1231, %v1230
    %v1508 = vpack.c.b16 %v1233, %v1232
    %v1509 = vpack.c.b16 %v1235, %v1234
    %v1510 = vpack.c.b16 %v1237, %v1236
    %v1511 = vpack.c.b16 %v1239, %v1238
    %v1512 = vpack.c.b16 %v1241, %v1240
    %v1513 = vpack.c.b16 %v1243, %v1242
    %v1514 = vpack.c.b16 %v1245, %v1244
    %v1515 = vpack.c.b16 %v1247, %v1246
    %v1516 = vpack.c.b16 %v1249, %v1248
    %v1517 = vpack.c.b16 %v1251, %v1250
    %v1518 = vpack.c.b16 %v1253, %v1252
    %v1519 = vpack.c.b16 %v1255, %v1254
    %v1520 = vpack.c.b16 %v1257, %v1256
    %v1521 = vpack.c.b16 %v1259, %v1258
    %v1522 = vpack.c.b16 %v1261, %v1260
    %v1523 = vpack.c.b16 %v1263, %v1262
    %v1524 = vpack.c.b16 %v1265, %v1264
    %v1525 = vpack.c.b16 %v1267, %v1266
    %v1526 = vpack.c.b16 %v1269, %v1268
    %v1527 = vpack.c.b16 %v1271, %v1270
    %v1528 = vpack.c.b16 %v1273, %v1272
    %v1529 = vpack.c.b16 %v1275, %v1274
    %v1530 = vpack.c.b16 %v1277, %v1276
    %v1531 = vpack.c.b16 %v1279, %v1278
    %v1532 = vpack.c.b16 %v1281, %v1280
    %v1533 = vpack.c.b16 %v1283, %v1282
    %v1534 = vpack.c.b16 %v1285, %v1284
    %v1535 = vpack.c.b16 %v1287, %v1286
    %v1536 = vpack.c.b16 %v1289, %v1288
    %v1537 = vpack.c.b16 %v1291, %v1290
    %v1538 = vpack.c.b16 %v1293, %v1292
    %v1539 = vpack.c.b16 %v1295, %v1294
    %v1540 = vpack.c.b16 %v1297, %v1296
    %v1541 = vpack.c.b16 %v1299, %v1298
    %v1542 = vpack.c.b16 %v1301, %v1300
    %v1543 = vpack.c.b16 %v1303, %v1302
    %v1544 = vpack.c.b16 %v1305, %v1304
    %v1545 = vpack.c.b16 %v1307, %v1306
    %v1546 = vpack.c.b16 %v1309, %v1308
    %v1547 = vpack.c.b16 %v1311, %v1310
    %v1548 = vpack.c.b16 %v1313, %v1312
    %v1549 = vpack.c.b16 %v1315, %v1314
    %v1550 = vpack.c.b16 %v1317, %v1316
    %v1551 = vpack.c.b16 %v1319, %v1318
    %v1552 = vpack.c.b16 %v1321, %v1320
    %v1553 = vpack.c.b16 %v1323, %v1322
    %v1554 = vpack.c.b16 %v1325, %v1324
    %v1555 = vpack.c.b16 %v1327, %v1326
    %v1556 = vpack.c.b16 %v1329, %v1328
    %v1557 = vpack.c.b16 %v1331, %v1330
    %v1558 = vpack.c.b16 %v1333, %v1332
    %v1559 = vpack.c.b16 %v1335, %v1334
    %v1560 = vpack.c.b16 %v1337, %v1336
    %v1561 = vpack.c.b16 %v1339, %v1338
    %v1562 = vpack.c.b16 %v1341, %v1340
    %v1563 = vpack.c.b16 %v1343, %v1342
    %v1564 = vpack.c.b16 %v1345, %v1344
    %v1565 = vpack.c.b16 %v1347, %v1346
    %v1566 = vpack.c.b16 %v1349, %v1348
    %v1567 = vpack.c.b16 %v1351, %v1350
    %v1568 = vpack.c.b16 %v1353, %v1352
    %v1569 = vpack.c.b16 %v1355, %v1354
    %v1570 = vpack.c.b16 %v1357, %v1356
    %v1571 = vpack.c.b16 %v1359, %v1358
    %v1572 = vpack.c.b16 %v1361, %v1360
    %v1573 = vpack.c.b16 %v1363, %v1362
    %v1574 = vpack.c.b16 %v1365, %v1364
    %v1575 = vpack.c.b16 %v1367, %v1366
    %v1576 = vpack.c.b16 %v1369, %v1368
    %v1577 = vpack.c.b16 %v1371, %v1370
    %v1578 = vpack.c.b16 %v1373, %v1372
    %v1579 = vpack.c.b16 %v1375, %v1374
    %v1580 = vpack.c.b16 %v1377, %v1376
    %v1581 = vpack.c.b16 %v1379, %v1378
    %v1582 = vpack.c.b16 %v1381, %v1380
    %v1583 = vpack.c.b16 %v1383, %v1382
    %v1584 = vpack.c.b16 %v1385, %v1384
    %v1585 = vpack.c.b16 %v1387, %v1386
    %v1586 = vpack.c.b16 %v1389, %v1388
    %v1587 = vpack.c.b16 %v1391, %v1390
    %vm1784 = vcmask 523264
    %v1786 = vsel %vm1784, %v583, 0
    %1788 = vmatprep.subr.bf16.mxu0 0
    %1789 = vmatpush1.bf16.msra.mxu0 %v1399
    %1790 = vmatprep.subr.bf16.mxu0 0
    %1791 = vmatpush1.bf16.msra.mxu0 %v1398
    %1792 = vmatprep.subr.bf16.mxu0 0
    %1793 = vmatpush1.bf16.msra.mxu0 %v1397
    %1794 = vmatprep.subr.bf16.mxu0 0
    %1795 = vmatpush1.bf16.msra.mxu0 %v1396
    %1796 = vmatprep.subr.bf16.mxu0 0
    %1797 = vmatpush1.bf16.msra.mxu0 %v1395
    %1798 = vmatprep.subr.bf16.mxu0 0
    %1799 = vmatpush1.bf16.msra.mxu0 %v1394
    %1800 = vmatprep.subr.bf16.mxu0 0
    %1801 = vmatpush1.bf16.msra.mxu0 %v1393
    %1802 = vmatprep.subr.bf16.mxu0 0
    %1803 = vmatpush1.bf16.msra.mxu0 %v1392
    %1804 = vmatprep.subr.bf16.mxu0 0
    %1805 = vmatpush2.bf16.msra.mxu0 %v1407
    %1806 = vmatprep.subr.bf16.mxu0 0
    %1807 = vmatpush2.bf16.msra.mxu0 %v1406
    %1808 = vmatprep.subr.bf16.mxu0 0
    %1809 = vmatpush2.bf16.msra.mxu0 %v1405
    %1810 = vmatprep.subr.bf16.mxu0 0
    %1811 = vmatpush2.bf16.msra.mxu0 %v1404
    %1812 = vmatprep.subr.bf16.mxu0 0
    %1813 = vmatpush2.bf16.msra.mxu0 %v1403
    %1814 = vmatprep.subr.bf16.mxu0 0
    %1815 = vmatpush2.bf16.msra.mxu0 %v1402
    %1816 = vmatprep.subr.bf16.mxu0 0
    %1817 = vmatpush2.bf16.msra.mxu0 %v1401
    %1818 = vmatprep.subr.bf16.mxu0 0
    %1819 = vmatpush2.bf16.msra.mxu0 %v1400
    %1820 = vmatprep.mubr.bf16.mxu0 %v460
    %1821 = vmatmul.mubr.bf16.gmra.mxu0 %v446
    %v1822 = vpop.f32.mrf.mxu0
    %v1823 = vadd.f32 %v417, %v1822
    %v1824 = vpop.f32.mrf.mxu0
    %v1825 = vpop.f32.mrf.mxu0
    %v1826 = vpop.f32.mrf.mxu0
    %1827 = vdwg.mxu0
    %1828 = vmatprep.subr.bf16.mxu0 0
    %1829 = vmatpush1.bf16.msra.mxu0 %v1415
    %1830 = vmatprep.subr.bf16.mxu0 0
    %1831 = vmatpush1.bf16.msra.mxu0 %v1414
    %1832 = vmatprep.subr.bf16.mxu0 0
    %1833 = vmatpush1.bf16.msra.mxu0 %v1413
    %1834 = vmatprep.subr.bf16.mxu0 0
    %1835 = vmatpush1.bf16.msra.mxu0 %v1412
    %1836 = vmatprep.subr.bf16.mxu0 0
    %1837 = vmatpush1.bf16.msra.mxu0 %v1411
    %1838 = vmatprep.subr.bf16.mxu0 0
    %1839 = vmatpush1.bf16.msra.mxu0 %v1410
    %1840 = vmatprep.subr.bf16.mxu0 0
    %1841 = vmatpush1.bf16.msra.mxu0 %v1409
    %1842 = vmatprep.subr.bf16.mxu0 0
    %1843 = vmatpush1.bf16.msra.mxu0 %v1408
    %1844 = vmatprep.subr.bf16.mxu0 0
    %1845 = vmatpush2.bf16.msra.mxu0 %v1423
    %1846 = vmatprep.subr.bf16.mxu0 0
    %1847 = vmatpush2.bf16.msra.mxu0 %v1422
    %1848 = vmatprep.subr.bf16.mxu0 0
    %1849 = vmatpush2.bf16.msra.mxu0 %v1421
    %1850 = vmatprep.subr.bf16.mxu0 0
    %1851 = vmatpush2.bf16.msra.mxu0 %v1420
    %1852 = vmatprep.subr.bf16.mxu0 0
    %1853 = vmatpush2.bf16.msra.mxu0 %v1419
    %1854 = vmatprep.subr.bf16.mxu0 0
    %1855 = vmatpush2.bf16.msra.mxu0 %v1418
    %1856 = vmatprep.subr.bf16.mxu0 0
    %1857 = vmatpush2.bf16.msra.mxu0 %v1417
    %1858 = vmatprep.subr.bf16.mxu0 0
    %1859 = vmatpush2.bf16.msra.mxu0 %v1416
    %1860 = vmatprep.mubr.bf16.mxu0 %v470
    %1861 = vmatmul.mubr.bf16.gmra.mxu0 %v468
    %v1862 = vpop.f32.mrf.mxu0
    %v1863 = vadd.f32 %v1823, %v1862
    %v1864 = vpop.f32.mrf.mxu0
    %v1865 = vpop.f32.mrf.mxu0
    %v1866 = vpop.f32.mrf.mxu0
    %1867 = vdwg.mxu0
    %1868 = vmatprep.subr.bf16.mxu0 0
    %1869 = vmatpush1.bf16.msra.mxu0 %v1431
    %1870 = vmatprep.subr.bf16.mxu0 0
    %1871 = vmatpush1.bf16.msra.mxu0 %v1430
    %1872 = vmatprep.subr.bf16.mxu0 0
    %1873 = vmatpush1.bf16.msra.mxu0 %v1429
    %1874 = vmatprep.subr.bf16.mxu0 0
    %1875 = vmatpush1.bf16.msra.mxu0 %v1428
    %1876 = vmatprep.subr.bf16.mxu0 0
    %1877 = vmatpush1.bf16.msra.mxu0 %v1427
    %1878 = vmatprep.subr.bf16.mxu0 0
    %1879 = vmatpush1.bf16.msra.mxu0 %v1426
    %1880 = vmatprep.subr.bf16.mxu0 0
    %1881 = vmatpush1.bf16.msra.mxu0 %v1425
    %1882 = vmatprep.subr.bf16.mxu0 0
    %1883 = vmatpush1.bf16.msra.mxu0 %v1424
    %1884 = vmatprep.subr.bf16.mxu0 0
    %1885 = vmatpush2.bf16.msra.mxu0 %v1439
    %1886 = vmatprep.subr.bf16.mxu0 0
    %1887 = vmatpush2.bf16.msra.mxu0 %v1438
    %1888 = vmatprep.subr.bf16.mxu0 0
    %1889 = vmatpush2.bf16.msra.mxu0 %v1437
    %1890 = vmatprep.subr.bf16.mxu0 0
    %1891 = vmatpush2.bf16.msra.mxu0 %v1436
    %1892 = vmatprep.subr.bf16.mxu0 0
    %1893 = vmatpush2.bf16.msra.mxu0 %v1435
    %1894 = vmatprep.subr.bf16.mxu0 0
    %1895 = vmatpush2.bf16.msra.mxu0 %v1434
    %1896 = vmatprep.subr.bf16.mxu0 0
    %1897 = vmatpush2.bf16.msra.mxu0 %v1433
    %1898 = vmatprep.subr.bf16.mxu0 0
    %1899 = vmatpush2.bf16.msra.mxu0 %v1432
    %1900 = vmatprep.mubr.bf16.mxu0 %v467
    %1901 = vmatmul.mubr.bf16.gmra.mxu0 %v453
    %v1902 = vpop.f32.mrf.mxu0
    %v1903 = vadd.f32 %v1863, %v1902
    %v1904 = vpop.f32.mrf.mxu0
    %v1905 = vpop.f32.mrf.mxu0
    %v1906 = vpop.f32.mrf.mxu0
    %1907 = vdwg.mxu0
    %1908 = vmatprep.subr.bf16.mxu0 0
    %1909 = vmatpush1.bf16.msra.mxu0 %v1447
    %1910 = vmatprep.subr.bf16.mxu0 0
    %1911 = vmatpush1.bf16.msra.mxu0 %v1446
    %1912 = vmatprep.subr.bf16.mxu0 0
    %1913 = vmatpush1.bf16.msra.mxu0 %v1445
    %1914 = vmatprep.subr.bf16.mxu0 0
    %1915 = vmatpush1.bf16.msra.mxu0 %v1444
    %1916 = vmatprep.subr.bf16.mxu0 0
    %1917 = vmatpush1.bf16.msra.mxu0 %v1443
    %1918 = vmatprep.subr.bf16.mxu0 0
    %1919 = vmatpush1.bf16.msra.mxu0 %v1442
    %1920 = vmatprep.subr.bf16.mxu0 0
    %1921 = vmatpush1.bf16.msra.mxu0 %v1441
    %1922 = vmatprep.subr.bf16.mxu0 0
    %1923 = vmatpush1.bf16.msra.mxu0 %v1440
    %1924 = vmatprep.subr.bf16.mxu0 0
    %1925 = vmatpush2.bf16.msra.mxu0 %v1455
    %1926 = vmatprep.subr.bf16.mxu0 0
    %1927 = vmatpush2.bf16.msra.mxu0 %v1454
    %1928 = vmatprep.subr.bf16.mxu0 0
    %1929 = vmatpush2.bf16.msra.mxu0 %v1453
    %1930 = vmatprep.subr.bf16.mxu0 0
    %1931 = vmatpush2.bf16.msra.mxu0 %v1452
    %1932 = vmatprep.subr.bf16.mxu0 0
    %1933 = vmatpush2.bf16.msra.mxu0 %v1451
    %1934 = vmatprep.subr.bf16.mxu0 0
    %1935 = vmatpush2.bf16.msra.mxu0 %v1450
    %1936 = vmatprep.subr.bf16.mxu0 0
    %1937 = vmatpush2.bf16.msra.mxu0 %v1449
    %1938 = vmatprep.subr.bf16.mxu0 0
    %1939 = vmatpush2.bf16.msra.mxu0 %v1448
    %1940 = vmatprep.mubr.bf16.mxu0 %v471
    %1941 = vmatmul.mubr.bf16.gmra.mxu0 %v469
    %v1942 = vpop.f32.mrf.mxu0
    %v1943 = vadd.f32 %v1903, %v1942
    %v1944 = vpop.f32.mrf.mxu0
    %v1945 = vpop.f32.mrf.mxu0
    %v1946 = vpop.f32.mrf.mxu0
    %1947 = vdwg.mxu0
    %1948 = vmatprep.subr.bf16.mxu0 0
    %1949 = vmatpush1.bf16.msra.mxu0 %v1463
    %1950 = vmatprep.subr.bf16.mxu0 0
    %1951 = vmatpush1.bf16.msra.mxu0 %v1462
    %1952 = vmatprep.subr.bf16.mxu0 0
    %1953 = vmatpush1.bf16.msra.mxu0 %v1461
    %1954 = vmatprep.subr.bf16.mxu0 0
    %1955 = vmatpush1.bf16.msra.mxu0 %v1460
    %1956 = vmatprep.subr.bf16.mxu0 0
    %1957 = vmatpush1.bf16.msra.mxu0 %v1459
    %1958 = vmatprep.subr.bf16.mxu0 0
    %1959 = vmatpush1.bf16.msra.mxu0 %v1458
    %1960 = vmatprep.subr.bf16.mxu0 0
    %1961 = vmatpush1.bf16.msra.mxu0 %v1457
    %1962 = vmatprep.subr.bf16.mxu0 0
    %1963 = vmatpush1.bf16.msra.mxu0 %v1456
    %1964 = vmatprep.subr.bf16.mxu0 0
    %1965 = vmatpush2.bf16.msra.mxu0 %v1471
    %1966 = vmatprep.subr.bf16.mxu0 0
    %1967 = vmatpush2.bf16.msra.mxu0 %v1470
    %1968 = vmatprep.subr.bf16.mxu0 0
    %1969 = vmatpush2.bf16.msra.mxu0 %v1469
    %1970 = vmatprep.subr.bf16.mxu0 0
    %1971 = vmatpush2.bf16.msra.mxu0 %v1468
    %1972 = vmatprep.subr.bf16.mxu0 0
    %1973 = vmatpush2.bf16.msra.mxu0 %v1467
    %1974 = vmatprep.subr.bf16.mxu0 0
    %1975 = vmatpush2.bf16.msra.mxu0 %v1466
    %1976 = vmatprep.subr.bf16.mxu0 0
    %1977 = vmatpush2.bf16.msra.mxu0 %v1465
    %1978 = vmatprep.subr.bf16.mxu0 0
    %1979 = vmatpush2.bf16.msra.mxu0 %v1464
    %1980 = vmatprep.mubr.bf16.mxu0 %v509
    %1981 = vmatmul.mubr.bf16.gmra.mxu0 %v495
    %v1982 = vpop.f32.mrf.mxu0
    %v1983 = vadd.f32 %v1943, %v1982
    %v1984 = vpop.f32.mrf.mxu0
    %v1985 = vpop.f32.mrf.mxu0
    %v1986 = vpop.f32.mrf.mxu0
    %1987 = vdwg.mxu0
    %1988 = vmatprep.subr.bf16.mxu0 0
    %1989 = vmatpush1.bf16.msra.mxu0 %v1479
    %1990 = vmatprep.subr.bf16.mxu0 0
    %1991 = vmatpush1.bf16.msra.mxu0 %v1478
    %1992 = vmatprep.subr.bf16.mxu0 0
    %1993 = vmatpush1.bf16.msra.mxu0 %v1477
    %1994 = vmatprep.subr.bf16.mxu0 0
    %1995 = vmatpush1.bf16.msra.mxu0 %v1476
    %1996 = vmatprep.subr.bf16.mxu0 0
    %1997 = vmatpush1.bf16.msra.mxu0 %v1475
    %1998 = vmatprep.subr.bf16.mxu0 0
    %1999 = vmatpush1.bf16.msra.mxu0 %v1474
    %2000 = vmatprep.subr.bf16.mxu0 0
    %2001 = vmatpush1.bf16.msra.mxu0 %v1473
    %2002 = vmatprep.subr.bf16.mxu0 0
    %2003 = vmatpush1.bf16.msra.mxu0 %v1472
    %2004 = vmatprep.subr.bf16.mxu0 0
    %2005 = vmatpush2.bf16.msra.mxu0 %v1487
    %2006 = vmatprep.subr.bf16.mxu0 0
    %2007 = vmatpush2.bf16.msra.mxu0 %v1486
    %2008 = vmatprep.subr.bf16.mxu0 0
    %2009 = vmatpush2.bf16.msra.mxu0 %v1485
    %2010 = vmatprep.subr.bf16.mxu0 0
    %2011 = vmatpush2.bf16.msra.mxu0 %v1484
    %2012 = vmatprep.subr.bf16.mxu0 0
    %2013 = vmatpush2.bf16.msra.mxu0 %v1483
    %2014 = vmatprep.subr.bf16.mxu0 0
    %2015 = vmatpush2.bf16.msra.mxu0 %v1482
    %2016 = vmatprep.subr.bf16.mxu0 0
    %2017 = vmatpush2.bf16.msra.mxu0 %v1481
    %2018 = vmatprep.subr.bf16.mxu0 0
    %2019 = vmatpush2.bf16.msra.mxu0 %v1480
    %2020 = vmatprep.mubr.bf16.mxu0 %v519
    %2021 = vmatmul.mubr.bf16.gmra.mxu0 %v517
    %v2022 = vpop.f32.mrf.mxu0
    %v2023 = vadd.f32 %v1983, %v2022
    %v2024 = vpop.f32.mrf.mxu0
    %v2025 = vpop.f32.mrf.mxu0
    %v2026 = vpop.f32.mrf.mxu0
    %2027 = vdwg.mxu0
    %2028 = vmatprep.subr.bf16.mxu0 0
    %2029 = vmatpush1.bf16.msra.mxu0 %v1495
    %2030 = vmatprep.subr.bf16.mxu0 0
    %2031 = vmatpush1.bf16.msra.mxu0 %v1494
    %2032 = vmatprep.subr.bf16.mxu0 0
    %2033 = vmatpush1.bf16.msra.mxu0 %v1493
    %2034 = vmatprep.subr.bf16.mxu0 0
    %2035 = vmatpush1.bf16.msra.mxu0 %v1492
    %2036 = vmatprep.subr.bf16.mxu0 0
    %2037 = vmatpush1.bf16.msra.mxu0 %v1491
    %2038 = vmatprep.subr.bf16.mxu0 0
    %2039 = vmatpush1.bf16.msra.mxu0 %v1490
    %2040 = vmatprep.subr.bf16.mxu0 0
    %2041 = vmatpush1.bf16.msra.mxu0 %v1489
    %2042 = vmatprep.subr.bf16.mxu0 0
    %2043 = vmatpush1.bf16.msra.mxu0 %v1488
    %2044 = vmatprep.subr.bf16.mxu0 0
    %2045 = vmatpush2.bf16.msra.mxu0 %v1503
    %2046 = vmatprep.subr.bf16.mxu0 0
    %2047 = vmatpush2.bf16.msra.mxu0 %v1502
    %2048 = vmatprep.subr.bf16.mxu0 0
    %2049 = vmatpush2.bf16.msra.mxu0 %v1501
    %2050 = vmatprep.subr.bf16.mxu0 0
    %2051 = vmatpush2.bf16.msra.mxu0 %v1500
    %2052 = vmatprep.subr.bf16.mxu0 0
    %2053 = vmatpush2.bf16.msra.mxu0 %v1499
    %2054 = vmatprep.subr.bf16.mxu0 0
    %2055 = vmatpush2.bf16.msra.mxu0 %v1498
    %2056 = vmatprep.subr.bf16.mxu0 0
    %2057 = vmatpush2.bf16.msra.mxu0 %v1497
    %2058 = vmatprep.subr.bf16.mxu0 0
    %2059 = vmatpush2.bf16.msra.mxu0 %v1496
    %2060 = vmatprep.mubr.bf16.mxu0 %v516
    %2061 = vmatmul.mubr.bf16.gmra.mxu0 %v502
    %v2062 = vpop.f32.mrf.mxu0
    %v2063 = vadd.f32 %v2023, %v2062
    %v2064 = vpop.f32.mrf.mxu0
    %v2065 = vpop.f32.mrf.mxu0
    %v2066 = vpop.f32.mrf.mxu0
    %2067 = vdwg.mxu0
    %2068 = vmatprep.subr.bf16.mxu0 0
    %2069 = vmatpush1.bf16.msra.mxu0 %v1511
    %2070 = vmatprep.subr.bf16.mxu0 0
    %2071 = vmatpush1.bf16.msra.mxu0 %v1510
    %2072 = vmatprep.subr.bf16.mxu0 0
    %2073 = vmatpush1.bf16.msra.mxu0 %v1509
    %2074 = vmatprep.subr.bf16.mxu0 0
    %2075 = vmatpush1.bf16.msra.mxu0 %v1508
    %2076 = vmatprep.subr.bf16.mxu0 0
    %2077 = vmatpush1.bf16.msra.mxu0 %v1507
    %2078 = vmatprep.subr.bf16.mxu0 0
    %2079 = vmatpush1.bf16.msra.mxu0 %v1506
    %2080 = vmatprep.subr.bf16.mxu0 0
    %2081 = vmatpush1.bf16.msra.mxu0 %v1505
    %2082 = vmatprep.subr.bf16.mxu0 0
    %2083 = vmatpush1.bf16.msra.mxu0 %v1504
    %2084 = vmatprep.subr.bf16.mxu0 0
    %2085 = vmatpush2.bf16.msra.mxu0 %v1519
    %2086 = vmatprep.subr.bf16.mxu0 0
    %2087 = vmatpush2.bf16.msra.mxu0 %v1518
    %2088 = vmatprep.subr.bf16.mxu0 0
    %2089 = vmatpush2.bf16.msra.mxu0 %v1517
    %2090 = vmatprep.subr.bf16.mxu0 0
    %2091 = vmatpush2.bf16.msra.mxu0 %v1516
    %2092 = vmatprep.subr.bf16.mxu0 0
    %2093 = vmatpush2.bf16.msra.mxu0 %v1515
    %2094 = vmatprep.subr.bf16.mxu0 0
    %2095 = vmatpush2.bf16.msra.mxu0 %v1514
    %2096 = vmatprep.subr.bf16.mxu0 0
    %2097 = vmatpush2.bf16.msra.mxu0 %v1513
    %2098 = vmatprep.subr.bf16.mxu0 0
    %2099 = vmatpush2.bf16.msra.mxu0 %v1512
    %2100 = vmatprep.mubr.bf16.mxu0 %v520
    %2101 = vmatmul.mubr.bf16.gmra.mxu0 %v518
    %v2102 = vpop.f32.mrf.mxu0
    %v2103 = vadd.f32 %v2063, %v2102
    %v2104 = vpop.f32.mrf.mxu0
    %v2105 = vpop.f32.mrf.mxu0
    %v2106 = vpop.f32.mrf.mxu0
    %2107 = vdwg.mxu0
    %2108 = vmatprep.subr.bf16.mxu0 0
    %2109 = vmatpush1.bf16.msra.mxu0 %v1527
    %2110 = vmatprep.subr.bf16.mxu0 0
    %2111 = vmatpush1.bf16.msra.mxu0 %v1526
    %2112 = vmatprep.subr.bf16.mxu0 0
    %2113 = vmatpush1.bf16.msra.mxu0 %v1525
    %2114 = vmatprep.subr.bf16.mxu0 0
    %2115 = vmatpush1.bf16.msra.mxu0 %v1524
    %2116 = vmatprep.subr.bf16.mxu0 0
    %2117 = vmatpush1.bf16.msra.mxu0 %v1523
    %2118 = vmatprep.subr.bf16.mxu0 0
    %2119 = vmatpush1.bf16.msra.mxu0 %v1522
    %2120 = vmatprep.subr.bf16.mxu0 0
    %2121 = vmatpush1.bf16.msra.mxu0 %v1521
    %2122 = vmatprep.subr.bf16.mxu0 0
    %2123 = vmatpush1.bf16.msra.mxu0 %v1520
    %2124 = vmatprep.subr.bf16.mxu0 0
    %2125 = vmatpush2.bf16.msra.mxu0 %v1535
    %2126 = vmatprep.subr.bf16.mxu0 0
    %2127 = vmatpush2.bf16.msra.mxu0 %v1534
    %2128 = vmatprep.subr.bf16.mxu0 0
    %2129 = vmatpush2.bf16.msra.mxu0 %v1533
    %2130 = vmatprep.subr.bf16.mxu0 0
    %2131 = vmatpush2.bf16.msra.mxu0 %v1532
    %2132 = vmatprep.subr.bf16.mxu0 0
    %2133 = vmatpush2.bf16.msra.mxu0 %v1531
    %2134 = vmatprep.subr.bf16.mxu0 0
    %2135 = vmatpush2.bf16.msra.mxu0 %v1530
    %2136 = vmatprep.subr.bf16.mxu0 0
    %2137 = vmatpush2.bf16.msra.mxu0 %v1529
    %2138 = vmatprep.subr.bf16.mxu0 0
    %2139 = vmatpush2.bf16.msra.mxu0 %v1528
    %2140 = vmatprep.mubr.bf16.mxu0 %v558
    %2141 = vmatmul.mubr.bf16.gmra.mxu0 %v544
    %v2142 = vpop.f32.mrf.mxu0
    %v2143 = vadd.f32 %v2103, %v2142
    %v2144 = vpop.f32.mrf.mxu0
    %v2145 = vpop.f32.mrf.mxu0
    %v2146 = vpop.f32.mrf.mxu0
    %2147 = vdwg.mxu0
    %2148 = vmatprep.subr.bf16.mxu0 0
    %2149 = vmatpush1.bf16.msra.mxu0 %v1543
    %2150 = vmatprep.subr.bf16.mxu0 0
    %2151 = vmatpush1.bf16.msra.mxu0 %v1542
    %2152 = vmatprep.subr.bf16.mxu0 0
    %2153 = vmatpush1.bf16.msra.mxu0 %v1541
    %2154 = vmatprep.subr.bf16.mxu0 0
    %2155 = vmatpush1.bf16.msra.mxu0 %v1540
    %2156 = vmatprep.subr.bf16.mxu0 0
    %2157 = vmatpush1.bf16.msra.mxu0 %v1539
    %2158 = vmatprep.subr.bf16.mxu0 0
    %2159 = vmatpush1.bf16.msra.mxu0 %v1538
    %2160 = vmatprep.subr.bf16.mxu0 0
    %2161 = vmatpush1.bf16.msra.mxu0 %v1537
    %2162 = vmatprep.subr.bf16.mxu0 0
    %2163 = vmatpush1.bf16.msra.mxu0 %v1536
    %2164 = vmatprep.subr.bf16.mxu0 0
    %2165 = vmatpush2.bf16.msra.mxu0 %v1551
    %2166 = vmatprep.subr.bf16.mxu0 0
    %2167 = vmatpush2.bf16.msra.mxu0 %v1550
    %2168 = vmatprep.subr.bf16.mxu0 0
    %2169 = vmatpush2.bf16.msra.mxu0 %v1549
    %2170 = vmatprep.subr.bf16.mxu0 0
    %2171 = vmatpush2.bf16.msra.mxu0 %v1548
    %2172 = vmatprep.subr.bf16.mxu0 0
    %2173 = vmatpush2.bf16.msra.mxu0 %v1547
    %2174 = vmatprep.subr.bf16.mxu0 0
    %2175 = vmatpush2.bf16.msra.mxu0 %v1546
    %2176 = vmatprep.subr.bf16.mxu0 0
    %2177 = vmatpush2.bf16.msra.mxu0 %v1545
    %2178 = vmatprep.subr.bf16.mxu0 0
    %2179 = vmatpush2.bf16.msra.mxu0 %v1544
    %2180 = vmatprep.mubr.bf16.mxu0 %v568
    %2181 = vmatmul.mubr.bf16.gmra.mxu0 %v566
    %v2182 = vpop.f32.mrf.mxu0
    %v2183 = vadd.f32 %v2143, %v2182
    %v2184 = vpop.f32.mrf.mxu0
    %v2185 = vpop.f32.mrf.mxu0
    %v2186 = vpop.f32.mrf.mxu0
    %2187 = vdwg.mxu0
    %2188 = vmatprep.subr.bf16.mxu0 0
    %2189 = vmatpush1.bf16.msra.mxu0 %v1559
    %2190 = vmatprep.subr.bf16.mxu0 0
    %2191 = vmatpush1.bf16.msra.mxu0 %v1558
    %2192 = vmatprep.subr.bf16.mxu0 0
    %2193 = vmatpush1.bf16.msra.mxu0 %v1557
    %2194 = vmatprep.subr.bf16.mxu0 0
    %2195 = vmatpush1.bf16.msra.mxu0 %v1556
    %2196 = vmatprep.subr.bf16.mxu0 0
    %2197 = vmatpush1.bf16.msra.mxu0 %v1555
    %2198 = vmatprep.subr.bf16.mxu0 0
    %2199 = vmatpush1.bf16.msra.mxu0 %v1554
    %2200 = vmatprep.subr.bf16.mxu0 0
    %2201 = vmatpush1.bf16.msra.mxu0 %v1553
    %2202 = vmatprep.subr.bf16.mxu0 0
    %2203 = vmatpush1.bf16.msra.mxu0 %v1552
    %2204 = vmatprep.subr.bf16.mxu0 0
    %2205 = vmatpush2.bf16.msra.mxu0 %v1567
    %2206 = vmatprep.subr.bf16.mxu0 0
    %2207 = vmatpush2.bf16.msra.mxu0 %v1566
    %2208 = vmatprep.subr.bf16.mxu0 0
    %2209 = vmatpush2.bf16.msra.mxu0 %v1565
    %2210 = vmatprep.subr.bf16.mxu0 0
    %2211 = vmatpush2.bf16.msra.mxu0 %v1564
    %2212 = vmatprep.subr.bf16.mxu0 0
    %2213 = vmatpush2.bf16.msra.mxu0 %v1563
    %2214 = vmatprep.subr.bf16.mxu0 0
    %2215 = vmatpush2.bf16.msra.mxu0 %v1562
    %2216 = vmatprep.subr.bf16.mxu0 0
    %2217 = vmatpush2.bf16.msra.mxu0 %v1561
    %2218 = vmatprep.subr.bf16.mxu0 0
    %2219 = vmatpush2.bf16.msra.mxu0 %v1560
    %2220 = vmatprep.mubr.bf16.mxu0 %v565
    %2221 = vmatmul.mubr.bf16.gmra.mxu0 %v551
    %v2222 = vpop.f32.mrf.mxu0
    %v2223 = vadd.f32 %v2183, %v2222
    %v2224 = vpop.f32.mrf.mxu0
    %v2225 = vpop.f32.mrf.mxu0
    %v2226 = vpop.f32.mrf.mxu0
    %2227 = vdwg.mxu0
    %2228 = vmatprep.subr.bf16.mxu0 0
    %2229 = vmatpush1.bf16.msra.mxu0 %v1575
    %2230 = vmatprep.subr.bf16.mxu0 0
    %2231 = vmatpush1.bf16.msra.mxu0 %v1574
    %2232 = vmatprep.subr.bf16.mxu0 0
    %2233 = vmatpush1.bf16.msra.mxu0 %v1573
    %2234 = vmatprep.subr.bf16.mxu0 0
    %2235 = vmatpush1.bf16.msra.mxu0 %v1572
    %2236 = vmatprep.subr.bf16.mxu0 0
    %2237 = vmatpush1.bf16.msra.mxu0 %v1571
    %2238 = vmatprep.subr.bf16.mxu0 0
    %2239 = vmatpush1.bf16.msra.mxu0 %v1570
    %2240 = vmatprep.subr.bf16.mxu0 0
    %2241 = vmatpush1.bf16.msra.mxu0 %v1569
    %2242 = vmatprep.subr.bf16.mxu0 0
    %2243 = vmatpush1.bf16.msra.mxu0 %v1568
    %2244 = vmatprep.subr.bf16.mxu0 0
    %2245 = vmatpush2.bf16.msra.mxu0 %v1583
    %2246 = vmatprep.subr.bf16.mxu0 0
    %2247 = vmatpush2.bf16.msra.mxu0 %v1582
    %2248 = vmatprep.subr.bf16.mxu0 0
    %2249 = vmatpush2.bf16.msra.mxu0 %v1581
    %2250 = vmatprep.subr.bf16.mxu0 0
    %2251 = vmatpush2.bf16.msra.mxu0 %v1580
    %2252 = vmatprep.subr.bf16.mxu0 0
    %2253 = vmatpush2.bf16.msra.mxu0 %v1579
    %2254 = vmatprep.subr.bf16.mxu0 0
    %2255 = vmatpush2.bf16.msra.mxu0 %v1578
    %2256 = vmatprep.subr.bf16.mxu0 0
    %2257 = vmatpush2.bf16.msra.mxu0 %v1577
    %2258 = vmatprep.subr.bf16.mxu0 0
    %2259 = vmatpush2.bf16.msra.mxu0 %v1576
    %2260 = vmatprep.mubr.bf16.mxu0 %v569
    %2261 = vmatmul.mubr.bf16.gmra.mxu0 %v567
    %v2262 = vpop.f32.mrf.mxu0
    %v2263 = vadd.f32 %v2223, %v2262
    %v2264 = vpop.f32.mrf.mxu0
    %v2265 = vpop.f32.mrf.mxu0
    %v2266 = vpop.f32.mrf.mxu0
    %2267 = vdwg.mxu0
    %2268 = vmatprep.subr.bf16.mxu0 0
    %2269 = vmatpush1.bf16.msra.mxu0 0
    %2270 = vmatprep.subr.bf16.mxu0 0
    %2271 = vmatpush1.bf16.msra.mxu0 0
    %2272 = vmatprep.subr.bf16.mxu0 0
    %2273 = vmatpush1.bf16.msra.mxu0 0
    %2274 = vmatprep.subr.bf16.mxu0 0
    %2275 = vmatpush1.bf16.msra.mxu0 0
    %2276 = vmatprep.subr.bf16.mxu0 0
    %2277 = vmatpush1.bf16.msra.mxu0 %v1587
    %2278 = vmatprep.subr.bf16.mxu0 0
    %2279 = vmatpush1.bf16.msra.mxu0 %v1586
    %2280 = vmatprep.subr.bf16.mxu0 0
    %2281 = vmatpush1.bf16.msra.mxu0 %v1585
    %2282 = vmatprep.subr.bf16.mxu0 0
    %2283 = vmatpush1.bf16.msra.mxu0 %v1584
    %2284 = vmatprep.subr.bf16.mxu0 0
    %2285 = vmatpush2.bf16.msra.mxu0 0
    %2286 = vmatprep.subr.bf16.mxu0 0
    %2287 = vmatpush2.bf16.msra.mxu0 0
    %2288 = vmatprep.subr.bf16.mxu0 0
    %2289 = vmatpush2.bf16.msra.mxu0 0
    %2290 = vmatprep.subr.bf16.mxu0 0
    %2291 = vmatpush2.bf16.msra.mxu0 0
    %2292 = vmatprep.subr.bf16.mxu0 0
    %2293 = vmatpush2.bf16.msra.mxu0 0
    %2294 = vmatprep.subr.bf16.mxu0 0
    %2295 = vmatpush2.bf16.msra.mxu0 0
    %2296 = vmatprep.subr.bf16.mxu0 0
    %2297 = vmatpush2.bf16.msra.mxu0 0
    %2298 = vmatprep.subr.bf16.mxu0 0
    %2299 = vmatpush2.bf16.msra.mxu0 0
    %2300 = vmatprep.mubr.bf16.mxu0 0
    %2301 = vmatmul.mubr.bf16.gmra.mxu0 %v1786
    %v2302 = vpop.f32.mrf.mxu0
    %v2303 = vadd.f32 %v2263, %v2302
    %v2304 = vpop.f32.mrf.mxu0
    %v2305 = vpop.f32.mrf.mxu0
    %v2306 = vpop.f32.mrf.mxu0
    %2307 = vdwg.mxu0
    %vm2308 = vcmask 74752
    %2309 = vst.msk [vmem:[#allocation2] sm:$0x3] %vm2308, %v2303
    // Predicated region
    $region14: #{cnn_forward.3} parent=1 // pred_check
      _
    $region15: #{cnn_forward.3} parent=1 // pred_check_branch
      %2311 = sbr.rel (0) target = $region17
    $region16: #{cnn_forward.3} parent=1 // pred_region
      %s2313 = ssub.s32 32, 32
      %2314 = vsyncadd [#allocation3], %s2313
      %s2316 = sshll.u32 [#allocation2], 4
      %s2317 = int_to_ptr.vmem [resolvable:$true] %s2316
      %2319 = dma.vmem_to_hbm [thread:$0]  %s2317, 32, %s3, [#allocation3]
    $region17: #{cnn_forward.3} parent=1 // pred_fallthru
      _
    // Predicated region
    $region18: #{cnn_forward.3} parent=1 // pred_check
      _
    $region19: #{cnn_forward.3} parent=1 // pred_check_branch
      %2321 = sbr.rel (0) target = $region21
    $region20: #{cnn_forward.3} parent=1 // pred_region
      %2322 = dma.done [#allocation3], 32
    $region21: #{cnn_forward.3} parent=1 // pred_fallthru
      _
    %2323 = vsyncpa [#allocation3], 1

// kernel: cnn_forward.2
$region0: #{cnn_forward.2}
  #allocation0 [shape = 'u32[]', space=smem, size = 0x4, offset = 0x4, fixed_abs, tag = 'smem constant byte address 0x4 - core index']
  #allocation1 [shape = 'u32[144,128]{1,0:T(1,128)}', space=vmem, size = 0x12000, scoped, tag = 'internal scratch']
  #allocation2 [shape = 'f32[1,30,30]{2,1,0:T(8,128)}', space=vmem, size = 0x4000, scoped, tag = 'scratch operand']
  #allocation3 [shape = 'f32[1,14,28,32]{3,2,1,0:T(8,128)}', space=vmem, size = 0x38000, scoped, tag = 'scratch operand']
  #allocation4 [shape = 'f32[1,16,18,32]{3,2,1,0:T(8,128)}', space=vmem, size = 0x30000, scoped, tag = 'scratch operand']
  #allocation5 [shape = 'f32[1,7,16,64]{3,2,1,0:T(8,128)}', space=vmem, size = 0xe000, scoped, tag = 'scratch operand']
  %s0 = inlined_call_operand.vmem [shape: f32[2,28,28], index: 0, kind: input, shape index: {}]
  %s1 = inlined_call_operand.vmem [shape: f32[9,32], index: 1, kind: input, shape index: {}]
  %s2 = inlined_call_operand.vmem [shape: f32[1,32], index: 2, kind: input, shape index: {}]
  %s3 = inlined_call_operand.vmem [shape: bf16[288,64], index: 3, kind: input, shape index: {}]
  %s4 = inlined_call_operand.vmem [shape: f32[1,64], index: 4, kind: input, shape index: {}]
  %s5 = inlined_call_operand.vmem [shape: bf16[2,7,7,64], index: 5, kind: output, shape index: {}]
  %s6 = sld [smem:[#allocation0]]
  $region53: #{cnn_forward.2} parent=0
    _
  %s8 = ssub.s32 1, %s6
  %s9 = scalar_select 0, %s8, %s6
  loop: start=0, step=1, limit=4
  $region2: #{cnn_forward.2} parent=0 // loop_pre_header
    _
  $region3: #{cnn_forward.2} parent=0 // loop_header
    %s11 = sphi 0, %s15
    %p12 = scmp.ge.s32.totalorder %s11, 4
    %s21 = sphi 0, %s23
    %s24 = sphi 0, %s21
    %s25 = sphi 0, %s24
    %s41 = sphi 0, %s25
    %s45 = sphi 0, %s45
    %s47 = sphi 0, %s45
    %s48 = sphi 0, %s47
    %s62 = sphi 0, %s48
    %s66 = sphi 0, %s66
    %s68 = sphi 0, %s66
    %s69 = sphi 0, %s68
    %s83 = sphi 0, %s69
    %s87 = sphi 0, %s87
    %s89 = sphi 0, %s87
    %s90 = sphi 0, %s89
    %s104 = sphi 0, %s90
    %s108 = sphi 0, %s108
    %s110 = sphi 0, %s108
    %s111 = sphi 0, %s110
    %s125 = sphi 0, %s111
    %s131 = sphi 0, %s133
    %s134 = sphi 0, %s131
    %s135 = sphi 0, %s134
    %s151 = sphi 0, %s135
  $region4: #{cnn_forward.2} parent=0 // loop_header_branch
    %14 = sbr.rel (%p12) target = $region8
  $region5: #{cnn_forward.2} parent=0 // loop_body
    %s16 = ssub.s32 %s11, 1
    %s17 = ssub.s32 %s11, 2
    %s18 = sadd.s32 %s11, 1
    %s19 = ssub.s32 %s11, %s18
    %p20 = scmp.eq.s32.totalorder %s19, 0
    %s22 = sadd.s32 %s21, 1
    %s23 = scalar_select %p20, %s21, %s22
    %p26 = pneg %p20
    %p27 = scmp.eq.s32.totalorder %s11, 1
    %p28 = por %p26, %p27
    %p29 = scmp.ne.s32.totalorder %s21, %s24
    %p30 = scmp.eq.s32.totalorder %s11, 0
    %p31 = por %p29, %p30
    %p32 = scmp.ne.s32.totalorder %s21, %s24
    %p33 = scmp.eq.s32.totalorder %s16, 1
    %p34 = por %p32, %p33
    %p35 = scmp.ne.s32.totalorder %s24, %s25
    %p36 = scmp.eq.s32.totalorder %s16, 0
    %p37 = por %p35, %p36
    %p38 = scmp.ne.s32.totalorder %s24, %s25
    %p39 = scmp.eq.s32.totalorder %s17, 1
    %p40 = por %p38, %p39
    %p42 = scmp.ne.s32.totalorder %s25, %s41
    %p43 = scmp.eq.s32.totalorder %s17, 0
    %p44 = por %p42, %p43
    %s46 = sadd.s32 %s45, 1
    %p49 = scmp.eq.s32.totalorder %s11, 1
    %p50 = scmp.ne.s32.totalorder %s45, %s47
    %p51 = scmp.eq.s32.totalorder %s11, 0
    %p52 = por %p50, %p51
    %p53 = scmp.ne.s32.totalorder %s45, %s47
    %p54 = scmp.eq.s32.totalorder %s16, 1
    %p55 = por %p53, %p54
    %p56 = scmp.ne.s32.totalorder %s47, %s48
    %p57 = scmp.eq.s32.totalorder %s16, 0
    %p58 = por %p56, %p57
    %p59 = scmp.ne.s32.totalorder %s47, %s48
    %p60 = scmp.eq.s32.totalorder %s17, 1
    %p61 = por %p59, %p60
    %p63 = scmp.ne.s32.totalorder %s48, %s62
    %p64 = scmp.eq.s32.totalorder %s17, 0
    %p65 = por %p63, %p64
    %s67 = sadd.s32 %s66, 1
    %p70 = scmp.eq.s32.totalorder %s11, 1
    %p71 = scmp.ne.s32.totalorder %s66, %s68
    %p72 = scmp.eq.s32.totalorder %s11, 0
    %p73 = por %p71, %p72
    %p74 = scmp.ne.s32.totalorder %s66, %s68
    %p75 = scmp.eq.s32.totalorder %s16, 1
    %p76 = por %p74, %p75
    %p77 = scmp.ne.s32.totalorder %s68, %s69
    %p78 = scmp.eq.s32.totalorder %s16, 0
    %p79 = por %p77, %p78
    %p80 = scmp.ne.s32.totalorder %s68, %s69
    %p81 = scmp.eq.s32.totalorder %s17, 1
    %p82 = por %p80, %p81
    %p84 = scmp.ne.s32.totalorder %s69, %s83
    %p85 = scmp.eq.s32.totalorder %s17, 0
    %p86 = por %p84, %p85
    %s88 = sadd.s32 %s87, 1
    %p91 = scmp.eq.s32.totalorder %s11, 1
    %p92 = scmp.ne.s32.totalorder %s87, %s89
    %p93 = scmp.eq.s32.totalorder %s11, 0
    %p94 = por %p92, %p93
    %p95 = scmp.ne.s32.totalorder %s87, %s89
    %p96 = scmp.eq.s32.totalorder %s16, 1
    %p97 = por %p95, %p96
    %p98 = scmp.ne.s32.totalorder %s89, %s90
    %p99 = scmp.eq.s32.totalorder %s16, 0
    %p100 = por %p98, %p99
    %p101 = scmp.ne.s32.totalorder %s89, %s90
    %p102 = scmp.eq.s32.totalorder %s17, 1
    %p103 = por %p101, %p102
    %p105 = scmp.ne.s32.totalorder %s90, %s104
    %p106 = scmp.eq.s32.totalorder %s17, 0
    %p107 = por %p105, %p106
    %s109 = sadd.s32 %s108, 1
    %p112 = scmp.eq.s32.totalorder %s11, 1
    %p113 = scmp.ne.s32.totalorder %s108, %s110
    %p114 = scmp.eq.s32.totalorder %s11, 0
    %p115 = por %p113, %p114
    %p116 = scmp.ne.s32.totalorder %s108, %s110
    %p117 = scmp.eq.s32.totalorder %s16, 1
    %p118 = por %p116, %p117
    %p119 = scmp.ne.s32.totalorder %s110, %s111
    %p120 = scmp.eq.s32.totalorder %s16, 0
    %p121 = por %p119, %p120
    %p122 = scmp.ne.s32.totalorder %s110, %s111
    %p123 = scmp.eq.s32.totalorder %s17, 1
    %p124 = por %p122, %p123
    %p126 = scmp.ne.s32.totalorder %s111, %s125
    %p127 = scmp.eq.s32.totalorder %s17, 0
    %p128 = por %p126, %p127
    %s129 = ssub.s32 %s11, %s18
    %p130 = scmp.eq.s32.totalorder %s129, 0
    %s132 = sadd.s32 %s131, 1
    %s133 = scalar_select %p130, %s131, %s132
    %p136 = pneg %p130
    %p137 = scmp.eq.s32.totalorder %s11, 1
    %p138 = por %p136, %p137
    %p139 = scmp.ne.s32.totalorder %s131, %s134
    %p140 = scmp.eq.s32.totalorder %s11, 0
    %p141 = por %p139, %p140
    %p142 = scmp.ne.s32.totalorder %s131, %s134
    %p143 = scmp.eq.s32.totalorder %s16, 1
    %p144 = por %p142, %p143
    %p145 = scmp.ne.s32.totalorder %s134, %s135
    %p146 = scmp.eq.s32.totalorder %s16, 0
    %p147 = por %p145, %p146
    %p148 = scmp.ne.s32.totalorder %s134, %s135
    %p149 = scmp.eq.s32.totalorder %s17, 1
    %p150 = por %p148, %p149
    %p152 = scmp.ne.s32.totalorder %s135, %s151
    %p153 = scmp.eq.s32.totalorder %s17, 0
    %p154 = por %p152, %p153
    %p155 = scmp.le.s32.totalorder 1, %s11
    %p156 = scmp.lt.s32.totalorder %s11, 3
    %p157 = pnand %p155, %p156
    %p158 = pneg %p157
    // Predicated region
    $region9: #{cnn_forward.2} parent=5 // pred_check
      _
    $region10: #{cnn_forward.2} parent=5 // pred_check_branch
      %160 = sbr.rel (%p157) target = $region12
    $region11: #{cnn_forward.2} parent=5 // pred_region
      %s161 = ssub.s32 %s11, 1
      // Predicated region
      $region13: #{cnn_forward.2} parent=11 // pred_check
        %p162 = pneg %p58
      $region14: #{cnn_forward.2} parent=11 // pred_check_branch
        %164 = sbr.rel (%p162) target = $region16
      $region15: #{cnn_forward.2} parent=11 // pred_region
        _
      $region16: #{cnn_forward.2} parent=11 // pred_fallthru
        _
      // Predicated region
      $region17: #{cnn_forward.2} parent=11 // pred_check
        %p165 = pneg %p79
      $region18: #{cnn_forward.2} parent=11 // pred_check_branch
        %167 = sbr.rel (%p165) target = $region20
      $region19: #{cnn_forward.2} parent=11 // pred_region
        _
      $region20: #{cnn_forward.2} parent=11 // pred_fallthru
        _
      // Predicated region
      $region21: #{cnn_forward.2} parent=11 // pred_check
        %p168 = pneg %p100
      $region22: #{cnn_forward.2} parent=11 // pred_check_branch
        %170 = sbr.rel (%p168) target = $region24
      $region23: #{cnn_forward.2} parent=11 // pred_region
        _
      $region24: #{cnn_forward.2} parent=11 // pred_fallthru
        _
      // Predicated region
      $region25: #{cnn_forward.2} parent=11 // pred_check
        %p171 = pneg %p121
      $region26: #{cnn_forward.2} parent=11 // pred_check_branch
        %173 = sbr.rel (%p171) target = $region28
      $region27: #{cnn_forward.2} parent=11 // pred_region
        _
      $region28: #{cnn_forward.2} parent=11 // pred_fallthru
        _
    $region12: #{cnn_forward.2} parent=5 // pred_fallthru
      _
    %p174 = scmp.lt.s32.totalorder %s11, 2
    // Predicated region
    $region29: #{cnn_forward.2} parent=5 // pred_check
      %p175 = pneg %p174
    $region30: #{cnn_forward.2} parent=5 // pred_check_branch
      %177 = sbr.rel (%p175) target = $region32
    $region31: #{cnn_forward.2} parent=5 // pred_region
      // Predicated region
      $region33: #{cnn_forward.2} parent=31 // pred_check
        %p178 = pneg %p31
      $region34: #{cnn_forward.2} parent=31 // pred_check_branch
        %180 = sbr.rel (%p178) target = $region36
      $region35: #{cnn_forward.2} parent=31 // pred_region
        %p181 = scmp.lt.s32.totalorder %s11, 1
        %s182 = scalar_select %p181, %s11, 1
        %s183 = smul.addr %s182, 4
        %s184 = smul.addr %s183, 8
        %s185 = scalar_lea.vmem %s0, %s184
      $region36: #{cnn_forward.2} parent=31 // pred_fallthru
        _
    $region32: #{cnn_forward.2} parent=5 // pred_fallthru
      _
    %p186 = scmp.le.s32.totalorder 1, %s11
    %p187 = scmp.lt.s32.totalorder %s11, 3
    %p188 = pnand %p186, %p187
    %p189 = pneg %p188
    // Predicated region
    $region37: #{cnn_forward.2} parent=5 // pred_check
      _
    $region38: #{cnn_forward.2} parent=5 // pred_check_branch
      %191 = sbr.rel (%p188) target = $region40
    $region39: #{cnn_forward.2} parent=5 // pred_region
      %s192 = ssub.s32 %s11, 1
      %p193 = scmp.lt.s32.totalorder %s16, 1
      %s194 = scalar_select %p193, %s16, 1
      %s195 = smul.addr %s194, 4
      %s196 = smul.addr %s195, 8
      %s197 = scalar_lea.vmem %s0, %s196
      %p198 = pneg %p37
      %p199 = pneg %p34
      %p200 = pneg %p58
      %p201 = pneg %p55
      %p202 = pneg %p79
      %p203 = pneg %p76
      %p204 = pneg %p100
      %p205 = pneg %p97
      %p206 = pneg %p121
      %p207 = pneg %p118
      %p208 = pneg %p147
      %p209 = pneg %p144
      %p210 = scmp.lt.s32.totalorder %s16, 1
      %s211 = scalar_select %p210, %s16, 1
      %s212 = smul.addr %s211, 7
      %s213 = smul.addr %s212, 4
      %s214 = scalar_lea.vmem %s5, %s213
      %p215 = scmp.lt.s32.totalorder %s16, 1
      %s216 = scalar_select %p215, %s16, 1
      %s217 = smul.addr %s216, 4
      %s218 = smul.addr %s217, 8
      %s219 = scalar_lea.vmem %s0, %s218
      %p220 = scmp.lt.s32.totalorder %s16, 1
      %s221 = scalar_select %p220, %s16, 1
      %s222 = smul.addr %s221, 7
      %s223 = smul.addr %s222, 4
      %s224 = scalar_lea.vmem %s5, %s223
      %vm226 = vcmask 244736
      %227 = vst.msk [vmem:[#allocation2] sm:$0xff] %vm226, 0.0
      %228 = vst.msk [vmem:[#allocation2 + $0x8] sm:$0xff] %vm226, 0.0
      %229 = vst.msk [vmem:[#allocation2 + $0x10] sm:$0xff] %vm226, 0.0
      %vm230 = vcmask 242688
      %231 = vst.msk [vmem:[#allocation2 + $0x18] sm:$0x3f] %vm230, 0.0
      %vm232 = vcmask 261120
      %233 = vst.msk [vmem:[#allocation4] sm:$0xff] %vm232, 0.0
      %234 = vst.msk [vmem:[#allocation4 + $0x8] sm:$0xff] %vm232, 0.0
      %vm235 = vcmask 254976
      %236 = vst.msk [vmem:[#allocation4 + $0x10] sm:$0x3] %vm235, 0.0
      %237 = vst.msk [vmem:[#allocation4 + $0x18] sm:$0xff] %vm232, 0.0
      %238 = vst.msk [vmem:[#allocation4 + $0x20] sm:$0xff] %vm232, 0.0
      %239 = vst.msk [vmem:[#allocation4 + $0x28] sm:$0x3] %vm235, 0.0
      %240 = vst.msk [vmem:[#allocation4 + $0x30] sm:$0xff] %vm232, 0.0
      %241 = vst.msk [vmem:[#allocation4 + $0x38] sm:$0xff] %vm232, 0.0
      %242 = vst.msk [vmem:[#allocation4 + $0x40] sm:$0x3] %vm235, 0.0
      %243 = vst.msk [vmem:[#allocation4 + $0x48] sm:$0xff] %vm232, 0.0
      %244 = vst.msk [vmem:[#allocation4 + $0x50] sm:$0xff] %vm232, 0.0
      %245 = vst.msk [vmem:[#allocation4 + $0x58] sm:$0x3] %vm235, 0.0
      %246 = vst.msk [vmem:[#allocation4 + $0x60] sm:$0xff] %vm232, 0.0
      %247 = vst.msk [vmem:[#allocation4 + $0x68] sm:$0xff] %vm232, 0.0
      %248 = vst.msk [vmem:[#allocation4 + $0x70] sm:$0x3] %vm235, 0.0
      %249 = vst.msk [vmem:[#allocation4 + $0x78] sm:$0xff] %vm232, 0.0
      %250 = vst.msk [vmem:[#allocation4 + $0x80] sm:$0xff] %vm232, 0.0
      %251 = vst.msk [vmem:[#allocation4 + $0x88] sm:$0x3] %vm235, 0.0
      %252 = vst.msk [vmem:[#allocation4 + $0x90] sm:$0xff] %vm232, 0.0
      %253 = vst.msk [vmem:[#allocation4 + $0x98] sm:$0xff] %vm232, 0.0
      %254 = vst.msk [vmem:[#allocation4 + $0xa0] sm:$0x3] %vm235, 0.0
      %255 = vst.msk [vmem:[#allocation4 + $0xa8] sm:$0xff] %vm232, 0.0
      %256 = vst.msk [vmem:[#allocation4 + $0xb0] sm:$0xff] %vm232, 0.0
      %257 = vst.msk [vmem:[#allocation4 + $0xb8] sm:$0x3] %vm235, 0.0
      %258 = vst.msk [vmem:[#allocation4 + $0xc0] sm:$0xff] %vm232, 0.0
      %259 = vst.msk [vmem:[#allocation4 + $0xc8] sm:$0xff] %vm232, 0.0
      %260 = vst.msk [vmem:[#allocation4 + $0xd0] sm:$0x3] %vm235, 0.0
      %261 = vst.msk [vmem:[#allocation4 + $0xd8] sm:$0xff] %vm232, 0.0
      %262 = vst.msk [vmem:[#allocation4 + $0xe0] sm:$0xff] %vm232, 0.0
      %263 = vst.msk [vmem:[#allocation4 + $0xe8] sm:$0x3] %vm235, 0.0
      %264 = vst.msk [vmem:[#allocation4 + $0xf0] sm:$0xff] %vm232, 0.0
      %265 = vst.msk [vmem:[#allocation4 + $0xf8] sm:$0xff] %vm232, 0.0
      %266 = vst.msk [vmem:[#allocation4 + $0x100] sm:$0x3] %vm235, 0.0
      %267 = vst.msk [vmem:[#allocation4 + $0x108] sm:$0xff] %vm232, 0.0
      %268 = vst.msk [vmem:[#allocation4 + $0x110] sm:$0xff] %vm232, 0.0
      %269 = vst.msk [vmem:[#allocation4 + $0x118] sm:$0x3] %vm235, 0.0
      %270 = vst.msk [vmem:[#allocation4 + $0x120] sm:$0xff] %vm232, 0.0
      %271 = vst.msk [vmem:[#allocation4 + $0x128] sm:$0xff] %vm232, 0.0
      %272 = vst.msk [vmem:[#allocation4 + $0x130] sm:$0x3] %vm235, 0.0
      %273 = vst.msk [vmem:[#allocation4 + $0x138] sm:$0xff] %vm232, 0.0
      %274 = vst.msk [vmem:[#allocation4 + $0x140] sm:$0xff] %vm232, 0.0
      %275 = vst.msk [vmem:[#allocation4 + $0x148] sm:$0x3] %vm235, 0.0
      %276 = vst.msk [vmem:[#allocation4 + $0x150] sm:$0xff] %vm232, 0.0
      %277 = vst.msk [vmem:[#allocation4 + $0x158] sm:$0xff] %vm232, 0.0
      %278 = vst.msk [vmem:[#allocation4 + $0x160] sm:$0x3] %vm235, 0.0
      %279 = vst.msk [vmem:[#allocation4 + $0x168] sm:$0xff] %vm232, 0.0
      %280 = vst.msk [vmem:[#allocation4 + $0x170] sm:$0xff] %vm232, 0.0
      %281 = vst.msk [vmem:[#allocation4 + $0x178] sm:$0x3] %vm235, 0.0
      %v282 = vld [vmem:[%s219] sm:$0xff]
      %v283 = vld [vmem:[%s219 + $0x8] sm:$0xff]
      %v284 = vld [vmem:[%s219 + $0x10] sm:$0xff]
      %v285 = vld [vmem:[%s219 + $0x18] sm:$0xf]
      %290 = vrot.lane.b32.xlu0 %v282, 1
      %v291 = vpop.permute.xlu0 %290
      %292 = vrot.lane.b32.xlu0 %v283, 1
      %v293 = vpop.permute.xlu0 %292
      %294 = vrot.lane.b32.xlu0 %v284, 1
      %v295 = vpop.permute.xlu0 %294
      %296 = vrot.lane.b32.xlu0 %v285, 1
      %v297 = vpop.permute.xlu0 %296
      %vm302 = vcmask 236552
      %303 = vst.msk [vmem:[#allocation2 + $0x1] sm:$0xff] %vm302, %v291
      %304 = vst.msk [vmem:[#allocation2 + $0x9] sm:$0xff] %vm302, %v293
      %305 = vst.msk [vmem:[#allocation2 + $0x11] sm:$0xff] %vm302, %v295
      %vm306 = vcmask 232456
      %307 = vst.msk [vmem:[#allocation2 + $0x19] sm:$0xf] %vm306, %v297
      %v308 = vld [vmem:[#allocation2] sm:$0xff]
      %v309 = vld [vmem:[#allocation2 + $0x8] sm:$0xff]
      %v310 = vld [vmem:[#allocation2 + $0x10] sm:$0xff]
      %v311 = vld [vmem:[#allocation2 + $0x18] sm:$0x3f]
      %v312 = vlaneseq
      %v313 = vshrl.u32 %v312, 7
      %v314 = vsub.s32 0, %v313
      %v315 = vrot.slane %v308, %v314
      %317 = vbcast.lane.b32.xlu0 %v315, 256
      %v318 = vpop.permute.xlu0 %317
      %s320 = sor.u32 256, 8
      %321 = vbcast.lane.b32.xlu0 %v315, %s320
      %v322 = vpop.permute.xlu0 %321
      %s324 = sor.u32 256, 16
      %325 = vbcast.lane.b32.xlu0 %v315, %s324
      %v326 = vpop.permute.xlu0 %325
      %s328 = sor.u32 256, 24
      %329 = vbcast.lane.b32.xlu0 %v315, %s328
      %v330 = vpop.permute.xlu0 %329
      %v331 = vlaneseq
      %v332 = vshrl.u32 %v331, 7
      %v333 = vsub.s32 1, %v332
      %v334 = vrot.slane %v308, %v333
      %336 = vbcast.lane.b32.xlu0 %v334, 256
      %v337 = vpop.permute.xlu0 %336
      %s339 = sor.u32 256, 8
      %340 = vbcast.lane.b32.xlu0 %v334, %s339
      %v341 = vpop.permute.xlu0 %340
      %s343 = sor.u32 256, 16
      %344 = vbcast.lane.b32.xlu0 %v334, %s343
      %v345 = vpop.permute.xlu0 %344
      %s347 = sor.u32 256, 24
      %348 = vbcast.lane.b32.xlu0 %v334, %s347
      %v349 = vpop.permute.xlu0 %348
      %v350 = vlaneseq
      %v351 = vshrl.u32 %v350, 7
      %v352 = vsub.s32 2, %v351
      %v353 = vrot.slane %v308, %v352
      %355 = vbcast.lane.b32.xlu0 %v353, 256
      %v356 = vpop.permute.xlu0 %355
      %s358 = sor.u32 256, 8
      %359 = vbcast.lane.b32.xlu0 %v353, %s358
      %v360 = vpop.permute.xlu0 %359
      %s362 = sor.u32 256, 16
      %363 = vbcast.lane.b32.xlu0 %v353, %s362
      %v364 = vpop.permute.xlu0 %363
      %s366 = sor.u32 256, 24
      %367 = vbcast.lane.b32.xlu0 %v353, %s366
      %v368 = vpop.permute.xlu0 %367
      %v369 = vlaneseq
      %v370 = vshrl.u32 %v369, 7
      %v371 = vsub.s32 3, %v370
      %v372 = vrot.slane %v308, %v371
      %374 = vbcast.lane.b32.xlu0 %v372, 256
      %v375 = vpop.permute.xlu0 %374
      %s377 = sor.u32 256, 8
      %378 = vbcast.lane.b32.xlu0 %v372, %s377
      %v379 = vpop.permute.xlu0 %378
      %s381 = sor.u32 256, 16
      %382 = vbcast.lane.b32.xlu0 %v372, %s381
      %v383 = vpop.permute.xlu0 %382
      %s385 = sor.u32 256, 24
      %386 = vbcast.lane.b32.xlu0 %v372, %s385
      %v387 = vpop.permute.xlu0 %386
      %v388 = vlaneseq
      %v389 = vshrl.u32 %v388, 7
      %v390 = vsub.s32 4, %v389
      %v391 = vrot.slane %v308, %v390
      %393 = vbcast.lane.b32.xlu0 %v391, 256
      %v394 = vpop.permute.xlu0 %393
      %s396 = sor.u32 256, 8
      %397 = vbcast.lane.b32.xlu0 %v391, %s396
      %v398 = vpop.permute.xlu0 %397
      %s400 = sor.u32 256, 16
      %401 = vbcast.lane.b32.xlu0 %v391, %s400
      %v402 = vpop.permute.xlu0 %401
      %s404 = sor.u32 256, 24
      %405 = vbcast.lane.b32.xlu0 %v391, %s404
      %v406 = vpop.permute.xlu0 %405
      %v407 = vlaneseq
      %v408 = vshrl.u32 %v407, 7
      %v409 = vsub.s32 5, %v408
      %v410 = vrot.slane %v308, %v409
      %412 = vbcast.lane.b32.xlu0 %v410, 256
      %v413 = vpop.permute.xlu0 %412
      %s415 = sor.u32 256, 8
      %416 = vbcast.lane.b32.xlu0 %v410, %s415
      %v417 = vpop.permute.xlu0 %416
      %s419 = sor.u32 256, 16
      %420 = vbcast.lane.b32.xlu0 %v410, %s419
      %v421 = vpop.permute.xlu0 %420
      %s423 = sor.u32 256, 24
      %424 = vbcast.lane.b32.xlu0 %v410, %s423
      %v425 = vpop.permute.xlu0 %424
      %v426 = vlaneseq
      %v427 = vshrl.u32 %v426, 7
      %v428 = vsub.s32 6, %v427
      %v429 = vrot.slane %v308, %v428
      %431 = vbcast.lane.b32.xlu0 %v429, 256
      %v432 = vpop.permute.xlu0 %431
      %s434 = sor.u32 256, 8
      %435 = vbcast.lane.b32.xlu0 %v429, %s434
      %v436 = vpop.permute.xlu0 %435
      %s438 = sor.u32 256, 16
      %439 = vbcast.lane.b32.xlu0 %v429, %s438
      %v440 = vpop.permute.xlu0 %439
      %s442 = sor.u32 256, 24
      %443 = vbcast.lane.b32.xlu0 %v429, %s442
      %v444 = vpop.permute.xlu0 %443
      %v445 = vlaneseq
      %v446 = vshrl.u32 %v445, 7
      %v447 = vsub.s32 7, %v446
      %v448 = vrot.slane %v308, %v447
      %450 = vbcast.lane.b32.xlu0 %v448, 256
      %v451 = vpop.permute.xlu0 %450
      %s453 = sor.u32 256, 8
      %454 = vbcast.lane.b32.xlu0 %v448, %s453
      %v455 = vpop.permute.xlu0 %454
      %s457 = sor.u32 256, 16
      %458 = vbcast.lane.b32.xlu0 %v448, %s457
      %v459 = vpop.permute.xlu0 %458
      %s461 = sor.u32 256, 24
      %462 = vbcast.lane.b32.xlu0 %v448, %s461
      %v463 = vpop.permute.xlu0 %462
      %v464 = vlaneseq
      %v465 = vshrl.u32 %v464, 7
      %v466 = vsub.s32 0, %v465
      %v467 = vrot.slane %v309, %v466
      %469 = vbcast.lane.b32.xlu0 %v467, 256
      %v470 = vpop.permute.xlu0 %469
      %s472 = sor.u32 256, 8
      %473 = vbcast.lane.b32.xlu0 %v467, %s472
      %v474 = vpop.permute.xlu0 %473
      %s476 = sor.u32 256, 16
      %477 = vbcast.lane.b32.xlu0 %v467, %s476
      %v478 = vpop.permute.xlu0 %477
      %s480 = sor.u32 256, 24
      %481 = vbcast.lane.b32.xlu0 %v467, %s480
      %v482 = vpop.permute.xlu0 %481
      %v483 = vlaneseq
      %v484 = vshrl.u32 %v483, 7
      %v485 = vsub.s32 1, %v484
      %v486 = vrot.slane %v309, %v485
      %488 = vbcast.lane.b32.xlu0 %v486, 256
      %v489 = vpop.permute.xlu0 %488
      %s491 = sor.u32 256, 8
      %492 = vbcast.lane.b32.xlu0 %v486, %s491
      %v493 = vpop.permute.xlu0 %492
      %s495 = sor.u32 256, 16
      %496 = vbcast.lane.b32.xlu0 %v486, %s495
      %v497 = vpop.permute.xlu0 %496
      %s499 = sor.u32 256, 24
      %500 = vbcast.lane.b32.xlu0 %v486, %s499
      %v501 = vpop.permute.xlu0 %500
      %v502 = vlaneseq
      %v503 = vshrl.u32 %v502, 7
      %v504 = vsub.s32 2, %v503
      %v505 = vrot.slane %v309, %v504
      %507 = vbcast.lane.b32.xlu0 %v505, 256
      %v508 = vpop.permute.xlu0 %507
      %s510 = sor.u32 256, 8
      %511 = vbcast.lane.b32.xlu0 %v505, %s510
      %v512 = vpop.permute.xlu0 %511
      %s514 = sor.u32 256, 16
      %515 = vbcast.lane.b32.xlu0 %v505, %s514
      %v516 = vpop.permute.xlu0 %515
      %s518 = sor.u32 256, 24
      %519 = vbcast.lane.b32.xlu0 %v505, %s518
      %v520 = vpop.permute.xlu0 %519
      %v521 = vlaneseq
      %v522 = vshrl.u32 %v521, 7
      %v523 = vsub.s32 3, %v522
      %v524 = vrot.slane %v309, %v523
      %526 = vbcast.lane.b32.xlu0 %v524, 256
      %v527 = vpop.permute.xlu0 %526
      %s529 = sor.u32 256, 8
      %530 = vbcast.lane.b32.xlu0 %v524, %s529
      %v531 = vpop.permute.xlu0 %530
      %s533 = sor.u32 256, 16
      %534 = vbcast.lane.b32.xlu0 %v524, %s533
      %v535 = vpop.permute.xlu0 %534
      %s537 = sor.u32 256, 24
      %538 = vbcast.lane.b32.xlu0 %v524, %s537
      %v539 = vpop.permute.xlu0 %538
      %v540 = vlaneseq
      %v541 = vshrl.u32 %v540, 7
      %v542 = vsub.s32 4, %v541
      %v543 = vrot.slane %v309, %v542
      %545 = vbcast.lane.b32.xlu0 %v543, 256
      %v546 = vpop.permute.xlu0 %545
      %s548 = sor.u32 256, 8
      %549 = vbcast.lane.b32.xlu0 %v543, %s548
      %v550 = vpop.permute.xlu0 %549
      %s552 = sor.u32 256, 16
      %553 = vbcast.lane.b32.xlu0 %v543, %s552
      %v554 = vpop.permute.xlu0 %553
      %s556 = sor.u32 256, 24
      %557 = vbcast.lane.b32.xlu0 %v543, %s556
      %v558 = vpop.permute.xlu0 %557
      %v559 = vlaneseq
      %v560 = vshrl.u32 %v559, 7
      %v561 = vsub.s32 5, %v560
      %v562 = vrot.slane %v309, %v561
      %564 = vbcast.lane.b32.xlu0 %v562, 256
      %v565 = vpop.permute.xlu0 %564
      %s567 = sor.u32 256, 8
      %568 = vbcast.lane.b32.xlu0 %v562, %s567
      %v569 = vpop.permute.xlu0 %568
      %s571 = sor.u32 256, 16
      %572 = vbcast.lane.b32.xlu0 %v562, %s571
      %v573 = vpop.permute.xlu0 %572
      %s575 = sor.u32 256, 24
      %576 = vbcast.lane.b32.xlu0 %v562, %s575
      %v577 = vpop.permute.xlu0 %576
      %v578 = vlaneseq
      %v579 = vshrl.u32 %v578, 7
      %v580 = vsub.s32 6, %v579
      %v581 = vrot.slane %v309, %v580
      %583 = vbcast.lane.b32.xlu0 %v581, 256
      %v584 = vpop.permute.xlu0 %583
      %s586 = sor.u32 256, 8
      %587 = vbcast.lane.b32.xlu0 %v581, %s586
      %v588 = vpop.permute.xlu0 %587
      %s590 = sor.u32 256, 16
      %591 = vbcast.lane.b32.xlu0 %v581, %s590
      %v592 = vpop.permute.xlu0 %591
      %s594 = sor.u32 256, 24
      %595 = vbcast.lane.b32.xlu0 %v581, %s594
      %v596 = vpop.permute.xlu0 %595
      %v597 = vlaneseq
      %v598 = vshrl.u32 %v597, 7
      %v599 = vsub.s32 7, %v598
      %v600 = vrot.slane %v309, %v599
      %602 = vbcast.lane.b32.xlu0 %v600, 256
      %v603 = vpop.permute.xlu0 %602
      %s605 = sor.u32 256, 8
      %606 = vbcast.lane.b32.xlu0 %v600, %s605
      %v607 = vpop.permute.xlu0 %606
      %s609 = sor.u32 256, 16
      %610 = vbcast.lane.b32.xlu0 %v600, %s609
      %v611 = vpop.permute.xlu0 %610
      %s613 = sor.u32 256, 24
      %614 = vbcast.lane.b32.xlu0 %v600, %s613
      %v615 = vpop.permute.xlu0 %614
      %v616 = vlaneseq
      %v617 = vshrl.u32 %v616, 7
      %v618 = vsub.s32 0, %v617
      %v619 = vrot.slane %v310, %v618
      %621 = vbcast.lane.b32.xlu0 %v619, 256
      %v622 = vpop.permute.xlu0 %621
      %s624 = sor.u32 256, 8
      %625 = vbcast.lane.b32.xlu0 %v619, %s624
      %v626 = vpop.permute.xlu0 %625
      %s628 = sor.u32 256, 16
      %629 = vbcast.lane.b32.xlu0 %v619, %s628
      %v630 = vpop.permute.xlu0 %629
      %s632 = sor.u32 256, 24
      %633 = vbcast.lane.b32.xlu0 %v619, %s632
      %v634 = vpop.permute.xlu0 %633
      %v635 = vlaneseq
      %v636 = vshrl.u32 %v635, 7
      %v637 = vsub.s32 1, %v636
      %v638 = vrot.slane %v310, %v637
      %640 = vbcast.lane.b32.xlu0 %v638, 256
      %v641 = vpop.permute.xlu0 %640
      %s643 = sor.u32 256, 8
      %644 = vbcast.lane.b32.xlu0 %v638, %s643
      %v645 = vpop.permute.xlu0 %644
      %s647 = sor.u32 256, 16
      %648 = vbcast.lane.b32.xlu0 %v638, %s647
      %v649 = vpop.permute.xlu0 %648
      %s651 = sor.u32 256, 24
      %652 = vbcast.lane.b32.xlu0 %v638, %s651
      %v653 = vpop.permute.xlu0 %652
      %v654 = vlaneseq
      %v655 = vshrl.u32 %v654, 7
      %v656 = vsub.s32 2, %v655
      %v657 = vrot.slane %v310, %v656
      %659 = vbcast.lane.b32.xlu0 %v657, 256
      %v660 = vpop.permute.xlu0 %659
      %s662 = sor.u32 256, 8
      %663 = vbcast.lane.b32.xlu0 %v657, %s662
      %v664 = vpop.permute.xlu0 %663
      %s666 = sor.u32 256, 16
      %667 = vbcast.lane.b32.xlu0 %v657, %s666
      %v668 = vpop.permute.xlu0 %667
      %s670 = sor.u32 256, 24
      %671 = vbcast.lane.b32.xlu0 %v657, %s670
      %v672 = vpop.permute.xlu0 %671
      %v673 = vlaneseq
      %v674 = vshrl.u32 %v673, 7
      %v675 = vsub.s32 3, %v674
      %v676 = vrot.slane %v310, %v675
      %678 = vbcast.lane.b32.xlu0 %v676, 256
      %v679 = vpop.permute.xlu0 %678
      %s681 = sor.u32 256, 8
      %682 = vbcast.lane.b32.xlu0 %v676, %s681
      %v683 = vpop.permute.xlu0 %682
      %s685 = sor.u32 256, 16
      %686 = vbcast.lane.b32.xlu0 %v676, %s685
      %v687 = vpop.permute.xlu0 %686
      %s689 = sor.u32 256, 24
      %690 = vbcast.lane.b32.xlu0 %v676, %s689
      %v691 = vpop.permute.xlu0 %690
      %v692 = vlaneseq
      %v693 = vshrl.u32 %v692, 7
      %v694 = vsub.s32 4, %v693
      %v695 = vrot.slane %v310, %v694
      %697 = vbcast.lane.b32.xlu0 %v695, 256
      %v698 = vpop.permute.xlu0 %697
      %s700 = sor.u32 256, 8
      %701 = vbcast.lane.b32.xlu0 %v695, %s700
      %v702 = vpop.permute.xlu0 %701
      %s704 = sor.u32 256, 16
      %705 = vbcast.lane.b32.xlu0 %v695, %s704
      %v706 = vpop.permute.xlu0 %705
      %s708 = sor.u32 256, 24
      %709 = vbcast.lane.b32.xlu0 %v695, %s708
      %v710 = vpop.permute.xlu0 %709
      %v711 = vlaneseq
      %v712 = vshrl.u32 %v711, 7
      %v713 = vsub.s32 5, %v712
      %v714 = vrot.slane %v310, %v713
      %716 = vbcast.lane.b32.xlu0 %v714, 256
      %v717 = vpop.permute.xlu0 %716
      %s719 = sor.u32 256, 8
      %720 = vbcast.lane.b32.xlu0 %v714, %s719
      %v721 = vpop.permute.xlu0 %720
      %s723 = sor.u32 256, 16
      %724 = vbcast.lane.b32.xlu0 %v714, %s723
      %v725 = vpop.permute.xlu0 %724
      %s727 = sor.u32 256, 24
      %728 = vbcast.lane.b32.xlu0 %v714, %s727
      %v729 = vpop.permute.xlu0 %728
      %v730 = vlaneseq
      %v731 = vshrl.u32 %v730, 7
      %v732 = vsub.s32 6, %v731
      %v733 = vrot.slane %v310, %v732
      %735 = vbcast.lane.b32.xlu0 %v733, 256
      %v736 = vpop.permute.xlu0 %735
      %s738 = sor.u32 256, 8
      %739 = vbcast.lane.b32.xlu0 %v733, %s738
      %v740 = vpop.permute.xlu0 %739
      %s742 = sor.u32 256, 16
      %743 = vbcast.lane.b32.xlu0 %v733, %s742
      %v744 = vpop.permute.xlu0 %743
      %s746 = sor.u32 256, 24
      %747 = vbcast.lane.b32.xlu0 %v733, %s746
      %v748 = vpop.permute.xlu0 %747
      %v749 = vlaneseq
      %v750 = vshrl.u32 %v749, 7
      %v751 = vsub.s32 7, %v750
      %v752 = vrot.slane %v310, %v751
      %754 = vbcast.lane.b32.xlu0 %v752, 256
      %v755 = vpop.permute.xlu0 %754
      %s757 = sor.u32 256, 8
      %758 = vbcast.lane.b32.xlu0 %v752, %s757
      %v759 = vpop.permute.xlu0 %758
      %s761 = sor.u32 256, 16
      %762 = vbcast.lane.b32.xlu0 %v752, %s761
      %v763 = vpop.permute.xlu0 %762
      %s765 = sor.u32 256, 24
      %766 = vbcast.lane.b32.xlu0 %v752, %s765
      %v767 = vpop.permute.xlu0 %766
      %v768 = vlaneseq
      %v769 = vshrl.u32 %v768, 7
      %v770 = vsub.s32 0, %v769
      %v771 = vrot.slane %v311, %v770
      %773 = vbcast.lane.b32.xlu0 %v771, 256
      %v774 = vpop.permute.xlu0 %773
      %s776 = sor.u32 256, 8
      %777 = vbcast.lane.b32.xlu0 %v771, %s776
      %v778 = vpop.permute.xlu0 %777
      %s780 = sor.u32 256, 16
      %781 = vbcast.lane.b32.xlu0 %v771, %s780
      %v782 = vpop.permute.xlu0 %781
      %s784 = sor.u32 256, 24
      %785 = vbcast.lane.b32.xlu0 %v771, %s784
      %v786 = vpop.permute.xlu0 %785
      %v787 = vlaneseq
      %v788 = vshrl.u32 %v787, 7
      %v789 = vsub.s32 1, %v788
      %v790 = vrot.slane %v311, %v789
      %792 = vbcast.lane.b32.xlu0 %v790, 256
      %v793 = vpop.permute.xlu0 %792
      %s795 = sor.u32 256, 8
      %796 = vbcast.lane.b32.xlu0 %v790, %s795
      %v797 = vpop.permute.xlu0 %796
      %s799 = sor.u32 256, 16
      %800 = vbcast.lane.b32.xlu0 %v790, %s799
      %v801 = vpop.permute.xlu0 %800
      %s803 = sor.u32 256, 24
      %804 = vbcast.lane.b32.xlu0 %v790, %s803
      %v805 = vpop.permute.xlu0 %804
      %v806 = vlaneseq
      %v807 = vshrl.u32 %v806, 7
      %v808 = vsub.s32 2, %v807
      %v809 = vrot.slane %v311, %v808
      %811 = vbcast.lane.b32.xlu0 %v809, 256
      %v812 = vpop.permute.xlu0 %811
      %s814 = sor.u32 256, 8
      %815 = vbcast.lane.b32.xlu0 %v809, %s814
      %v816 = vpop.permute.xlu0 %815
      %s818 = sor.u32 256, 16
      %819 = vbcast.lane.b32.xlu0 %v809, %s818
      %v820 = vpop.permute.xlu0 %819
      %s822 = sor.u32 256, 24
      %823 = vbcast.lane.b32.xlu0 %v809, %s822
      %v824 = vpop.permute.xlu0 %823
      %v825 = vlaneseq
      %v826 = vshrl.u32 %v825, 7
      %v827 = vsub.s32 3, %v826
      %v828 = vrot.slane %v311, %v827
      %830 = vbcast.lane.b32.xlu0 %v828, 256
      %v831 = vpop.permute.xlu0 %830
      %s833 = sor.u32 256, 8
      %834 = vbcast.lane.b32.xlu0 %v828, %s833
      %v835 = vpop.permute.xlu0 %834
      %s837 = sor.u32 256, 16
      %838 = vbcast.lane.b32.xlu0 %v828, %s837
      %v839 = vpop.permute.xlu0 %838
      %s841 = sor.u32 256, 24
      %842 = vbcast.lane.b32.xlu0 %v828, %s841
      %v843 = vpop.permute.xlu0 %842
      %v844 = vlaneseq
      %v845 = vshrl.u32 %v844, 7
      %v846 = vsub.s32 4, %v845
      %v847 = vrot.slane %v311, %v846
      %849 = vbcast.lane.b32.xlu0 %v847, 256
      %v850 = vpop.permute.xlu0 %849
      %s852 = sor.u32 256, 8
      %853 = vbcast.lane.b32.xlu0 %v847, %s852
      %v854 = vpop.permute.xlu0 %853
      %s856 = sor.u32 256, 16
      %857 = vbcast.lane.b32.xlu0 %v847, %s856
      %v858 = vpop.permute.xlu0 %857
      %s860 = sor.u32 256, 24
      %861 = vbcast.lane.b32.xlu0 %v847, %s860
      %v862 = vpop.permute.xlu0 %861
      %v863 = vlaneseq
      %v864 = vshrl.u32 %v863, 7
      %v865 = vsub.s32 5, %v864
      %v866 = vrot.slane %v311, %v865
      %868 = vbcast.lane.b32.xlu0 %v866, 256
      %v869 = vpop.permute.xlu0 %868
      %s871 = sor.u32 256, 8
      %872 = vbcast.lane.b32.xlu0 %v866, %s871
      %v873 = vpop.permute.xlu0 %872
      %s875 = sor.u32 256, 16
      %876 = vbcast.lane.b32.xlu0 %v866, %s875
      %v877 = vpop.permute.xlu0 %876
      %s879 = sor.u32 256, 24
      %880 = vbcast.lane.b32.xlu0 %v866, %s879
      %v881 = vpop.permute.xlu0 %880
      %v882 = vld [vmem:[%s1] sm:$0xff]
      %v883 = vld [vmem:[%s1 + $0x8] sm:$0x1]
      %v884 = vlaneseq
      %v885 = vshrl.u32 %v884, 7
      %v886 = vsub.s32 0, %v885
      %v887 = vrot.slane %v882, %v886
      %v888 = vmul.f32 %v318, %v887
      %v889 = vmul.f32 %v322, %v887
      %v890 = vmul.f32 %v326, %v887
      %v891 = vmul.f32 %v330, %v887
      %v892 = vmul.f32 %v337, %v887
      %v893 = vmul.f32 %v341, %v887
      %v894 = vmul.f32 %v345, %v887
      %v895 = vmul.f32 %v349, %v887
      %v896 = vmul.f32 %v356, %v887
      %v897 = vmul.f32 %v360, %v887
      %v898 = vmul.f32 %v364, %v887
      %v899 = vmul.f32 %v368, %v887
      %v900 = vmul.f32 %v375, %v887
      %v901 = vmul.f32 %v379, %v887
      %v902 = vmul.f32 %v383, %v887
      %v903 = vmul.f32 %v387, %v887
      %v904 = vmul.f32 %v394, %v887
      %v905 = vmul.f32 %v398, %v887
      %v906 = vmul.f32 %v402, %v887
      %v907 = vmul.f32 %v406, %v887
      %v908 = vmul.f32 %v413, %v887
      %v909 = vmul.f32 %v417, %v887
      %v910 = vmul.f32 %v421, %v887
      %v911 = vmul.f32 %v425, %v887
      %v912 = vmul.f32 %v432, %v887
      %v913 = vmul.f32 %v436, %v887
      %v914 = vmul.f32 %v440, %v887
      %v915 = vmul.f32 %v444, %v887
      %v916 = vmul.f32 %v451, %v887
      %v917 = vmul.f32 %v455, %v887
      %v918 = vmul.f32 %v459, %v887
      %v919 = vmul.f32 %v463, %v887
      %v920 = vmul.f32 %v470, %v887
      %v921 = vmul.f32 %v474, %v887
      %v922 = vmul.f32 %v478, %v887
      %v923 = vmul.f32 %v482, %v887
      %v924 = vmul.f32 %v489, %v887
      %v925 = vmul.f32 %v493, %v887
      %v926 = vmul.f32 %v497, %v887
      %v927 = vmul.f32 %v501, %v887
      %v928 = vmul.f32 %v508, %v887
      %v929 = vmul.f32 %v512, %v887
      %v930 = vmul.f32 %v516, %v887
      %v931 = vmul.f32 %v520, %v887
      %v932 = vmul.f32 %v527, %v887
      %v933 = vmul.f32 %v531, %v887
      %v934 = vmul.f32 %v535, %v887
      %v935 = vmul.f32 %v539, %v887
      %v936 = vmul.f32 %v546, %v887
      %v937 = vmul.f32 %v550, %v887
      %v938 = vmul.f32 %v554, %v887
      %v939 = vmul.f32 %v558, %v887
      %v940 = vmul.f32 %v565, %v887
      %v941 = vmul.f32 %v569, %v887
      %v942 = vmul.f32 %v573, %v887
      %v943 = vmul.f32 %v577, %v887
      %v944 = vmul.f32 %v584, %v887
      %v945 = vmul.f32 %v588, %v887
      %v946 = vmul.f32 %v592, %v887
      %v947 = vmul.f32 %v596, %v887
      %v948 = vmul.f32 %v603, %v887
      %v949 = vmul.f32 %v607, %v887
      %v950 = vmul.f32 %v611, %v887
      %v951 = vmul.f32 %v615, %v887
      %v952 = vmul.f32 %v622, %v887
      %v953 = vmul.f32 %v626, %v887
      %v954 = vmul.f32 %v630, %v887
      %v955 = vmul.f32 %v634, %v887
      %v956 = vmul.f32 %v641, %v887
      %v957 = vmul.f32 %v645, %v887
      %v958 = vmul.f32 %v649, %v887
      %v959 = vmul.f32 %v653, %v887
      %v960 = vmul.f32 %v660, %v887
      %v961 = vmul.f32 %v664, %v887
      %v962 = vmul.f32 %v668, %v887
      %v963 = vmul.f32 %v672, %v887
      %v964 = vmul.f32 %v679, %v887
      %v965 = vmul.f32 %v683, %v887
      %v966 = vmul.f32 %v687, %v887
      %v967 = vmul.f32 %v691, %v887
      %v968 = vmul.f32 %v698, %v887
      %v969 = vmul.f32 %v702, %v887
      %v970 = vmul.f32 %v706, %v887
      %v971 = vmul.f32 %v710, %v887
      %v972 = vmul.f32 %v717, %v887
      %v973 = vmul.f32 %v721, %v887
      %v974 = vmul.f32 %v725, %v887
      %v975 = vmul.f32 %v729, %v887
      %v976 = vmul.f32 %v736, %v887
      %v977 = vmul.f32 %v740, %v887
      %v978 = vmul.f32 %v744, %v887
      %v979 = vmul.f32 %v748, %v887
      %v980 = vmul.f32 %v755, %v887
      %v981 = vmul.f32 %v759, %v887
      %v982 = vmul.f32 %v763, %v887
      %v983 = vmul.f32 %v767, %v887
      %v984 = vmul.f32 %v774, %v887
      %v985 = vmul.f32 %v778, %v887
      %v986 = vmul.f32 %v782, %v887
      %v987 = vmul.f32 %v786, %v887
      %v988 = vmul.f32 %v793, %v887
      %v989 = vmul.f32 %v797, %v887
      %v990 = vmul.f32 %v801, %v887
      %v991 = vmul.f32 %v805, %v887
      %v992 = vmul.f32 %v812, %v887
      %v993 = vmul.f32 %v816, %v887
      %v994 = vmul.f32 %v820, %v887
      %v995 = vmul.f32 %v824, %v887
      %v996 = vmul.f32 %v831, %v887
      %v997 = vmul.f32 %v835, %v887
      %v998 = vmul.f32 %v839, %v887
      %v999 = vmul.f32 %v843, %v887
      %v1000 = vadd.f32 %v888, 0.0
      %v1001 = vadd.f32 %v889, 0.0
      %v1002 = vadd.f32 %v890, 0.0
      %v1003 = vadd.f32 %v891, 0.0
      %v1004 = vadd.f32 %v892, 0.0
      %v1005 = vadd.f32 %v893, 0.0
      %v1006 = vadd.f32 %v894, 0.0
      %v1007 = vadd.f32 %v895, 0.0
      %v1008 = vadd.f32 %v896, 0.0
      %v1009 = vadd.f32 %v897, 0.0
      %v1010 = vadd.f32 %v898, 0.0
      %v1011 = vadd.f32 %v899, 0.0
      %v1012 = vadd.f32 %v900, 0.0
      %v1013 = vadd.f32 %v901, 0.0
      %v1014 = vadd.f32 %v902, 0.0
      %v1015 = vadd.f32 %v903, 0.0
      %v1016 = vadd.f32 %v904, 0.0
      %v1017 = vadd.f32 %v905, 0.0
      %v1018 = vadd.f32 %v906, 0.0
      %v1019 = vadd.f32 %v907, 0.0
      %v1020 = vadd.f32 %v908, 0.0
      %v1021 = vadd.f32 %v909, 0.0
      %v1022 = vadd.f32 %v910, 0.0
      %v1023 = vadd.f32 %v911, 0.0
      %v1024 = vadd.f32 %v912, 0.0
      %v1025 = vadd.f32 %v913, 0.0
      %v1026 = vadd.f32 %v914, 0.0
      %v1027 = vadd.f32 %v915, 0.0
      %v1028 = vadd.f32 %v916, 0.0
      %v1029 = vadd.f32 %v917, 0.0
      %v1030 = vadd.f32 %v918, 0.0
      %v1031 = vadd.f32 %v919, 0.0
      %v1032 = vadd.f32 %v920, 0.0
      %v1033 = vadd.f32 %v921, 0.0
      %v1034 = vadd.f32 %v922, 0.0
      %v1035 = vadd.f32 %v923, 0.0
      %v1036 = vadd.f32 %v924, 0.0
      %v1037 = vadd.f32 %v925, 0.0
      %v1038 = vadd.f32 %v926, 0.0
      %v1039 = vadd.f32 %v927, 0.0
      %v1040 = vadd.f32 %v928, 0.0
      %v1041 = vadd.f32 %v929, 0.0
      %v1042 = vadd.f32 %v930, 0.0
      %v1043 = vadd.f32 %v931, 0.0
      %v1044 = vadd.f32 %v932, 0.0
      %v1045 = vadd.f32 %v933, 0.0
      %v1046 = vadd.f32 %v934, 0.0
      %v1047 = vadd.f32 %v935, 0.0
      %v1048 = vadd.f32 %v936, 0.0
      %v1049 = vadd.f32 %v937, 0.0
      %v1050 = vadd.f32 %v938, 0.0
      %v1051 = vadd.f32 %v939, 0.0
      %v1052 = vadd.f32 %v940, 0.0
      %v1053 = vadd.f32 %v941, 0.0
      %v1054 = vadd.f32 %v942, 0.0
      %v1055 = vadd.f32 %v943, 0.0
      %v1056 = vadd.f32 %v944, 0.0
      %v1057 = vadd.f32 %v945, 0.0
      %v1058 = vadd.f32 %v946, 0.0
      %v1059 = vadd.f32 %v947, 0.0
      %v1060 = vadd.f32 %v948, 0.0
      %v1061 = vadd.f32 %v949, 0.0
      %v1062 = vadd.f32 %v950, 0.0
      %v1063 = vadd.f32 %v951, 0.0
      %v1064 = vadd.f32 %v952, 0.0
      %v1065 = vadd.f32 %v953, 0.0
      %v1066 = vadd.f32 %v954, 0.0
      %v1067 = vadd.f32 %v955, 0.0
      %v1068 = vadd.f32 %v956, 0.0
      %v1069 = vadd.f32 %v957, 0.0
      %v1070 = vadd.f32 %v958, 0.0
      %v1071 = vadd.f32 %v959, 0.0
      %v1072 = vadd.f32 %v960, 0.0
      %v1073 = vadd.f32 %v961, 0.0
      %v1074 = vadd.f32 %v962, 0.0
      %v1075 = vadd.f32 %v963, 0.0
      %v1076 = vadd.f32 %v964, 0.0
      %v1077 = vadd.f32 %v965, 0.0
      %v1078 = vadd.f32 %v966, 0.0
      %v1079 = vadd.f32 %v967, 0.0
      %v1080 = vadd.f32 %v968, 0.0
      %v1081 = vadd.f32 %v969, 0.0
      %v1082 = vadd.f32 %v970, 0.0
      %v1083 = vadd.f32 %v971, 0.0
      %v1084 = vadd.f32 %v972, 0.0
      %v1085 = vadd.f32 %v973, 0.0
      %v1086 = vadd.f32 %v974, 0.0
      %v1087 = vadd.f32 %v975, 0.0
      %v1088 = vadd.f32 %v976, 0.0
      %v1089 = vadd.f32 %v977, 0.0
      %v1090 = vadd.f32 %v978, 0.0
      %v1091 = vadd.f32 %v979, 0.0
      %v1092 = vadd.f32 %v980, 0.0
      %v1093 = vadd.f32 %v981, 0.0
      %v1094 = vadd.f32 %v982, 0.0
      %v1095 = vadd.f32 %v983, 0.0
      %v1096 = vadd.f32 %v984, 0.0
      %v1097 = vadd.f32 %v985, 0.0
      %v1098 = vadd.f32 %v986, 0.0
      %v1099 = vadd.f32 %v987, 0.0
      %v1100 = vadd.f32 %v988, 0.0
      %v1101 = vadd.f32 %v989, 0.0
      %v1102 = vadd.f32 %v990, 0.0
      %v1103 = vadd.f32 %v991, 0.0
      %v1104 = vadd.f32 %v992, 0.0
      %v1105 = vadd.f32 %v993, 0.0
      %v1106 = vadd.f32 %v994, 0.0
      %v1107 = vadd.f32 %v995, 0.0
      %v1108 = vadd.f32 %v996, 0.0
      %v1109 = vadd.f32 %v997, 0.0
      %v1110 = vadd.f32 %v998, 0.0
      %v1111 = vadd.f32 %v999, 0.0
      %v1112 = vlaneseq
      %v1113 = vshrl.u32 %v1112, 7
      %v1114 = vsub.s32 3, %v1113
      %v1115 = vrot.slane %v882, %v1114
      %v1116 = vmul.f32 %v337, %v1115
      %v1117 = vmul.f32 %v341, %v1115
      %v1118 = vmul.f32 %v345, %v1115
      %v1119 = vmul.f32 %v349, %v1115
      %v1120 = vmul.f32 %v356, %v1115
      %v1121 = vmul.f32 %v360, %v1115
      %v1122 = vmul.f32 %v364, %v1115
      %v1123 = vmul.f32 %v368, %v1115
      %v1124 = vmul.f32 %v375, %v1115
      %v1125 = vmul.f32 %v379, %v1115
      %v1126 = vmul.f32 %v383, %v1115
      %v1127 = vmul.f32 %v387, %v1115
      %v1128 = vmul.f32 %v394, %v1115
      %v1129 = vmul.f32 %v398, %v1115
      %v1130 = vmul.f32 %v402, %v1115
      %v1131 = vmul.f32 %v406, %v1115
      %v1132 = vmul.f32 %v413, %v1115
      %v1133 = vmul.f32 %v417, %v1115
      %v1134 = vmul.f32 %v421, %v1115
      %v1135 = vmul.f32 %v425, %v1115
      %v1136 = vmul.f32 %v432, %v1115
      %v1137 = vmul.f32 %v436, %v1115
      %v1138 = vmul.f32 %v440, %v1115
      %v1139 = vmul.f32 %v444, %v1115
      %v1140 = vmul.f32 %v451, %v1115
      %v1141 = vmul.f32 %v455, %v1115
      %v1142 = vmul.f32 %v459, %v1115
      %v1143 = vmul.f32 %v463, %v1115
      %v1144 = vmul.f32 %v470, %v1115
      %v1145 = vmul.f32 %v474, %v1115
      %v1146 = vmul.f32 %v478, %v1115
      %v1147 = vmul.f32 %v482, %v1115
      %v1148 = vmul.f32 %v489, %v1115
      %v1149 = vmul.f32 %v493, %v1115
      %v1150 = vmul.f32 %v497, %v1115
      %v1151 = vmul.f32 %v501, %v1115
      %v1152 = vmul.f32 %v508, %v1115
      %v1153 = vmul.f32 %v512, %v1115
      %v1154 = vmul.f32 %v516, %v1115
      %v1155 = vmul.f32 %v520, %v1115
      %v1156 = vmul.f32 %v527, %v1115
      %v1157 = vmul.f32 %v531, %v1115
      %v1158 = vmul.f32 %v535, %v1115
      %v1159 = vmul.f32 %v539, %v1115
      %v1160 = vmul.f32 %v546, %v1115
      %v1161 = vmul.f32 %v550, %v1115
      %v1162 = vmul.f32 %v554, %v1115
      %v1163 = vmul.f32 %v558, %v1115
      %v1164 = vmul.f32 %v565, %v1115
      %v1165 = vmul.f32 %v569, %v1115
      %v1166 = vmul.f32 %v573, %v1115
      %v1167 = vmul.f32 %v577, %v1115
      %v1168 = vmul.f32 %v584, %v1115
      %v1169 = vmul.f32 %v588, %v1115
      %v1170 = vmul.f32 %v592, %v1115
      %v1171 = vmul.f32 %v596, %v1115
      %v1172 = vmul.f32 %v603, %v1115
      %v1173 = vmul.f32 %v607, %v1115
      %v1174 = vmul.f32 %v611, %v1115
      %v1175 = vmul.f32 %v615, %v1115
      %v1176 = vmul.f32 %v622, %v1115
      %v1177 = vmul.f32 %v626, %v1115
      %v1178 = vmul.f32 %v630, %v1115
      %v1179 = vmul.f32 %v634, %v1115
      %v1180 = vmul.f32 %v641, %v1115
      %v1181 = vmul.f32 %v645, %v1115
      %v1182 = vmul.f32 %v649, %v1115
      %v1183 = vmul.f32 %v653, %v1115
      %v1184 = vmul.f32 %v660, %v1115
      %v1185 = vmul.f32 %v664, %v1115
      %v1186 = vmul.f32 %v668, %v1115
      %v1187 = vmul.f32 %v672, %v1115
      %v1188 = vmul.f32 %v679, %v1115
      %v1189 = vmul.f32 %v683, %v1115
      %v1190 = vmul.f32 %v687, %v1115
      %v1191 = vmul.f32 %v691, %v1115
      %v1192 = vmul.f32 %v698, %v1115
      %v1193 = vmul.f32 %v702, %v1115
      %v1194 = vmul.f32 %v706, %v1115
      %v1195 = vmul.f32 %v710, %v1115
      %v1196 = vmul.f32 %v717, %v1115
      %v1197 = vmul.f32 %v721, %v1115
      %v1198 = vmul.f32 %v725, %v1115
      %v1199 = vmul.f32 %v729, %v1115
      %v1200 = vmul.f32 %v736, %v1115
      %v1201 = vmul.f32 %v740, %v1115
      %v1202 = vmul.f32 %v744, %v1115
      %v1203 = vmul.f32 %v748, %v1115
      %v1204 = vmul.f32 %v755, %v1115
      %v1205 = vmul.f32 %v759, %v1115
      %v1206 = vmul.f32 %v763, %v1115
      %v1207 = vmul.f32 %v767, %v1115
      %v1208 = vmul.f32 %v774, %v1115
      %v1209 = vmul.f32 %v778, %v1115
      %v1210 = vmul.f32 %v782, %v1115
      %v1211 = vmul.f32 %v786, %v1115
      %v1212 = vmul.f32 %v793, %v1115
      %v1213 = vmul.f32 %v797, %v1115
      %v1214 = vmul.f32 %v801, %v1115
      %v1215 = vmul.f32 %v805, %v1115
      %v1216 = vmul.f32 %v812, %v1115
      %v1217 = vmul.f32 %v816, %v1115
      %v1218 = vmul.f32 %v820, %v1115
      %v1219 = vmul.f32 %v824, %v1115
      %v1220 = vmul.f32 %v831, %v1115
      %v1221 = vmul.f32 %v835, %v1115
      %v1222 = vmul.f32 %v839, %v1115
      %v1223 = vmul.f32 %v843, %v1115
      %v1224 = vmul.f32 %v850, %v1115
      %v1225 = vmul.f32 %v854, %v1115
      %v1226 = vmul.f32 %v858, %v1115
      %v1227 = vmul.f32 %v862, %v1115
      %v1228 = vadd.f32 %v1000, %v1116
      %v1229 = vadd.f32 %v1001, %v1117
      %v1230 = vadd.f32 %v1002, %v1118
      %v1231 = vadd.f32 %v1003, %v1119
      %v1232 = vadd.f32 %v1004, %v1120
      %v1233 = vadd.f32 %v1005, %v1121
      %v1234 = vadd.f32 %v1006, %v1122
      %v1235 = vadd.f32 %v1007, %v1123
      %v1236 = vadd.f32 %v1008, %v1124
      %v1237 = vadd.f32 %v1009, %v1125
      %v1238 = vadd.f32 %v1010, %v1126
      %v1239 = vadd.f32 %v1011, %v1127
      %v1240 = vadd.f32 %v1012, %v1128
      %v1241 = vadd.f32 %v1013, %v1129
      %v1242 = vadd.f32 %v1014, %v1130
      %v1243 = vadd.f32 %v1015, %v1131
      %v1244 = vadd.f32 %v1016, %v1132
      %v1245 = vadd.f32 %v1017, %v1133
      %v1246 = vadd.f32 %v1018, %v1134
      %v1247 = vadd.f32 %v1019, %v1135
      %v1248 = vadd.f32 %v1020, %v1136
      %v1249 = vadd.f32 %v1021, %v1137
      %v1250 = vadd.f32 %v1022, %v1138
      %v1251 = vadd.f32 %v1023, %v1139
      %v1252 = vadd.f32 %v1024, %v1140
      %v1253 = vadd.f32 %v1025, %v1141
      %v1254 = vadd.f32 %v1026, %v1142
      %v1255 = vadd.f32 %v1027, %v1143
      %v1256 = vadd.f32 %v1028, %v1144
      %v1257 = vadd.f32 %v1029, %v1145
      %v1258 = vadd.f32 %v1030, %v1146
      %v1259 = vadd.f32 %v1031, %v1147
      %v1260 = vadd.f32 %v1032, %v1148
      %v1261 = vadd.f32 %v1033, %v1149
      %v1262 = vadd.f32 %v1034, %v1150
      %v1263 = vadd.f32 %v1035, %v1151
      %v1264 = vadd.f32 %v1036, %v1152
      %v1265 = vadd.f32 %v1037, %v1153
      %v1266 = vadd.f32 %v1038, %v1154
      %v1267 = vadd.f32 %v1039, %v1155
      %v1268 = vadd.f32 %v1040, %v1156
      %v1269 = vadd.f32 %v1041, %v1157
      %v1270 = vadd.f32 %v1042, %v1158
      %v1271 = vadd.f32 %v1043, %v1159
      %v1272 = vadd.f32 %v1044, %v1160
      %v1273 = vadd.f32 %v1045, %v1161
      %v1274 = vadd.f32 %v1046, %v1162
      %v1275 = vadd.f32 %v1047, %v1163
      %v1276 = vadd.f32 %v1048, %v1164
      %v1277 = vadd.f32 %v1049, %v1165
      %v1278 = vadd.f32 %v1050, %v1166
      %v1279 = vadd.f32 %v1051, %v1167
      %v1280 = vadd.f32 %v1052, %v1168
      %v1281 = vadd.f32 %v1053, %v1169
      %v1282 = vadd.f32 %v1054, %v1170
      %v1283 = vadd.f32 %v1055, %v1171
      %v1284 = vadd.f32 %v1056, %v1172
      %v1285 = vadd.f32 %v1057, %v1173
      %v1286 = vadd.f32 %v1058, %v1174
      %v1287 = vadd.f32 %v1059, %v1175
      %v1288 = vadd.f32 %v1060, %v1176
      %v1289 = vadd.f32 %v1061, %v1177
      %v1290 = vadd.f32 %v1062, %v1178
      %v1291 = vadd.f32 %v1063, %v1179
      %v1292 = vadd.f32 %v1064, %v1180
      %v1293 = vadd.f32 %v1065, %v1181
      %v1294 = vadd.f32 %v1066, %v1182
      %v1295 = vadd.f32 %v1067, %v1183
      %v1296 = vadd.f32 %v1068, %v1184
      %v1297 = vadd.f32 %v1069, %v1185
      %v1298 = vadd.f32 %v1070, %v1186
      %v1299 = vadd.f32 %v1071, %v1187
      %v1300 = vadd.f32 %v1072, %v1188
      %v1301 = vadd.f32 %v1073, %v1189
      %v1302 = vadd.f32 %v1074, %v1190
      %v1303 = vadd.f32 %v1075, %v1191
      %v1304 = vadd.f32 %v1076, %v1192
      %v1305 = vadd.f32 %v1077, %v1193
      %v1306 = vadd.f32 %v1078, %v1194
      %v1307 = vadd.f32 %v1079, %v1195
      %v1308 = vadd.f32 %v1080, %v1196
      %v1309 = vadd.f32 %v1081, %v1197
      %v1310 = vadd.f32 %v1082, %v1198
      %v1311 = vadd.f32 %v1083, %v1199
      %v1312 = vadd.f32 %v1084, %v1200
      %v1313 = vadd.f32 %v1085, %v1201
      %v1314 = vadd.f32 %v1086, %v1202
      %v1315 = vadd.f32 %v1087, %v1203
      %v1316 = vadd.f32 %v1088, %v1204
      %v1317 = vadd.f32 %v1089, %v1205
      %v1318 = vadd.f32 %v1090, %v1206
      %v1319 = vadd.f32 %v1091, %v1207
      %v1320 = vadd.f32 %v1092, %v1208
      %v1321 = vadd.f32 %v1093, %v1209
      %v1322 = vadd.f32 %v1094, %v1210
      %v1323 = vadd.f32 %v1095, %v1211
      %v1324 = vadd.f32 %v1096, %v1212
      %v1325 = vadd.f32 %v1097, %v1213
      %v1326 = vadd.f32 %v1098, %v1214
      %v1327 = vadd.f32 %v1099, %v1215
      %v1328 = vadd.f32 %v1100, %v1216
      %v1329 = vadd.f32 %v1101, %v1217
      %v1330 = vadd.f32 %v1102, %v1218
      %v1331 = vadd.f32 %v1103, %v1219
      %v1332 = vadd.f32 %v1104, %v1220
      %v1333 = vadd.f32 %v1105, %v1221
      %v1334 = vadd.f32 %v1106, %v1222
      %v1335 = vadd.f32 %v1107, %v1223
      %v1336 = vadd.f32 %v1108, %v1224
      %v1337 = vadd.f32 %v1109, %v1225
      %v1338 = vadd.f32 %v1110, %v1226
      %v1339 = vadd.f32 %v1111, %v1227
      %v1340 = vlaneseq
      %v1341 = vshrl.u32 %v1340, 7
      %v1342 = vsub.s32 6, %v1341
      %v1343 = vrot.slane %v882, %v1342
      %v1344 = vmul.f32 %v356, %v1343
      %v1345 = vmul.f32 %v360, %v1343
      %v1346 = vmul.f32 %v364, %v1343
      %v1347 = vmul.f32 %v368, %v1343
      %v1348 = vmul.f32 %v375, %v1343
      %v1349 = vmul.f32 %v379, %v1343
      %v1350 = vmul.f32 %v383, %v1343
      %v1351 = vmul.f32 %v387, %v1343
      %v1352 = vmul.f32 %v394, %v1343
      %v1353 = vmul.f32 %v398, %v1343
      %v1354 = vmul.f32 %v402, %v1343
      %v1355 = vmul.f32 %v406, %v1343
      %v1356 = vmul.f32 %v413, %v1343
      %v1357 = vmul.f32 %v417, %v1343
      %v1358 = vmul.f32 %v421, %v1343
      %v1359 = vmul.f32 %v425, %v1343
      %v1360 = vmul.f32 %v432, %v1343
      %v1361 = vmul.f32 %v436, %v1343
      %v1362 = vmul.f32 %v440, %v1343
      %v1363 = vmul.f32 %v444, %v1343
      %v1364 = vmul.f32 %v451, %v1343
      %v1365 = vmul.f32 %v455, %v1343
      %v1366 = vmul.f32 %v459, %v1343
      %v1367 = vmul.f32 %v463, %v1343
      %v1368 = vmul.f32 %v470, %v1343
      %v1369 = vmul.f32 %v474, %v1343
      %v1370 = vmul.f32 %v478, %v1343
      %v1371 = vmul.f32 %v482, %v1343
      %v1372 = vmul.f32 %v489, %v1343
      %v1373 = vmul.f32 %v493, %v1343
      %v1374 = vmul.f32 %v497, %v1343
      %v1375 = vmul.f32 %v501, %v1343
      %v1376 = vmul.f32 %v508, %v1343
      %v1377 = vmul.f32 %v512, %v1343
      %v1378 = vmul.f32 %v516, %v1343
      %v1379 = vmul.f32 %v520, %v1343
      %v1380 = vmul.f32 %v527, %v1343
      %v1381 = vmul.f32 %v531, %v1343
      %v1382 = vmul.f32 %v535, %v1343
      %v1383 = vmul.f32 %v539, %v1343
      %v1384 = vmul.f32 %v546, %v1343
      %v1385 = vmul.f32 %v550, %v1343
      %v1386 = vmul.f32 %v554, %v1343
      %v1387 = vmul.f32 %v558, %v1343
      %v1388 = vmul.f32 %v565, %v1343
      %v1389 = vmul.f32 %v569, %v1343
      %v1390 = vmul.f32 %v573, %v1343
      %v1391 = vmul.f32 %v577, %v1343
      %v1392 = vmul.f32 %v584, %v1343
      %v1393 = vmul.f32 %v588, %v1343
      %v1394 = vmul.f32 %v592, %v1343
      %v1395 = vmul.f32 %v596, %v1343
      %v1396 = vmul.f32 %v603, %v1343
      %v1397 = vmul.f32 %v607, %v1343
      %v1398 = vmul.f32 %v611, %v1343
      %v1399 = vmul.f32 %v615, %v1343
      %v1400 = vmul.f32 %v622, %v1343
      %v1401 = vmul.f32 %v626, %v1343
      %v1402 = vmul.f32 %v630, %v1343
      %v1403 = vmul.f32 %v634, %v1343
      %v1404 = vmul.f32 %v641, %v1343
      %v1405 = vmul.f32 %v645, %v1343
      %v1406 = vmul.f32 %v649, %v1343
      %v1407 = vmul.f32 %v653, %v1343
      %v1408 = vmul.f32 %v660, %v1343
      %v1409 = vmul.f32 %v664, %v1343
      %v1410 = vmul.f32 %v668, %v1343
      %v1411 = vmul.f32 %v672, %v1343
      %v1412 = vmul.f32 %v679, %v1343
      %v1413 = vmul.f32 %v683, %v1343
      %v1414 = vmul.f32 %v687, %v1343
      %v1415 = vmul.f32 %v691, %v1343
      %v1416 = vmul.f32 %v698, %v1343
      %v1417 = vmul.f32 %v702, %v1343
      %v1418 = vmul.f32 %v706, %v1343
      %v1419 = vmul.f32 %v710, %v1343
      %v1420 = vmul.f32 %v717, %v1343
      %v1421 = vmul.f32 %v721, %v1343
      %v1422 = vmul.f32 %v725, %v1343
      %v1423 = vmul.f32 %v729, %v1343
      %v1424 = vmul.f32 %v736, %v1343
      %v1425 = vmul.f32 %v740, %v1343
      %v1426 = vmul.f32 %v744, %v1343
      %v1427 = vmul.f32 %v748, %v1343
      %v1428 = vmul.f32 %v755, %v1343
      %v1429 = vmul.f32 %v759, %v1343
      %v1430 = vmul.f32 %v763, %v1343
      %v1431 = vmul.f32 %v767, %v1343
      %v1432 = vmul.f32 %v774, %v1343
      %v1433 = vmul.f32 %v778, %v1343
      %v1434 = vmul.f32 %v782, %v1343
      %v1435 = vmul.f32 %v786, %v1343
      %v1436 = vmul.f32 %v793, %v1343
      %v1437 = vmul.f32 %v797, %v1343
      %v1438 = vmul.f32 %v801, %v1343
      %v1439 = vmul.f32 %v805, %v1343
      %v1440 = vmul.f32 %v812, %v1343
      %v1441 = vmul.f32 %v816, %v1343
      %v1442 = vmul.f32 %v820, %v1343
      %v1443 = vmul.f32 %v824, %v1343
      %v1444 = vmul.f32 %v831, %v1343
      %v1445 = vmul.f32 %v835, %v1343
      %v1446 = vmul.f32 %v839, %v1343
      %v1447 = vmul.f32 %v843, %v1343
      %v1448 = vmul.f32 %v850, %v1343
      %v1449 = vmul.f32 %v854, %v1343
      %v1450 = vmul.f32 %v858, %v1343
      %v1451 = vmul.f32 %v862, %v1343
      %v1452 = vmul.f32 %v869, %v1343
      %v1453 = vmul.f32 %v873, %v1343
      %v1454 = vmul.f32 %v877, %v1343
      %v1455 = vmul.f32 %v881, %v1343
      %v1456 = vadd.f32 %v1228, %v1344
      %v1457 = vadd.f32 %v1229, %v1345
      %v1458 = vadd.f32 %v1230, %v1346
      %v1459 = vadd.f32 %v1231, %v1347
      %v1460 = vadd.f32 %v1232, %v1348
      %v1461 = vadd.f32 %v1233, %v1349
      %v1462 = vadd.f32 %v1234, %v1350
      %v1463 = vadd.f32 %v1235, %v1351
      %v1464 = vadd.f32 %v1236, %v1352
      %v1465 = vadd.f32 %v1237, %v1353
      %v1466 = vadd.f32 %v1238, %v1354
      %v1467 = vadd.f32 %v1239, %v1355
      %v1468 = vadd.f32 %v1240, %v1356
      %v1469 = vadd.f32 %v1241, %v1357
      %v1470 = vadd.f32 %v1242, %v1358
      %v1471 = vadd.f32 %v1243, %v1359
      %v1472 = vadd.f32 %v1244, %v1360
      %v1473 = vadd.f32 %v1245, %v1361
      %v1474 = vadd.f32 %v1246, %v1362
      %v1475 = vadd.f32 %v1247, %v1363
      %v1476 = vadd.f32 %v1248, %v1364
      %v1477 = vadd.f32 %v1249, %v1365
      %v1478 = vadd.f32 %v1250, %v1366
      %v1479 = vadd.f32 %v1251, %v1367
      %v1480 = vadd.f32 %v1252, %v1368
      %v1481 = vadd.f32 %v1253, %v1369
      %v1482 = vadd.f32 %v1254, %v1370
      %v1483 = vadd.f32 %v1255, %v1371
      %v1484 = vadd.f32 %v1256, %v1372
      %v1485 = vadd.f32 %v1257, %v1373
      %v1486 = vadd.f32 %v1258, %v1374
      %v1487 = vadd.f32 %v1259, %v1375
      %v1488 = vadd.f32 %v1260, %v1376
      %v1489 = vadd.f32 %v1261, %v1377
      %v1490 = vadd.f32 %v1262, %v1378
      %v1491 = vadd.f32 %v1263, %v1379
      %v1492 = vadd.f32 %v1264, %v1380
      %v1493 = vadd.f32 %v1265, %v1381
      %v1494 = vadd.f32 %v1266, %v1382
      %v1495 = vadd.f32 %v1267, %v1383
      %v1496 = vadd.f32 %v1268, %v1384
      %v1497 = vadd.f32 %v1269, %v1385
      %v1498 = vadd.f32 %v1270, %v1386
      %v1499 = vadd.f32 %v1271, %v1387
      %v1500 = vadd.f32 %v1272, %v1388
      %v1501 = vadd.f32 %v1273, %v1389
      %v1502 = vadd.f32 %v1274, %v1390
      %v1503 = vadd.f32 %v1275, %v1391
      %v1504 = vadd.f32 %v1276, %v1392
      %v1505 = vadd.f32 %v1277, %v1393
      %v1506 = vadd.f32 %v1278, %v1394
      %v1507 = vadd.f32 %v1279, %v1395
      %v1508 = vadd.f32 %v1280, %v1396
      %v1509 = vadd.f32 %v1281, %v1397
      %v1510 = vadd.f32 %v1282, %v1398
      %v1511 = vadd.f32 %v1283, %v1399
      %v1512 = vadd.f32 %v1284, %v1400
      %v1513 = vadd.f32 %v1285, %v1401
      %v1514 = vadd.f32 %v1286, %v1402
      %v1515 = vadd.f32 %v1287, %v1403
      %v1516 = vadd.f32 %v1288, %v1404
      %v1517 = vadd.f32 %v1289, %v1405
      %v1518 = vadd.f32 %v1290, %v1406
      %v1519 = vadd.f32 %v1291, %v1407
      %v1520 = vadd.f32 %v1292, %v1408
      %v1521 = vadd.f32 %v1293, %v1409
      %v1522 = vadd.f32 %v1294, %v1410
      %v1523 = vadd.f32 %v1295, %v1411
      %v1524 = vadd.f32 %v1296, %v1412
      %v1525 = vadd.f32 %v1297, %v1413
      %v1526 = vadd.f32 %v1298, %v1414
      %v1527 = vadd.f32 %v1299, %v1415
      %v1528 = vadd.f32 %v1300, %v1416
      %v1529 = vadd.f32 %v1301, %v1417
      %v1530 = vadd.f32 %v1302, %v1418
      %v1531 = vadd.f32 %v1303, %v1419
      %v1532 = vadd.f32 %v1304, %v1420
      %v1533 = vadd.f32 %v1305, %v1421
      %v1534 = vadd.f32 %v1306, %v1422
      %v1535 = vadd.f32 %v1307, %v1423
      %v1536 = vadd.f32 %v1308, %v1424
      %v1537 = vadd.f32 %v1309, %v1425
      %v1538 = vadd.f32 %v1310, %v1426
      %v1539 = vadd.f32 %v1311, %v1427
      %v1540 = vadd.f32 %v1312, %v1428
      %v1541 = vadd.f32 %v1313, %v1429
      %v1542 = vadd.f32 %v1314, %v1430
      %v1543 = vadd.f32 %v1315, %v1431
      %v1544 = vadd.f32 %v1316, %v1432
      %v1545 = vadd.f32 %v1317, %v1433
      %v1546 = vadd.f32 %v1318, %v1434
      %v1547 = vadd.f32 %v1319, %v1435
      %v1548 = vadd.f32 %v1320, %v1436
      %v1549 = vadd.f32 %v1321, %v1437
      %v1550 = vadd.f32 %v1322, %v1438
      %v1551 = vadd.f32 %v1323, %v1439
      %v1552 = vadd.f32 %v1324, %v1440
      %v1553 = vadd.f32 %v1325, %v1441
      %v1554 = vadd.f32 %v1326, %v1442
      %v1555 = vadd.f32 %v1327, %v1443
      %v1556 = vadd.f32 %v1328, %v1444
      %v1557 = vadd.f32 %v1329, %v1445
      %v1558 = vadd.f32 %v1330, %v1446
      %v1559 = vadd.f32 %v1331, %v1447
      %v1560 = vadd.f32 %v1332, %v1448
      %v1561 = vadd.f32 %v1333, %v1449
      %v1562 = vadd.f32 %v1334, %v1450
      %v1563 = vadd.f32 %v1335, %v1451
      %v1564 = vadd.f32 %v1336, %v1452
      %v1565 = vadd.f32 %v1337, %v1453
      %v1566 = vadd.f32 %v1338, %v1454
      %v1567 = vadd.f32 %v1339, %v1455
      %v1568 = vlaneseq
      %v1569 = vshrl.u32 %v1568, 7
      %v1570 = vsub.s32 1, %v1569
      %v1571 = vrot.slane %v882, %v1570
      %v1572 = vmul.f32 %v318, %v1571
      %v1573 = vmul.f32 %v322, %v1571
      %v1574 = vmul.f32 %v326, %v1571
      %v1575 = vmul.f32 %v330, %v1571
      %v1576 = vmul.f32 %v337, %v1571
      %v1577 = vmul.f32 %v341, %v1571
      %v1578 = vmul.f32 %v345, %v1571
      %v1579 = vmul.f32 %v349, %v1571
      %v1580 = vmul.f32 %v356, %v1571
      %v1581 = vmul.f32 %v360, %v1571
      %v1582 = vmul.f32 %v364, %v1571
      %v1583 = vmul.f32 %v368, %v1571
      %v1584 = vmul.f32 %v375, %v1571
      %v1585 = vmul.f32 %v379, %v1571
      %v1586 = vmul.f32 %v383, %v1571
      %v1587 = vmul.f32 %v387, %v1571
      %v1588 = vmul.f32 %v394, %v1571
      %v1589 = vmul.f32 %v398, %v1571
      %v1590 = vmul.f32 %v402, %v1571
      %v1591 = vmul.f32 %v406, %v1571
      %v1592 = vmul.f32 %v413, %v1571
      %v1593 = vmul.f32 %v417, %v1571
      %v1594 = vmul.f32 %v421, %v1571
      %v1595 = vmul.f32 %v425, %v1571
      %v1596 = vmul.f32 %v432, %v1571
      %v1597 = vmul.f32 %v436, %v1571
      %v1598 = vmul.f32 %v440, %v1571
      %v1599 = vmul.f32 %v444, %v1571
      %v1600 = vmul.f32 %v451, %v1571
      %v1601 = vmul.f32 %v455, %v1571
      %v1602 = vmul.f32 %v459, %v1571
      %v1603 = vmul.f32 %v463, %v1571
      %v1604 = vmul.f32 %v470, %v1571
      %v1605 = vmul.f32 %v474, %v1571
      %v1606 = vmul.f32 %v478, %v1571
      %v1607 = vmul.f32 %v482, %v1571
      %v1608 = vmul.f32 %v489, %v1571
      %v1609 = vmul.f32 %v493, %v1571
      %v1610 = vmul.f32 %v497, %v1571
      %v1611 = vmul.f32 %v501, %v1571
      %v1612 = vmul.f32 %v508, %v1571
      %v1613 = vmul.f32 %v512, %v1571
      %v1614 = vmul.f32 %v516, %v1571
      %v1615 = vmul.f32 %v520, %v1571
      %v1616 = vmul.f32 %v527, %v1571
      %v1617 = vmul.f32 %v531, %v1571
      %v1618 = vmul.f32 %v535, %v1571
      %v1619 = vmul.f32 %v539, %v1571
      %v1620 = vmul.f32 %v546, %v1571
      %v1621 = vmul.f32 %v550, %v1571
      %v1622 = vmul.f32 %v554, %v1571
      %v1623 = vmul.f32 %v558, %v1571
      %v1624 = vmul.f32 %v565, %v1571
      %v1625 = vmul.f32 %v569, %v1571
      %v1626 = vmul.f32 %v573, %v1571
      %v1627 = vmul.f32 %v577, %v1571
      %v1628 = vmul.f32 %v584, %v1571
      %v1629 = vmul.f32 %v588, %v1571
      %v1630 = vmul.f32 %v592, %v1571
      %v1631 = vmul.f32 %v596, %v1571
      %v1632 = vmul.f32 %v603, %v1571
      %v1633 = vmul.f32 %v607, %v1571
      %v1634 = vmul.f32 %v611, %v1571
      %v1635 = vmul.f32 %v615, %v1571
      %v1636 = vmul.f32 %v622, %v1571
      %v1637 = vmul.f32 %v626, %v1571
      %v1638 = vmul.f32 %v630, %v1571
      %v1639 = vmul.f32 %v634, %v1571
      %v1640 = vmul.f32 %v641, %v1571
      %v1641 = vmul.f32 %v645, %v1571
      %v1642 = vmul.f32 %v649, %v1571
      %v1643 = vmul.f32 %v653, %v1571
      %v1644 = vmul.f32 %v660, %v1571
      %v1645 = vmul.f32 %v664, %v1571
      %v1646 = vmul.f32 %v668, %v1571
      %v1647 = vmul.f32 %v672, %v1571
      %v1648 = vmul.f32 %v679, %v1571
      %v1649 = vmul.f32 %v683, %v1571
      %v1650 = vmul.f32 %v687, %v1571
      %v1651 = vmul.f32 %v691, %v1571
      %v1652 = vmul.f32 %v698, %v1571
      %v1653 = vmul.f32 %v702, %v1571
      %v1654 = vmul.f32 %v706, %v1571
      %v1655 = vmul.f32 %v710, %v1571
      %v1656 = vmul.f32 %v717, %v1571
      %v1657 = vmul.f32 %v721, %v1571
      %v1658 = vmul.f32 %v725, %v1571
      %v1659 = vmul.f32 %v729, %v1571
      %v1660 = vmul.f32 %v736, %v1571
      %v1661 = vmul.f32 %v740, %v1571
      %v1662 = vmul.f32 %v744, %v1571
      %v1663 = vmul.f32 %v748, %v1571
      %v1664 = vmul.f32 %v755, %v1571
      %v1665 = vmul.f32 %v759, %v1571
      %v1666 = vmul.f32 %v763, %v1571
      %v1667 = vmul.f32 %v767, %v1571
      %v1668 = vmul.f32 %v774, %v1571
      %v1669 = vmul.f32 %v778, %v1571
      %v1670 = vmul.f32 %v782, %v1571
      %v1671 = vmul.f32 %v786, %v1571
      %v1672 = vmul.f32 %v793, %v1571
      %v1673 = vmul.f32 %v797, %v1571
      %v1674 = vmul.f32 %v801, %v1571
      %v1675 = vmul.f32 %v805, %v1571
      %v1676 = vmul.f32 %v812, %v1571
      %v1677 = vmul.f32 %v816, %v1571
      %v1678 = vmul.f32 %v820, %v1571
      %v1679 = vmul.f32 %v824, %v1571
      %v1680 = vmul.f32 %v831, %v1571
      %v1681 = vmul.f32 %v835, %v1571
      %v1682 = vmul.f32 %v839, %v1571
      %v1683 = vmul.f32 %v843, %v1571
      %vm1796 = vcmask 1046528
      %v1797 = vrot.slane %v1572, 1
      %v1798 = vrot.slane %v1573, 1
      %v1799 = vsel %vm1796, %v1797, %v1798
      %v1800 = vrot.slane %v1574, 1
      %v1801 = vsel %vm1796, %v1798, %v1800
      %v1802 = vrot.slane %v1575, 1
      %v1803 = vsel %vm1796, %v1800, %v1802
      %v1804 = vrot.slane %v1576, 1
      %v1805 = vrot.slane %v1577, 1
      %v1806 = vsel %vm1796, %v1804, %v1805
      %v1807 = vrot.slane %v1578, 1
      %v1808 = vsel %vm1796, %v1805, %v1807
      %v1809 = vrot.slane %v1579, 1
      %v1810 = vsel %vm1796, %v1807, %v1809
      %v1811 = vrot.slane %v1580, 1
      %v1812 = vrot.slane %v1581, 1
      %v1813 = vsel %vm1796, %v1811, %v1812
      %v1814 = vrot.slane %v1582, 1
      %v1815 = vsel %vm1796, %v1812, %v1814
      %v1816 = vrot.slane %v1583, 1
      %v1817 = vsel %vm1796, %v1814, %v1816
      %v1818 = vrot.slane %v1584, 1
      %v1819 = vrot.slane %v1585, 1
      %v1820 = vsel %vm1796, %v1818, %v1819
      %v1821 = vrot.slane %v1586, 1
      %v1822 = vsel %vm1796, %v1819, %v1821
      %v1823 = vrot.slane %v1587, 1
      %v1824 = vsel %vm1796, %v1821, %v1823
      %v1825 = vrot.slane %v1588, 1
      %v1826 = vrot.slane %v1589, 1
      %v1827 = vsel %vm1796, %v1825, %v1826
      %v1828 = vrot.slane %v1590, 1
      %v1829 = vsel %vm1796, %v1826, %v1828
      %v1830 = vrot.slane %v1591, 1
      %v1831 = vsel %vm1796, %v1828, %v1830
      %v1832 = vrot.slane %v1592, 1
      %v1833 = vrot.slane %v1593, 1
      %v1834 = vsel %vm1796, %v1832, %v1833
      %v1835 = vrot.slane %v1594, 1
      %v1836 = vsel %vm1796, %v1833, %v1835
      %v1837 = vrot.slane %v1595, 1
      %v1838 = vsel %vm1796, %v1835, %v1837
      %v1839 = vrot.slane %v1596, 1
      %v1840 = vrot.slane %v1597, 1
      %v1841 = vsel %vm1796, %v1839, %v1840
      %v1842 = vrot.slane %v1598, 1
      %v1843 = vsel %vm1796, %v1840, %v1842
      %v1844 = vrot.slane %v1599, 1
      %v1845 = vsel %vm1796, %v1842, %v1844
      %v1846 = vrot.slane %v1600, 1
      %v1847 = vrot.slane %v1601, 1
      %v1848 = vsel %vm1796, %v1846, %v1847
      %v1849 = vrot.slane %v1602, 1
      %v1850 = vsel %vm1796, %v1847, %v1849
      %v1851 = vrot.slane %v1603, 1
      %v1852 = vsel %vm1796, %v1849, %v1851
      %v1853 = vrot.slane %v1604, 1
      %v1854 = vrot.slane %v1605, 1
      %v1855 = vsel %vm1796, %v1853, %v1854
      %v1856 = vrot.slane %v1606, 1
      %v1857 = vsel %vm1796, %v1854, %v1856
      %v1858 = vrot.slane %v1607, 1
      %v1859 = vsel %vm1796, %v1856, %v1858
      %v1860 = vrot.slane %v1608, 1
      %v1861 = vrot.slane %v1609, 1
      %v1862 = vsel %vm1796, %v1860, %v1861
      %v1863 = vrot.slane %v1610, 1
      %v1864 = vsel %vm1796, %v1861, %v1863
      %v1865 = vrot.slane %v1611, 1
      %v1866 = vsel %vm1796, %v1863, %v1865
      %v1867 = vrot.slane %v1612, 1
      %v1868 = vrot.slane %v1613, 1
      %v1869 = vsel %vm1796, %v1867, %v1868
      %v1870 = vrot.slane %v1614, 1
      %v1871 = vsel %vm1796, %v1868, %v1870
      %v1872 = vrot.slane %v1615, 1
      %v1873 = vsel %vm1796, %v1870, %v1872
      %v1874 = vrot.slane %v1616, 1
      %v1875 = vrot.slane %v1617, 1
      %v1876 = vsel %vm1796, %v1874, %v1875
      %v1877 = vrot.slane %v1618, 1
      %v1878 = vsel %vm1796, %v1875, %v1877
      %v1879 = vrot.slane %v1619, 1
      %v1880 = vsel %vm1796, %v1877, %v1879
      %v1881 = vrot.slane %v1620, 1
      %v1882 = vrot.slane %v1621, 1
      %v1883 = vsel %vm1796, %v1881, %v1882
      %v1884 = vrot.slane %v1622, 1
      %v1885 = vsel %vm1796, %v1882, %v1884
      %v1886 = vrot.slane %v1623, 1
      %v1887 = vsel %vm1796, %v1884, %v1886
      %v1888 = vrot.slane %v1624, 1
      %v1889 = vrot.slane %v1625, 1
      %v1890 = vsel %vm1796, %v1888, %v1889
      %v1891 = vrot.slane %v1626, 1
      %v1892 = vsel %vm1796, %v1889, %v1891
      %v1893 = vrot.slane %v1627, 1
      %v1894 = vsel %vm1796, %v1891, %v1893
      %v1895 = vrot.slane %v1628, 1
      %v1896 = vrot.slane %v1629, 1
      %v1897 = vsel %vm1796, %v1895, %v1896
      %v1898 = vrot.slane %v1630, 1
      %v1899 = vsel %vm1796, %v1896, %v1898
      %v1900 = vrot.slane %v1631, 1
      %v1901 = vsel %vm1796, %v1898, %v1900
      %v1902 = vrot.slane %v1632, 1
      %v1903 = vrot.slane %v1633, 1
      %v1904 = vsel %vm1796, %v1902, %v1903
      %v1905 = vrot.slane %v1634, 1
      %v1906 = vsel %vm1796, %v1903, %v1905
      %v1907 = vrot.slane %v1635, 1
      %v1908 = vsel %vm1796, %v1905, %v1907
      %v1909 = vrot.slane %v1636, 1
      %v1910 = vrot.slane %v1637, 1
      %v1911 = vsel %vm1796, %v1909, %v1910
      %v1912 = vrot.slane %v1638, 1
      %v1913 = vsel %vm1796, %v1910, %v1912
      %v1914 = vrot.slane %v1639, 1
      %v1915 = vsel %vm1796, %v1912, %v1914
      %v1916 = vrot.slane %v1640, 1
      %v1917 = vrot.slane %v1641, 1
      %v1918 = vsel %vm1796, %v1916, %v1917
      %v1919 = vrot.slane %v1642, 1
      %v1920 = vsel %vm1796, %v1917, %v1919
      %v1921 = vrot.slane %v1643, 1
      %v1922 = vsel %vm1796, %v1919, %v1921
      %v1923 = vrot.slane %v1644, 1
      %v1924 = vrot.slane %v1645, 1
      %v1925 = vsel %vm1796, %v1923, %v1924
      %v1926 = vrot.slane %v1646, 1
      %v1927 = vsel %vm1796, %v1924, %v1926
      %v1928 = vrot.slane %v1647, 1
      %v1929 = vsel %vm1796, %v1926, %v1928
      %v1930 = vrot.slane %v1648, 1
      %v1931 = vrot.slane %v1649, 1
      %v1932 = vsel %vm1796, %v1930, %v1931
      %v1933 = vrot.slane %v1650, 1
      %v1934 = vsel %vm1796, %v1931, %v1933
      %v1935 = vrot.slane %v1651, 1
      %v1936 = vsel %vm1796, %v1933, %v1935
      %v1937 = vrot.slane %v1652, 1
      %v1938 = vrot.slane %v1653, 1
      %v1939 = vsel %vm1796, %v1937, %v1938
      %v1940 = vrot.slane %v1654, 1
      %v1941 = vsel %vm1796, %v1938, %v1940
      %v1942 = vrot.slane %v1655, 1
      %v1943 = vsel %vm1796, %v1940, %v1942
      %v1944 = vrot.slane %v1656, 1
      %v1945 = vrot.slane %v1657, 1
      %v1946 = vsel %vm1796, %v1944, %v1945
      %v1947 = vrot.slane %v1658, 1
      %v1948 = vsel %vm1796, %v1945, %v1947
      %v1949 = vrot.slane %v1659, 1
      %v1950 = vsel %vm1796, %v1947, %v1949
      %v1951 = vrot.slane %v1660, 1
      %v1952 = vrot.slane %v1661, 1
      %v1953 = vsel %vm1796, %v1951, %v1952
      %v1954 = vrot.slane %v1662, 1
      %v1955 = vsel %vm1796, %v1952, %v1954
      %v1956 = vrot.slane %v1663, 1
      %v1957 = vsel %vm1796, %v1954, %v1956
      %v1958 = vrot.slane %v1664, 1
      %v1959 = vrot.slane %v1665, 1
      %v1960 = vsel %vm1796, %v1958, %v1959
      %v1961 = vrot.slane %v1666, 1
      %v1962 = vsel %vm1796, %v1959, %v1961
      %v1963 = vrot.slane %v1667, 1
      %v1964 = vsel %vm1796, %v1961, %v1963
      %v1965 = vrot.slane %v1668, 1
      %v1966 = vrot.slane %v1669, 1
      %v1967 = vsel %vm1796, %v1965, %v1966
      %v1968 = vrot.slane %v1670, 1
      %v1969 = vsel %vm1796, %v1966, %v1968
      %v1970 = vrot.slane %v1671, 1
      %v1971 = vsel %vm1796, %v1968, %v1970
      %v1972 = vrot.slane %v1672, 1
      %v1973 = vrot.slane %v1673, 1
      %v1974 = vsel %vm1796, %v1972, %v1973
      %v1975 = vrot.slane %v1674, 1
      %v1976 = vsel %vm1796, %v1973, %v1975
      %v1977 = vrot.slane %v1675, 1
      %v1978 = vsel %vm1796, %v1975, %v1977
      %v1979 = vrot.slane %v1676, 1
      %v1980 = vrot.slane %v1677, 1
      %v1981 = vsel %vm1796, %v1979, %v1980
      %v1982 = vrot.slane %v1678, 1
      %v1983 = vsel %vm1796, %v1980, %v1982
      %v1984 = vrot.slane %v1679, 1
      %v1985 = vsel %vm1796, %v1982, %v1984
      %v1986 = vrot.slane %v1680, 1
      %v1987 = vrot.slane %v1681, 1
      %v1988 = vsel %vm1796, %v1986, %v1987
      %v1989 = vrot.slane %v1682, 1
      %v1990 = vsel %vm1796, %v1987, %v1989
      %v1991 = vrot.slane %v1683, 1
      %v1992 = vsel %vm1796, %v1989, %v1991
      %v2105 = vadd.f32 %v1456, %v1799
      %v2106 = vadd.f32 %v1457, %v1801
      %v2107 = vadd.f32 %v1458, %v1803
      %v2108 = vadd.f32 %v1459, %v1802
      %v2109 = vadd.f32 %v1460, %v1806
      %v2110 = vadd.f32 %v1461, %v1808
      %v2111 = vadd.f32 %v1462, %v1810
      %v2112 = vadd.f32 %v1463, %v1809
      %v2113 = vadd.f32 %v1464, %v1813
      %v2114 = vadd.f32 %v1465, %v1815
      %v2115 = vadd.f32 %v1466, %v1817
      %v2116 = vadd.f32 %v1467, %v1816
      %v2117 = vadd.f32 %v1468, %v1820
      %v2118 = vadd.f32 %v1469, %v1822
      %v2119 = vadd.f32 %v1470, %v1824
      %v2120 = vadd.f32 %v1471, %v1823
      %v2121 = vadd.f32 %v1472, %v1827
      %v2122 = vadd.f32 %v1473, %v1829
      %v2123 = vadd.f32 %v1474, %v1831
      %v2124 = vadd.f32 %v1475, %v1830
      %v2125 = vadd.f32 %v1476, %v1834
      %v2126 = vadd.f32 %v1477, %v1836
      %v2127 = vadd.f32 %v1478, %v1838
      %v2128 = vadd.f32 %v1479, %v1837
      %v2129 = vadd.f32 %v1480, %v1841
      %v2130 = vadd.f32 %v1481, %v1843
      %v2131 = vadd.f32 %v1482, %v1845
      %v2132 = vadd.f32 %v1483, %v1844
      %v2133 = vadd.f32 %v1484, %v1848
      %v2134 = vadd.f32 %v1485, %v1850
      %v2135 = vadd.f32 %v1486, %v1852
      %v2136 = vadd.f32 %v1487, %v1851
      %v2137 = vadd.f32 %v1488, %v1855
      %v2138 = vadd.f32 %v1489, %v1857
      %v2139 = vadd.f32 %v1490, %v1859
      %v2140 = vadd.f32 %v1491, %v1858
      %v2141 = vadd.f32 %v1492, %v1862
      %v2142 = vadd.f32 %v1493, %v1864
      %v2143 = vadd.f32 %v1494, %v1866
      %v2144 = vadd.f32 %v1495, %v1865
      %v2145 = vadd.f32 %v1496, %v1869
      %v2146 = vadd.f32 %v1497, %v1871
      %v2147 = vadd.f32 %v1498, %v1873
      %v2148 = vadd.f32 %v1499, %v1872
      %v2149 = vadd.f32 %v1500, %v1876
      %v2150 = vadd.f32 %v1501, %v1878
      %v2151 = vadd.f32 %v1502, %v1880
      %v2152 = vadd.f32 %v1503, %v1879
      %v2153 = vadd.f32 %v1504, %v1883
      %v2154 = vadd.f32 %v1505, %v1885
      %v2155 = vadd.f32 %v1506, %v1887
      %v2156 = vadd.f32 %v1507, %v1886
      %v2157 = vadd.f32 %v1508, %v1890
      %v2158 = vadd.f32 %v1509, %v1892
      %v2159 = vadd.f32 %v1510, %v1894
      %v2160 = vadd.f32 %v1511, %v1893
      %v2161 = vadd.f32 %v1512, %v1897
      %v2162 = vadd.f32 %v1513, %v1899
      %v2163 = vadd.f32 %v1514, %v1901
      %v2164 = vadd.f32 %v1515, %v1900
      %v2165 = vadd.f32 %v1516, %v1904
      %v2166 = vadd.f32 %v1517, %v1906
      %v2167 = vadd.f32 %v1518, %v1908
      %v2168 = vadd.f32 %v1519, %v1907
      %v2169 = vadd.f32 %v1520, %v1911
      %v2170 = vadd.f32 %v1521, %v1913
      %v2171 = vadd.f32 %v1522, %v1915
      %v2172 = vadd.f32 %v1523, %v1914
      %v2173 = vadd.f32 %v1524, %v1918
      %v2174 = vadd.f32 %v1525, %v1920
      %v2175 = vadd.f32 %v1526, %v1922
      %v2176 = vadd.f32 %v1527, %v1921
      %v2177 = vadd.f32 %v1528, %v1925
      %v2178 = vadd.f32 %v1529, %v1927
      %v2179 = vadd.f32 %v1530, %v1929
      %v2180 = vadd.f32 %v1531, %v1928
      %v2181 = vadd.f32 %v1532, %v1932
      %v2182 = vadd.f32 %v1533, %v1934
      %v2183 = vadd.f32 %v1534, %v1936
      %v2184 = vadd.f32 %v1535, %v1935
      %v2185 = vadd.f32 %v1536, %v1939
      %v2186 = vadd.f32 %v1537, %v1941
      %v2187 = vadd.f32 %v1538, %v1943
      %v2188 = vadd.f32 %v1539, %v1942
      %v2189 = vadd.f32 %v1540, %v1946
      %v2190 = vadd.f32 %v1541, %v1948
      %v2191 = vadd.f32 %v1542, %v1950
      %v2192 = vadd.f32 %v1543, %v1949
      %v2193 = vadd.f32 %v1544, %v1953
      %v2194 = vadd.f32 %v1545, %v1955
      %v2195 = vadd.f32 %v1546, %v1957
      %v2196 = vadd.f32 %v1547, %v1956
      %v2197 = vadd.f32 %v1548, %v1960
      %v2198 = vadd.f32 %v1549, %v1962
      %v2199 = vadd.f32 %v1550, %v1964
      %v2200 = vadd.f32 %v1551, %v1963
      %v2201 = vadd.f32 %v1552, %v1967
      %v2202 = vadd.f32 %v1553, %v1969
      %v2203 = vadd.f32 %v1554, %v1971
      %v2204 = vadd.f32 %v1555, %v1970
      %v2205 = vadd.f32 %v1556, %v1974
      %v2206 = vadd.f32 %v1557, %v1976
      %v2207 = vadd.f32 %v1558, %v1978
      %v2208 = vadd.f32 %v1559, %v1977
      %v2209 = vadd.f32 %v1560, %v1981
      %v2210 = vadd.f32 %v1561, %v1983
      %v2211 = vadd.f32 %v1562, %v1985
      %v2212 = vadd.f32 %v1563, %v1984
      %v2213 = vadd.f32 %v1564, %v1988
      %v2214 = vadd.f32 %v1565, %v1990
      %v2215 = vadd.f32 %v1566, %v1992
      %v2216 = vadd.f32 %v1567, %v1991
      %v2217 = vlaneseq
      %v2218 = vshrl.u32 %v2217, 7
      %v2219 = vsub.s32 4, %v2218
      %v2220 = vrot.slane %v882, %v2219
      %v2221 = vmul.f32 %v337, %v2220
      %v2222 = vmul.f32 %v341, %v2220
      %v2223 = vmul.f32 %v345, %v2220
      %v2224 = vmul.f32 %v349, %v2220
      %v2225 = vmul.f32 %v356, %v2220
      %v2226 = vmul.f32 %v360, %v2220
      %v2227 = vmul.f32 %v364, %v2220
      %v2228 = vmul.f32 %v368, %v2220
      %v2229 = vmul.f32 %v375, %v2220
      %v2230 = vmul.f32 %v379, %v2220
      %v2231 = vmul.f32 %v383, %v2220
      %v2232 = vmul.f32 %v387, %v2220
      %v2233 = vmul.f32 %v394, %v2220
      %v2234 = vmul.f32 %v398, %v2220
      %v2235 = vmul.f32 %v402, %v2220
      %v2236 = vmul.f32 %v406, %v2220
      %v2237 = vmul.f32 %v413, %v2220
      %v2238 = vmul.f32 %v417, %v2220
      %v2239 = vmul.f32 %v421, %v2220
      %v2240 = vmul.f32 %v425, %v2220
      %v2241 = vmul.f32 %v432, %v2220
      %v2242 = vmul.f32 %v436, %v2220
      %v2243 = vmul.f32 %v440, %v2220
      %v2244 = vmul.f32 %v444, %v2220
      %v2245 = vmul.f32 %v451, %v2220
      %v2246 = vmul.f32 %v455, %v2220
      %v2247 = vmul.f32 %v459, %v2220
      %v2248 = vmul.f32 %v463, %v2220
      %v2249 = vmul.f32 %v470, %v2220
      %v2250 = vmul.f32 %v474, %v2220
      %v2251 = vmul.f32 %v478, %v2220
      %v2252 = vmul.f32 %v482, %v2220
      %v2253 = vmul.f32 %v489, %v2220
      %v2254 = vmul.f32 %v493, %v2220
      %v2255 = vmul.f32 %v497, %v2220
      %v2256 = vmul.f32 %v501, %v2220
      %v2257 = vmul.f32 %v508, %v2220
      %v2258 = vmul.f32 %v512, %v2220
      %v2259 = vmul.f32 %v516, %v2220
      %v2260 = vmul.f32 %v520, %v2220
      %v2261 = vmul.f32 %v527, %v2220
      %v2262 = vmul.f32 %v531, %v2220
      %v2263 = vmul.f32 %v535, %v2220
      %v2264 = vmul.f32 %v539, %v2220
      %v2265 = vmul.f32 %v546, %v2220
      %v2266 = vmul.f32 %v550, %v2220
      %v2267 = vmul.f32 %v554, %v2220
      %v2268 = vmul.f32 %v558, %v2220
      %v2269 = vmul.f32 %v565, %v2220
      %v2270 = vmul.f32 %v569, %v2220
      %v2271 = vmul.f32 %v573, %v2220
      %v2272 = vmul.f32 %v577, %v2220
      %v2273 = vmul.f32 %v584, %v2220
      %v2274 = vmul.f32 %v588, %v2220
      %v2275 = vmul.f32 %v592, %v2220
      %v2276 = vmul.f32 %v596, %v2220
      %v2277 = vmul.f32 %v603, %v2220
      %v2278 = vmul.f32 %v607, %v2220
      %v2279 = vmul.f32 %v611, %v2220
      %v2280 = vmul.f32 %v615, %v2220
      %v2281 = vmul.f32 %v622, %v2220
      %v2282 = vmul.f32 %v626, %v2220
      %v2283 = vmul.f32 %v630, %v2220
      %v2284 = vmul.f32 %v634, %v2220
      %v2285 = vmul.f32 %v641, %v2220
      %v2286 = vmul.f32 %v645, %v2220
      %v2287 = vmul.f32 %v649, %v2220
      %v2288 = vmul.f32 %v653, %v2220
      %v2289 = vmul.f32 %v660, %v2220
      %v2290 = vmul.f32 %v664, %v2220
      %v2291 = vmul.f32 %v668, %v2220
      %v2292 = vmul.f32 %v672, %v2220
      %v2293 = vmul.f32 %v679, %v2220
      %v2294 = vmul.f32 %v683, %v2220
      %v2295 = vmul.f32 %v687, %v2220
      %v2296 = vmul.f32 %v691, %v2220
      %v2297 = vmul.f32 %v698, %v2220
      %v2298 = vmul.f32 %v702, %v2220
      %v2299 = vmul.f32 %v706, %v2220
      %v2300 = vmul.f32 %v710, %v2220
      %v2301 = vmul.f32 %v717, %v2220
      %v2302 = vmul.f32 %v721, %v2220
      %v2303 = vmul.f32 %v725, %v2220
      %v2304 = vmul.f32 %v729, %v2220
      %v2305 = vmul.f32 %v736, %v2220
      %v2306 = vmul.f32 %v740, %v2220
      %v2307 = vmul.f32 %v744, %v2220
      %v2308 = vmul.f32 %v748, %v2220
      %v2309 = vmul.f32 %v755, %v2220
      %v2310 = vmul.f32 %v759, %v2220
      %v2311 = vmul.f32 %v763, %v2220
      %v2312 = vmul.f32 %v767, %v2220
      %v2313 = vmul.f32 %v774, %v2220
      %v2314 = vmul.f32 %v778, %v2220
      %v2315 = vmul.f32 %v782, %v2220
      %v2316 = vmul.f32 %v786, %v2220
      %v2317 = vmul.f32 %v793, %v2220
      %v2318 = vmul.f32 %v797, %v2220
      %v2319 = vmul.f32 %v801, %v2220
      %v2320 = vmul.f32 %v805, %v2220
      %v2321 = vmul.f32 %v812, %v2220
      %v2322 = vmul.f32 %v816, %v2220
      %v2323 = vmul.f32 %v820, %v2220
      %v2324 = vmul.f32 %v824, %v2220
      %v2325 = vmul.f32 %v831, %v2220
      %v2326 = vmul.f32 %v835, %v2220
      %v2327 = vmul.f32 %v839, %v2220
      %v2328 = vmul.f32 %v843, %v2220
      %v2329 = vmul.f32 %v850, %v2220
      %v2330 = vmul.f32 %v854, %v2220
      %v2331 = vmul.f32 %v858, %v2220
      %v2332 = vmul.f32 %v862, %v2220
      %v2445 = vrot.slane %v2221, 1
      %v2446 = vrot.slane %v2222, 1
      %v2447 = vsel %vm1796, %v2445, %v2446
      %v2448 = vrot.slane %v2223, 1
      %v2449 = vsel %vm1796, %v2446, %v2448
      %v2450 = vrot.slane %v2224, 1
      %v2451 = vsel %vm1796, %v2448, %v2450
      %v2452 = vrot.slane %v2225, 1
      %v2453 = vrot.slane %v2226, 1
      %v2454 = vsel %vm1796, %v2452, %v2453
      %v2455 = vrot.slane %v2227, 1
      %v2456 = vsel %vm1796, %v2453, %v2455
      %v2457 = vrot.slane %v2228, 1
      %v2458 = vsel %vm1796, %v2455, %v2457
      %v2459 = vrot.slane %v2229, 1
      %v2460 = vrot.slane %v2230, 1
      %v2461 = vsel %vm1796, %v2459, %v2460
      %v2462 = vrot.slane %v2231, 1
      %v2463 = vsel %vm1796, %v2460, %v2462
      %v2464 = vrot.slane %v2232, 1
      %v2465 = vsel %vm1796, %v2462, %v2464
      %v2466 = vrot.slane %v2233, 1
      %v2467 = vrot.slane %v2234, 1
      %v2468 = vsel %vm1796, %v2466, %v2467
      %v2469 = vrot.slane %v2235, 1
      %v2470 = vsel %vm1796, %v2467, %v2469
      %v2471 = vrot.slane %v2236, 1
      %v2472 = vsel %vm1796, %v2469, %v2471
      %v2473 = vrot.slane %v2237, 1
      %v2474 = vrot.slane %v2238, 1
      %v2475 = vsel %vm1796, %v2473, %v2474
      %v2476 = vrot.slane %v2239, 1
      %v2477 = vsel %vm1796, %v2474, %v2476
      %v2478 = vrot.slane %v2240, 1
      %v2479 = vsel %vm1796, %v2476, %v2478
      %v2480 = vrot.slane %v2241, 1
      %v2481 = vrot.slane %v2242, 1
      %v2482 = vsel %vm1796, %v2480, %v2481
      %v2483 = vrot.slane %v2243, 1
      %v2484 = vsel %vm1796, %v2481, %v2483
      %v2485 = vrot.slane %v2244, 1
      %v2486 = vsel %vm1796, %v2483, %v2485
      %v2487 = vrot.slane %v2245, 1
      %v2488 = vrot.slane %v2246, 1
      %v2489 = vsel %vm1796, %v2487, %v2488
      %v2490 = vrot.slane %v2247, 1
      %v2491 = vsel %vm1796, %v2488, %v2490
      %v2492 = vrot.slane %v2248, 1
      %v2493 = vsel %vm1796, %v2490, %v2492
      %v2494 = vrot.slane %v2249, 1
      %v2495 = vrot.slane %v2250, 1
      %v2496 = vsel %vm1796, %v2494, %v2495
      %v2497 = vrot.slane %v2251, 1
      %v2498 = vsel %vm1796, %v2495, %v2497
      %v2499 = vrot.slane %v2252, 1
      %v2500 = vsel %vm1796, %v2497, %v2499
      %v2501 = vrot.slane %v2253, 1
      %v2502 = vrot.slane %v2254, 1
      %v2503 = vsel %vm1796, %v2501, %v2502
      %v2504 = vrot.slane %v2255, 1
      %v2505 = vsel %vm1796, %v2502, %v2504
      %v2506 = vrot.slane %v2256, 1
      %v2507 = vsel %vm1796, %v2504, %v2506
      %v2508 = vrot.slane %v2257, 1
      %v2509 = vrot.slane %v2258, 1
      %v2510 = vsel %vm1796, %v2508, %v2509
      %v2511 = vrot.slane %v2259, 1
      %v2512 = vsel %vm1796, %v2509, %v2511
      %v2513 = vrot.slane %v2260, 1
      %v2514 = vsel %vm1796, %v2511, %v2513
      %v2515 = vrot.slane %v2261, 1
      %v2516 = vrot.slane %v2262, 1
      %v2517 = vsel %vm1796, %v2515, %v2516
      %v2518 = vrot.slane %v2263, 1
      %v2519 = vsel %vm1796, %v2516, %v2518
      %v2520 = vrot.slane %v2264, 1
      %v2521 = vsel %vm1796, %v2518, %v2520
      %v2522 = vrot.slane %v2265, 1
      %v2523 = vrot.slane %v2266, 1
      %v2524 = vsel %vm1796, %v2522, %v2523
      %v2525 = vrot.slane %v2267, 1
      %v2526 = vsel %vm1796, %v2523, %v2525
      %v2527 = vrot.slane %v2268, 1
      %v2528 = vsel %vm1796, %v2525, %v2527
      %v2529 = vrot.slane %v2269, 1
      %v2530 = vrot.slane %v2270, 1
      %v2531 = vsel %vm1796, %v2529, %v2530
      %v2532 = vrot.slane %v2271, 1
      %v2533 = vsel %vm1796, %v2530, %v2532
      %v2534 = vrot.slane %v2272, 1
      %v2535 = vsel %vm1796, %v2532, %v2534
      %v2536 = vrot.slane %v2273, 1
      %v2537 = vrot.slane %v2274, 1
      %v2538 = vsel %vm1796, %v2536, %v2537
      %v2539 = vrot.slane %v2275, 1
      %v2540 = vsel %vm1796, %v2537, %v2539
      %v2541 = vrot.slane %v2276, 1
      %v2542 = vsel %vm1796, %v2539, %v2541
      %v2543 = vrot.slane %v2277, 1
      %v2544 = vrot.slane %v2278, 1
      %v2545 = vsel %vm1796, %v2543, %v2544
      %v2546 = vrot.slane %v2279, 1
      %v2547 = vsel %vm1796, %v2544, %v2546
      %v2548 = vrot.slane %v2280, 1
      %v2549 = vsel %vm1796, %v2546, %v2548
      %v2550 = vrot.slane %v2281, 1
      %v2551 = vrot.slane %v2282, 1
      %v2552 = vsel %vm1796, %v2550, %v2551
      %v2553 = vrot.slane %v2283, 1
      %v2554 = vsel %vm1796, %v2551, %v2553
      %v2555 = vrot.slane %v2284, 1
      %v2556 = vsel %vm1796, %v2553, %v2555
      %v2557 = vrot.slane %v2285, 1
      %v2558 = vrot.slane %v2286, 1
      %v2559 = vsel %vm1796, %v2557, %v2558
      %v2560 = vrot.slane %v2287, 1
      %v2561 = vsel %vm1796, %v2558, %v2560
      %v2562 = vrot.slane %v2288, 1
      %v2563 = vsel %vm1796, %v2560, %v2562
      %v2564 = vrot.slane %v2289, 1
      %v2565 = vrot.slane %v2290, 1
      %v2566 = vsel %vm1796, %v2564, %v2565
      %v2567 = vrot.slane %v2291, 1
      %v2568 = vsel %vm1796, %v2565, %v2567
      %v2569 = vrot.slane %v2292, 1
      %v2570 = vsel %vm1796, %v2567, %v2569
      %v2571 = vrot.slane %v2293, 1
      %v2572 = vrot.slane %v2294, 1
      %v2573 = vsel %vm1796, %v2571, %v2572
      %v2574 = vrot.slane %v2295, 1
      %v2575 = vsel %vm1796, %v2572, %v2574
      %v2576 = vrot.slane %v2296, 1
      %v2577 = vsel %vm1796, %v2574, %v2576
      %v2578 = vrot.slane %v2297, 1
      %v2579 = vrot.slane %v2298, 1
      %v2580 = vsel %vm1796, %v2578, %v2579
      %v2581 = vrot.slane %v2299, 1
      %v2582 = vsel %vm1796, %v2579, %v2581
      %v2583 = vrot.slane %v2300, 1
      %v2584 = vsel %vm1796, %v2581, %v2583
      %v2585 = vrot.slane %v2301, 1
      %v2586 = vrot.slane %v2302, 1
      %v2587 = vsel %vm1796, %v2585, %v2586
      %v2588 = vrot.slane %v2303, 1
      %v2589 = vsel %vm1796, %v2586, %v2588
      %v2590 = vrot.slane %v2304, 1
      %v2591 = vsel %vm1796, %v2588, %v2590
      %v2592 = vrot.slane %v2305, 1
      %v2593 = vrot.slane %v2306, 1
      %v2594 = vsel %vm1796, %v2592, %v2593
      %v2595 = vrot.slane %v2307, 1
      %v2596 = vsel %vm1796, %v2593, %v2595
      %v2597 = vrot.slane %v2308, 1
      %v2598 = vsel %vm1796, %v2595, %v2597
      %v2599 = vrot.slane %v2309, 1
      %v2600 = vrot.slane %v2310, 1
      %v2601 = vsel %vm1796, %v2599, %v2600
      %v2602 = vrot.slane %v2311, 1
      %v2603 = vsel %vm1796, %v2600, %v2602
      %v2604 = vrot.slane %v2312, 1
      %v2605 = vsel %vm1796, %v2602, %v2604
      %v2606 = vrot.slane %v2313, 1
      %v2607 = vrot.slane %v2314, 1
      %v2608 = vsel %vm1796, %v2606, %v2607
      %v2609 = vrot.slane %v2315, 1
      %v2610 = vsel %vm1796, %v2607, %v2609
      %v2611 = vrot.slane %v2316, 1
      %v2612 = vsel %vm1796, %v2609, %v2611
      %v2613 = vrot.slane %v2317, 1
      %v2614 = vrot.slane %v2318, 1
      %v2615 = vsel %vm1796, %v2613, %v2614
      %v2616 = vrot.slane %v2319, 1
      %v2617 = vsel %vm1796, %v2614, %v2616
      %v2618 = vrot.slane %v2320, 1
      %v2619 = vsel %vm1796, %v2616, %v2618
      %v2620 = vrot.slane %v2321, 1
      %v2621 = vrot.slane %v2322, 1
      %v2622 = vsel %vm1796, %v2620, %v2621
      %v2623 = vrot.slane %v2323, 1
      %v2624 = vsel %vm1796, %v2621, %v2623
      %v2625 = vrot.slane %v2324, 1
      %v2626 = vsel %vm1796, %v2623, %v2625
      %v2627 = vrot.slane %v2325, 1
      %v2628 = vrot.slane %v2326, 1
      %v2629 = vsel %vm1796, %v2627, %v2628
      %v2630 = vrot.slane %v2327, 1
      %v2631 = vsel %vm1796, %v2628, %v2630
      %v2632 = vrot.slane %v2328, 1
      %v2633 = vsel %vm1796, %v2630, %v2632
      %v2634 = vrot.slane %v2329, 1
      %v2635 = vrot.slane %v2330, 1
      %v2636 = vsel %vm1796, %v2634, %v2635
      %v2637 = vrot.slane %v2331, 1
      %v2638 = vsel %vm1796, %v2635, %v2637
      %v2639 = vrot.slane %v2332, 1
      %v2640 = vsel %vm1796, %v2637, %v2639
      %v2753 = vadd.f32 %v2105, %v2447
      %v2754 = vadd.f32 %v2106, %v2449
      %v2755 = vadd.f32 %v2107, %v2451
      %v2756 = vadd.f32 %v2108, %v2450
      %v2757 = vadd.f32 %v2109, %v2454
      %v2758 = vadd.f32 %v2110, %v2456
      %v2759 = vadd.f32 %v2111, %v2458
      %v2760 = vadd.f32 %v2112, %v2457
      %v2761 = vadd.f32 %v2113, %v2461
      %v2762 = vadd.f32 %v2114, %v2463
      %v2763 = vadd.f32 %v2115, %v2465
      %v2764 = vadd.f32 %v2116, %v2464
      %v2765 = vadd.f32 %v2117, %v2468
      %v2766 = vadd.f32 %v2118, %v2470
      %v2767 = vadd.f32 %v2119, %v2472
      %v2768 = vadd.f32 %v2120, %v2471
      %v2769 = vadd.f32 %v2121, %v2475
      %v2770 = vadd.f32 %v2122, %v2477
      %v2771 = vadd.f32 %v2123, %v2479
      %v2772 = vadd.f32 %v2124, %v2478
      %v2773 = vadd.f32 %v2125, %v2482
      %v2774 = vadd.f32 %v2126, %v2484
      %v2775 = vadd.f32 %v2127, %v2486
      %v2776 = vadd.f32 %v2128, %v2485
      %v2777 = vadd.f32 %v2129, %v2489
      %v2778 = vadd.f32 %v2130, %v2491
      %v2779 = vadd.f32 %v2131, %v2493
      %v2780 = vadd.f32 %v2132, %v2492
      %v2781 = vadd.f32 %v2133, %v2496
      %v2782 = vadd.f32 %v2134, %v2498
      %v2783 = vadd.f32 %v2135, %v2500
      %v2784 = vadd.f32 %v2136, %v2499
      %v2785 = vadd.f32 %v2137, %v2503
      %v2786 = vadd.f32 %v2138, %v2505
      %v2787 = vadd.f32 %v2139, %v2507
      %v2788 = vadd.f32 %v2140, %v2506
      %v2789 = vadd.f32 %v2141, %v2510
      %v2790 = vadd.f32 %v2142, %v2512
      %v2791 = vadd.f32 %v2143, %v2514
      %v2792 = vadd.f32 %v2144, %v2513
      %v2793 = vadd.f32 %v2145, %v2517
      %v2794 = vadd.f32 %v2146, %v2519
      %v2795 = vadd.f32 %v2147, %v2521
      %v2796 = vadd.f32 %v2148, %v2520
      %v2797 = vadd.f32 %v2149, %v2524
      %v2798 = vadd.f32 %v2150, %v2526
      %v2799 = vadd.f32 %v2151, %v2528
      %v2800 = vadd.f32 %v2152, %v2527
      %v2801 = vadd.f32 %v2153, %v2531
      %v2802 = vadd.f32 %v2154, %v2533
      %v2803 = vadd.f32 %v2155, %v2535
      %v2804 = vadd.f32 %v2156, %v2534
      %v2805 = vadd.f32 %v2157, %v2538
      %v2806 = vadd.f32 %v2158, %v2540
      %v2807 = vadd.f32 %v2159, %v2542
      %v2808 = vadd.f32 %v2160, %v2541
      %v2809 = vadd.f32 %v2161, %v2545
      %v2810 = vadd.f32 %v2162, %v2547
      %v2811 = vadd.f32 %v2163, %v2549
      %v2812 = vadd.f32 %v2164, %v2548
      %v2813 = vadd.f32 %v2165, %v2552
      %v2814 = vadd.f32 %v2166, %v2554
      %v2815 = vadd.f32 %v2167, %v2556
      %v2816 = vadd.f32 %v2168, %v2555
      %v2817 = vadd.f32 %v2169, %v2559
      %v2818 = vadd.f32 %v2170, %v2561
      %v2819 = vadd.f32 %v2171, %v2563
      %v2820 = vadd.f32 %v2172, %v2562
      %v2821 = vadd.f32 %v2173, %v2566
      %v2822 = vadd.f32 %v2174, %v2568
      %v2823 = vadd.f32 %v2175, %v2570
      %v2824 = vadd.f32 %v2176, %v2569
      %v2825 = vadd.f32 %v2177, %v2573
      %v2826 = vadd.f32 %v2178, %v2575
      %v2827 = vadd.f32 %v2179, %v2577
      %v2828 = vadd.f32 %v2180, %v2576
      %v2829 = vadd.f32 %v2181, %v2580
      %v2830 = vadd.f32 %v2182, %v2582
      %v2831 = vadd.f32 %v2183, %v2584
      %v2832 = vadd.f32 %v2184, %v2583
      %v2833 = vadd.f32 %v2185, %v2587
      %v2834 = vadd.f32 %v2186, %v2589
      %v2835 = vadd.f32 %v2187, %v2591
      %v2836 = vadd.f32 %v2188, %v2590
      %v2837 = vadd.f32 %v2189, %v2594
      %v2838 = vadd.f32 %v2190, %v2596
      %v2839 = vadd.f32 %v2191, %v2598
      %v2840 = vadd.f32 %v2192, %v2597
      %v2841 = vadd.f32 %v2193, %v2601
      %v2842 = vadd.f32 %v2194, %v2603
      %v2843 = vadd.f32 %v2195, %v2605
      %v2844 = vadd.f32 %v2196, %v2604
      %v2845 = vadd.f32 %v2197, %v2608
      %v2846 = vadd.f32 %v2198, %v2610
      %v2847 = vadd.f32 %v2199, %v2612
      %v2848 = vadd.f32 %v2200, %v2611
      %v2849 = vadd.f32 %v2201, %v2615
      %v2850 = vadd.f32 %v2202, %v2617
      %v2851 = vadd.f32 %v2203, %v2619
      %v2852 = vadd.f32 %v2204, %v2618
      %v2853 = vadd.f32 %v2205, %v2622
      %v2854 = vadd.f32 %v2206, %v2624
      %v2855 = vadd.f32 %v2207, %v2626
      %v2856 = vadd.f32 %v2208, %v2625
      %v2857 = vadd.f32 %v2209, %v2629
      %v2858 = vadd.f32 %v2210, %v2631
      %v2859 = vadd.f32 %v2211, %v2633
      %v2860 = vadd.f32 %v2212, %v2632
      %v2861 = vadd.f32 %v2213, %v2636
      %v2862 = vadd.f32 %v2214, %v2638
      %v2863 = vadd.f32 %v2215, %v2640
      %v2864 = vadd.f32 %v2216, %v2639
      %v2865 = vlaneseq
      %v2866 = vshrl.u32 %v2865, 7
      %v2867 = vsub.s32 7, %v2866
      %v2868 = vrot.slane %v882, %v2867
      %v2869 = vmul.f32 %v356, %v2868
      %v2870 = vmul.f32 %v360, %v2868
      %v2871 = vmul.f32 %v364, %v2868
      %v2872 = vmul.f32 %v368, %v2868
      %v2873 = vmul.f32 %v375, %v2868
      %v2874 = vmul.f32 %v379, %v2868
      %v2875 = vmul.f32 %v383, %v2868
      %v2876 = vmul.f32 %v387, %v2868
      %v2877 = vmul.f32 %v394, %v2868
      %v2878 = vmul.f32 %v398, %v2868
      %v2879 = vmul.f32 %v402, %v2868
      %v2880 = vmul.f32 %v406, %v2868
      %v2881 = vmul.f32 %v413, %v2868
      %v2882 = vmul.f32 %v417, %v2868
      %v2883 = vmul.f32 %v421, %v2868
      %v2884 = vmul.f32 %v425, %v2868
      %v2885 = vmul.f32 %v432, %v2868
      %v2886 = vmul.f32 %v436, %v2868
      %v2887 = vmul.f32 %v440, %v2868
      %v2888 = vmul.f32 %v444, %v2868
      %v2889 = vmul.f32 %v451, %v2868
      %v2890 = vmul.f32 %v455, %v2868
      %v2891 = vmul.f32 %v459, %v2868
      %v2892 = vmul.f32 %v463, %v2868
      %v2893 = vmul.f32 %v470, %v2868
      %v2894 = vmul.f32 %v474, %v2868
      %v2895 = vmul.f32 %v478, %v2868
      %v2896 = vmul.f32 %v482, %v2868
      %v2897 = vmul.f32 %v489, %v2868
      %v2898 = vmul.f32 %v493, %v2868
      %v2899 = vmul.f32 %v497, %v2868
      %v2900 = vmul.f32 %v501, %v2868
      %v2901 = vmul.f32 %v508, %v2868
      %v2902 = vmul.f32 %v512, %v2868
      %v2903 = vmul.f32 %v516, %v2868
      %v2904 = vmul.f32 %v520, %v2868
      %v2905 = vmul.f32 %v527, %v2868
      %v2906 = vmul.f32 %v531, %v2868
      %v2907 = vmul.f32 %v535, %v2868
      %v2908 = vmul.f32 %v539, %v2868
      %v2909 = vmul.f32 %v546, %v2868
      %v2910 = vmul.f32 %v550, %v2868
      %v2911 = vmul.f32 %v554, %v2868
      %v2912 = vmul.f32 %v558, %v2868
      %v2913 = vmul.f32 %v565, %v2868
      %v2914 = vmul.f32 %v569, %v2868
      %v2915 = vmul.f32 %v573, %v2868
      %v2916 = vmul.f32 %v577, %v2868
      %v2917 = vmul.f32 %v584, %v2868
      %v2918 = vmul.f32 %v588, %v2868
      %v2919 = vmul.f32 %v592, %v2868
      %v2920 = vmul.f32 %v596, %v2868
      %v2921 = vmul.f32 %v603, %v2868
      %v2922 = vmul.f32 %v607, %v2868
      %v2923 = vmul.f32 %v611, %v2868
      %v2924 = vmul.f32 %v615, %v2868
      %v2925 = vmul.f32 %v622, %v2868
      %v2926 = vmul.f32 %v626, %v2868
      %v2927 = vmul.f32 %v630, %v2868
      %v2928 = vmul.f32 %v634, %v2868
      %v2929 = vmul.f32 %v641, %v2868
      %v2930 = vmul.f32 %v645, %v2868
      %v2931 = vmul.f32 %v649, %v2868
      %v2932 = vmul.f32 %v653, %v2868
      %v2933 = vmul.f32 %v660, %v2868
      %v2934 = vmul.f32 %v664, %v2868
      %v2935 = vmul.f32 %v668, %v2868
      %v2936 = vmul.f32 %v672, %v2868
      %v2937 = vmul.f32 %v679, %v2868
      %v2938 = vmul.f32 %v683, %v2868
      %v2939 = vmul.f32 %v687, %v2868
      %v2940 = vmul.f32 %v691, %v2868
      %v2941 = vmul.f32 %v698, %v2868
      %v2942 = vmul.f32 %v702, %v2868
      %v2943 = vmul.f32 %v706, %v2868
      %v2944 = vmul.f32 %v710, %v2868
      %v2945 = vmul.f32 %v717, %v2868
      %v2946 = vmul.f32 %v721, %v2868
      %v2947 = vmul.f32 %v725, %v2868
      %v2948 = vmul.f32 %v729, %v2868
      %v2949 = vmul.f32 %v736, %v2868
      %v2950 = vmul.f32 %v740, %v2868
      %v2951 = vmul.f32 %v744, %v2868
      %v2952 = vmul.f32 %v748, %v2868
      %v2953 = vmul.f32 %v755, %v2868
      %v2954 = vmul.f32 %v759, %v2868
      %v2955 = vmul.f32 %v763, %v2868
      %v2956 = vmul.f32 %v767, %v2868
      %v2957 = vmul.f32 %v774, %v2868
      %v2958 = vmul.f32 %v778, %v2868
      %v2959 = vmul.f32 %v782, %v2868
      %v2960 = vmul.f32 %v786, %v2868
      %v2961 = vmul.f32 %v793, %v2868
      %v2962 = vmul.f32 %v797, %v2868
      %v2963 = vmul.f32 %v801, %v2868
      %v2964 = vmul.f32 %v805, %v2868
      %v2965 = vmul.f32 %v812, %v2868
      %v2966 = vmul.f32 %v816, %v2868
      %v2967 = vmul.f32 %v820, %v2868
      %v2968 = vmul.f32 %v824, %v2868
      %v2969 = vmul.f32 %v831, %v2868
      %v2970 = vmul.f32 %v835, %v2868
      %v2971 = vmul.f32 %v839, %v2868
      %v2972 = vmul.f32 %v843, %v2868
      %v2973 = vmul.f32 %v850, %v2868
      %v2974 = vmul.f32 %v854, %v2868
      %v2975 = vmul.f32 %v858, %v2868
      %v2976 = vmul.f32 %v862, %v2868
      %v2977 = vmul.f32 %v869, %v2868
      %v2978 = vmul.f32 %v873, %v2868
      %v2979 = vmul.f32 %v877, %v2868
      %v2980 = vmul.f32 %v881, %v2868
      %v3093 = vrot.slane %v2869, 1
      %v3094 = vrot.slane %v2870, 1
      %v3095 = vsel %vm1796, %v3093, %v3094
      %v3096 = vrot.slane %v2871, 1
      %v3097 = vsel %vm1796, %v3094, %v3096
      %v3098 = vrot.slane %v2872, 1
      %v3099 = vsel %vm1796, %v3096, %v3098
      %v3100 = vrot.slane %v2873, 1
      %v3101 = vrot.slane %v2874, 1
      %v3102 = vsel %vm1796, %v3100, %v3101
      %v3103 = vrot.slane %v2875, 1
      %v3104 = vsel %vm1796, %v3101, %v3103
      %v3105 = vrot.slane %v2876, 1
      %v3106 = vsel %vm1796, %v3103, %v3105
      %v3107 = vrot.slane %v2877, 1
      %v3108 = vrot.slane %v2878, 1
      %v3109 = vsel %vm1796, %v3107, %v3108
      %v3110 = vrot.slane %v2879, 1
      %v3111 = vsel %vm1796, %v3108, %v3110
      %v3112 = vrot.slane %v2880, 1
      %v3113 = vsel %vm1796, %v3110, %v3112
      %v3114 = vrot.slane %v2881, 1
      %v3115 = vrot.slane %v2882, 1
      %v3116 = vsel %vm1796, %v3114, %v3115
      %v3117 = vrot.slane %v2883, 1
      %v3118 = vsel %vm1796, %v3115, %v3117
      %v3119 = vrot.slane %v2884, 1
      %v3120 = vsel %vm1796, %v3117, %v3119
      %v3121 = vrot.slane %v2885, 1
      %v3122 = vrot.slane %v2886, 1
      %v3123 = vsel %vm1796, %v3121, %v3122
      %v3124 = vrot.slane %v2887, 1
      %v3125 = vsel %vm1796, %v3122, %v3124
      %v3126 = vrot.slane %v2888, 1
      %v3127 = vsel %vm1796, %v3124, %v3126
      %v3128 = vrot.slane %v2889, 1
      %v3129 = vrot.slane %v2890, 1
      %v3130 = vsel %vm1796, %v3128, %v3129
      %v3131 = vrot.slane %v2891, 1
      %v3132 = vsel %vm1796, %v3129, %v3131
      %v3133 = vrot.slane %v2892, 1
      %v3134 = vsel %vm1796, %v3131, %v3133
      %v3135 = vrot.slane %v2893, 1
      %v3136 = vrot.slane %v2894, 1
      %v3137 = vsel %vm1796, %v3135, %v3136
      %v3138 = vrot.slane %v2895, 1
      %v3139 = vsel %vm1796, %v3136, %v3138
      %v3140 = vrot.slane %v2896, 1
      %v3141 = vsel %vm1796, %v3138, %v3140
      %v3142 = vrot.slane %v2897, 1
      %v3143 = vrot.slane %v2898, 1
      %v3144 = vsel %vm1796, %v3142, %v3143
      %v3145 = vrot.slane %v2899, 1
      %v3146 = vsel %vm1796, %v3143, %v3145
      %v3147 = vrot.slane %v2900, 1
      %v3148 = vsel %vm1796, %v3145, %v3147
      %v3149 = vrot.slane %v2901, 1
      %v3150 = vrot.slane %v2902, 1
      %v3151 = vsel %vm1796, %v3149, %v3150
      %v3152 = vrot.slane %v2903, 1
      %v3153 = vsel %vm1796, %v3150, %v3152
      %v3154 = vrot.slane %v2904, 1
      %v3155 = vsel %vm1796, %v3152, %v3154
      %v3156 = vrot.slane %v2905, 1
      %v3157 = vrot.slane %v2906, 1
      %v3158 = vsel %vm1796, %v3156, %v3157
      %v3159 = vrot.slane %v2907, 1
      %v3160 = vsel %vm1796, %v3157, %v3159
      %v3161 = vrot.slane %v2908, 1
      %v3162 = vsel %vm1796, %v3159, %v3161
      %v3163 = vrot.slane %v2909, 1
      %v3164 = vrot.slane %v2910, 1
      %v3165 = vsel %vm1796, %v3163, %v3164
      %v3166 = vrot.slane %v2911, 1
      %v3167 = vsel %vm1796, %v3164, %v3166
      %v3168 = vrot.slane %v2912, 1
      %v3169 = vsel %vm1796, %v3166, %v3168
      %v3170 = vrot.slane %v2913, 1
      %v3171 = vrot.slane %v2914, 1
      %v3172 = vsel %vm1796, %v3170, %v3171
      %v3173 = vrot.slane %v2915, 1
      %v3174 = vsel %vm1796, %v3171, %v3173
      %v3175 = vrot.slane %v2916, 1
      %v3176 = vsel %vm1796, %v3173, %v3175
      %v3177 = vrot.slane %v2917, 1
      %v3178 = vrot.slane %v2918, 1
      %v3179 = vsel %vm1796, %v3177, %v3178
      %v3180 = vrot.slane %v2919, 1
      %v3181 = vsel %vm1796, %v3178, %v3180
      %v3182 = vrot.slane %v2920, 1
      %v3183 = vsel %vm1796, %v3180, %v3182
      %v3184 = vrot.slane %v2921, 1
      %v3185 = vrot.slane %v2922, 1
      %v3186 = vsel %vm1796, %v3184, %v3185
      %v3187 = vrot.slane %v2923, 1
      %v3188 = vsel %vm1796, %v3185, %v3187
      %v3189 = vrot.slane %v2924, 1
      %v3190 = vsel %vm1796, %v3187, %v3189
      %v3191 = vrot.slane %v2925, 1
      %v3192 = vrot.slane %v2926, 1
      %v3193 = vsel %vm1796, %v3191, %v3192
      %v3194 = vrot.slane %v2927, 1
      %v3195 = vsel %vm1796, %v3192, %v3194
      %v3196 = vrot.slane %v2928, 1
      %v3197 = vsel %vm1796, %v3194, %v3196
      %v3198 = vrot.slane %v2929, 1
      %v3199 = vrot.slane %v2930, 1
      %v3200 = vsel %vm1796, %v3198, %v3199
      %v3201 = vrot.slane %v2931, 1
      %v3202 = vsel %vm1796, %v3199, %v3201
      %v3203 = vrot.slane %v2932, 1
      %v3204 = vsel %vm1796, %v3201, %v3203
      %v3205 = vrot.slane %v2933, 1
      %v3206 = vrot.slane %v2934, 1
      %v3207 = vsel %vm1796, %v3205, %v3206
      %v3208 = vrot.slane %v2935, 1
      %v3209 = vsel %vm1796, %v3206, %v3208
      %v3210 = vrot.slane %v2936, 1
      %v3211 = vsel %vm1796, %v3208, %v3210
      %v3212 = vrot.slane %v2937, 1
      %v3213 = vrot.slane %v2938, 1
      %v3214 = vsel %vm1796, %v3212, %v3213
      %v3215 = vrot.slane %v2939, 1
      %v3216 = vsel %vm1796, %v3213, %v3215
      %v3217 = vrot.slane %v2940, 1
      %v3218 = vsel %vm1796, %v3215, %v3217
      %v3219 = vrot.slane %v2941, 1
      %v3220 = vrot.slane %v2942, 1
      %v3221 = vsel %vm1796, %v3219, %v3220
      %v3222 = vrot.slane %v2943, 1
      %v3223 = vsel %vm1796, %v3220, %v3222
      %v3224 = vrot.slane %v2944, 1
      %v3225 = vsel %vm1796, %v3222, %v3224
      %v3226 = vrot.slane %v2945, 1
      %v3227 = vrot.slane %v2946, 1
      %v3228 = vsel %vm1796, %v3226, %v3227
      %v3229 = vrot.slane %v2947, 1
      %v3230 = vsel %vm1796, %v3227, %v3229
      %v3231 = vrot.slane %v2948, 1
      %v3232 = vsel %vm1796, %v3229, %v3231
      %v3233 = vrot.slane %v2949, 1
      %v3234 = vrot.slane %v2950, 1
      %v3235 = vsel %vm1796, %v3233, %v3234
      %v3236 = vrot.slane %v2951, 1
      %v3237 = vsel %vm1796, %v3234, %v3236
      %v3238 = vrot.slane %v2952, 1
      %v3239 = vsel %vm1796, %v3236, %v3238
      %v3240 = vrot.slane %v2953, 1
      %v3241 = vrot.slane %v2954, 1
      %v3242 = vsel %vm1796, %v3240, %v3241
      %v3243 = vrot.slane %v2955, 1
      %v3244 = vsel %vm1796, %v3241, %v3243
      %v3245 = vrot.slane %v2956, 1
      %v3246 = vsel %vm1796, %v3243, %v3245
      %v3247 = vrot.slane %v2957, 1
      %v3248 = vrot.slane %v2958, 1
      %v3249 = vsel %vm1796, %v3247, %v3248
      %v3250 = vrot.slane %v2959, 1
      %v3251 = vsel %vm1796, %v3248, %v3250
      %v3252 = vrot.slane %v2960, 1
      %v3253 = vsel %vm1796, %v3250, %v3252
      %v3254 = vrot.slane %v2961, 1
      %v3255 = vrot.slane %v2962, 1
      %v3256 = vsel %vm1796, %v3254, %v3255
      %v3257 = vrot.slane %v2963, 1
      %v3258 = vsel %vm1796, %v3255, %v3257
      %v3259 = vrot.slane %v2964, 1
      %v3260 = vsel %vm1796, %v3257, %v3259
      %v3261 = vrot.slane %v2965, 1
      %v3262 = vrot.slane %v2966, 1
      %v3263 = vsel %vm1796, %v3261, %v3262
      %v3264 = vrot.slane %v2967, 1
      %v3265 = vsel %vm1796, %v3262, %v3264
      %v3266 = vrot.slane %v2968, 1
      %v3267 = vsel %vm1796, %v3264, %v3266
      %v3268 = vrot.slane %v2969, 1
      %v3269 = vrot.slane %v2970, 1
      %v3270 = vsel %vm1796, %v3268, %v3269
      %v3271 = vrot.slane %v2971, 1
      %v3272 = vsel %vm1796, %v3269, %v3271
      %v3273 = vrot.slane %v2972, 1
      %v3274 = vsel %vm1796, %v3271, %v3273
      %v3275 = vrot.slane %v2973, 1
      %v3276 = vrot.slane %v2974, 1
      %v3277 = vsel %vm1796, %v3275, %v3276
      %v3278 = vrot.slane %v2975, 1
      %v3279 = vsel %vm1796, %v3276, %v3278
      %v3280 = vrot.slane %v2976, 1
      %v3281 = vsel %vm1796, %v3278, %v3280
      %v3282 = vrot.slane %v2977, 1
      %v3283 = vrot.slane %v2978, 1
      %v3284 = vsel %vm1796, %v3282, %v3283
      %v3285 = vrot.slane %v2979, 1
      %v3286 = vsel %vm1796, %v3283, %v3285
      %v3287 = vrot.slane %v2980, 1
      %v3288 = vsel %vm1796, %v3285, %v3287
      %v3401 = vadd.f32 %v2753, %v3095
      %v3402 = vadd.f32 %v2754, %v3097
      %v3403 = vadd.f32 %v2755, %v3099
      %v3404 = vadd.f32 %v2756, %v3098
      %v3405 = vadd.f32 %v2757, %v3102
      %v3406 = vadd.f32 %v2758, %v3104
      %v3407 = vadd.f32 %v2759, %v3106
      %v3408 = vadd.f32 %v2760, %v3105
      %v3409 = vadd.f32 %v2761, %v3109
      %v3410 = vadd.f32 %v2762, %v3111
      %v3411 = vadd.f32 %v2763, %v3113
      %v3412 = vadd.f32 %v2764, %v3112
      %v3413 = vadd.f32 %v2765, %v3116
      %v3414 = vadd.f32 %v2766, %v3118
      %v3415 = vadd.f32 %v2767, %v3120
      %v3416 = vadd.f32 %v2768, %v3119
      %v3417 = vadd.f32 %v2769, %v3123
      %v3418 = vadd.f32 %v2770, %v3125
      %v3419 = vadd.f32 %v2771, %v3127
      %v3420 = vadd.f32 %v2772, %v3126
      %v3421 = vadd.f32 %v2773, %v3130
      %v3422 = vadd.f32 %v2774, %v3132
      %v3423 = vadd.f32 %v2775, %v3134
      %v3424 = vadd.f32 %v2776, %v3133
      %v3425 = vadd.f32 %v2777, %v3137
      %v3426 = vadd.f32 %v2778, %v3139
      %v3427 = vadd.f32 %v2779, %v3141
      %v3428 = vadd.f32 %v2780, %v3140
      %v3429 = vadd.f32 %v2781, %v3144
      %v3430 = vadd.f32 %v2782, %v3146
      %v3431 = vadd.f32 %v2783, %v3148
      %v3432 = vadd.f32 %v2784, %v3147
      %v3433 = vadd.f32 %v2785, %v3151
      %v3434 = vadd.f32 %v2786, %v3153
      %v3435 = vadd.f32 %v2787, %v3155
      %v3436 = vadd.f32 %v2788, %v3154
      %v3437 = vadd.f32 %v2789, %v3158
      %v3438 = vadd.f32 %v2790, %v3160
      %v3439 = vadd.f32 %v2791, %v3162
      %v3440 = vadd.f32 %v2792, %v3161
      %v3441 = vadd.f32 %v2793, %v3165
      %v3442 = vadd.f32 %v2794, %v3167
      %v3443 = vadd.f32 %v2795, %v3169
      %v3444 = vadd.f32 %v2796, %v3168
      %v3445 = vadd.f32 %v2797, %v3172
      %v3446 = vadd.f32 %v2798, %v3174
      %v3447 = vadd.f32 %v2799, %v3176
      %v3448 = vadd.f32 %v2800, %v3175
      %v3449 = vadd.f32 %v2801, %v3179
      %v3450 = vadd.f32 %v2802, %v3181
      %v3451 = vadd.f32 %v2803, %v3183
      %v3452 = vadd.f32 %v2804, %v3182
      %v3453 = vadd.f32 %v2805, %v3186
      %v3454 = vadd.f32 %v2806, %v3188
      %v3455 = vadd.f32 %v2807, %v3190
      %v3456 = vadd.f32 %v2808, %v3189
      %v3457 = vadd.f32 %v2809, %v3193
      %v3458 = vadd.f32 %v2810, %v3195
      %v3459 = vadd.f32 %v2811, %v3197
      %v3460 = vadd.f32 %v2812, %v3196
      %v3461 = vadd.f32 %v2813, %v3200
      %v3462 = vadd.f32 %v2814, %v3202
      %v3463 = vadd.f32 %v2815, %v3204
      %v3464 = vadd.f32 %v2816, %v3203
      %v3465 = vadd.f32 %v2817, %v3207
      %v3466 = vadd.f32 %v2818, %v3209
      %v3467 = vadd.f32 %v2819, %v3211
      %v3468 = vadd.f32 %v2820, %v3210
      %v3469 = vadd.f32 %v2821, %v3214
      %v3470 = vadd.f32 %v2822, %v3216
      %v3471 = vadd.f32 %v2823, %v3218
      %v3472 = vadd.f32 %v2824, %v3217
      %v3473 = vadd.f32 %v2825, %v3221
      %v3474 = vadd.f32 %v2826, %v3223
      %v3475 = vadd.f32 %v2827, %v3225
      %v3476 = vadd.f32 %v2828, %v3224
      %v3477 = vadd.f32 %v2829, %v3228
      %v3478 = vadd.f32 %v2830, %v3230
      %v3479 = vadd.f32 %v2831, %v3232
      %v3480 = vadd.f32 %v2832, %v3231
      %v3481 = vadd.f32 %v2833, %v3235
      %v3482 = vadd.f32 %v2834, %v3237
      %v3483 = vadd.f32 %v2835, %v3239
      %v3484 = vadd.f32 %v2836, %v3238
      %v3485 = vadd.f32 %v2837, %v3242
      %v3486 = vadd.f32 %v2838, %v3244
      %v3487 = vadd.f32 %v2839, %v3246
      %v3488 = vadd.f32 %v2840, %v3245
      %v3489 = vadd.f32 %v2841, %v3249
      %v3490 = vadd.f32 %v2842, %v3251
      %v3491 = vadd.f32 %v2843, %v3253
      %v3492 = vadd.f32 %v2844, %v3252
      %v3493 = vadd.f32 %v2845, %v3256
      %v3494 = vadd.f32 %v2846, %v3258
      %v3495 = vadd.f32 %v2847, %v3260
      %v3496 = vadd.f32 %v2848, %v3259
      %v3497 = vadd.f32 %v2849, %v3263
      %v3498 = vadd.f32 %v2850, %v3265
      %v3499 = vadd.f32 %v2851, %v3267
      %v3500 = vadd.f32 %v2852, %v3266
      %v3501 = vadd.f32 %v2853, %v3270
      %v3502 = vadd.f32 %v2854, %v3272
      %v3503 = vadd.f32 %v2855, %v3274
      %v3504 = vadd.f32 %v2856, %v3273
      %v3505 = vadd.f32 %v2857, %v3277
      %v3506 = vadd.f32 %v2858, %v3279
      %v3507 = vadd.f32 %v2859, %v3281
      %v3508 = vadd.f32 %v2860, %v3280
      %v3509 = vadd.f32 %v2861, %v3284
      %v3510 = vadd.f32 %v2862, %v3286
      %v3511 = vadd.f32 %v2863, %v3288
      %v3512 = vadd.f32 %v2864, %v3287
      %v3513 = vlaneseq
      %v3514 = vshrl.u32 %v3513, 7
      %v3515 = vsub.s32 2, %v3514
      %v3516 = vrot.slane %v882, %v3515
      %v3517 = vmul.f32 %v318, %v3516
      %v3518 = vmul.f32 %v322, %v3516
      %v3519 = vmul.f32 %v326, %v3516
      %v3520 = vmul.f32 %v330, %v3516
      %v3521 = vmul.f32 %v337, %v3516
      %v3522 = vmul.f32 %v341, %v3516
      %v3523 = vmul.f32 %v345, %v3516
      %v3524 = vmul.f32 %v349, %v3516
      %v3525 = vmul.f32 %v356, %v3516
      %v3526 = vmul.f32 %v360, %v3516
      %v3527 = vmul.f32 %v364, %v3516
      %v3528 = vmul.f32 %v368, %v3516
      %v3529 = vmul.f32 %v375, %v3516
      %v3530 = vmul.f32 %v379, %v3516
      %v3531 = vmul.f32 %v383, %v3516
      %v3532 = vmul.f32 %v387, %v3516
      %v3533 = vmul.f32 %v394, %v3516
      %v3534 = vmul.f32 %v398, %v3516
      %v3535 = vmul.f32 %v402, %v3516
      %v3536 = vmul.f32 %v406, %v3516
      %v3537 = vmul.f32 %v413, %v3516
      %v3538 = vmul.f32 %v417, %v3516
      %v3539 = vmul.f32 %v421, %v3516
      %v3540 = vmul.f32 %v425, %v3516
      %v3541 = vmul.f32 %v432, %v3516
      %v3542 = vmul.f32 %v436, %v3516
      %v3543 = vmul.f32 %v440, %v3516
      %v3544 = vmul.f32 %v444, %v3516
      %v3545 = vmul.f32 %v451, %v3516
      %v3546 = vmul.f32 %v455, %v3516
      %v3547 = vmul.f32 %v459, %v3516
      %v3548 = vmul.f32 %v463, %v3516
      %v3549 = vmul.f32 %v470, %v3516
      %v3550 = vmul.f32 %v474, %v3516
      %v3551 = vmul.f32 %v478, %v3516
      %v3552 = vmul.f32 %v482, %v3516
      %v3553 = vmul.f32 %v489, %v3516
      %v3554 = vmul.f32 %v493, %v3516
      %v3555 = vmul.f32 %v497, %v3516
      %v3556 = vmul.f32 %v501, %v3516
      %v3557 = vmul.f32 %v508, %v3516
      %v3558 = vmul.f32 %v512, %v3516
      %v3559 = vmul.f32 %v516, %v3516
      %v3560 = vmul.f32 %v520, %v3516
      %v3561 = vmul.f32 %v527, %v3516
      %v3562 = vmul.f32 %v531, %v3516
      %v3563 = vmul.f32 %v535, %v3516
      %v3564 = vmul.f32 %v539, %v3516
      %v3565 = vmul.f32 %v546, %v3516
      %v3566 = vmul.f32 %v550, %v3516
      %v3567 = vmul.f32 %v554, %v3516
      %v3568 = vmul.f32 %v558, %v3516
      %v3569 = vmul.f32 %v565, %v3516
      %v3570 = vmul.f32 %v569, %v3516
      %v3571 = vmul.f32 %v573, %v3516
      %v3572 = vmul.f32 %v577, %v3516
      %v3573 = vmul.f32 %v584, %v3516
      %v3574 = vmul.f32 %v588, %v3516
      %v3575 = vmul.f32 %v592, %v3516
      %v3576 = vmul.f32 %v596, %v3516
      %v3577 = vmul.f32 %v603, %v3516
      %v3578 = vmul.f32 %v607, %v3516
      %v3579 = vmul.f32 %v611, %v3516
      %v3580 = vmul.f32 %v615, %v3516
      %v3581 = vmul.f32 %v622, %v3516
      %v3582 = vmul.f32 %v626, %v3516
      %v3583 = vmul.f32 %v630, %v3516
      %v3584 = vmul.f32 %v634, %v3516
      %v3585 = vmul.f32 %v641, %v3516
      %v3586 = vmul.f32 %v645, %v3516
      %v3587 = vmul.f32 %v649, %v3516
      %v3588 = vmul.f32 %v653, %v3516
      %v3589 = vmul.f32 %v660, %v3516
      %v3590 = vmul.f32 %v664, %v3516
      %v3591 = vmul.f32 %v668, %v3516
      %v3592 = vmul.f32 %v672, %v3516
      %v3593 = vmul.f32 %v679, %v3516
      %v3594 = vmul.f32 %v683, %v3516
      %v3595 = vmul.f32 %v687, %v3516
      %v3596 = vmul.f32 %v691, %v3516
      %v3597 = vmul.f32 %v698, %v3516
      %v3598 = vmul.f32 %v702, %v3516
      %v3599 = vmul.f32 %v706, %v3516
      %v3600 = vmul.f32 %v710, %v3516
      %v3601 = vmul.f32 %v717, %v3516
      %v3602 = vmul.f32 %v721, %v3516
      %v3603 = vmul.f32 %v725, %v3516
      %v3604 = vmul.f32 %v729, %v3516
      %v3605 = vmul.f32 %v736, %v3516
      %v3606 = vmul.f32 %v740, %v3516
      %v3607 = vmul.f32 %v744, %v3516
      %v3608 = vmul.f32 %v748, %v3516
      %v3609 = vmul.f32 %v755, %v3516
      %v3610 = vmul.f32 %v759, %v3516
      %v3611 = vmul.f32 %v763, %v3516
      %v3612 = vmul.f32 %v767, %v3516
      %v3613 = vmul.f32 %v774, %v3516
      %v3614 = vmul.f32 %v778, %v3516
      %v3615 = vmul.f32 %v782, %v3516
      %v3616 = vmul.f32 %v786, %v3516
      %v3617 = vmul.f32 %v793, %v3516
      %v3618 = vmul.f32 %v797, %v3516
      %v3619 = vmul.f32 %v801, %v3516
      %v3620 = vmul.f32 %v805, %v3516
      %v3621 = vmul.f32 %v812, %v3516
      %v3622 = vmul.f32 %v816, %v3516
      %v3623 = vmul.f32 %v820, %v3516
      %v3624 = vmul.f32 %v824, %v3516
      %v3625 = vmul.f32 %v831, %v3516
      %v3626 = vmul.f32 %v835, %v3516
      %v3627 = vmul.f32 %v839, %v3516
      %v3628 = vmul.f32 %v843, %v3516
      %vm3741 = vcmask 1045504
      %v3742 = vrot.slane %v3517, 2
      %v3743 = vrot.slane %v3518, 2
      %v3744 = vsel %vm3741, %v3742, %v3743
      %v3745 = vrot.slane %v3519, 2
      %v3746 = vsel %vm3741, %v3743, %v3745
      %v3747 = vrot.slane %v3520, 2
      %v3748 = vsel %vm3741, %v3745, %v3747
      %v3749 = vrot.slane %v3521, 2
      %v3750 = vrot.slane %v3522, 2
      %v3751 = vsel %vm3741, %v3749, %v3750
      %v3752 = vrot.slane %v3523, 2
      %v3753 = vsel %vm3741, %v3750, %v3752
      %v3754 = vrot.slane %v3524, 2
      %v3755 = vsel %vm3741, %v3752, %v3754
      %v3756 = vrot.slane %v3525, 2
      %v3757 = vrot.slane %v3526, 2
      %v3758 = vsel %vm3741, %v3756, %v3757
      %v3759 = vrot.slane %v3527, 2
      %v3760 = vsel %vm3741, %v3757, %v3759
      %v3761 = vrot.slane %v3528, 2
      %v3762 = vsel %vm3741, %v3759, %v3761
      %v3763 = vrot.slane %v3529, 2
      %v3764 = vrot.slane %v3530, 2
      %v3765 = vsel %vm3741, %v3763, %v3764
      %v3766 = vrot.slane %v3531, 2
      %v3767 = vsel %vm3741, %v3764, %v3766
      %v3768 = vrot.slane %v3532, 2
      %v3769 = vsel %vm3741, %v3766, %v3768
      %v3770 = vrot.slane %v3533, 2
      %v3771 = vrot.slane %v3534, 2
      %v3772 = vsel %vm3741, %v3770, %v3771
      %v3773 = vrot.slane %v3535, 2
      %v3774 = vsel %vm3741, %v3771, %v3773
      %v3775 = vrot.slane %v3536, 2
      %v3776 = vsel %vm3741, %v3773, %v3775
      %v3777 = vrot.slane %v3537, 2
      %v3778 = vrot.slane %v3538, 2
      %v3779 = vsel %vm3741, %v3777, %v3778
      %v3780 = vrot.slane %v3539, 2
      %v3781 = vsel %vm3741, %v3778, %v3780
      %v3782 = vrot.slane %v3540, 2
      %v3783 = vsel %vm3741, %v3780, %v3782
      %v3784 = vrot.slane %v3541, 2
      %v3785 = vrot.slane %v3542, 2
      %v3786 = vsel %vm3741, %v3784, %v3785
      %v3787 = vrot.slane %v3543, 2
      %v3788 = vsel %vm3741, %v3785, %v3787
      %v3789 = vrot.slane %v3544, 2
      %v3790 = vsel %vm3741, %v3787, %v3789
      %v3791 = vrot.slane %v3545, 2
      %v3792 = vrot.slane %v3546, 2
      %v3793 = vsel %vm3741, %v3791, %v3792
      %v3794 = vrot.slane %v3547, 2
      %v3795 = vsel %vm3741, %v3792, %v3794
      %v3796 = vrot.slane %v3548, 2
      %v3797 = vsel %vm3741, %v3794, %v3796
      %v3798 = vrot.slane %v3549, 2
      %v3799 = vrot.slane %v3550, 2
      %v3800 = vsel %vm3741, %v3798, %v3799
      %v3801 = vrot.slane %v3551, 2
      %v3802 = vsel %vm3741, %v3799, %v3801
      %v3803 = vrot.slane %v3552, 2
      %v3804 = vsel %vm3741, %v3801, %v3803
      %v3805 = vrot.slane %v3553, 2
      %v3806 = vrot.slane %v3554, 2
      %v3807 = vsel %vm3741, %v3805, %v3806
      %v3808 = vrot.slane %v3555, 2
      %v3809 = vsel %vm3741, %v3806, %v3808
      %v3810 = vrot.slane %v3556, 2
      %v3811 = vsel %vm3741, %v3808, %v3810
      %v3812 = vrot.slane %v3557, 2
      %v3813 = vrot.slane %v3558, 2
      %v3814 = vsel %vm3741, %v3812, %v3813
      %v3815 = vrot.slane %v3559, 2
      %v3816 = vsel %vm3741, %v3813, %v3815
      %v3817 = vrot.slane %v3560, 2
      %v3818 = vsel %vm3741, %v3815, %v3817
      %v3819 = vrot.slane %v3561, 2
      %v3820 = vrot.slane %v3562, 2
      %v3821 = vsel %vm3741, %v3819, %v3820
      %v3822 = vrot.slane %v3563, 2
      %v3823 = vsel %vm3741, %v3820, %v3822
      %v3824 = vrot.slane %v3564, 2
      %v3825 = vsel %vm3741, %v3822, %v3824
      %v3826 = vrot.slane %v3565, 2
      %v3827 = vrot.slane %v3566, 2
      %v3828 = vsel %vm3741, %v3826, %v3827
      %v3829 = vrot.slane %v3567, 2
      %v3830 = vsel %vm3741, %v3827, %v3829
      %v3831 = vrot.slane %v3568, 2
      %v3832 = vsel %vm3741, %v3829, %v3831
      %v3833 = vrot.slane %v3569, 2
      %v3834 = vrot.slane %v3570, 2
      %v3835 = vsel %vm3741, %v3833, %v3834
      %v3836 = vrot.slane %v3571, 2
      %v3837 = vsel %vm3741, %v3834, %v3836
      %v3838 = vrot.slane %v3572, 2
      %v3839 = vsel %vm3741, %v3836, %v3838
      %v3840 = vrot.slane %v3573, 2
      %v3841 = vrot.slane %v3574, 2
      %v3842 = vsel %vm3741, %v3840, %v3841
      %v3843 = vrot.slane %v3575, 2
      %v3844 = vsel %vm3741, %v3841, %v3843
      %v3845 = vrot.slane %v3576, 2
      %v3846 = vsel %vm3741, %v3843, %v3845
      %v3847 = vrot.slane %v3577, 2
      %v3848 = vrot.slane %v3578, 2
      %v3849 = vsel %vm3741, %v3847, %v3848
      %v3850 = vrot.slane %v3579, 2
      %v3851 = vsel %vm3741, %v3848, %v3850
      %v3852 = vrot.slane %v3580, 2
      %v3853 = vsel %vm3741, %v3850, %v3852
      %v3854 = vrot.slane %v3581, 2
      %v3855 = vrot.slane %v3582, 2
      %v3856 = vsel %vm3741, %v3854, %v3855
      %v3857 = vrot.slane %v3583, 2
      %v3858 = vsel %vm3741, %v3855, %v3857
      %v3859 = vrot.slane %v3584, 2
      %v3860 = vsel %vm3741, %v3857, %v3859
      %v3861 = vrot.slane %v3585, 2
      %v3862 = vrot.slane %v3586, 2
      %v3863 = vsel %vm3741, %v3861, %v3862
      %v3864 = vrot.slane %v3587, 2
      %v3865 = vsel %vm3741, %v3862, %v3864
      %v3866 = vrot.slane %v3588, 2
      %v3867 = vsel %vm3741, %v3864, %v3866
      %v3868 = vrot.slane %v3589, 2
      %v3869 = vrot.slane %v3590, 2
      %v3870 = vsel %vm3741, %v3868, %v3869
      %v3871 = vrot.slane %v3591, 2
      %v3872 = vsel %vm3741, %v3869, %v3871
      %v3873 = vrot.slane %v3592, 2
      %v3874 = vsel %vm3741, %v3871, %v3873
      %v3875 = vrot.slane %v3593, 2
      %v3876 = vrot.slane %v3594, 2
      %v3877 = vsel %vm3741, %v3875, %v3876
      %v3878 = vrot.slane %v3595, 2
      %v3879 = vsel %vm3741, %v3876, %v3878
      %v3880 = vrot.slane %v3596, 2
      %v3881 = vsel %vm3741, %v3878, %v3880
      %v3882 = vrot.slane %v3597, 2
      %v3883 = vrot.slane %v3598, 2
      %v3884 = vsel %vm3741, %v3882, %v3883
      %v3885 = vrot.slane %v3599, 2
      %v3886 = vsel %vm3741, %v3883, %v3885
      %v3887 = vrot.slane %v3600, 2
      %v3888 = vsel %vm3741, %v3885, %v3887
      %v3889 = vrot.slane %v3601, 2
      %v3890 = vrot.slane %v3602, 2
      %v3891 = vsel %vm3741, %v3889, %v3890
      %v3892 = vrot.slane %v3603, 2
      %v3893 = vsel %vm3741, %v3890, %v3892
      %v3894 = vrot.slane %v3604, 2
      %v3895 = vsel %vm3741, %v3892, %v3894
      %v3896 = vrot.slane %v3605, 2
      %v3897 = vrot.slane %v3606, 2
      %v3898 = vsel %vm3741, %v3896, %v3897
      %v3899 = vrot.slane %v3607, 2
      %v3900 = vsel %vm3741, %v3897, %v3899
      %v3901 = vrot.slane %v3608, 2
      %v3902 = vsel %vm3741, %v3899, %v3901
      %v3903 = vrot.slane %v3609, 2
      %v3904 = vrot.slane %v3610, 2
      %v3905 = vsel %vm3741, %v3903, %v3904
      %v3906 = vrot.slane %v3611, 2
      %v3907 = vsel %vm3741, %v3904, %v3906
      %v3908 = vrot.slane %v3612, 2
      %v3909 = vsel %vm3741, %v3906, %v3908
      %v3910 = vrot.slane %v3613, 2
      %v3911 = vrot.slane %v3614, 2
      %v3912 = vsel %vm3741, %v3910, %v3911
      %v3913 = vrot.slane %v3615, 2
      %v3914 = vsel %vm3741, %v3911, %v3913
      %v3915 = vrot.slane %v3616, 2
      %v3916 = vsel %vm3741, %v3913, %v3915
      %v3917 = vrot.slane %v3617, 2
      %v3918 = vrot.slane %v3618, 2
      %v3919 = vsel %vm3741, %v3917, %v3918
      %v3920 = vrot.slane %v3619, 2
      %v3921 = vsel %vm3741, %v3918, %v3920
      %v3922 = vrot.slane %v3620, 2
      %v3923 = vsel %vm3741, %v3920, %v3922
      %v3924 = vrot.slane %v3621, 2
      %v3925 = vrot.slane %v3622, 2
      %v3926 = vsel %vm3741, %v3924, %v3925
      %v3927 = vrot.slane %v3623, 2
      %v3928 = vsel %vm3741, %v3925, %v3927
      %v3929 = vrot.slane %v3624, 2
      %v3930 = vsel %vm3741, %v3927, %v3929
      %v3931 = vrot.slane %v3625, 2
      %v3932 = vrot.slane %v3626, 2
      %v3933 = vsel %vm3741, %v3931, %v3932
      %v3934 = vrot.slane %v3627, 2
      %v3935 = vsel %vm3741, %v3932, %v3934
      %v3936 = vrot.slane %v3628, 2
      %v3937 = vsel %vm3741, %v3934, %v3936
      %v4050 = vadd.f32 %v3401, %v3744
      %v4051 = vadd.f32 %v3402, %v3746
      %v4052 = vadd.f32 %v3403, %v3748
      %v4053 = vadd.f32 %v3404, %v3747
      %v4054 = vadd.f32 %v3405, %v3751
      %v4055 = vadd.f32 %v3406, %v3753
      %v4056 = vadd.f32 %v3407, %v3755
      %v4057 = vadd.f32 %v3408, %v3754
      %v4058 = vadd.f32 %v3409, %v3758
      %v4059 = vadd.f32 %v3410, %v3760
      %v4060 = vadd.f32 %v3411, %v3762
      %v4061 = vadd.f32 %v3412, %v3761
      %v4062 = vadd.f32 %v3413, %v3765
      %v4063 = vadd.f32 %v3414, %v3767
      %v4064 = vadd.f32 %v3415, %v3769
      %v4065 = vadd.f32 %v3416, %v3768
      %v4066 = vadd.f32 %v3417, %v3772
      %v4067 = vadd.f32 %v3418, %v3774
      %v4068 = vadd.f32 %v3419, %v3776
      %v4069 = vadd.f32 %v3420, %v3775
      %v4070 = vadd.f32 %v3421, %v3779
      %v4071 = vadd.f32 %v3422, %v3781
      %v4072 = vadd.f32 %v3423, %v3783
      %v4073 = vadd.f32 %v3424, %v3782
      %v4074 = vadd.f32 %v3425, %v3786
      %v4075 = vadd.f32 %v3426, %v3788
      %v4076 = vadd.f32 %v3427, %v3790
      %v4077 = vadd.f32 %v3428, %v3789
      %v4078 = vadd.f32 %v3429, %v3793
      %v4079 = vadd.f32 %v3430, %v3795
      %v4080 = vadd.f32 %v3431, %v3797
      %v4081 = vadd.f32 %v3432, %v3796
      %v4082 = vadd.f32 %v3433, %v3800
      %v4083 = vadd.f32 %v3434, %v3802
      %v4084 = vadd.f32 %v3435, %v3804
      %v4085 = vadd.f32 %v3436, %v3803
      %v4086 = vadd.f32 %v3437, %v3807
      %v4087 = vadd.f32 %v3438, %v3809
      %v4088 = vadd.f32 %v3439, %v3811
      %v4089 = vadd.f32 %v3440, %v3810
      %v4090 = vadd.f32 %v3441, %v3814
      %v4091 = vadd.f32 %v3442, %v3816
      %v4092 = vadd.f32 %v3443, %v3818
      %v4093 = vadd.f32 %v3444, %v3817
      %v4094 = vadd.f32 %v3445, %v3821
      %v4095 = vadd.f32 %v3446, %v3823
      %v4096 = vadd.f32 %v3447, %v3825
      %v4097 = vadd.f32 %v3448, %v3824
      %v4098 = vadd.f32 %v3449, %v3828
      %v4099 = vadd.f32 %v3450, %v3830
      %v4100 = vadd.f32 %v3451, %v3832
      %v4101 = vadd.f32 %v3452, %v3831
      %v4102 = vadd.f32 %v3453, %v3835
      %v4103 = vadd.f32 %v3454, %v3837
      %v4104 = vadd.f32 %v3455, %v3839
      %v4105 = vadd.f32 %v3456, %v3838
      %v4106 = vadd.f32 %v3457, %v3842
      %v4107 = vadd.f32 %v3458, %v3844
      %v4108 = vadd.f32 %v3459, %v3846
      %v4109 = vadd.f32 %v3460, %v3845
      %v4110 = vadd.f32 %v3461, %v3849
      %v4111 = vadd.f32 %v3462, %v3851
      %v4112 = vadd.f32 %v3463, %v3853
      %v4113 = vadd.f32 %v3464, %v3852
      %v4114 = vadd.f32 %v3465, %v3856
      %v4115 = vadd.f32 %v3466, %v3858
      %v4116 = vadd.f32 %v3467, %v3860
      %v4117 = vadd.f32 %v3468, %v3859
      %v4118 = vadd.f32 %v3469, %v3863
      %v4119 = vadd.f32 %v3470, %v3865
      %v4120 = vadd.f32 %v3471, %v3867
      %v4121 = vadd.f32 %v3472, %v3866
      %v4122 = vadd.f32 %v3473, %v3870
      %v4123 = vadd.f32 %v3474, %v3872
      %v4124 = vadd.f32 %v3475, %v3874
      %v4125 = vadd.f32 %v3476, %v3873
      %v4126 = vadd.f32 %v3477, %v3877
      %v4127 = vadd.f32 %v3478, %v3879
      %v4128 = vadd.f32 %v3479, %v3881
      %v4129 = vadd.f32 %v3480, %v3880
      %v4130 = vadd.f32 %v3481, %v3884
      %v4131 = vadd.f32 %v3482, %v3886
      %v4132 = vadd.f32 %v3483, %v3888
      %v4133 = vadd.f32 %v3484, %v3887
      %v4134 = vadd.f32 %v3485, %v3891
      %v4135 = vadd.f32 %v3486, %v3893
      %v4136 = vadd.f32 %v3487, %v3895
      %v4137 = vadd.f32 %v3488, %v3894
      %v4138 = vadd.f32 %v3489, %v3898
      %v4139 = vadd.f32 %v3490, %v3900
      %v4140 = vadd.f32 %v3491, %v3902
      %v4141 = vadd.f32 %v3492, %v3901
      %v4142 = vadd.f32 %v3493, %v3905
      %v4143 = vadd.f32 %v3494, %v3907
      %v4144 = vadd.f32 %v3495, %v3909
      %v4145 = vadd.f32 %v3496, %v3908
      %v4146 = vadd.f32 %v3497, %v3912
      %v4147 = vadd.f32 %v3498, %v3914
      %v4148 = vadd.f32 %v3499, %v3916
      %v4149 = vadd.f32 %v3500, %v3915
      %v4150 = vadd.f32 %v3501, %v3919
      %v4151 = vadd.f32 %v3502, %v3921
      %v4152 = vadd.f32 %v3503, %v3923
      %v4153 = vadd.f32 %v3504, %v3922
      %v4154 = vadd.f32 %v3505, %v3926
      %v4155 = vadd.f32 %v3506, %v3928
      %v4156 = vadd.f32 %v3507, %v3930
      %v4157 = vadd.f32 %v3508, %v3929
      %v4158 = vadd.f32 %v3509, %v3933
      %v4159 = vadd.f32 %v3510, %v3935
      %v4160 = vadd.f32 %v3511, %v3937
      %v4161 = vadd.f32 %v3512, %v3936
      %v4162 = vlaneseq
      %v4163 = vshrl.u32 %v4162, 7
      %v4164 = vsub.s32 5, %v4163
      %v4165 = vrot.slane %v882, %v4164
      %v4166 = vmul.f32 %v337, %v4165
      %v4167 = vmul.f32 %v341, %v4165
      %v4168 = vmul.f32 %v345, %v4165
      %v4169 = vmul.f32 %v349, %v4165
      %v4170 = vmul.f32 %v356, %v4165
      %v4171 = vmul.f32 %v360, %v4165
      %v4172 = vmul.f32 %v364, %v4165
      %v4173 = vmul.f32 %v368, %v4165
      %v4174 = vmul.f32 %v375, %v4165
      %v4175 = vmul.f32 %v379, %v4165
      %v4176 = vmul.f32 %v383, %v4165
      %v4177 = vmul.f32 %v387, %v4165
      %v4178 = vmul.f32 %v394, %v4165
      %v4179 = vmul.f32 %v398, %v4165
      %v4180 = vmul.f32 %v402, %v4165
      %v4181 = vmul.f32 %v406, %v4165
      %v4182 = vmul.f32 %v413, %v4165
      %v4183 = vmul.f32 %v417, %v4165
      %v4184 = vmul.f32 %v421, %v4165
      %v4185 = vmul.f32 %v425, %v4165
      %v4186 = vmul.f32 %v432, %v4165
      %v4187 = vmul.f32 %v436, %v4165
      %v4188 = vmul.f32 %v440, %v4165
      %v4189 = vmul.f32 %v444, %v4165
      %v4190 = vmul.f32 %v451, %v4165
      %v4191 = vmul.f32 %v455, %v4165
      %v4192 = vmul.f32 %v459, %v4165
      %v4193 = vmul.f32 %v463, %v4165
      %v4194 = vmul.f32 %v470, %v4165
      %v4195 = vmul.f32 %v474, %v4165
      %v4196 = vmul.f32 %v478, %v4165
      %v4197 = vmul.f32 %v482, %v4165
      %v4198 = vmul.f32 %v489, %v4165
      %v4199 = vmul.f32 %v493, %v4165
      %v4200 = vmul.f32 %v497, %v4165
      %v4201 = vmul.f32 %v501, %v4165
      %v4202 = vmul.f32 %v508, %v4165
      %v4203 = vmul.f32 %v512, %v4165
      %v4204 = vmul.f32 %v516, %v4165
      %v4205 = vmul.f32 %v520, %v4165
      %v4206 = vmul.f32 %v527, %v4165
      %v4207 = vmul.f32 %v531, %v4165
      %v4208 = vmul.f32 %v535, %v4165
      %v4209 = vmul.f32 %v539, %v4165
      %v4210 = vmul.f32 %v546, %v4165
      %v4211 = vmul.f32 %v550, %v4165
      %v4212 = vmul.f32 %v554, %v4165
      %v4213 = vmul.f32 %v558, %v4165
      %v4214 = vmul.f32 %v565, %v4165
      %v4215 = vmul.f32 %v569, %v4165
      %v4216 = vmul.f32 %v573, %v4165
      %v4217 = vmul.f32 %v577, %v4165
      %v4218 = vmul.f32 %v584, %v4165
      %v4219 = vmul.f32 %v588, %v4165
      %v4220 = vmul.f32 %v592, %v4165
      %v4221 = vmul.f32 %v596, %v4165
      %v4222 = vmul.f32 %v603, %v4165
      %v4223 = vmul.f32 %v607, %v4165
      %v4224 = vmul.f32 %v611, %v4165
      %v4225 = vmul.f32 %v615, %v4165
      %v4226 = vmul.f32 %v622, %v4165
      %v4227 = vmul.f32 %v626, %v4165
      %v4228 = vmul.f32 %v630, %v4165
      %v4229 = vmul.f32 %v634, %v4165
      %v4230 = vmul.f32 %v641, %v4165
      %v4231 = vmul.f32 %v645, %v4165
      %v4232 = vmul.f32 %v649, %v4165
      %v4233 = vmul.f32 %v653, %v4165
      %v4234 = vmul.f32 %v660, %v4165
      %v4235 = vmul.f32 %v664, %v4165
      %v4236 = vmul.f32 %v668, %v4165
      %v4237 = vmul.f32 %v672, %v4165
      %v4238 = vmul.f32 %v679, %v4165
      %v4239 = vmul.f32 %v683, %v4165
      %v4240 = vmul.f32 %v687, %v4165
      %v4241 = vmul.f32 %v691, %v4165
      %v4242 = vmul.f32 %v698, %v4165
      %v4243 = vmul.f32 %v702, %v4165
      %v4244 = vmul.f32 %v706, %v4165
      %v4245 = vmul.f32 %v710, %v4165
      %v4246 = vmul.f32 %v717, %v4165
      %v4247 = vmul.f32 %v721, %v4165
      %v4248 = vmul.f32 %v725, %v4165
      %v4249 = vmul.f32 %v729, %v4165
      %v4250 = vmul.f32 %v736, %v4165
      %v4251 = vmul.f32 %v740, %v4165
      %v4252 = vmul.f32 %v744, %v4165
      %v4253 = vmul.f32 %v748, %v4165
      %v4254 = vmul.f32 %v755, %v4165
      %v4255 = vmul.f32 %v759, %v4165
      %v4256 = vmul.f32 %v763, %v4165
      %v4257 = vmul.f32 %v767, %v4165
      %v4258 = vmul.f32 %v774, %v4165
      %v4259 = vmul.f32 %v778, %v4165
      %v4260 = vmul.f32 %v782, %v4165
      %v4261 = vmul.f32 %v786, %v4165
      %v4262 = vmul.f32 %v793, %v4165
      %v4263 = vmul.f32 %v797, %v4165
      %v4264 = vmul.f32 %v801, %v4165
      %v4265 = vmul.f32 %v805, %v4165
      %v4266 = vmul.f32 %v812, %v4165
      %v4267 = vmul.f32 %v816, %v4165
      %v4268 = vmul.f32 %v820, %v4165
      %v4269 = vmul.f32 %v824, %v4165
      %v4270 = vmul.f32 %v831, %v4165
      %v4271 = vmul.f32 %v835, %v4165
      %v4272 = vmul.f32 %v839, %v4165
      %v4273 = vmul.f32 %v843, %v4165
      %v4274 = vmul.f32 %v850, %v4165
      %v4275 = vmul.f32 %v854, %v4165
      %v4276 = vmul.f32 %v858, %v4165
      %v4277 = vmul.f32 %v862, %v4165
      %v4390 = vrot.slane %v4166, 2
      %v4391 = vrot.slane %v4167, 2
      %v4392 = vsel %vm3741, %v4390, %v4391
      %v4393 = vrot.slane %v4168, 2
      %v4394 = vsel %vm3741, %v4391, %v4393
      %v4395 = vrot.slane %v4169, 2
      %v4396 = vsel %vm3741, %v4393, %v4395
      %v4397 = vrot.slane %v4170, 2
      %v4398 = vrot.slane %v4171, 2
      %v4399 = vsel %vm3741, %v4397, %v4398
      %v4400 = vrot.slane %v4172, 2
      %v4401 = vsel %vm3741, %v4398, %v4400
      %v4402 = vrot.slane %v4173, 2
      %v4403 = vsel %vm3741, %v4400, %v4402
      %v4404 = vrot.slane %v4174, 2
      %v4405 = vrot.slane %v4175, 2
      %v4406 = vsel %vm3741, %v4404, %v4405
      %v4407 = vrot.slane %v4176, 2
      %v4408 = vsel %vm3741, %v4405, %v4407
      %v4409 = vrot.slane %v4177, 2
      %v4410 = vsel %vm3741, %v4407, %v4409
      %v4411 = vrot.slane %v4178, 2
      %v4412 = vrot.slane %v4179, 2
      %v4413 = vsel %vm3741, %v4411, %v4412
      %v4414 = vrot.slane %v4180, 2
      %v4415 = vsel %vm3741, %v4412, %v4414
      %v4416 = vrot.slane %v4181, 2
      %v4417 = vsel %vm3741, %v4414, %v4416
      %v4418 = vrot.slane %v4182, 2
      %v4419 = vrot.slane %v4183, 2
      %v4420 = vsel %vm3741, %v4418, %v4419
      %v4421 = vrot.slane %v4184, 2
      %v4422 = vsel %vm3741, %v4419, %v4421
      %v4423 = vrot.slane %v4185, 2
      %v4424 = vsel %vm3741, %v4421, %v4423
      %v4425 = vrot.slane %v4186, 2
      %v4426 = vrot.slane %v4187, 2
      %v4427 = vsel %vm3741, %v4425, %v4426
      %v4428 = vrot.slane %v4188, 2
      %v4429 = vsel %vm3741, %v4426, %v4428
      %v4430 = vrot.slane %v4189, 2
      %v4431 = vsel %vm3741, %v4428, %v4430
      %v4432 = vrot.slane %v4190, 2
      %v4433 = vrot.slane %v4191, 2
      %v4434 = vsel %vm3741, %v4432, %v4433
      %v4435 = vrot.slane %v4192, 2
      %v4436 = vsel %vm3741, %v4433, %v4435
      %v4437 = vrot.slane %v4193, 2
      %v4438 = vsel %vm3741, %v4435, %v4437
      %v4439 = vrot.slane %v4194, 2
      %v4440 = vrot.slane %v4195, 2
      %v4441 = vsel %vm3741, %v4439, %v4440
      %v4442 = vrot.slane %v4196, 2
      %v4443 = vsel %vm3741, %v4440, %v4442
      %v4444 = vrot.slane %v4197, 2
      %v4445 = vsel %vm3741, %v4442, %v4444
      %v4446 = vrot.slane %v4198, 2
      %v4447 = vrot.slane %v4199, 2
      %v4448 = vsel %vm3741, %v4446, %v4447
      %v4449 = vrot.slane %v4200, 2
      %v4450 = vsel %vm3741, %v4447, %v4449
      %v4451 = vrot.slane %v4201, 2
      %v4452 = vsel %vm3741, %v4449, %v4451
      %v4453 = vrot.slane %v4202, 2
      %v4454 = vrot.slane %v4203, 2
      %v4455 = vsel %vm3741, %v4453, %v4454
      %v4456 = vrot.slane %v4204, 2
      %v4457 = vsel %vm3741, %v4454, %v4456
      %v4458 = vrot.slane %v4205, 2
      %v4459 = vsel %vm3741, %v4456, %v4458
      %v4460 = vrot.slane %v4206, 2
      %v4461 = vrot.slane %v4207, 2
      %v4462 = vsel %vm3741, %v4460, %v4461
      %v4463 = vrot.slane %v4208, 2
      %v4464 = vsel %vm3741, %v4461, %v4463
      %v4465 = vrot.slane %v4209, 2
      %v4466 = vsel %vm3741, %v4463, %v4465
      %v4467 = vrot.slane %v4210, 2
      %v4468 = vrot.slane %v4211, 2
      %v4469 = vsel %vm3741, %v4467, %v4468
      %v4470 = vrot.slane %v4212, 2
      %v4471 = vsel %vm3741, %v4468, %v4470
      %v4472 = vrot.slane %v4213, 2
      %v4473 = vsel %vm3741, %v4470, %v4472
      %v4474 = vrot.slane %v4214, 2
      %v4475 = vrot.slane %v4215, 2
      %v4476 = vsel %vm3741, %v4474, %v4475
      %v4477 = vrot.slane %v4216, 2
      %v4478 = vsel %vm3741, %v4475, %v4477
      %v4479 = vrot.slane %v4217, 2
      %v4480 = vsel %vm3741, %v4477, %v4479
      %v4481 = vrot.slane %v4218, 2
      %v4482 = vrot.slane %v4219, 2
      %v4483 = vsel %vm3741, %v4481, %v4482
      %v4484 = vrot.slane %v4220, 2
      %v4485 = vsel %vm3741, %v4482, %v4484
      %v4486 = vrot.slane %v4221, 2
      %v4487 = vsel %vm3741, %v4484, %v4486
      %v4488 = vrot.slane %v4222, 2
      %v4489 = vrot.slane %v4223, 2
      %v4490 = vsel %vm3741, %v4488, %v4489
      %v4491 = vrot.slane %v4224, 2
      %v4492 = vsel %vm3741, %v4489, %v4491
      %v4493 = vrot.slane %v4225, 2
      %v4494 = vsel %vm3741, %v4491, %v4493
      %v4495 = vrot.slane %v4226, 2
      %v4496 = vrot.slane %v4227, 2
      %v4497 = vsel %vm3741, %v4495, %v4496
      %v4498 = vrot.slane %v4228, 2
      %v4499 = vsel %vm3741, %v4496, %v4498
      %v4500 = vrot.slane %v4229, 2
      %v4501 = vsel %vm3741, %v4498, %v4500
      %v4502 = vrot.slane %v4230, 2
      %v4503 = vrot.slane %v4231, 2
      %v4504 = vsel %vm3741, %v4502, %v4503
      %v4505 = vrot.slane %v4232, 2
      %v4506 = vsel %vm3741, %v4503, %v4505
      %v4507 = vrot.slane %v4233, 2
      %v4508 = vsel %vm3741, %v4505, %v4507
      %v4509 = vrot.slane %v4234, 2
      %v4510 = vrot.slane %v4235, 2
      %v4511 = vsel %vm3741, %v4509, %v4510
      %v4512 = vrot.slane %v4236, 2
      %v4513 = vsel %vm3741, %v4510, %v4512
      %v4514 = vrot.slane %v4237, 2
      %v4515 = vsel %vm3741, %v4512, %v4514
      %v4516 = vrot.slane %v4238, 2
      %v4517 = vrot.slane %v4239, 2
      %v4518 = vsel %vm3741, %v4516, %v4517
      %v4519 = vrot.slane %v4240, 2
      %v4520 = vsel %vm3741, %v4517, %v4519
      %v4521 = vrot.slane %v4241, 2
      %v4522 = vsel %vm3741, %v4519, %v4521
      %v4523 = vrot.slane %v4242, 2
      %v4524 = vrot.slane %v4243, 2
      %v4525 = vsel %vm3741, %v4523, %v4524
      %v4526 = vrot.slane %v4244, 2
      %v4527 = vsel %vm3741, %v4524, %v4526
      %v4528 = vrot.slane %v4245, 2
      %v4529 = vsel %vm3741, %v4526, %v4528
      %v4530 = vrot.slane %v4246, 2
      %v4531 = vrot.slane %v4247, 2
      %v4532 = vsel %vm3741, %v4530, %v4531
      %v4533 = vrot.slane %v4248, 2
      %v4534 = vsel %vm3741, %v4531, %v4533
      %v4535 = vrot.slane %v4249, 2
      %v4536 = vsel %vm3741, %v4533, %v4535
      %v4537 = vrot.slane %v4250, 2
      %v4538 = vrot.slane %v4251, 2
      %v4539 = vsel %vm3741, %v4537, %v4538
      %v4540 = vrot.slane %v4252, 2
      %v4541 = vsel %vm3741, %v4538, %v4540
      %v4542 = vrot.slane %v4253, 2
      %v4543 = vsel %vm3741, %v4540, %v4542
      %v4544 = vrot.slane %v4254, 2
      %v4545 = vrot.slane %v4255, 2
      %v4546 = vsel %vm3741, %v4544, %v4545
      %v4547 = vrot.slane %v4256, 2
      %v4548 = vsel %vm3741, %v4545, %v4547
      %v4549 = vrot.slane %v4257, 2
      %v4550 = vsel %vm3741, %v4547, %v4549
      %v4551 = vrot.slane %v4258, 2
      %v4552 = vrot.slane %v4259, 2
      %v4553 = vsel %vm3741, %v4551, %v4552
      %v4554 = vrot.slane %v4260, 2
      %v4555 = vsel %vm3741, %v4552, %v4554
      %v4556 = vrot.slane %v4261, 2
      %v4557 = vsel %vm3741, %v4554, %v4556
      %v4558 = vrot.slane %v4262, 2
      %v4559 = vrot.slane %v4263, 2
      %v4560 = vsel %vm3741, %v4558, %v4559
      %v4561 = vrot.slane %v4264, 2
      %v4562 = vsel %vm3741, %v4559, %v4561
      %v4563 = vrot.slane %v4265, 2
      %v4564 = vsel %vm3741, %v4561, %v4563
      %v4565 = vrot.slane %v4266, 2
      %v4566 = vrot.slane %v4267, 2
      %v4567 = vsel %vm3741, %v4565, %v4566
      %v4568 = vrot.slane %v4268, 2
      %v4569 = vsel %vm3741, %v4566, %v4568
      %v4570 = vrot.slane %v4269, 2
      %v4571 = vsel %vm3741, %v4568, %v4570
      %v4572 = vrot.slane %v4270, 2
      %v4573 = vrot.slane %v4271, 2
      %v4574 = vsel %vm3741, %v4572, %v4573
      %v4575 = vrot.slane %v4272, 2
      %v4576 = vsel %vm3741, %v4573, %v4575
      %v4577 = vrot.slane %v4273, 2
      %v4578 = vsel %vm3741, %v4575, %v4577
      %v4579 = vrot.slane %v4274, 2
      %v4580 = vrot.slane %v4275, 2
      %v4581 = vsel %vm3741, %v4579, %v4580
      %v4582 = vrot.slane %v4276, 2
      %v4583 = vsel %vm3741, %v4580, %v4582
      %v4584 = vrot.slane %v4277, 2
      %v4585 = vsel %vm3741, %v4582, %v4584
      %v4698 = vadd.f32 %v4050, %v4392
      %v4699 = vadd.f32 %v4051, %v4394
      %v4700 = vadd.f32 %v4052, %v4396
      %v4701 = vadd.f32 %v4053, %v4395
      %v4702 = vadd.f32 %v4054, %v4399
      %v4703 = vadd.f32 %v4055, %v4401
      %v4704 = vadd.f32 %v4056, %v4403
      %v4705 = vadd.f32 %v4057, %v4402
      %v4706 = vadd.f32 %v4058, %v4406
      %v4707 = vadd.f32 %v4059, %v4408
      %v4708 = vadd.f32 %v4060, %v4410
      %v4709 = vadd.f32 %v4061, %v4409
      %v4710 = vadd.f32 %v4062, %v4413
      %v4711 = vadd.f32 %v4063, %v4415
      %v4712 = vadd.f32 %v4064, %v4417
      %v4713 = vadd.f32 %v4065, %v4416
      %v4714 = vadd.f32 %v4066, %v4420
      %v4715 = vadd.f32 %v4067, %v4422
      %v4716 = vadd.f32 %v4068, %v4424
      %v4717 = vadd.f32 %v4069, %v4423
      %v4718 = vadd.f32 %v4070, %v4427
      %v4719 = vadd.f32 %v4071, %v4429
      %v4720 = vadd.f32 %v4072, %v4431
      %v4721 = vadd.f32 %v4073, %v4430
      %v4722 = vadd.f32 %v4074, %v4434
      %v4723 = vadd.f32 %v4075, %v4436
      %v4724 = vadd.f32 %v4076, %v4438
      %v4725 = vadd.f32 %v4077, %v4437
      %v4726 = vadd.f32 %v4078, %v4441
      %v4727 = vadd.f32 %v4079, %v4443
      %v4728 = vadd.f32 %v4080, %v4445
      %v4729 = vadd.f32 %v4081, %v4444
      %v4730 = vadd.f32 %v4082, %v4448
      %v4731 = vadd.f32 %v4083, %v4450
      %v4732 = vadd.f32 %v4084, %v4452
      %v4733 = vadd.f32 %v4085, %v4451
      %v4734 = vadd.f32 %v4086, %v4455
      %v4735 = vadd.f32 %v4087, %v4457
      %v4736 = vadd.f32 %v4088, %v4459
      %v4737 = vadd.f32 %v4089, %v4458
      %v4738 = vadd.f32 %v4090, %v4462
      %v4739 = vadd.f32 %v4091, %v4464
      %v4740 = vadd.f32 %v4092, %v4466
      %v4741 = vadd.f32 %v4093, %v4465
      %v4742 = vadd.f32 %v4094, %v4469
      %v4743 = vadd.f32 %v4095, %v4471
      %v4744 = vadd.f32 %v4096, %v4473
      %v4745 = vadd.f32 %v4097, %v4472
      %v4746 = vadd.f32 %v4098, %v4476
      %v4747 = vadd.f32 %v4099, %v4478
      %v4748 = vadd.f32 %v4100, %v4480
      %v4749 = vadd.f32 %v4101, %v4479
      %v4750 = vadd.f32 %v4102, %v4483
      %v4751 = vadd.f32 %v4103, %v4485
      %v4752 = vadd.f32 %v4104, %v4487
      %v4753 = vadd.f32 %v4105, %v4486
      %v4754 = vadd.f32 %v4106, %v4490
      %v4755 = vadd.f32 %v4107, %v4492
      %v4756 = vadd.f32 %v4108, %v4494
      %v4757 = vadd.f32 %v4109, %v4493
      %v4758 = vadd.f32 %v4110, %v4497
      %v4759 = vadd.f32 %v4111, %v4499
      %v4760 = vadd.f32 %v4112, %v4501
      %v4761 = vadd.f32 %v4113, %v4500
      %v4762 = vadd.f32 %v4114, %v4504
      %v4763 = vadd.f32 %v4115, %v4506
      %v4764 = vadd.f32 %v4116, %v4508
      %v4765 = vadd.f32 %v4117, %v4507
      %v4766 = vadd.f32 %v4118, %v4511
      %v4767 = vadd.f32 %v4119, %v4513
      %v4768 = vadd.f32 %v4120, %v4515
      %v4769 = vadd.f32 %v4121, %v4514
      %v4770 = vadd.f32 %v4122, %v4518
      %v4771 = vadd.f32 %v4123, %v4520
      %v4772 = vadd.f32 %v4124, %v4522
      %v4773 = vadd.f32 %v4125, %v4521
      %v4774 = vadd.f32 %v4126, %v4525
      %v4775 = vadd.f32 %v4127, %v4527
      %v4776 = vadd.f32 %v4128, %v4529
      %v4777 = vadd.f32 %v4129, %v4528
      %v4778 = vadd.f32 %v4130, %v4532
      %v4779 = vadd.f32 %v4131, %v4534
      %v4780 = vadd.f32 %v4132, %v4536
      %v4781 = vadd.f32 %v4133, %v4535
      %v4782 = vadd.f32 %v4134, %v4539
      %v4783 = vadd.f32 %v4135, %v4541
      %v4784 = vadd.f32 %v4136, %v4543
      %v4785 = vadd.f32 %v4137, %v4542
      %v4786 = vadd.f32 %v4138, %v4546
      %v4787 = vadd.f32 %v4139, %v4548
      %v4788 = vadd.f32 %v4140, %v4550
      %v4789 = vadd.f32 %v4141, %v4549
      %v4790 = vadd.f32 %v4142, %v4553
      %v4791 = vadd.f32 %v4143, %v4555
      %v4792 = vadd.f32 %v4144, %v4557
      %v4793 = vadd.f32 %v4145, %v4556
      %v4794 = vadd.f32 %v4146, %v4560
      %v4795 = vadd.f32 %v4147, %v4562
      %v4796 = vadd.f32 %v4148, %v4564
      %v4797 = vadd.f32 %v4149, %v4563
      %v4798 = vadd.f32 %v4150, %v4567
      %v4799 = vadd.f32 %v4151, %v4569
      %v4800 = vadd.f32 %v4152, %v4571
      %v4801 = vadd.f32 %v4153, %v4570
      %v4802 = vadd.f32 %v4154, %v4574
      %v4803 = vadd.f32 %v4155, %v4576
      %v4804 = vadd.f32 %v4156, %v4578
      %v4805 = vadd.f32 %v4157, %v4577
      %v4806 = vadd.f32 %v4158, %v4581
      %v4807 = vadd.f32 %v4159, %v4583
      %v4808 = vadd.f32 %v4160, %v4585
      %v4809 = vadd.f32 %v4161, %v4584
      %v4810 = vlaneseq
      %v4811 = vshrl.u32 %v4810, 7
      %v4812 = vsub.s32 0, %v4811
      %v4813 = vrot.slane %v883, %v4812
      %v4814 = vmul.f32 %v356, %v4813
      %v4815 = vmul.f32 %v360, %v4813
      %v4816 = vmul.f32 %v364, %v4813
      %v4817 = vmul.f32 %v368, %v4813
      %v4818 = vmul.f32 %v375, %v4813
      %v4819 = vmul.f32 %v379, %v4813
      %v4820 = vmul.f32 %v383, %v4813
      %v4821 = vmul.f32 %v387, %v4813
      %v4822 = vmul.f32 %v394, %v4813
      %v4823 = vmul.f32 %v398, %v4813
      %v4824 = vmul.f32 %v402, %v4813
      %v4825 = vmul.f32 %v406, %v4813
      %v4826 = vmul.f32 %v413, %v4813
      %v4827 = vmul.f32 %v417, %v4813
      %v4828 = vmul.f32 %v421, %v4813
      %v4829 = vmul.f32 %v425, %v4813
      %v4830 = vmul.f32 %v432, %v4813
      %v4831 = vmul.f32 %v436, %v4813
      %v4832 = vmul.f32 %v440, %v4813
      %v4833 = vmul.f32 %v444, %v4813
      %v4834 = vmul.f32 %v451, %v4813
      %v4835 = vmul.f32 %v455, %v4813
      %v4836 = vmul.f32 %v459, %v4813
      %v4837 = vmul.f32 %v463, %v4813
      %v4838 = vmul.f32 %v470, %v4813
      %v4839 = vmul.f32 %v474, %v4813
      %v4840 = vmul.f32 %v478, %v4813
      %v4841 = vmul.f32 %v482, %v4813
      %v4842 = vmul.f32 %v489, %v4813
      %v4843 = vmul.f32 %v493, %v4813
      %v4844 = vmul.f32 %v497, %v4813
      %v4845 = vmul.f32 %v501, %v4813
      %v4846 = vmul.f32 %v508, %v4813
      %v4847 = vmul.f32 %v512, %v4813
      %v4848 = vmul.f32 %v516, %v4813
      %v4849 = vmul.f32 %v520, %v4813
      %v4850 = vmul.f32 %v527, %v4813
      %v4851 = vmul.f32 %v531, %v4813
      %v4852 = vmul.f32 %v535, %v4813
      %v4853 = vmul.f32 %v539, %v4813
      %v4854 = vmul.f32 %v546, %v4813
      %v4855 = vmul.f32 %v550, %v4813
      %v4856 = vmul.f32 %v554, %v4813
      %v4857 = vmul.f32 %v558, %v4813
      %v4858 = vmul.f32 %v565, %v4813
      %v4859 = vmul.f32 %v569, %v4813
      %v4860 = vmul.f32 %v573, %v4813
      %v4861 = vmul.f32 %v577, %v4813
      %v4862 = vmul.f32 %v584, %v4813
      %v4863 = vmul.f32 %v588, %v4813
      %v4864 = vmul.f32 %v592, %v4813
      %v4865 = vmul.f32 %v596, %v4813
      %v4866 = vmul.f32 %v603, %v4813
      %v4867 = vmul.f32 %v607, %v4813
      %v4868 = vmul.f32 %v611, %v4813
      %v4869 = vmul.f32 %v615, %v4813
      %v4870 = vmul.f32 %v622, %v4813
      %v4871 = vmul.f32 %v626, %v4813
      %v4872 = vmul.f32 %v630, %v4813
      %v4873 = vmul.f32 %v634, %v4813
      %v4874 = vmul.f32 %v641, %v4813
      %v4875 = vmul.f32 %v645, %v4813
      %v4876 = vmul.f32 %v649, %v4813
      %v4877 = vmul.f32 %v653, %v4813
      %v4878 = vmul.f32 %v660, %v4813
      %v4879 = vmul.f32 %v664, %v4813
      %v4880 = vmul.f32 %v668, %v4813
      %v4881 = vmul.f32 %v672, %v4813
      %v4882 = vmul.f32 %v679, %v4813
      %v4883 = vmul.f32 %v683, %v4813
      %v4884 = vmul.f32 %v687, %v4813
      %v4885 = vmul.f32 %v691, %v4813
      %v4886 = vmul.f32 %v698, %v4813
      %v4887 = vmul.f32 %v702, %v4813
      %v4888 = vmul.f32 %v706, %v4813
      %v4889 = vmul.f32 %v710, %v4813
      %v4890 = vmul.f32 %v717, %v4813
      %v4891 = vmul.f32 %v721, %v4813
      %v4892 = vmul.f32 %v725, %v4813
      %v4893 = vmul.f32 %v729, %v4813
      %v4894 = vmul.f32 %v736, %v4813
      %v4895 = vmul.f32 %v740, %v4813
      %v4896 = vmul.f32 %v744, %v4813
      %v4897 = vmul.f32 %v748, %v4813
      %v4898 = vmul.f32 %v755, %v4813
      %v4899 = vmul.f32 %v759, %v4813
      %v4900 = vmul.f32 %v763, %v4813
      %v4901 = vmul.f32 %v767, %v4813
      %v4902 = vmul.f32 %v774, %v4813
      %v4903 = vmul.f32 %v778, %v4813
      %v4904 = vmul.f32 %v782, %v4813
      %v4905 = vmul.f32 %v786, %v4813
      %v4906 = vmul.f32 %v793, %v4813
      %v4907 = vmul.f32 %v797, %v4813
      %v4908 = vmul.f32 %v801, %v4813
      %v4909 = vmul.f32 %v805, %v4813
      %v4910 = vmul.f32 %v812, %v4813
      %v4911 = vmul.f32 %v816, %v4813
      %v4912 = vmul.f32 %v820, %v4813
      %v4913 = vmul.f32 %v824, %v4813
      %v4914 = vmul.f32 %v831, %v4813
      %v4915 = vmul.f32 %v835, %v4813
      %v4916 = vmul.f32 %v839, %v4813
      %v4917 = vmul.f32 %v843, %v4813
      %v4918 = vmul.f32 %v850, %v4813
      %v4919 = vmul.f32 %v854, %v4813
      %v4920 = vmul.f32 %v858, %v4813
      %v4921 = vmul.f32 %v862, %v4813
      %v4922 = vmul.f32 %v869, %v4813
      %v4923 = vmul.f32 %v873, %v4813
      %v4924 = vmul.f32 %v877, %v4813
      %v4925 = vmul.f32 %v881, %v4813
      %v5038 = vrot.slane %v4814, 2
      %v5039 = vrot.slane %v4815, 2
      %v5040 = vsel %vm3741, %v5038, %v5039
      %v5041 = vrot.slane %v4816, 2
      %v5042 = vsel %vm3741, %v5039, %v5041
      %v5043 = vrot.slane %v4817, 2
      %v5044 = vsel %vm3741, %v5041, %v5043
      %v5045 = vrot.slane %v4818, 2
      %v5046 = vrot.slane %v4819, 2
      %v5047 = vsel %vm3741, %v5045, %v5046
      %v5048 = vrot.slane %v4820, 2
      %v5049 = vsel %vm3741, %v5046, %v5048
      %v5050 = vrot.slane %v4821, 2
      %v5051 = vsel %vm3741, %v5048, %v5050
      %v5052 = vrot.slane %v4822, 2
      %v5053 = vrot.slane %v4823, 2
      %v5054 = vsel %vm3741, %v5052, %v5053
      %v5055 = vrot.slane %v4824, 2
      %v5056 = vsel %vm3741, %v5053, %v5055
      %v5057 = vrot.slane %v4825, 2
      %v5058 = vsel %vm3741, %v5055, %v5057
      %v5059 = vrot.slane %v4826, 2
      %v5060 = vrot.slane %v4827, 2
      %v5061 = vsel %vm3741, %v5059, %v5060
      %v5062 = vrot.slane %v4828, 2
      %v5063 = vsel %vm3741, %v5060, %v5062
      %v5064 = vrot.slane %v4829, 2
      %v5065 = vsel %vm3741, %v5062, %v5064
      %v5066 = vrot.slane %v4830, 2
      %v5067 = vrot.slane %v4831, 2
      %v5068 = vsel %vm3741, %v5066, %v5067
      %v5069 = vrot.slane %v4832, 2
      %v5070 = vsel %vm3741, %v5067, %v5069
      %v5071 = vrot.slane %v4833, 2
      %v5072 = vsel %vm3741, %v5069, %v5071
      %v5073 = vrot.slane %v4834, 2
      %v5074 = vrot.slane %v4835, 2
      %v5075 = vsel %vm3741, %v5073, %v5074
      %v5076 = vrot.slane %v4836, 2
      %v5077 = vsel %vm3741, %v5074, %v5076
      %v5078 = vrot.slane %v4837, 2
      %v5079 = vsel %vm3741, %v5076, %v5078
      %v5080 = vrot.slane %v4838, 2
      %v5081 = vrot.slane %v4839, 2
      %v5082 = vsel %vm3741, %v5080, %v5081
      %v5083 = vrot.slane %v4840, 2
      %v5084 = vsel %vm3741, %v5081, %v5083
      %v5085 = vrot.slane %v4841, 2
      %v5086 = vsel %vm3741, %v5083, %v5085
      %v5087 = vrot.slane %v4842, 2
      %v5088 = vrot.slane %v4843, 2
      %v5089 = vsel %vm3741, %v5087, %v5088
      %v5090 = vrot.slane %v4844, 2
      %v5091 = vsel %vm3741, %v5088, %v5090
      %v5092 = vrot.slane %v4845, 2
      %v5093 = vsel %vm3741, %v5090, %v5092
      %v5094 = vrot.slane %v4846, 2
      %v5095 = vrot.slane %v4847, 2
      %v5096 = vsel %vm3741, %v5094, %v5095
      %v5097 = vrot.slane %v4848, 2
      %v5098 = vsel %vm3741, %v5095, %v5097
      %v5099 = vrot.slane %v4849, 2
      %v5100 = vsel %vm3741, %v5097, %v5099
      %v5101 = vrot.slane %v4850, 2
      %v5102 = vrot.slane %v4851, 2
      %v5103 = vsel %vm3741, %v5101, %v5102
      %v5104 = vrot.slane %v4852, 2
      %v5105 = vsel %vm3741, %v5102, %v5104
      %v5106 = vrot.slane %v4853, 2
      %v5107 = vsel %vm3741, %v5104, %v5106
      %v5108 = vrot.slane %v4854, 2
      %v5109 = vrot.slane %v4855, 2
      %v5110 = vsel %vm3741, %v5108, %v5109
      %v5111 = vrot.slane %v4856, 2
      %v5112 = vsel %vm3741, %v5109, %v5111
      %v5113 = vrot.slane %v4857, 2
      %v5114 = vsel %vm3741, %v5111, %v5113
      %v5115 = vrot.slane %v4858, 2
      %v5116 = vrot.slane %v4859, 2
      %v5117 = vsel %vm3741, %v5115, %v5116
      %v5118 = vrot.slane %v4860, 2
      %v5119 = vsel %vm3741, %v5116, %v5118
      %v5120 = vrot.slane %v4861, 2
      %v5121 = vsel %vm3741, %v5118, %v5120
      %v5122 = vrot.slane %v4862, 2
      %v5123 = vrot.slane %v4863, 2
      %v5124 = vsel %vm3741, %v5122, %v5123
      %v5125 = vrot.slane %v4864, 2
      %v5126 = vsel %vm3741, %v5123, %v5125
      %v5127 = vrot.slane %v4865, 2
      %v5128 = vsel %vm3741, %v5125, %v5127
      %v5129 = vrot.slane %v4866, 2
      %v5130 = vrot.slane %v4867, 2
      %v5131 = vsel %vm3741, %v5129, %v5130
      %v5132 = vrot.slane %v4868, 2
      %v5133 = vsel %vm3741, %v5130, %v5132
      %v5134 = vrot.slane %v4869, 2
      %v5135 = vsel %vm3741, %v5132, %v5134
      %v5136 = vrot.slane %v4870, 2
      %v5137 = vrot.slane %v4871, 2
      %v5138 = vsel %vm3741, %v5136, %v5137
      %v5139 = vrot.slane %v4872, 2
      %v5140 = vsel %vm3741, %v5137, %v5139
      %v5141 = vrot.slane %v4873, 2
      %v5142 = vsel %vm3741, %v5139, %v5141
      %v5143 = vrot.slane %v4874, 2
      %v5144 = vrot.slane %v4875, 2
      %v5145 = vsel %vm3741, %v5143, %v5144
      %v5146 = vrot.slane %v4876, 2
      %v5147 = vsel %vm3741, %v5144, %v5146
      %v5148 = vrot.slane %v4877, 2
      %v5149 = vsel %vm3741, %v5146, %v5148
      %v5150 = vrot.slane %v4878, 2
      %v5151 = vrot.slane %v4879, 2
      %v5152 = vsel %vm3741, %v5150, %v5151
      %v5153 = vrot.slane %v4880, 2
      %v5154 = vsel %vm3741, %v5151, %v5153
      %v5155 = vrot.slane %v4881, 2
      %v5156 = vsel %vm3741, %v5153, %v5155
      %v5157 = vrot.slane %v4882, 2
      %v5158 = vrot.slane %v4883, 2
      %v5159 = vsel %vm3741, %v5157, %v5158
      %v5160 = vrot.slane %v4884, 2
      %v5161 = vsel %vm3741, %v5158, %v5160
      %v5162 = vrot.slane %v4885, 2
      %v5163 = vsel %vm3741, %v5160, %v5162
      %v5164 = vrot.slane %v4886, 2
      %v5165 = vrot.slane %v4887, 2
      %v5166 = vsel %vm3741, %v5164, %v5165
      %v5167 = vrot.slane %v4888, 2
      %v5168 = vsel %vm3741, %v5165, %v5167
      %v5169 = vrot.slane %v4889, 2
      %v5170 = vsel %vm3741, %v5167, %v5169
      %v5171 = vrot.slane %v4890, 2
      %v5172 = vrot.slane %v4891, 2
      %v5173 = vsel %vm3741, %v5171, %v5172
      %v5174 = vrot.slane %v4892, 2
      %v5175 = vsel %vm3741, %v5172, %v5174
      %v5176 = vrot.slane %v4893, 2
      %v5177 = vsel %vm3741, %v5174, %v5176
      %v5178 = vrot.slane %v4894, 2
      %v5179 = vrot.slane %v4895, 2
      %v5180 = vsel %vm3741, %v5178, %v5179
      %v5181 = vrot.slane %v4896, 2
      %v5182 = vsel %vm3741, %v5179, %v5181
      %v5183 = vrot.slane %v4897, 2
      %v5184 = vsel %vm3741, %v5181, %v5183
      %v5185 = vrot.slane %v4898, 2
      %v5186 = vrot.slane %v4899, 2
      %v5187 = vsel %vm3741, %v5185, %v5186
      %v5188 = vrot.slane %v4900, 2
      %v5189 = vsel %vm3741, %v5186, %v5188
      %v5190 = vrot.slane %v4901, 2
      %v5191 = vsel %vm3741, %v5188, %v5190
      %v5192 = vrot.slane %v4902, 2
      %v5193 = vrot.slane %v4903, 2
      %v5194 = vsel %vm3741, %v5192, %v5193
      %v5195 = vrot.slane %v4904, 2
      %v5196 = vsel %vm3741, %v5193, %v5195
      %v5197 = vrot.slane %v4905, 2
      %v5198 = vsel %vm3741, %v5195, %v5197
      %v5199 = vrot.slane %v4906, 2
      %v5200 = vrot.slane %v4907, 2
      %v5201 = vsel %vm3741, %v5199, %v5200
      %v5202 = vrot.slane %v4908, 2
      %v5203 = vsel %vm3741, %v5200, %v5202
      %v5204 = vrot.slane %v4909, 2
      %v5205 = vsel %vm3741, %v5202, %v5204
      %v5206 = vrot.slane %v4910, 2
      %v5207 = vrot.slane %v4911, 2
      %v5208 = vsel %vm3741, %v5206, %v5207
      %v5209 = vrot.slane %v4912, 2
      %v5210 = vsel %vm3741, %v5207, %v5209
      %v5211 = vrot.slane %v4913, 2
      %v5212 = vsel %vm3741, %v5209, %v5211
      %v5213 = vrot.slane %v4914, 2
      %v5214 = vrot.slane %v4915, 2
      %v5215 = vsel %vm3741, %v5213, %v5214
      %v5216 = vrot.slane %v4916, 2
      %v5217 = vsel %vm3741, %v5214, %v5216
      %v5218 = vrot.slane %v4917, 2
      %v5219 = vsel %vm3741, %v5216, %v5218
      %v5220 = vrot.slane %v4918, 2
      %v5221 = vrot.slane %v4919, 2
      %v5222 = vsel %vm3741, %v5220, %v5221
      %v5223 = vrot.slane %v4920, 2
      %v5224 = vsel %vm3741, %v5221, %v5223
      %v5225 = vrot.slane %v4921, 2
      %v5226 = vsel %vm3741, %v5223, %v5225
      %v5227 = vrot.slane %v4922, 2
      %v5228 = vrot.slane %v4923, 2
      %v5229 = vsel %vm3741, %v5227, %v5228
      %v5230 = vrot.slane %v4924, 2
      %v5231 = vsel %vm3741, %v5228, %v5230
      %v5232 = vrot.slane %v4925, 2
      %v5233 = vsel %vm3741, %v5230, %v5232
      %v5346 = vadd.f32 %v4698, %v5040
      %v5347 = vadd.f32 %v4699, %v5042
      %v5348 = vadd.f32 %v4700, %v5044
      %v5349 = vadd.f32 %v4701, %v5043
      %v5350 = vadd.f32 %v4702, %v5047
      %v5351 = vadd.f32 %v4703, %v5049
      %v5352 = vadd.f32 %v4704, %v5051
      %v5353 = vadd.f32 %v4705, %v5050
      %v5354 = vadd.f32 %v4706, %v5054
      %v5355 = vadd.f32 %v4707, %v5056
      %v5356 = vadd.f32 %v4708, %v5058
      %v5357 = vadd.f32 %v4709, %v5057
      %v5358 = vadd.f32 %v4710, %v5061
      %v5359 = vadd.f32 %v4711, %v5063
      %v5360 = vadd.f32 %v4712, %v5065
      %v5361 = vadd.f32 %v4713, %v5064
      %v5362 = vadd.f32 %v4714, %v5068
      %v5363 = vadd.f32 %v4715, %v5070
      %v5364 = vadd.f32 %v4716, %v5072
      %v5365 = vadd.f32 %v4717, %v5071
      %v5366 = vadd.f32 %v4718, %v5075
      %v5367 = vadd.f32 %v4719, %v5077
      %v5368 = vadd.f32 %v4720, %v5079
      %v5369 = vadd.f32 %v4721, %v5078
      %v5370 = vadd.f32 %v4722, %v5082
      %v5371 = vadd.f32 %v4723, %v5084
      %v5372 = vadd.f32 %v4724, %v5086
      %v5373 = vadd.f32 %v4725, %v5085
      %v5374 = vadd.f32 %v4726, %v5089
      %v5375 = vadd.f32 %v4727, %v5091
      %v5376 = vadd.f32 %v4728, %v5093
      %v5377 = vadd.f32 %v4729, %v5092
      %v5378 = vadd.f32 %v4730, %v5096
      %v5379 = vadd.f32 %v4731, %v5098
      %v5380 = vadd.f32 %v4732, %v5100
      %v5381 = vadd.f32 %v4733, %v5099
      %v5382 = vadd.f32 %v4734, %v5103
      %v5383 = vadd.f32 %v4735, %v5105
      %v5384 = vadd.f32 %v4736, %v5107
      %v5385 = vadd.f32 %v4737, %v5106
      %v5386 = vadd.f32 %v4738, %v5110
      %v5387 = vadd.f32 %v4739, %v5112
      %v5388 = vadd.f32 %v4740, %v5114
      %v5389 = vadd.f32 %v4741, %v5113
      %v5390 = vadd.f32 %v4742, %v5117
      %v5391 = vadd.f32 %v4743, %v5119
      %v5392 = vadd.f32 %v4744, %v5121
      %v5393 = vadd.f32 %v4745, %v5120
      %v5394 = vadd.f32 %v4746, %v5124
      %v5395 = vadd.f32 %v4747, %v5126
      %v5396 = vadd.f32 %v4748, %v5128
      %v5397 = vadd.f32 %v4749, %v5127
      %v5398 = vadd.f32 %v4750, %v5131
      %v5399 = vadd.f32 %v4751, %v5133
      %v5400 = vadd.f32 %v4752, %v5135
      %v5401 = vadd.f32 %v4753, %v5134
      %v5402 = vadd.f32 %v4754, %v5138
      %v5403 = vadd.f32 %v4755, %v5140
      %v5404 = vadd.f32 %v4756, %v5142
      %v5405 = vadd.f32 %v4757, %v5141
      %v5406 = vadd.f32 %v4758, %v5145
      %v5407 = vadd.f32 %v4759, %v5147
      %v5408 = vadd.f32 %v4760, %v5149
      %v5409 = vadd.f32 %v4761, %v5148
      %v5410 = vadd.f32 %v4762, %v5152
      %v5411 = vadd.f32 %v4763, %v5154
      %v5412 = vadd.f32 %v4764, %v5156
      %v5413 = vadd.f32 %v4765, %v5155
      %v5414 = vadd.f32 %v4766, %v5159
      %v5415 = vadd.f32 %v4767, %v5161
      %v5416 = vadd.f32 %v4768, %v5163
      %v5417 = vadd.f32 %v4769, %v5162
      %v5418 = vadd.f32 %v4770, %v5166
      %v5419 = vadd.f32 %v4771, %v5168
      %v5420 = vadd.f32 %v4772, %v5170
      %v5421 = vadd.f32 %v4773, %v5169
      %v5422 = vadd.f32 %v4774, %v5173
      %v5423 = vadd.f32 %v4775, %v5175
      %v5424 = vadd.f32 %v4776, %v5177
      %v5425 = vadd.f32 %v4777, %v5176
      %v5426 = vadd.f32 %v4778, %v5180
      %v5427 = vadd.f32 %v4779, %v5182
      %v5428 = vadd.f32 %v4780, %v5184
      %v5429 = vadd.f32 %v4781, %v5183
      %v5430 = vadd.f32 %v4782, %v5187
      %v5431 = vadd.f32 %v4783, %v5189
      %v5432 = vadd.f32 %v4784, %v5191
      %v5433 = vadd.f32 %v4785, %v5190
      %v5434 = vadd.f32 %v4786, %v5194
      %v5435 = vadd.f32 %v4787, %v5196
      %v5436 = vadd.f32 %v4788, %v5198
      %v5437 = vadd.f32 %v4789, %v5197
      %v5438 = vadd.f32 %v4790, %v5201
      %v5439 = vadd.f32 %v4791, %v5203
      %v5440 = vadd.f32 %v4792, %v5205
      %v5441 = vadd.f32 %v4793, %v5204
      %v5442 = vadd.f32 %v4794, %v5208
      %v5443 = vadd.f32 %v4795, %v5210
      %v5444 = vadd.f32 %v4796, %v5212
      %v5445 = vadd.f32 %v4797, %v5211
      %v5446 = vadd.f32 %v4798, %v5215
      %v5447 = vadd.f32 %v4799, %v5217
      %v5448 = vadd.f32 %v4800, %v5219
      %v5449 = vadd.f32 %v4801, %v5218
      %v5450 = vadd.f32 %v4802, %v5222
      %v5451 = vadd.f32 %v4803, %v5224
      %v5452 = vadd.f32 %v4804, %v5226
      %v5453 = vadd.f32 %v4805, %v5225
      %v5454 = vadd.f32 %v4806, %v5229
      %v5455 = vadd.f32 %v4807, %v5231
      %v5456 = vadd.f32 %v4808, %v5233
      %v5457 = vadd.f32 %v4809, %v5232
      %v5458 = vld [vmem:[%s2] sm:$0x1]
      %v5460 = vlaneseq
      %v5461 = vshrl.u32 %v5460, 7
      %v5462 = vsub.s32 0, %v5461
      %v5463 = vrot.slane %v5458, %v5462
      %v5465 = vadd.f32 %v5346, %v5463
      %v5466 = vadd.f32 %v5347, %v5463
      %v5467 = vadd.f32 %v5348, %v5463
      %v5468 = vadd.f32 %v5349, %v5463
      %v5469 = vadd.f32 %v5350, %v5463
      %v5470 = vadd.f32 %v5351, %v5463
      %v5471 = vadd.f32 %v5352, %v5463
      %v5472 = vadd.f32 %v5353, %v5463
      %v5473 = vadd.f32 %v5354, %v5463
      %v5474 = vadd.f32 %v5355, %v5463
      %v5475 = vadd.f32 %v5356, %v5463
      %v5476 = vadd.f32 %v5357, %v5463
      %v5477 = vadd.f32 %v5358, %v5463
      %v5478 = vadd.f32 %v5359, %v5463
      %v5479 = vadd.f32 %v5360, %v5463
      %v5480 = vadd.f32 %v5361, %v5463
      %v5481 = vadd.f32 %v5362, %v5463
      %v5482 = vadd.f32 %v5363, %v5463
      %v5483 = vadd.f32 %v5364, %v5463
      %v5484 = vadd.f32 %v5365, %v5463
      %v5485 = vadd.f32 %v5366, %v5463
      %v5486 = vadd.f32 %v5367, %v5463
      %v5487 = vadd.f32 %v5368, %v5463
      %v5488 = vadd.f32 %v5369, %v5463
      %v5489 = vadd.f32 %v5370, %v5463
      %v5490 = vadd.f32 %v5371, %v5463
      %v5491 = vadd.f32 %v5372, %v5463
      %v5492 = vadd.f32 %v5373, %v5463
      %v5493 = vadd.f32 %v5374, %v5463
      %v5494 = vadd.f32 %v5375, %v5463
      %v5495 = vadd.f32 %v5376, %v5463
      %v5496 = vadd.f32 %v5377, %v5463
      %v5497 = vadd.f32 %v5378, %v5463
      %v5498 = vadd.f32 %v5379, %v5463
      %v5499 = vadd.f32 %v5380, %v5463
      %v5500 = vadd.f32 %v5381, %v5463
      %v5501 = vadd.f32 %v5382, %v5463
      %v5502 = vadd.f32 %v5383, %v5463
      %v5503 = vadd.f32 %v5384, %v5463
      %v5504 = vadd.f32 %v5385, %v5463
      %v5505 = vadd.f32 %v5386, %v5463
      %v5506 = vadd.f32 %v5387, %v5463
      %v5507 = vadd.f32 %v5388, %v5463
      %v5508 = vadd.f32 %v5389, %v5463
      %v5509 = vadd.f32 %v5390, %v5463
      %v5510 = vadd.f32 %v5391, %v5463
      %v5511 = vadd.f32 %v5392, %v5463
      %v5512 = vadd.f32 %v5393, %v5463
      %v5513 = vadd.f32 %v5394, %v5463
      %v5514 = vadd.f32 %v5395, %v5463
      %v5515 = vadd.f32 %v5396, %v5463
      %v5516 = vadd.f32 %v5397, %v5463
      %v5517 = vadd.f32 %v5398, %v5463
      %v5518 = vadd.f32 %v5399, %v5463
      %v5519 = vadd.f32 %v5400, %v5463
      %v5520 = vadd.f32 %v5401, %v5463
      %v5521 = vadd.f32 %v5402, %v5463
      %v5522 = vadd.f32 %v5403, %v5463
      %v5523 = vadd.f32 %v5404, %v5463
      %v5524 = vadd.f32 %v5405, %v5463
      %v5525 = vadd.f32 %v5406, %v5463
      %v5526 = vadd.f32 %v5407, %v5463
      %v5527 = vadd.f32 %v5408, %v5463
      %v5528 = vadd.f32 %v5409, %v5463
      %v5529 = vadd.f32 %v5410, %v5463
      %v5530 = vadd.f32 %v5411, %v5463
      %v5531 = vadd.f32 %v5412, %v5463
      %v5532 = vadd.f32 %v5413, %v5463
      %v5533 = vadd.f32 %v5414, %v5463
      %v5534 = vadd.f32 %v5415, %v5463
      %v5535 = vadd.f32 %v5416, %v5463
      %v5536 = vadd.f32 %v5417, %v5463
      %v5537 = vadd.f32 %v5418, %v5463
      %v5538 = vadd.f32 %v5419, %v5463
      %v5539 = vadd.f32 %v5420, %v5463
      %v5540 = vadd.f32 %v5421, %v5463
      %v5541 = vadd.f32 %v5422, %v5463
      %v5542 = vadd.f32 %v5423, %v5463
      %v5543 = vadd.f32 %v5424, %v5463
      %v5544 = vadd.f32 %v5425, %v5463
      %v5545 = vadd.f32 %v5426, %v5463
      %v5546 = vadd.f32 %v5427, %v5463
      %v5547 = vadd.f32 %v5428, %v5463
      %v5548 = vadd.f32 %v5429, %v5463
      %v5549 = vadd.f32 %v5430, %v5463
      %v5550 = vadd.f32 %v5431, %v5463
      %v5551 = vadd.f32 %v5432, %v5463
      %v5552 = vadd.f32 %v5433, %v5463
      %v5553 = vadd.f32 %v5434, %v5463
      %v5554 = vadd.f32 %v5435, %v5463
      %v5555 = vadd.f32 %v5436, %v5463
      %v5556 = vadd.f32 %v5437, %v5463
      %v5557 = vadd.f32 %v5438, %v5463
      %v5558 = vadd.f32 %v5439, %v5463
      %v5559 = vadd.f32 %v5440, %v5463
      %v5560 = vadd.f32 %v5441, %v5463
      %v5561 = vadd.f32 %v5442, %v5463
      %v5562 = vadd.f32 %v5443, %v5463
      %v5563 = vadd.f32 %v5444, %v5463
      %v5564 = vadd.f32 %v5445, %v5463
      %v5565 = vadd.f32 %v5446, %v5463
      %v5566 = vadd.f32 %v5447, %v5463
      %v5567 = vadd.f32 %v5448, %v5463
      %v5568 = vadd.f32 %v5449, %v5463
      %v5569 = vadd.f32 %v5450, %v5463
      %v5570 = vadd.f32 %v5451, %v5463
      %v5571 = vadd.f32 %v5452, %v5463
      %v5572 = vadd.f32 %v5453, %v5463
      %v5573 = vadd.f32 %v5454, %v5463
      %v5574 = vadd.f32 %v5455, %v5463
      %v5575 = vadd.f32 %v5456, %v5463
      %v5576 = vadd.f32 %v5457, %v5463
      %v5577 = vmax.f32 %v5465, 0.0
      %v5578 = vmax.f32 %v5466, 0.0
      %v5579 = vmax.f32 %v5467, 0.0
      %v5580 = vmax.f32 %v5468, 0.0
      %v5581 = vmax.f32 %v5469, 0.0
      %v5582 = vmax.f32 %v5470, 0.0
      %v5583 = vmax.f32 %v5471, 0.0
      %v5584 = vmax.f32 %v5472, 0.0
      %v5585 = vmax.f32 %v5473, 0.0
      %v5586 = vmax.f32 %v5474, 0.0
      %v5587 = vmax.f32 %v5475, 0.0
      %v5588 = vmax.f32 %v5476, 0.0
      %v5589 = vmax.f32 %v5477, 0.0
      %v5590 = vmax.f32 %v5478, 0.0
      %v5591 = vmax.f32 %v5479, 0.0
      %v5592 = vmax.f32 %v5480, 0.0
      %v5593 = vmax.f32 %v5481, 0.0
      %v5594 = vmax.f32 %v5482, 0.0
      %v5595 = vmax.f32 %v5483, 0.0
      %v5596 = vmax.f32 %v5484, 0.0
      %v5597 = vmax.f32 %v5485, 0.0
      %v5598 = vmax.f32 %v5486, 0.0
      %v5599 = vmax.f32 %v5487, 0.0
      %v5600 = vmax.f32 %v5488, 0.0
      %v5601 = vmax.f32 %v5489, 0.0
      %v5602 = vmax.f32 %v5490, 0.0
      %v5603 = vmax.f32 %v5491, 0.0
      %v5604 = vmax.f32 %v5492, 0.0
      %v5605 = vmax.f32 %v5493, 0.0
      %v5606 = vmax.f32 %v5494, 0.0
      %v5607 = vmax.f32 %v5495, 0.0
      %v5608 = vmax.f32 %v5496, 0.0
      %v5609 = vmax.f32 %v5497, 0.0
      %v5610 = vmax.f32 %v5498, 0.0
      %v5611 = vmax.f32 %v5499, 0.0
      %v5612 = vmax.f32 %v5500, 0.0
      %v5613 = vmax.f32 %v5501, 0.0
      %v5614 = vmax.f32 %v5502, 0.0
      %v5615 = vmax.f32 %v5503, 0.0
      %v5616 = vmax.f32 %v5504, 0.0
      %v5617 = vmax.f32 %v5505, 0.0
      %v5618 = vmax.f32 %v5506, 0.0
      %v5619 = vmax.f32 %v5507, 0.0
      %v5620 = vmax.f32 %v5508, 0.0
      %v5621 = vmax.f32 %v5509, 0.0
      %v5622 = vmax.f32 %v5510, 0.0
      %v5623 = vmax.f32 %v5511, 0.0
      %v5624 = vmax.f32 %v5512, 0.0
      %v5625 = vmax.f32 %v5513, 0.0
      %v5626 = vmax.f32 %v5514, 0.0
      %v5627 = vmax.f32 %v5515, 0.0
      %v5628 = vmax.f32 %v5516, 0.0
      %v5629 = vmax.f32 %v5517, 0.0
      %v5630 = vmax.f32 %v5518, 0.0
      %v5631 = vmax.f32 %v5519, 0.0
      %v5632 = vmax.f32 %v5520, 0.0
      %v5633 = vmax.f32 %v5521, 0.0
      %v5634 = vmax.f32 %v5522, 0.0
      %v5635 = vmax.f32 %v5523, 0.0
      %v5636 = vmax.f32 %v5524, 0.0
      %v5637 = vmax.f32 %v5525, 0.0
      %v5638 = vmax.f32 %v5526, 0.0
      %v5639 = vmax.f32 %v5527, 0.0
      %v5640 = vmax.f32 %v5528, 0.0
      %v5641 = vmax.f32 %v5529, 0.0
      %v5642 = vmax.f32 %v5530, 0.0
      %v5643 = vmax.f32 %v5531, 0.0
      %v5644 = vmax.f32 %v5532, 0.0
      %v5645 = vmax.f32 %v5533, 0.0
      %v5646 = vmax.f32 %v5534, 0.0
      %v5647 = vmax.f32 %v5535, 0.0
      %v5648 = vmax.f32 %v5536, 0.0
      %v5649 = vmax.f32 %v5537, 0.0
      %v5650 = vmax.f32 %v5538, 0.0
      %v5651 = vmax.f32 %v5539, 0.0
      %v5652 = vmax.f32 %v5540, 0.0
      %v5653 = vmax.f32 %v5541, 0.0
      %v5654 = vmax.f32 %v5542, 0.0
      %v5655 = vmax.f32 %v5543, 0.0
      %v5656 = vmax.f32 %v5544, 0.0
      %v5657 = vmax.f32 %v5545, 0.0
      %v5658 = vmax.f32 %v5546, 0.0
      %v5659 = vmax.f32 %v5547, 0.0
      %v5660 = vmax.f32 %v5548, 0.0
      %v5661 = vmax.f32 %v5549, 0.0
      %v5662 = vmax.f32 %v5550, 0.0
      %v5663 = vmax.f32 %v5551, 0.0
      %v5664 = vmax.f32 %v5552, 0.0
      %v5665 = vmax.f32 %v5553, 0.0
      %v5666 = vmax.f32 %v5554, 0.0
      %v5667 = vmax.f32 %v5555, 0.0
      %v5668 = vmax.f32 %v5556, 0.0
      %v5669 = vmax.f32 %v5557, 0.0
      %v5670 = vmax.f32 %v5558, 0.0
      %v5671 = vmax.f32 %v5559, 0.0
      %v5672 = vmax.f32 %v5560, 0.0
      %v5673 = vmax.f32 %v5561, 0.0
      %v5674 = vmax.f32 %v5562, 0.0
      %v5675 = vmax.f32 %v5563, 0.0
      %v5676 = vmax.f32 %v5564, 0.0
      %v5677 = vmax.f32 %v5565, 0.0
      %v5678 = vmax.f32 %v5566, 0.0
      %v5679 = vmax.f32 %v5567, 0.0
      %v5680 = vmax.f32 %v5568, 0.0
      %v5681 = vmax.f32 %v5569, 0.0
      %v5682 = vmax.f32 %v5570, 0.0
      %v5683 = vmax.f32 %v5571, 0.0
      %v5684 = vmax.f32 %v5572, 0.0
      %v5685 = vmax.f32 %v5573, 0.0
      %v5686 = vmax.f32 %v5574, 0.0
      %v5687 = vmax.f32 %v5575, 0.0
      %v5688 = vmax.f32 %v5576, 0.0
      %v5689 = vsel %vm232, %v5577, -inf
      %v5690 = vsel %vm232, %v5581, -inf
      %v5691 = vmax.f32 %v5689, %v5690
      %v5692 = vsel %vm232, %v5578, -inf
      %v5693 = vsel %vm232, %v5582, -inf
      %v5694 = vmax.f32 %v5692, %v5693
      %v5695 = vsel %vm232, %v5579, -inf
      %v5696 = vsel %vm232, %v5583, -inf
      %v5697 = vmax.f32 %v5695, %v5696
      %vm5698 = vcmask 257024
      %v5699 = vsel %vm5698, %v5580, -inf
      %v5700 = vsel %vm5698, %v5584, -inf
      %v5701 = vmax.f32 %v5699, %v5700
      %v5702 = vsel %vm232, %v5585, -inf
      %v5703 = vsel %vm232, %v5589, -inf
      %v5704 = vmax.f32 %v5702, %v5703
      %v5705 = vsel %vm232, %v5586, -inf
      %v5706 = vsel %vm232, %v5590, -inf
      %v5707 = vmax.f32 %v5705, %v5706
      %v5708 = vsel %vm232, %v5587, -inf
      %v5709 = vsel %vm232, %v5591, -inf
      %v5710 = vmax.f32 %v5708, %v5709
      %v5711 = vsel %vm5698, %v5588, -inf
      %v5712 = vsel %vm5698, %v5592, -inf
      %v5713 = vmax.f32 %v5711, %v5712
      %v5714 = vsel %vm232, %v5593, -inf
      %v5715 = vsel %vm232, %v5597, -inf
      %v5716 = vmax.f32 %v5714, %v5715
      %v5717 = vsel %vm232, %v5594, -inf
      %v5718 = vsel %vm232, %v5598, -inf
      %v5719 = vmax.f32 %v5717, %v5718
      %v5720 = vsel %vm232, %v5595, -inf
      %v5721 = vsel %vm232, %v5599, -inf
      %v5722 = vmax.f32 %v5720, %v5721
      %v5723 = vsel %vm5698, %v5596, -inf
      %v5724 = vsel %vm5698, %v5600, -inf
      %v5725 = vmax.f32 %v5723, %v5724
      %v5726 = vsel %vm232, %v5601, -inf
      %v5727 = vsel %vm232, %v5605, -inf
      %v5728 = vmax.f32 %v5726, %v5727
      %v5729 = vsel %vm232, %v5602, -inf
      %v5730 = vsel %vm232, %v5606, -inf
      %v5731 = vmax.f32 %v5729, %v5730
      %v5732 = vsel %vm232, %v5603, -inf
      %v5733 = vsel %vm232, %v5607, -inf
      %v5734 = vmax.f32 %v5732, %v5733
      %v5735 = vsel %vm5698, %v5604, -inf
      %v5736 = vsel %vm5698, %v5608, -inf
      %v5737 = vmax.f32 %v5735, %v5736
      %v5738 = vsel %vm232, %v5609, -inf
      %v5739 = vsel %vm232, %v5613, -inf
      %v5740 = vmax.f32 %v5738, %v5739
      %v5741 = vsel %vm232, %v5610, -inf
      %v5742 = vsel %vm232, %v5614, -inf
      %v5743 = vmax.f32 %v5741, %v5742
      %v5744 = vsel %vm232, %v5611, -inf
      %v5745 = vsel %vm232, %v5615, -inf
      %v5746 = vmax.f32 %v5744, %v5745
      %v5747 = vsel %vm5698, %v5612, -inf
      %v5748 = vsel %vm5698, %v5616, -inf
      %v5749 = vmax.f32 %v5747, %v5748
      %v5750 = vsel %vm232, %v5617, -inf
      %v5751 = vsel %vm232, %v5621, -inf
      %v5752 = vmax.f32 %v5750, %v5751
      %v5753 = vsel %vm232, %v5618, -inf
      %v5754 = vsel %vm232, %v5622, -inf
      %v5755 = vmax.f32 %v5753, %v5754
      %v5756 = vsel %vm232, %v5619, -inf
      %v5757 = vsel %vm232, %v5623, -inf
      %v5758 = vmax.f32 %v5756, %v5757
      %v5759 = vsel %vm5698, %v5620, -inf
      %v5760 = vsel %vm5698, %v5624, -inf
      %v5761 = vmax.f32 %v5759, %v5760
      %v5762 = vsel %vm232, %v5625, -inf
      %v5763 = vsel %vm232, %v5629, -inf
      %v5764 = vmax.f32 %v5762, %v5763
      %v5765 = vsel %vm232, %v5626, -inf
      %v5766 = vsel %vm232, %v5630, -inf
      %v5767 = vmax.f32 %v5765, %v5766
      %v5768 = vsel %vm232, %v5627, -inf
      %v5769 = vsel %vm232, %v5631, -inf
      %v5770 = vmax.f32 %v5768, %v5769
      %v5771 = vsel %vm5698, %v5628, -inf
      %v5772 = vsel %vm5698, %v5632, -inf
      %v5773 = vmax.f32 %v5771, %v5772
      %v5774 = vsel %vm232, %v5633, -inf
      %v5775 = vsel %vm232, %v5637, -inf
      %v5776 = vmax.f32 %v5774, %v5775
      %v5777 = vsel %vm232, %v5634, -inf
      %v5778 = vsel %vm232, %v5638, -inf
      %v5779 = vmax.f32 %v5777, %v5778
      %v5780 = vsel %vm232, %v5635, -inf
      %v5781 = vsel %vm232, %v5639, -inf
      %v5782 = vmax.f32 %v5780, %v5781
      %v5783 = vsel %vm5698, %v5636, -inf
      %v5784 = vsel %vm5698, %v5640, -inf
      %v5785 = vmax.f32 %v5783, %v5784
      %v5786 = vsel %vm232, %v5641, -inf
      %v5787 = vsel %vm232, %v5645, -inf
      %v5788 = vmax.f32 %v5786, %v5787
      %v5789 = vsel %vm232, %v5642, -inf
      %v5790 = vsel %vm232, %v5646, -inf
      %v5791 = vmax.f32 %v5789, %v5790
      %v5792 = vsel %vm232, %v5643, -inf
      %v5793 = vsel %vm232, %v5647, -inf
      %v5794 = vmax.f32 %v5792, %v5793
      %v5795 = vsel %vm5698, %v5644, -inf
      %v5796 = vsel %vm5698, %v5648, -inf
      %v5797 = vmax.f32 %v5795, %v5796
      %v5798 = vsel %vm232, %v5649, -inf
      %v5799 = vsel %vm232, %v5653, -inf
      %v5800 = vmax.f32 %v5798, %v5799
      %v5801 = vsel %vm232, %v5650, -inf
      %v5802 = vsel %vm232, %v5654, -inf
      %v5803 = vmax.f32 %v5801, %v5802
      %v5804 = vsel %vm232, %v5651, -inf
      %v5805 = vsel %vm232, %v5655, -inf
      %v5806 = vmax.f32 %v5804, %v5805
      %v5807 = vsel %vm5698, %v5652, -inf
      %v5808 = vsel %vm5698, %v5656, -inf
      %v5809 = vmax.f32 %v5807, %v5808
      %v5810 = vsel %vm232, %v5657, -inf
      %v5811 = vsel %vm232, %v5661, -inf
      %v5812 = vmax.f32 %v5810, %v5811
      %v5813 = vsel %vm232, %v5658, -inf
      %v5814 = vsel %vm232, %v5662, -inf
      %v5815 = vmax.f32 %v5813, %v5814
      %v5816 = vsel %vm232, %v5659, -inf
      %v5817 = vsel %vm232, %v5663, -inf
      %v5818 = vmax.f32 %v5816, %v5817
      %v5819 = vsel %vm5698, %v5660, -inf
      %v5820 = vsel %vm5698, %v5664, -inf
      %v5821 = vmax.f32 %v5819, %v5820
      %v5822 = vsel %vm232, %v5665, -inf
      %v5823 = vsel %vm232, %v5669, -inf
      %v5824 = vmax.f32 %v5822, %v5823
      %v5825 = vsel %vm232, %v5666, -inf
      %v5826 = vsel %vm232, %v5670, -inf
      %v5827 = vmax.f32 %v5825, %v5826
      %v5828 = vsel %vm232, %v5667, -inf
      %v5829 = vsel %vm232, %v5671, -inf
      %v5830 = vmax.f32 %v5828, %v5829
      %v5831 = vsel %vm5698, %v5668, -inf
      %v5832 = vsel %vm5698, %v5672, -inf
      %v5833 = vmax.f32 %v5831, %v5832
      %v5834 = vsel %vm232, %v5673, -inf
      %v5835 = vsel %vm232, %v5677, -inf
      %v5836 = vmax.f32 %v5834, %v5835
      %v5837 = vsel %vm232, %v5674, -inf
      %v5838 = vsel %vm232, %v5678, -inf
      %v5839 = vmax.f32 %v5837, %v5838
      %v5840 = vsel %vm232, %v5675, -inf
      %v5841 = vsel %vm232, %v5679, -inf
      %v5842 = vmax.f32 %v5840, %v5841
      %v5843 = vsel %vm5698, %v5676, -inf
      %v5844 = vsel %vm5698, %v5680, -inf
      %v5845 = vmax.f32 %v5843, %v5844
      %v5846 = vsel %vm232, %v5681, -inf
      %v5847 = vsel %vm232, %v5685, -inf
      %v5848 = vmax.f32 %v5846, %v5847
      %v5849 = vsel %vm232, %v5682, -inf
      %v5850 = vsel %vm232, %v5686, -inf
      %v5851 = vmax.f32 %v5849, %v5850
      %v5852 = vsel %vm232, %v5683, -inf
      %v5853 = vsel %vm232, %v5687, -inf
      %v5854 = vmax.f32 %v5852, %v5853
      %v5855 = vsel %vm5698, %v5684, -inf
      %v5856 = vsel %vm5698, %v5688, -inf
      %v5857 = vmax.f32 %v5855, %v5856
      %5858 = vst.msk [vmem:[#allocation3] sm:$0xff] %vm232, %v5691
      %5859 = vst.msk [vmem:[#allocation3 + $0x8] sm:$0xff] %vm232, %v5694
      %5860 = vst.msk [vmem:[#allocation3 + $0x10] sm:$0xff] %vm232, %v5697
      %5861 = vst.msk [vmem:[#allocation3 + $0x18] sm:$0xf] %vm5698, %v5701
      %5862 = vst.msk [vmem:[#allocation3 + $0x20] sm:$0xff] %vm232, %v5704
      %5863 = vst.msk [vmem:[#allocation3 + $0x28] sm:$0xff] %vm232, %v5707
      %5864 = vst.msk [vmem:[#allocation3 + $0x30] sm:$0xff] %vm232, %v5710
      %5865 = vst.msk [vmem:[#allocation3 + $0x38] sm:$0xf] %vm5698, %v5713
      %5866 = vst.msk [vmem:[#allocation3 + $0x40] sm:$0xff] %vm232, %v5716
      %5867 = vst.msk [vmem:[#allocation3 + $0x48] sm:$0xff] %vm232, %v5719
      %5868 = vst.msk [vmem:[#allocation3 + $0x50] sm:$0xff] %vm232, %v5722
      %5869 = vst.msk [vmem:[#allocation3 + $0x58] sm:$0xf] %vm5698, %v5725
      %5870 = vst.msk [vmem:[#allocation3 + $0x60] sm:$0xff] %vm232, %v5728
      %5871 = vst.msk [vmem:[#allocation3 + $0x68] sm:$0xff] %vm232, %v5731
      %5872 = vst.msk [vmem:[#allocation3 + $0x70] sm:$0xff] %vm232, %v5734
      %5873 = vst.msk [vmem:[#allocation3 + $0x78] sm:$0xf] %vm5698, %v5737
      %5874 = vst.msk [vmem:[#allocation3 + $0x80] sm:$0xff] %vm232, %v5740
      %5875 = vst.msk [vmem:[#allocation3 + $0x88] sm:$0xff] %vm232, %v5743
      %5876 = vst.msk [vmem:[#allocation3 + $0x90] sm:$0xff] %vm232, %v5746
      %5877 = vst.msk [vmem:[#allocation3 + $0x98] sm:$0xf] %vm5698, %v5749
      %5878 = vst.msk [vmem:[#allocation3 + $0xa0] sm:$0xff] %vm232, %v5752
      %5879 = vst.msk [vmem:[#allocation3 + $0xa8] sm:$0xff] %vm232, %v5755
      %5880 = vst.msk [vmem:[#allocation3 + $0xb0] sm:$0xff] %vm232, %v5758
      %5881 = vst.msk [vmem:[#allocation3 + $0xb8] sm:$0xf] %vm5698, %v5761
      %5882 = vst.msk [vmem:[#allocation3 + $0xc0] sm:$0xff] %vm232, %v5764
      %5883 = vst.msk [vmem:[#allocation3 + $0xc8] sm:$0xff] %vm232, %v5767
      %5884 = vst.msk [vmem:[#allocation3 + $0xd0] sm:$0xff] %vm232, %v5770
      %5885 = vst.msk [vmem:[#allocation3 + $0xd8] sm:$0xf] %vm5698, %v5773
      %5886 = vst.msk [vmem:[#allocation3 + $0xe0] sm:$0xff] %vm232, %v5776
      %5887 = vst.msk [vmem:[#allocation3 + $0xe8] sm:$0xff] %vm232, %v5779
      %5888 = vst.msk [vmem:[#allocation3 + $0xf0] sm:$0xff] %vm232, %v5782
      %5889 = vst.msk [vmem:[#allocation3 + $0xf8] sm:$0xf] %vm5698, %v5785
      %5890 = vst.msk [vmem:[#allocation3 + $0x100] sm:$0xff] %vm232, %v5788
      %5891 = vst.msk [vmem:[#allocation3 + $0x108] sm:$0xff] %vm232, %v5791
      %5892 = vst.msk [vmem:[#allocation3 + $0x110] sm:$0xff] %vm232, %v5794
      %5893 = vst.msk [vmem:[#allocation3 + $0x118] sm:$0xf] %vm5698, %v5797
      %5894 = vst.msk [vmem:[#allocation3 + $0x120] sm:$0xff] %vm232, %v5800
      %5895 = vst.msk [vmem:[#allocation3 + $0x128] sm:$0xff] %vm232, %v5803
      %5896 = vst.msk [vmem:[#allocation3 + $0x130] sm:$0xff] %vm232, %v5806
      %5897 = vst.msk [vmem:[#allocation3 + $0x138] sm:$0xf] %vm5698, %v5809
      %5898 = vst.msk [vmem:[#allocation3 + $0x140] sm:$0xff] %vm232, %v5812
      %5899 = vst.msk [vmem:[#allocation3 + $0x148] sm:$0xff] %vm232, %v5815
      %5900 = vst.msk [vmem:[#allocation3 + $0x150] sm:$0xff] %vm232, %v5818
      %5901 = vst.msk [vmem:[#allocation3 + $0x158] sm:$0xf] %vm5698, %v5821
      %5902 = vst.msk [vmem:[#allocation3 + $0x160] sm:$0xff] %vm232, %v5824
      %5903 = vst.msk [vmem:[#allocation3 + $0x168] sm:$0xff] %vm232, %v5827
      %5904 = vst.msk [vmem:[#allocation3 + $0x170] sm:$0xff] %vm232, %v5830
      %5905 = vst.msk [vmem:[#allocation3 + $0x178] sm:$0xf] %vm5698, %v5833
      %5906 = vst.msk [vmem:[#allocation3 + $0x180] sm:$0xff] %vm232, %v5836
      %5907 = vst.msk [vmem:[#allocation3 + $0x188] sm:$0xff] %vm232, %v5839
      %5908 = vst.msk [vmem:[#allocation3 + $0x190] sm:$0xff] %vm232, %v5842
      %5909 = vst.msk [vmem:[#allocation3 + $0x198] sm:$0xf] %vm5698, %v5845
      %5910 = vst.msk [vmem:[#allocation3 + $0x1a0] sm:$0xff] %vm232, %v5848
      %5911 = vst.msk [vmem:[#allocation3 + $0x1a8] sm:$0xff] %vm232, %v5851
      %5912 = vst.msk [vmem:[#allocation3 + $0x1b0] sm:$0xff] %vm232, %v5854
      %5913 = vst.msk [vmem:[#allocation3 + $0x1b8] sm:$0xf] %vm5698, %v5857
      %v5914 = vld [vmem:[#allocation3] ss:$2 sm:$0xff]
      %s5915 = scalar_lea.vmem [#allocation3], 16
      %v5916 = vld [vmem:[%s5915] ss:$2 sm:$0x3f]
      %s5917 = scalar_lea.vmem [#allocation3], 32
      %v5918 = vld [vmem:[%s5917] ss:$2 sm:$0xff]
      %s5919 = scalar_lea.vmem [#allocation3], 48
      %v5920 = vld [vmem:[%s5919] ss:$2 sm:$0x3f]
      %s5921 = scalar_lea.vmem [#allocation3], 64
      %v5922 = vld [vmem:[%s5921] ss:$2 sm:$0xff]
      %s5923 = scalar_lea.vmem [#allocation3], 80
      %v5924 = vld [vmem:[%s5923] ss:$2 sm:$0x3f]
      %s5925 = scalar_lea.vmem [#allocation3], 96
      %v5926 = vld [vmem:[%s5925] ss:$2 sm:$0xff]
      %s5927 = scalar_lea.vmem [#allocation3], 112
      %v5928 = vld [vmem:[%s5927] ss:$2 sm:$0x3f]
      %s5929 = scalar_lea.vmem [#allocation3], 128
      %v5930 = vld [vmem:[%s5929] ss:$2 sm:$0xff]
      %s5931 = scalar_lea.vmem [#allocation3], 144
      %v5932 = vld [vmem:[%s5931] ss:$2 sm:$0x3f]
      %s5933 = scalar_lea.vmem [#allocation3], 160
      %v5934 = vld [vmem:[%s5933] ss:$2 sm:$0xff]
      %s5935 = scalar_lea.vmem [#allocation3], 176
      %v5936 = vld [vmem:[%s5935] ss:$2 sm:$0x3f]
      %s5937 = scalar_lea.vmem [#allocation3], 192
      %v5938 = vld [vmem:[%s5937] ss:$2 sm:$0xff]
      %s5939 = scalar_lea.vmem [#allocation3], 208
      %v5940 = vld [vmem:[%s5939] ss:$2 sm:$0x3f]
      %s5941 = scalar_lea.vmem [#allocation3], 224
      %v5942 = vld [vmem:[%s5941] ss:$2 sm:$0xff]
      %s5943 = scalar_lea.vmem [#allocation3], 240
      %v5944 = vld [vmem:[%s5943] ss:$2 sm:$0x3f]
      %s5945 = scalar_lea.vmem [#allocation3], 256
      %v5946 = vld [vmem:[%s5945] ss:$2 sm:$0xff]
      %s5947 = scalar_lea.vmem [#allocation3], 272
      %v5948 = vld [vmem:[%s5947] ss:$2 sm:$0x3f]
      %s5949 = scalar_lea.vmem [#allocation3], 288
      %v5950 = vld [vmem:[%s5949] ss:$2 sm:$0xff]
      %s5951 = scalar_lea.vmem [#allocation3], 304
      %v5952 = vld [vmem:[%s5951] ss:$2 sm:$0x3f]
      %s5953 = scalar_lea.vmem [#allocation3], 320
      %v5954 = vld [vmem:[%s5953] ss:$2 sm:$0xff]
      %s5955 = scalar_lea.vmem [#allocation3], 336
      %v5956 = vld [vmem:[%s5955] ss:$2 sm:$0x3f]
      %s5957 = scalar_lea.vmem [#allocation3], 352
      %v5958 = vld [vmem:[%s5957] ss:$2 sm:$0xff]
      %s5959 = scalar_lea.vmem [#allocation3], 368
      %v5960 = vld [vmem:[%s5959] ss:$2 sm:$0x3f]
      %s5961 = scalar_lea.vmem [#allocation3], 384
      %v5962 = vld [vmem:[%s5961] ss:$2 sm:$0xff]
      %s5963 = scalar_lea.vmem [#allocation3], 400
      %v5964 = vld [vmem:[%s5963] ss:$2 sm:$0x3f]
      %s5965 = scalar_lea.vmem [#allocation3], 416
      %v5966 = vld [vmem:[%s5965] ss:$2 sm:$0xff]
      %s5967 = scalar_lea.vmem [#allocation3], 432
      %v5968 = vld [vmem:[%s5967] ss:$2 sm:$0x3f]
      %s5969 = scalar_lea.vmem [#allocation3], 1
      %v5970 = vld [vmem:[%s5969] ss:$2 sm:$0xff]
      %s5971 = scalar_lea.vmem [#allocation3], 17
      %v5972 = vld [vmem:[%s5971] ss:$2 sm:$0x3f]
      %s5973 = scalar_lea.vmem [#allocation3], 33
      %v5974 = vld [vmem:[%s5973] ss:$2 sm:$0xff]
      %s5975 = scalar_lea.vmem [#allocation3], 49
      %v5976 = vld [vmem:[%s5975] ss:$2 sm:$0x3f]
      %s5977 = scalar_lea.vmem [#allocation3], 65
      %v5978 = vld [vmem:[%s5977] ss:$2 sm:$0xff]
      %s5979 = scalar_lea.vmem [#allocation3], 81
      %v5980 = vld [vmem:[%s5979] ss:$2 sm:$0x3f]
      %s5981 = scalar_lea.vmem [#allocation3], 97
      %v5982 = vld [vmem:[%s5981] ss:$2 sm:$0xff]
      %s5983 = scalar_lea.vmem [#allocation3], 113
      %v5984 = vld [vmem:[%s5983] ss:$2 sm:$0x3f]
      %s5985 = scalar_lea.vmem [#allocation3], 129
      %v5986 = vld [vmem:[%s5985] ss:$2 sm:$0xff]
      %s5987 = scalar_lea.vmem [#allocation3], 145
      %v5988 = vld [vmem:[%s5987] ss:$2 sm:$0x3f]
      %s5989 = scalar_lea.vmem [#allocation3], 161
      %v5990 = vld [vmem:[%s5989] ss:$2 sm:$0xff]
      %s5991 = scalar_lea.vmem [#allocation3], 177
      %v5992 = vld [vmem:[%s5991] ss:$2 sm:$0x3f]
      %s5993 = scalar_lea.vmem [#allocation3], 193
      %v5994 = vld [vmem:[%s5993] ss:$2 sm:$0xff]
      %s5995 = scalar_lea.vmem [#allocation3], 209
      %v5996 = vld [vmem:[%s5995] ss:$2 sm:$0x3f]
      %s5997 = scalar_lea.vmem [#allocation3], 225
      %v5998 = vld [vmem:[%s5997] ss:$2 sm:$0xff]
      %s5999 = scalar_lea.vmem [#allocation3], 241
      %v6000 = vld [vmem:[%s5999] ss:$2 sm:$0x3f]
      %s6001 = scalar_lea.vmem [#allocation3], 257
      %v6002 = vld [vmem:[%s6001] ss:$2 sm:$0xff]
      %s6003 = scalar_lea.vmem [#allocation3], 273
      %v6004 = vld [vmem:[%s6003] ss:$2 sm:$0x3f]
      %s6005 = scalar_lea.vmem [#allocation3], 289
      %v6006 = vld [vmem:[%s6005] ss:$2 sm:$0xff]
      %s6007 = scalar_lea.vmem [#allocation3], 305
      %v6008 = vld [vmem:[%s6007] ss:$2 sm:$0x3f]
      %s6009 = scalar_lea.vmem [#allocation3], 321
      %v6010 = vld [vmem:[%s6009] ss:$2 sm:$0xff]
      %s6011 = scalar_lea.vmem [#allocation3], 337
      %v6012 = vld [vmem:[%s6011] ss:$2 sm:$0x3f]
      %s6013 = scalar_lea.vmem [#allocation3], 353
      %v6014 = vld [vmem:[%s6013] ss:$2 sm:$0xff]
      %s6015 = scalar_lea.vmem [#allocation3], 369
      %v6016 = vld [vmem:[%s6015] ss:$2 sm:$0x3f]
      %s6017 = scalar_lea.vmem [#allocation3], 385
      %v6018 = vld [vmem:[%s6017] ss:$2 sm:$0xff]
      %s6019 = scalar_lea.vmem [#allocation3], 401
      %v6020 = vld [vmem:[%s6019] ss:$2 sm:$0x3f]
      %s6021 = scalar_lea.vmem [#allocation3], 417
      %v6022 = vld [vmem:[%s6021] ss:$2 sm:$0xff]
      %s6023 = scalar_lea.vmem [#allocation3], 433
      %v6024 = vld [vmem:[%s6023] ss:$2 sm:$0x3f]
      %v6025 = vmax.f32 %v5914, %v5970
      %v6026 = vmax.f32 %v5916, %v5972
      %v6027 = vmax.f32 %v5918, %v5974
      %v6028 = vmax.f32 %v5920, %v5976
      %v6029 = vmax.f32 %v5922, %v5978
      %v6030 = vmax.f32 %v5924, %v5980
      %v6031 = vmax.f32 %v5926, %v5982
      %v6032 = vmax.f32 %v5928, %v5984
      %v6033 = vmax.f32 %v5930, %v5986
      %v6034 = vmax.f32 %v5932, %v5988
      %v6035 = vmax.f32 %v5934, %v5990
      %v6036 = vmax.f32 %v5936, %v5992
      %v6037 = vmax.f32 %v5938, %v5994
      %v6038 = vmax.f32 %v5940, %v5996
      %v6039 = vmax.f32 %v5942, %v5998
      %v6040 = vmax.f32 %v5944, %v6000
      %v6041 = vmax.f32 %v5946, %v6002
      %v6042 = vmax.f32 %v5948, %v6004
      %v6043 = vmax.f32 %v5950, %v6006
      %v6044 = vmax.f32 %v5952, %v6008
      %v6045 = vmax.f32 %v5954, %v6010
      %v6046 = vmax.f32 %v5956, %v6012
      %v6047 = vmax.f32 %v5958, %v6014
      %v6048 = vmax.f32 %v5960, %v6016
      %v6049 = vmax.f32 %v5962, %v6018
      %v6050 = vmax.f32 %v5964, %v6020
      %v6051 = vmax.f32 %v5966, %v6022
      %v6052 = vmax.f32 %v5968, %v6024
      %s6053 = scalar_lea.vmem [#allocation4], 24
      %6054 = vst.msk [vmem:[%s6053 + $0x1] sm:$0xff] %vm232, %v6025
      %vm6055 = vcmask 259072
      %6056 = vst.msk [vmem:[%s6053 + $0x9] sm:$0x3f] %vm6055, %v6026
      %6057 = vst.msk [vmem:[%s6053 + $0x19] sm:$0xff] %vm232, %v6027
      %6058 = vst.msk [vmem:[%s6053 + $0x21] sm:$0x3f] %vm6055, %v6028
      %6059 = vst.msk [vmem:[%s6053 + $0x31] sm:$0xff] %vm232, %v6029
      %6060 = vst.msk [vmem:[%s6053 + $0x39] sm:$0x3f] %vm6055, %v6030
      %6061 = vst.msk [vmem:[%s6053 + $0x49] sm:$0xff] %vm232, %v6031
      %6062 = vst.msk [vmem:[%s6053 + $0x51] sm:$0x3f] %vm6055, %v6032
      %6063 = vst.msk [vmem:[%s6053 + $0x61] sm:$0xff] %vm232, %v6033
      %6064 = vst.msk [vmem:[%s6053 + $0x69] sm:$0x3f] %vm6055, %v6034
      %6065 = vst.msk [vmem:[%s6053 + $0x79] sm:$0xff] %vm232, %v6035
      %6066 = vst.msk [vmem:[%s6053 + $0x81] sm:$0x3f] %vm6055, %v6036
      %6067 = vst.msk [vmem:[%s6053 + $0x91] sm:$0xff] %vm232, %v6037
      %6068 = vst.msk [vmem:[%s6053 + $0x99] sm:$0x3f] %vm6055, %v6038
      %6069 = vst.msk [vmem:[%s6053 + $0xa9] sm:$0xff] %vm232, %v6039
      %6070 = vst.msk [vmem:[%s6053 + $0xb1] sm:$0x3f] %vm6055, %v6040
      %6071 = vst.msk [vmem:[%s6053 + $0xc1] sm:$0xff] %vm232, %v6041
      %6072 = vst.msk [vmem:[%s6053 + $0xc9] sm:$0x3f] %vm6055, %v6042
      %6073 = vst.msk [vmem:[%s6053 + $0xd9] sm:$0xff] %vm232, %v6043
      %6074 = vst.msk [vmem:[%s6053 + $0xe1] sm:$0x3f] %vm6055, %v6044
      %6075 = vst.msk [vmem:[%s6053 + $0xf1] sm:$0xff] %vm232, %v6045
      %6076 = vst.msk [vmem:[%s6053 + $0xf9] sm:$0x3f] %vm6055, %v6046
      %6077 = vst.msk [vmem:[%s6053 + $0x109] sm:$0xff] %vm232, %v6047
      %6078 = vst.msk [vmem:[%s6053 + $0x111] sm:$0x3f] %vm6055, %v6048
      %6079 = vst.msk [vmem:[%s6053 + $0x121] sm:$0xff] %vm232, %v6049
      %6080 = vst.msk [vmem:[%s6053 + $0x129] sm:$0x3f] %vm6055, %v6050
      %6081 = vst.msk [vmem:[%s6053 + $0x139] sm:$0xff] %vm232, %v6051
      %6082 = vst.msk [vmem:[%s6053 + $0x141] sm:$0x3f] %vm6055, %v6052
      %v6083 = vld [vmem:[#allocation4] sm:$0xff]
      %v6084 = vld [vmem:[#allocation4 + $0x8] sm:$0xff]
      %v6085 = vld [vmem:[#allocation4 + $0x10] sm:$0x3]
      %v6086 = vld [vmem:[#allocation4 + $0x18] sm:$0xff]
      %v6087 = vld [vmem:[#allocation4 + $0x20] sm:$0xff]
      %v6088 = vld [vmem:[#allocation4 + $0x28] sm:$0x3]
      %v6089 = vld [vmem:[#allocation4 + $0x30] sm:$0xff]
      %v6090 = vld [vmem:[#allocation4 + $0x38] sm:$0xff]
      %v6091 = vld [vmem:[#allocation4 + $0x40] sm:$0x3]
      %v6092 = vld [vmem:[#allocation4 + $0x48] sm:$0xff]
      %v6093 = vld [vmem:[#allocation4 + $0x50] sm:$0xff]
      %v6094 = vld [vmem:[#allocation4 + $0x58] sm:$0x3]
      %v6095 = vld [vmem:[#allocation4 + $0x60] sm:$0xff]
      %v6096 = vld [vmem:[#allocation4 + $0x68] sm:$0xff]
      %v6097 = vld [vmem:[#allocation4 + $0x70] sm:$0x3]
      %v6098 = vld [vmem:[#allocation4 + $0x78] sm:$0xff]
      %v6099 = vld [vmem:[#allocation4 + $0x80] sm:$0xff]
      %v6100 = vld [vmem:[#allocation4 + $0x88] sm:$0x3]
      %v6101 = vld [vmem:[#allocation4 + $0x90] sm:$0xff]
      %v6102 = vld [vmem:[#allocation4 + $0x98] sm:$0xff]
      %v6103 = vld [vmem:[#allocation4 + $0xa0] sm:$0x3]
      %v6104 = vld [vmem:[#allocation4 + $0xa8] sm:$0xff]
      %v6105 = vld [vmem:[#allocation4 + $0xb0] sm:$0xff]
      %v6106 = vld [vmem:[#allocation4 + $0xb8] sm:$0x3]
      %v6107 = vld [vmem:[#allocation4 + $0xc0] sm:$0xff]
      %v6108 = vld [vmem:[#allocation4 + $0xc8] sm:$0xff]
      %v6109 = vld [vmem:[#allocation4 + $0xd0] sm:$0x3]
      %v6110 = vld [vmem:[#allocation4 + $0xd8] sm:$0xff]
      %v6111 = vld [vmem:[#allocation4 + $0xe0] sm:$0xff]
      %v6112 = vld [vmem:[#allocation4 + $0xe8] sm:$0x3]
      %v6113 = vld [vmem:[#allocation4 + $0xf0] sm:$0xff]
      %v6114 = vld [vmem:[#allocation4 + $0xf8] sm:$0xff]
      %v6115 = vld [vmem:[#allocation4 + $0x100] sm:$0x3]
      %v6116 = vld [vmem:[#allocation4 + $0x108] sm:$0xff]
      %v6117 = vld [vmem:[#allocation4 + $0x110] sm:$0xff]
      %v6118 = vld [vmem:[#allocation4 + $0x118] sm:$0x3]
      %v6119 = vld [vmem:[#allocation4 + $0x120] sm:$0xff]
      %v6120 = vld [vmem:[#allocation4 + $0x128] sm:$0xff]
      %v6121 = vld [vmem:[#allocation4 + $0x130] sm:$0x3]
      %v6122 = vld [vmem:[#allocation4 + $0x138] sm:$0xff]
      %v6123 = vld [vmem:[#allocation4 + $0x140] sm:$0xff]
      %v6124 = vld [vmem:[#allocation4 + $0x148] sm:$0x3]
      %v6125 = vld [vmem:[#allocation4 + $0x150] sm:$0xff]
      %v6126 = vld [vmem:[#allocation4 + $0x158] sm:$0xff]
      %v6127 = vld [vmem:[#allocation4 + $0x160] sm:$0x3]
      %v6128 = vld [vmem:[#allocation4 + $0x168] sm:$0xff]
      %v6129 = vld [vmem:[#allocation4 + $0x170] sm:$0xff]
      %v6130 = vld [vmem:[#allocation4 + $0x178] sm:$0x3]
      %v6173 = vrot.slane %v6083, 1
      %v6174 = vrot.slane %v6084, 1
      %v6175 = vsel %vm1796, %v6173, %v6174
      %v6176 = vrot.slane %v6085, 1
      %v6177 = vsel %vm1796, %v6174, %v6176
      %v6178 = vrot.slane %v6086, 1
      %v6179 = vrot.slane %v6087, 1
      %v6180 = vsel %vm1796, %v6178, %v6179
      %v6181 = vrot.slane %v6088, 1
      %v6182 = vsel %vm1796, %v6179, %v6181
      %v6183 = vrot.slane %v6089, 1
      %v6184 = vrot.slane %v6090, 1
      %v6185 = vsel %vm1796, %v6183, %v6184
      %v6186 = vrot.slane %v6091, 1
      %v6187 = vsel %vm1796, %v6184, %v6186
      %v6188 = vrot.slane %v6092, 1
      %v6189 = vrot.slane %v6093, 1
      %v6190 = vsel %vm1796, %v6188, %v6189
      %v6191 = vrot.slane %v6094, 1
      %v6192 = vsel %vm1796, %v6189, %v6191
      %v6193 = vrot.slane %v6095, 1
      %v6194 = vrot.slane %v6096, 1
      %v6195 = vsel %vm1796, %v6193, %v6194
      %v6196 = vrot.slane %v6097, 1
      %v6197 = vsel %vm1796, %v6194, %v6196
      %v6198 = vrot.slane %v6098, 1
      %v6199 = vrot.slane %v6099, 1
      %v6200 = vsel %vm1796, %v6198, %v6199
      %v6201 = vrot.slane %v6100, 1
      %v6202 = vsel %vm1796, %v6199, %v6201
      %v6203 = vrot.slane %v6101, 1
      %v6204 = vrot.slane %v6102, 1
      %v6205 = vsel %vm1796, %v6203, %v6204
      %v6206 = vrot.slane %v6103, 1
      %v6207 = vsel %vm1796, %v6204, %v6206
      %v6208 = vrot.slane %v6104, 1
      %v6209 = vrot.slane %v6105, 1
      %v6210 = vsel %vm1796, %v6208, %v6209
      %v6211 = vrot.slane %v6106, 1
      %v6212 = vsel %vm1796, %v6209, %v6211
      %v6213 = vrot.slane %v6107, 1
      %v6214 = vrot.slane %v6108, 1
      %v6215 = vsel %vm1796, %v6213, %v6214
      %v6216 = vrot.slane %v6109, 1
      %v6217 = vsel %vm1796, %v6214, %v6216
      %v6218 = vrot.slane %v6110, 1
      %v6219 = vrot.slane %v6111, 1
      %v6220 = vsel %vm1796, %v6218, %v6219
      %v6221 = vrot.slane %v6112, 1
      %v6222 = vsel %vm1796, %v6219, %v6221
      %v6223 = vrot.slane %v6113, 1
      %v6224 = vrot.slane %v6114, 1
      %v6225 = vsel %vm1796, %v6223, %v6224
      %v6226 = vrot.slane %v6115, 1
      %v6227 = vsel %vm1796, %v6224, %v6226
      %v6228 = vrot.slane %v6116, 1
      %v6229 = vrot.slane %v6117, 1
      %v6230 = vsel %vm1796, %v6228, %v6229
      %v6231 = vrot.slane %v6118, 1
      %v6232 = vsel %vm1796, %v6229, %v6231
      %v6233 = vrot.slane %v6119, 1
      %v6234 = vrot.slane %v6120, 1
      %v6235 = vsel %vm1796, %v6233, %v6234
      %v6236 = vrot.slane %v6121, 1
      %v6237 = vsel %vm1796, %v6234, %v6236
      %v6238 = vrot.slane %v6122, 1
      %v6239 = vrot.slane %v6123, 1
      %v6240 = vsel %vm1796, %v6238, %v6239
      %v6241 = vrot.slane %v6124, 1
      %v6242 = vsel %vm1796, %v6239, %v6241
      %6243 = vrot.lane.b32.xlu0 %v6175, 32
      %v6244 = vpop.permute.xlu0 %6243
      %6245 = vrot.lane.b32.xlu0 %v6177, 32
      %v6246 = vpop.permute.xlu0 %6245
      %6247 = vrot.lane.b32.xlu0 %v6180, 32
      %v6248 = vpop.permute.xlu0 %6247
      %6249 = vrot.lane.b32.xlu0 %v6182, 32
      %v6250 = vpop.permute.xlu0 %6249
      %6251 = vrot.lane.b32.xlu0 %v6185, 32
      %v6252 = vpop.permute.xlu0 %6251
      %6253 = vrot.lane.b32.xlu0 %v6187, 32
      %v6254 = vpop.permute.xlu0 %6253
      %6255 = vrot.lane.b32.xlu0 %v6190, 32
      %v6256 = vpop.permute.xlu0 %6255
      %6257 = vrot.lane.b32.xlu0 %v6192, 32
      %v6258 = vpop.permute.xlu0 %6257
      %6259 = vrot.lane.b32.xlu0 %v6195, 32
      %v6260 = vpop.permute.xlu0 %6259
      %6261 = vrot.lane.b32.xlu0 %v6197, 32
      %v6262 = vpop.permute.xlu0 %6261
      %6263 = vrot.lane.b32.xlu0 %v6200, 32
      %v6264 = vpop.permute.xlu0 %6263
      %6265 = vrot.lane.b32.xlu0 %v6202, 32
      %v6266 = vpop.permute.xlu0 %6265
      %6267 = vrot.lane.b32.xlu0 %v6205, 32
      %v6268 = vpop.permute.xlu0 %6267
      %6269 = vrot.lane.b32.xlu0 %v6207, 32
      %v6270 = vpop.permute.xlu0 %6269
      %6271 = vrot.lane.b32.xlu0 %v6210, 32
      %v6272 = vpop.permute.xlu0 %6271
      %6273 = vrot.lane.b32.xlu0 %v6212, 32
      %v6274 = vpop.permute.xlu0 %6273
      %6275 = vrot.lane.b32.xlu0 %v6215, 32
      %v6276 = vpop.permute.xlu0 %6275
      %6277 = vrot.lane.b32.xlu0 %v6217, 32
      %v6278 = vpop.permute.xlu0 %6277
      %6279 = vrot.lane.b32.xlu0 %v6220, 32
      %v6280 = vpop.permute.xlu0 %6279
      %6281 = vrot.lane.b32.xlu0 %v6222, 32
      %v6282 = vpop.permute.xlu0 %6281
      %6283 = vrot.lane.b32.xlu0 %v6225, 32
      %v6284 = vpop.permute.xlu0 %6283
      %6285 = vrot.lane.b32.xlu0 %v6227, 32
      %v6286 = vpop.permute.xlu0 %6285
      %6287 = vrot.lane.b32.xlu0 %v6230, 32
      %v6288 = vpop.permute.xlu0 %6287
      %6289 = vrot.lane.b32.xlu0 %v6232, 32
      %v6290 = vpop.permute.xlu0 %6289
      %6291 = vrot.lane.b32.xlu0 %v6235, 32
      %v6292 = vpop.permute.xlu0 %6291
      %6293 = vrot.lane.b32.xlu0 %v6237, 32
      %v6294 = vpop.permute.xlu0 %6293
      %6295 = vrot.lane.b32.xlu0 %v6240, 32
      %v6296 = vpop.permute.xlu0 %6295
      %6297 = vrot.lane.b32.xlu0 %v6242, 32
      %v6298 = vpop.permute.xlu0 %6297
      %v6327 = vrot.slane %v6083, 2
      %v6328 = vrot.slane %v6084, 2
      %v6329 = vsel %vm3741, %v6327, %v6328
      %v6330 = vrot.slane %v6085, 2
      %v6331 = vsel %vm3741, %v6328, %v6330
      %v6332 = vrot.slane %v6086, 2
      %v6333 = vrot.slane %v6087, 2
      %v6334 = vsel %vm3741, %v6332, %v6333
      %v6335 = vrot.slane %v6088, 2
      %v6336 = vsel %vm3741, %v6333, %v6335
      %v6337 = vrot.slane %v6089, 2
      %v6338 = vrot.slane %v6090, 2
      %v6339 = vsel %vm3741, %v6337, %v6338
      %v6340 = vrot.slane %v6091, 2
      %v6341 = vsel %vm3741, %v6338, %v6340
      %v6342 = vrot.slane %v6092, 2
      %v6343 = vrot.slane %v6093, 2
      %v6344 = vsel %vm3741, %v6342, %v6343
      %v6345 = vrot.slane %v6094, 2
      %v6346 = vsel %vm3741, %v6343, %v6345
      %v6347 = vrot.slane %v6095, 2
      %v6348 = vrot.slane %v6096, 2
      %v6349 = vsel %vm3741, %v6347, %v6348
      %v6350 = vrot.slane %v6097, 2
      %v6351 = vsel %vm3741, %v6348, %v6350
      %v6352 = vrot.slane %v6098, 2
      %v6353 = vrot.slane %v6099, 2
      %v6354 = vsel %vm3741, %v6352, %v6353
      %v6355 = vrot.slane %v6100, 2
      %v6356 = vsel %vm3741, %v6353, %v6355
      %v6357 = vrot.slane %v6101, 2
      %v6358 = vrot.slane %v6102, 2
      %v6359 = vsel %vm3741, %v6357, %v6358
      %v6360 = vrot.slane %v6103, 2
      %v6361 = vsel %vm3741, %v6358, %v6360
      %v6362 = vrot.slane %v6104, 2
      %v6363 = vrot.slane %v6105, 2
      %v6364 = vsel %vm3741, %v6362, %v6363
      %v6365 = vrot.slane %v6106, 2
      %v6366 = vsel %vm3741, %v6363, %v6365
      %v6367 = vrot.slane %v6107, 2
      %v6368 = vrot.slane %v6108, 2
      %v6369 = vsel %vm3741, %v6367, %v6368
      %v6370 = vrot.slane %v6109, 2
      %v6371 = vsel %vm3741, %v6368, %v6370
      %v6372 = vrot.slane %v6110, 2
      %v6373 = vrot.slane %v6111, 2
      %v6374 = vsel %vm3741, %v6372, %v6373
      %v6375 = vrot.slane %v6112, 2
      %v6376 = vsel %vm3741, %v6373, %v6375
      %v6377 = vrot.slane %v6113, 2
      %v6378 = vrot.slane %v6114, 2
      %v6379 = vsel %vm3741, %v6377, %v6378
      %v6380 = vrot.slane %v6115, 2
      %v6381 = vsel %vm3741, %v6378, %v6380
      %v6382 = vrot.slane %v6116, 2
      %v6383 = vrot.slane %v6117, 2
      %v6384 = vsel %vm3741, %v6382, %v6383
      %v6385 = vrot.slane %v6118, 2
      %v6386 = vsel %vm3741, %v6383, %v6385
      %v6387 = vrot.slane %v6119, 2
      %v6388 = vrot.slane %v6120, 2
      %v6389 = vsel %vm3741, %v6387, %v6388
      %v6390 = vrot.slane %v6121, 2
      %v6391 = vsel %vm3741, %v6388, %v6390
      %v6392 = vrot.slane %v6122, 2
      %v6393 = vrot.slane %v6123, 2
      %v6394 = vsel %vm3741, %v6392, %v6393
      %v6395 = vrot.slane %v6124, 2
      %v6396 = vsel %vm3741, %v6393, %v6395
      %6397 = vrot.lane.b32.xlu0 %v6329, 64
      %v6398 = vpop.permute.xlu0 %6397
      %6399 = vrot.lane.b32.xlu0 %v6331, 64
      %v6400 = vpop.permute.xlu0 %6399
      %6401 = vrot.lane.b32.xlu0 %v6334, 64
      %v6402 = vpop.permute.xlu0 %6401
      %6403 = vrot.lane.b32.xlu0 %v6336, 64
      %v6404 = vpop.permute.xlu0 %6403
      %6405 = vrot.lane.b32.xlu0 %v6339, 64
      %v6406 = vpop.permute.xlu0 %6405
      %6407 = vrot.lane.b32.xlu0 %v6341, 64
      %v6408 = vpop.permute.xlu0 %6407
      %6409 = vrot.lane.b32.xlu0 %v6344, 64
      %v6410 = vpop.permute.xlu0 %6409
      %6411 = vrot.lane.b32.xlu0 %v6346, 64
      %v6412 = vpop.permute.xlu0 %6411
      %6413 = vrot.lane.b32.xlu0 %v6349, 64
      %v6414 = vpop.permute.xlu0 %6413
      %6415 = vrot.lane.b32.xlu0 %v6351, 64
      %v6416 = vpop.permute.xlu0 %6415
      %6417 = vrot.lane.b32.xlu0 %v6354, 64
      %v6418 = vpop.permute.xlu0 %6417
      %6419 = vrot.lane.b32.xlu0 %v6356, 64
      %v6420 = vpop.permute.xlu0 %6419
      %6421 = vrot.lane.b32.xlu0 %v6359, 64
      %v6422 = vpop.permute.xlu0 %6421
      %6423 = vrot.lane.b32.xlu0 %v6361, 64
      %v6424 = vpop.permute.xlu0 %6423
      %6425 = vrot.lane.b32.xlu0 %v6364, 64
      %v6426 = vpop.permute.xlu0 %6425
      %6427 = vrot.lane.b32.xlu0 %v6366, 64
      %v6428 = vpop.permute.xlu0 %6427
      %6429 = vrot.lane.b32.xlu0 %v6369, 64
      %v6430 = vpop.permute.xlu0 %6429
      %6431 = vrot.lane.b32.xlu0 %v6371, 64
      %v6432 = vpop.permute.xlu0 %6431
      %6433 = vrot.lane.b32.xlu0 %v6374, 64
      %v6434 = vpop.permute.xlu0 %6433
      %6435 = vrot.lane.b32.xlu0 %v6376, 64
      %v6436 = vpop.permute.xlu0 %6435
      %6437 = vrot.lane.b32.xlu0 %v6379, 64
      %v6438 = vpop.permute.xlu0 %6437
      %6439 = vrot.lane.b32.xlu0 %v6381, 64
      %v6440 = vpop.permute.xlu0 %6439
      %6441 = vrot.lane.b32.xlu0 %v6384, 64
      %v6442 = vpop.permute.xlu0 %6441
      %6443 = vrot.lane.b32.xlu0 %v6386, 64
      %v6444 = vpop.permute.xlu0 %6443
      %6445 = vrot.lane.b32.xlu0 %v6389, 64
      %v6446 = vpop.permute.xlu0 %6445
      %6447 = vrot.lane.b32.xlu0 %v6391, 64
      %v6448 = vpop.permute.xlu0 %6447
      %6449 = vrot.lane.b32.xlu0 %v6394, 64
      %v6450 = vpop.permute.xlu0 %6449
      %6451 = vrot.lane.b32.xlu0 %v6396, 64
      %v6452 = vpop.permute.xlu0 %6451
      %6483 = vrot.lane.b32.xlu0 %v6086, 96
      %v6484 = vpop.permute.xlu0 %6483
      %6485 = vrot.lane.b32.xlu0 %v6087, 96
      %v6486 = vpop.permute.xlu0 %6485
      %6487 = vrot.lane.b32.xlu0 %v6089, 96
      %v6488 = vpop.permute.xlu0 %6487
      %6489 = vrot.lane.b32.xlu0 %v6090, 96
      %v6490 = vpop.permute.xlu0 %6489
      %6491 = vrot.lane.b32.xlu0 %v6092, 96
      %v6492 = vpop.permute.xlu0 %6491
      %6493 = vrot.lane.b32.xlu0 %v6093, 96
      %v6494 = vpop.permute.xlu0 %6493
      %6495 = vrot.lane.b32.xlu0 %v6095, 96
      %v6496 = vpop.permute.xlu0 %6495
      %6497 = vrot.lane.b32.xlu0 %v6096, 96
      %v6498 = vpop.permute.xlu0 %6497
      %6499 = vrot.lane.b32.xlu0 %v6098, 96
      %v6500 = vpop.permute.xlu0 %6499
      %6501 = vrot.lane.b32.xlu0 %v6099, 96
      %v6502 = vpop.permute.xlu0 %6501
      %6503 = vrot.lane.b32.xlu0 %v6101, 96
      %v6504 = vpop.permute.xlu0 %6503
      %6505 = vrot.lane.b32.xlu0 %v6102, 96
      %v6506 = vpop.permute.xlu0 %6505
      %6507 = vrot.lane.b32.xlu0 %v6104, 96
      %v6508 = vpop.permute.xlu0 %6507
      %6509 = vrot.lane.b32.xlu0 %v6105, 96
      %v6510 = vpop.permute.xlu0 %6509
      %6511 = vrot.lane.b32.xlu0 %v6107, 96
      %v6512 = vpop.permute.xlu0 %6511
      %6513 = vrot.lane.b32.xlu0 %v6108, 96
      %v6514 = vpop.permute.xlu0 %6513
      %6515 = vrot.lane.b32.xlu0 %v6110, 96
      %v6516 = vpop.permute.xlu0 %6515
      %6517 = vrot.lane.b32.xlu0 %v6111, 96
      %v6518 = vpop.permute.xlu0 %6517
      %6519 = vrot.lane.b32.xlu0 %v6113, 96
      %v6520 = vpop.permute.xlu0 %6519
      %6521 = vrot.lane.b32.xlu0 %v6114, 96
      %v6522 = vpop.permute.xlu0 %6521
      %6523 = vrot.lane.b32.xlu0 %v6116, 96
      %v6524 = vpop.permute.xlu0 %6523
      %6525 = vrot.lane.b32.xlu0 %v6117, 96
      %v6526 = vpop.permute.xlu0 %6525
      %6527 = vrot.lane.b32.xlu0 %v6119, 96
      %v6528 = vpop.permute.xlu0 %6527
      %6529 = vrot.lane.b32.xlu0 %v6120, 96
      %v6530 = vpop.permute.xlu0 %6529
      %6531 = vrot.lane.b32.xlu0 %v6122, 96
      %v6532 = vpop.permute.xlu0 %6531
      %6533 = vrot.lane.b32.xlu0 %v6123, 96
      %v6534 = vpop.permute.xlu0 %6533
      %6535 = vrot.lane.b32.xlu0 %v6125, 96
      %v6536 = vpop.permute.xlu0 %6535
      %6537 = vrot.lane.b32.xlu0 %v6126, 96
      %v6538 = vpop.permute.xlu0 %6537
      %v6568 = vrot.slane %v6125, 1
      %v6569 = vrot.slane %v6126, 1
      %v6570 = vsel %vm1796, %v6568, %v6569
      %v6571 = vrot.slane %v6127, 1
      %v6572 = vsel %vm1796, %v6569, %v6571
      %v6601 = vrot.slane %v6125, 2
      %v6602 = vrot.slane %v6126, 2
      %v6603 = vsel %vm3741, %v6601, %v6602
      %v6604 = vrot.slane %v6127, 2
      %v6605 = vsel %vm3741, %v6602, %v6604
      %6606 = vrot.lane.b32.xlu0 %v6334, 32
      %v6607 = vpop.permute.xlu0 %6606
      %6608 = vrot.lane.b32.xlu0 %v6336, 32
      %v6609 = vpop.permute.xlu0 %6608
      %6610 = vrot.lane.b32.xlu0 %v6339, 32
      %v6611 = vpop.permute.xlu0 %6610
      %6612 = vrot.lane.b32.xlu0 %v6341, 32
      %v6613 = vpop.permute.xlu0 %6612
      %6614 = vrot.lane.b32.xlu0 %v6344, 32
      %v6615 = vpop.permute.xlu0 %6614
      %6616 = vrot.lane.b32.xlu0 %v6346, 32
      %v6617 = vpop.permute.xlu0 %6616
      %6618 = vrot.lane.b32.xlu0 %v6349, 32
      %v6619 = vpop.permute.xlu0 %6618
      %6620 = vrot.lane.b32.xlu0 %v6351, 32
      %v6621 = vpop.permute.xlu0 %6620
      %6622 = vrot.lane.b32.xlu0 %v6354, 32
      %v6623 = vpop.permute.xlu0 %6622
      %6624 = vrot.lane.b32.xlu0 %v6356, 32
      %v6625 = vpop.permute.xlu0 %6624
      %6626 = vrot.lane.b32.xlu0 %v6359, 32
      %v6627 = vpop.permute.xlu0 %6626
      %6628 = vrot.lane.b32.xlu0 %v6361, 32
      %v6629 = vpop.permute.xlu0 %6628
      %6630 = vrot.lane.b32.xlu0 %v6364, 32
      %v6631 = vpop.permute.xlu0 %6630
      %6632 = vrot.lane.b32.xlu0 %v6366, 32
      %v6633 = vpop.permute.xlu0 %6632
      %6634 = vrot.lane.b32.xlu0 %v6369, 32
      %v6635 = vpop.permute.xlu0 %6634
      %6636 = vrot.lane.b32.xlu0 %v6371, 32
      %v6637 = vpop.permute.xlu0 %6636
      %6638 = vrot.lane.b32.xlu0 %v6374, 32
      %v6639 = vpop.permute.xlu0 %6638
      %6640 = vrot.lane.b32.xlu0 %v6376, 32
      %v6641 = vpop.permute.xlu0 %6640
      %6642 = vrot.lane.b32.xlu0 %v6379, 32
      %v6643 = vpop.permute.xlu0 %6642
      %6644 = vrot.lane.b32.xlu0 %v6381, 32
      %v6645 = vpop.permute.xlu0 %6644
      %6646 = vrot.lane.b32.xlu0 %v6384, 32
      %v6647 = vpop.permute.xlu0 %6646
      %6648 = vrot.lane.b32.xlu0 %v6386, 32
      %v6649 = vpop.permute.xlu0 %6648
      %6650 = vrot.lane.b32.xlu0 %v6389, 32
      %v6651 = vpop.permute.xlu0 %6650
      %6652 = vrot.lane.b32.xlu0 %v6391, 32
      %v6653 = vpop.permute.xlu0 %6652
      %6654 = vrot.lane.b32.xlu0 %v6394, 32
      %v6655 = vpop.permute.xlu0 %6654
      %6656 = vrot.lane.b32.xlu0 %v6396, 32
      %v6657 = vpop.permute.xlu0 %6656
      %6658 = vrot.lane.b32.xlu0 %v6603, 32
      %v6659 = vpop.permute.xlu0 %6658
      %6660 = vrot.lane.b32.xlu0 %v6605, 32
      %v6661 = vpop.permute.xlu0 %6660
      %6692 = vrot.lane.b32.xlu0 %v6089, 64
      %v6693 = vpop.permute.xlu0 %6692
      %6694 = vrot.lane.b32.xlu0 %v6090, 64
      %v6695 = vpop.permute.xlu0 %6694
      %6696 = vrot.lane.b32.xlu0 %v6092, 64
      %v6697 = vpop.permute.xlu0 %6696
      %6698 = vrot.lane.b32.xlu0 %v6093, 64
      %v6699 = vpop.permute.xlu0 %6698
      %6700 = vrot.lane.b32.xlu0 %v6095, 64
      %v6701 = vpop.permute.xlu0 %6700
      %6702 = vrot.lane.b32.xlu0 %v6096, 64
      %v6703 = vpop.permute.xlu0 %6702
      %6704 = vrot.lane.b32.xlu0 %v6098, 64
      %v6705 = vpop.permute.xlu0 %6704
      %6706 = vrot.lane.b32.xlu0 %v6099, 64
      %v6707 = vpop.permute.xlu0 %6706
      %6708 = vrot.lane.b32.xlu0 %v6101, 64
      %v6709 = vpop.permute.xlu0 %6708
      %6710 = vrot.lane.b32.xlu0 %v6102, 64
      %v6711 = vpop.permute.xlu0 %6710
      %6712 = vrot.lane.b32.xlu0 %v6104, 64
      %v6713 = vpop.permute.xlu0 %6712
      %6714 = vrot.lane.b32.xlu0 %v6105, 64
      %v6715 = vpop.permute.xlu0 %6714
      %6716 = vrot.lane.b32.xlu0 %v6107, 64
      %v6717 = vpop.permute.xlu0 %6716
      %6718 = vrot.lane.b32.xlu0 %v6108, 64
      %v6719 = vpop.permute.xlu0 %6718
      %6720 = vrot.lane.b32.xlu0 %v6110, 64
      %v6721 = vpop.permute.xlu0 %6720
      %6722 = vrot.lane.b32.xlu0 %v6111, 64
      %v6723 = vpop.permute.xlu0 %6722
      %6724 = vrot.lane.b32.xlu0 %v6113, 64
      %v6725 = vpop.permute.xlu0 %6724
      %6726 = vrot.lane.b32.xlu0 %v6114, 64
      %v6727 = vpop.permute.xlu0 %6726
      %6728 = vrot.lane.b32.xlu0 %v6116, 64
      %v6729 = vpop.permute.xlu0 %6728
      %6730 = vrot.lane.b32.xlu0 %v6117, 64
      %v6731 = vpop.permute.xlu0 %6730
      %6732 = vrot.lane.b32.xlu0 %v6119, 64
      %v6733 = vpop.permute.xlu0 %6732
      %6734 = vrot.lane.b32.xlu0 %v6120, 64
      %v6735 = vpop.permute.xlu0 %6734
      %6736 = vrot.lane.b32.xlu0 %v6122, 64
      %v6737 = vpop.permute.xlu0 %6736
      %6738 = vrot.lane.b32.xlu0 %v6123, 64
      %v6739 = vpop.permute.xlu0 %6738
      %6740 = vrot.lane.b32.xlu0 %v6125, 64
      %v6741 = vpop.permute.xlu0 %6740
      %6742 = vrot.lane.b32.xlu0 %v6126, 64
      %v6743 = vpop.permute.xlu0 %6742
      %6744 = vrot.lane.b32.xlu0 %v6128, 64
      %v6745 = vpop.permute.xlu0 %6744
      %6746 = vrot.lane.b32.xlu0 %v6129, 64
      %v6747 = vpop.permute.xlu0 %6746
      %v6777 = vrot.slane %v6128, 1
      %v6778 = vrot.slane %v6129, 1
      %v6779 = vsel %vm1796, %v6777, %v6778
      %v6780 = vrot.slane %v6130, 1
      %v6781 = vsel %vm1796, %v6778, %v6780
      %6782 = vrot.lane.b32.xlu0 %v6185, 96
      %v6783 = vpop.permute.xlu0 %6782
      %6784 = vrot.lane.b32.xlu0 %v6187, 96
      %v6785 = vpop.permute.xlu0 %6784
      %6786 = vrot.lane.b32.xlu0 %v6190, 96
      %v6787 = vpop.permute.xlu0 %6786
      %6788 = vrot.lane.b32.xlu0 %v6192, 96
      %v6789 = vpop.permute.xlu0 %6788
      %6790 = vrot.lane.b32.xlu0 %v6195, 96
      %v6791 = vpop.permute.xlu0 %6790
      %6792 = vrot.lane.b32.xlu0 %v6197, 96
      %v6793 = vpop.permute.xlu0 %6792
      %6794 = vrot.lane.b32.xlu0 %v6200, 96
      %v6795 = vpop.permute.xlu0 %6794
      %6796 = vrot.lane.b32.xlu0 %v6202, 96
      %v6797 = vpop.permute.xlu0 %6796
      %6798 = vrot.lane.b32.xlu0 %v6205, 96
      %v6799 = vpop.permute.xlu0 %6798
      %6800 = vrot.lane.b32.xlu0 %v6207, 96
      %v6801 = vpop.permute.xlu0 %6800
      %6802 = vrot.lane.b32.xlu0 %v6210, 96
      %v6803 = vpop.permute.xlu0 %6802
      %6804 = vrot.lane.b32.xlu0 %v6212, 96
      %v6805 = vpop.permute.xlu0 %6804
      %6806 = vrot.lane.b32.xlu0 %v6215, 96
      %v6807 = vpop.permute.xlu0 %6806
      %6808 = vrot.lane.b32.xlu0 %v6217, 96
      %v6809 = vpop.permute.xlu0 %6808
      %6810 = vrot.lane.b32.xlu0 %v6220, 96
      %v6811 = vpop.permute.xlu0 %6810
      %6812 = vrot.lane.b32.xlu0 %v6222, 96
      %v6813 = vpop.permute.xlu0 %6812
      %6814 = vrot.lane.b32.xlu0 %v6225, 96
      %v6815 = vpop.permute.xlu0 %6814
      %6816 = vrot.lane.b32.xlu0 %v6227, 96
      %v6817 = vpop.permute.xlu0 %6816
      %6818 = vrot.lane.b32.xlu0 %v6230, 96
      %v6819 = vpop.permute.xlu0 %6818
      %6820 = vrot.lane.b32.xlu0 %v6232, 96
      %v6821 = vpop.permute.xlu0 %6820
      %6822 = vrot.lane.b32.xlu0 %v6235, 96
      %v6823 = vpop.permute.xlu0 %6822
      %6824 = vrot.lane.b32.xlu0 %v6237, 96
      %v6825 = vpop.permute.xlu0 %6824
      %6826 = vrot.lane.b32.xlu0 %v6240, 96
      %v6827 = vpop.permute.xlu0 %6826
      %6828 = vrot.lane.b32.xlu0 %v6242, 96
      %v6829 = vpop.permute.xlu0 %6828
      %6830 = vrot.lane.b32.xlu0 %v6570, 96
      %v6831 = vpop.permute.xlu0 %6830
      %6832 = vrot.lane.b32.xlu0 %v6572, 96
      %v6833 = vpop.permute.xlu0 %6832
      %6834 = vrot.lane.b32.xlu0 %v6779, 96
      %v6835 = vpop.permute.xlu0 %6834
      %6836 = vrot.lane.b32.xlu0 %v6781, 96
      %v6837 = vpop.permute.xlu0 %6836
      %v6866 = vrot.slane %v6128, 2
      %v6867 = vrot.slane %v6129, 2
      %v6868 = vsel %vm3741, %v6866, %v6867
      %v6869 = vrot.slane %v6130, 2
      %v6870 = vsel %vm3741, %v6867, %v6869
      %v6899 = vsel %vm232, %v6083, %v6244
      %v6900 = vsel %vm232, %v6084, %v6246
      %v6901 = vsel %vm232, %v6086, %v6248
      %v6902 = vsel %vm232, %v6087, %v6250
      %v6903 = vsel %vm232, %v6089, %v6252
      %v6904 = vsel %vm232, %v6090, %v6254
      %v6905 = vsel %vm232, %v6092, %v6256
      %v6906 = vsel %vm232, %v6093, %v6258
      %v6907 = vsel %vm232, %v6095, %v6260
      %v6908 = vsel %vm232, %v6096, %v6262
      %v6909 = vsel %vm232, %v6098, %v6264
      %v6910 = vsel %vm232, %v6099, %v6266
      %v6911 = vsel %vm232, %v6101, %v6268
      %v6912 = vsel %vm232, %v6102, %v6270
      %v6913 = vsel %vm232, %v6104, %v6272
      %v6914 = vsel %vm232, %v6105, %v6274
      %v6915 = vsel %vm232, %v6107, %v6276
      %v6916 = vsel %vm232, %v6108, %v6278
      %v6917 = vsel %vm232, %v6110, %v6280
      %v6918 = vsel %vm232, %v6111, %v6282
      %v6919 = vsel %vm232, %v6113, %v6284
      %v6920 = vsel %vm232, %v6114, %v6286
      %v6921 = vsel %vm232, %v6116, %v6288
      %v6922 = vsel %vm232, %v6117, %v6290
      %v6923 = vsel %vm232, %v6119, %v6292
      %v6924 = vsel %vm232, %v6120, %v6294
      %v6925 = vsel %vm232, %v6122, %v6296
      %v6926 = vsel %vm232, %v6123, %v6298
      %vm6927 = vcmask 523264
      %v6928 = vsel %vm6927, %v6899, %v6398
      %v6929 = vsel %vm6927, %v6900, %v6400
      %v6930 = vsel %vm6927, %v6901, %v6402
      %v6931 = vsel %vm6927, %v6902, %v6404
      %v6932 = vsel %vm6927, %v6903, %v6406
      %v6933 = vsel %vm6927, %v6904, %v6408
      %v6934 = vsel %vm6927, %v6905, %v6410
      %v6935 = vsel %vm6927, %v6906, %v6412
      %v6936 = vsel %vm6927, %v6907, %v6414
      %v6937 = vsel %vm6927, %v6908, %v6416
      %v6938 = vsel %vm6927, %v6909, %v6418
      %v6939 = vsel %vm6927, %v6910, %v6420
      %v6940 = vsel %vm6927, %v6911, %v6422
      %v6941 = vsel %vm6927, %v6912, %v6424
      %v6942 = vsel %vm6927, %v6913, %v6426
      %v6943 = vsel %vm6927, %v6914, %v6428
      %v6944 = vsel %vm6927, %v6915, %v6430
      %v6945 = vsel %vm6927, %v6916, %v6432
      %v6946 = vsel %vm6927, %v6917, %v6434
      %v6947 = vsel %vm6927, %v6918, %v6436
      %v6948 = vsel %vm6927, %v6919, %v6438
      %v6949 = vsel %vm6927, %v6920, %v6440
      %v6950 = vsel %vm6927, %v6921, %v6442
      %v6951 = vsel %vm6927, %v6922, %v6444
      %v6952 = vsel %vm6927, %v6923, %v6446
      %v6953 = vsel %vm6927, %v6924, %v6448
      %v6954 = vsel %vm6927, %v6925, %v6450
      %v6955 = vsel %vm6927, %v6926, %v6452
      %vm6956 = vcmask 785408
      %v6957 = vsel %vm6956, %v6928, %v6484
      %v6958 = vsel %vm6956, %v6929, %v6486
      %v6959 = vsel %vm6956, %v6930, %v6488
      %v6960 = vsel %vm6956, %v6931, %v6490
      %v6961 = vsel %vm6956, %v6932, %v6492
      %v6962 = vsel %vm6956, %v6933, %v6494
      %v6963 = vsel %vm6956, %v6934, %v6496
      %v6964 = vsel %vm6956, %v6935, %v6498
      %v6965 = vsel %vm6956, %v6936, %v6500
      %v6966 = vsel %vm6956, %v6937, %v6502
      %v6967 = vsel %vm6956, %v6938, %v6504
      %v6968 = vsel %vm6956, %v6939, %v6506
      %v6969 = vsel %vm6956, %v6940, %v6508
      %v6970 = vsel %vm6956, %v6941, %v6510
      %v6971 = vsel %vm6956, %v6942, %v6512
      %v6972 = vsel %vm6956, %v6943, %v6514
      %v6973 = vsel %vm6956, %v6944, %v6516
      %v6974 = vsel %vm6956, %v6945, %v6518
      %v6975 = vsel %vm6956, %v6946, %v6520
      %v6976 = vsel %vm6956, %v6947, %v6522
      %v6977 = vsel %vm6956, %v6948, %v6524
      %v6978 = vsel %vm6956, %v6949, %v6526
      %v6979 = vsel %vm6956, %v6950, %v6528
      %v6980 = vsel %vm6956, %v6951, %v6530
      %v6981 = vsel %vm6956, %v6952, %v6532
      %v6982 = vsel %vm6956, %v6953, %v6534
      %v6983 = vsel %vm6956, %v6954, %v6536
      %v6984 = vsel %vm6956, %v6955, %v6538
      %v6985 = vsel %vm232, %v6180, %v6607
      %v6986 = vsel %vm232, %v6182, %v6609
      %v6987 = vsel %vm232, %v6185, %v6611
      %v6988 = vsel %vm232, %v6187, %v6613
      %v6989 = vsel %vm232, %v6190, %v6615
      %v6990 = vsel %vm232, %v6192, %v6617
      %v6991 = vsel %vm232, %v6195, %v6619
      %v6992 = vsel %vm232, %v6197, %v6621
      %v6993 = vsel %vm232, %v6200, %v6623
      %v6994 = vsel %vm232, %v6202, %v6625
      %v6995 = vsel %vm232, %v6205, %v6627
      %v6996 = vsel %vm232, %v6207, %v6629
      %v6997 = vsel %vm232, %v6210, %v6631
      %v6998 = vsel %vm232, %v6212, %v6633
      %v6999 = vsel %vm232, %v6215, %v6635
      %v7000 = vsel %vm232, %v6217, %v6637
      %v7001 = vsel %vm232, %v6220, %v6639
      %v7002 = vsel %vm232, %v6222, %v6641
      %v7003 = vsel %vm232, %v6225, %v6643
      %v7004 = vsel %vm232, %v6227, %v6645
      %v7005 = vsel %vm232, %v6230, %v6647
      %v7006 = vsel %vm232, %v6232, %v6649
      %v7007 = vsel %vm232, %v6235, %v6651
      %v7008 = vsel %vm232, %v6237, %v6653
      %v7009 = vsel %vm232, %v6240, %v6655
      %v7010 = vsel %vm232, %v6242, %v6657
      %v7011 = vsel %vm232, %v6570, %v6659
      %v7012 = vsel %vm232, %v6572, %v6661
      %v7013 = vsel %vm6927, %v6985, %v6693
      %v7014 = vsel %vm6927, %v6986, %v6695
      %v7015 = vsel %vm6927, %v6987, %v6697
      %v7016 = vsel %vm6927, %v6988, %v6699
      %v7017 = vsel %vm6927, %v6989, %v6701
      %v7018 = vsel %vm6927, %v6990, %v6703
      %v7019 = vsel %vm6927, %v6991, %v6705
      %v7020 = vsel %vm6927, %v6992, %v6707
      %v7021 = vsel %vm6927, %v6993, %v6709
      %v7022 = vsel %vm6927, %v6994, %v6711
      %v7023 = vsel %vm6927, %v6995, %v6713
      %v7024 = vsel %vm6927, %v6996, %v6715
      %v7025 = vsel %vm6927, %v6997, %v6717
      %v7026 = vsel %vm6927, %v6998, %v6719
      %v7027 = vsel %vm6927, %v6999, %v6721
      %v7028 = vsel %vm6927, %v7000, %v6723
      %v7029 = vsel %vm6927, %v7001, %v6725
      %v7030 = vsel %vm6927, %v7002, %v6727
      %v7031 = vsel %vm6927, %v7003, %v6729
      %v7032 = vsel %vm6927, %v7004, %v6731
      %v7033 = vsel %vm6927, %v7005, %v6733
      %v7034 = vsel %vm6927, %v7006, %v6735
      %v7035 = vsel %vm6927, %v7007, %v6737
      %v7036 = vsel %vm6927, %v7008, %v6739
      %v7037 = vsel %vm6927, %v7009, %v6741
      %v7038 = vsel %vm6927, %v7010, %v6743
      %v7039 = vsel %vm6927, %v7011, %v6745
      %v7040 = vsel %vm6927, %v7012, %v6747
      %v7041 = vsel %vm6956, %v7013, %v6783
      %v7042 = vsel %vm6956, %v7014, %v6785
      %v7043 = vsel %vm6956, %v7015, %v6787
      %v7044 = vsel %vm6956, %v7016, %v6789
      %v7045 = vsel %vm6956, %v7017, %v6791
      %v7046 = vsel %vm6956, %v7018, %v6793
      %v7047 = vsel %vm6956, %v7019, %v6795
      %v7048 = vsel %vm6956, %v7020, %v6797
      %v7049 = vsel %vm6956, %v7021, %v6799
      %v7050 = vsel %vm6956, %v7022, %v6801
      %v7051 = vsel %vm6956, %v7023, %v6803
      %v7052 = vsel %vm6956, %v7024, %v6805
      %v7053 = vsel %vm6956, %v7025, %v6807
      %v7054 = vsel %vm6956, %v7026, %v6809
      %v7055 = vsel %vm6956, %v7027, %v6811
      %v7056 = vsel %vm6956, %v7028, %v6813
      %v7057 = vsel %vm6956, %v7029, %v6815
      %v7058 = vsel %vm6956, %v7030, %v6817
      %v7059 = vsel %vm6956, %v7031, %v6819
      %v7060 = vsel %vm6956, %v7032, %v6821
      %v7061 = vsel %vm6956, %v7033, %v6823
      %v7062 = vsel %vm6956, %v7034, %v6825
      %v7063 = vsel %vm6956, %v7035, %v6827
      %v7064 = vsel %vm6956, %v7036, %v6829
      %v7065 = vsel %vm6956, %v7037, %v6831
      %v7066 = vsel %vm6956, %v7038, %v6833
      %v7067 = vsel %vm6956, %v7039, %v6835
      %v7068 = vsel %vm6956, %v7040, %v6837
      %v7069 = vpack.c.bf16 %v6958, %v6957
      %v7070 = vpack.c.bf16 %v7042, %v7041
      %v7071 = vpack.c.bf16 %v6341, %v6339
      %v7072 = vpack.c.bf16 %v6960, %v6959
      %v7073 = vpack.c.bf16 %v7044, %v7043
      %v7074 = vpack.c.bf16 %v6346, %v6344
      %v7075 = vpack.c.bf16 %v6962, %v6961
      %v7076 = vpack.c.bf16 %v7046, %v7045
      %v7077 = vpack.c.bf16 %v6351, %v6349
      %v7078 = vpack.c.bf16 %v6964, %v6963
      %v7079 = vpack.c.bf16 %v7048, %v7047
      %v7080 = vpack.c.bf16 %v6356, %v6354
      %v7081 = vpack.c.bf16 %v6966, %v6965
      %v7082 = vpack.c.bf16 %v7050, %v7049
      %v7083 = vpack.c.bf16 %v6361, %v6359
      %v7084 = vpack.c.bf16 %v6968, %v6967
      %v7085 = vpack.c.bf16 %v7052, %v7051
      %v7086 = vpack.c.bf16 %v6366, %v6364
      %v7087 = vpack.c.bf16 %v6970, %v6969
      %v7088 = vpack.c.bf16 %v7054, %v7053
      %v7089 = vpack.c.bf16 %v6371, %v6369
      %v7090 = vpack.c.bf16 %v6972, %v6971
      %v7091 = vpack.c.bf16 %v7056, %v7055
      %v7092 = vpack.c.bf16 %v6376, %v6374
      %v7093 = vpack.c.bf16 %v6974, %v6973
      %v7094 = vpack.c.bf16 %v7058, %v7057
      %v7095 = vpack.c.bf16 %v6381, %v6379
      %v7096 = vpack.c.bf16 %v6976, %v6975
      %v7097 = vpack.c.bf16 %v7060, %v7059
      %v7098 = vpack.c.bf16 %v6386, %v6384
      %v7099 = vpack.c.bf16 %v6978, %v6977
      %v7100 = vpack.c.bf16 %v7062, %v7061
      %v7101 = vpack.c.bf16 %v6391, %v6389
      %v7102 = vpack.c.bf16 %v6980, %v6979
      %v7103 = vpack.c.bf16 %v7064, %v7063
      %v7104 = vpack.c.bf16 %v6396, %v6394
      %v7105 = vpack.c.bf16 %v6982, %v6981
      %v7106 = vpack.c.bf16 %v7066, %v7065
      %v7107 = vpack.c.bf16 %v6605, %v6603
      %v7108 = vpack.c.bf16 %v6984, %v6983
      %v7109 = vpack.c.bf16 %v7068, %v7067
      %v7110 = vpack.c.bf16 %v6870, %v6868
      %v7111 = vld [vmem:[%s3] sm:$0xf]
      %v7112 = vld [vmem:[%s3 + $0x4] sm:$0xf]
      %v7113 = vld [vmem:[%s3 + $0x8] sm:$0xf]
      %v7114 = vld [vmem:[%s3 + $0xc] sm:$0xf]
      %v7115 = vld [vmem:[%s3 + $0x10] sm:$0xf]
      %v7116 = vld [vmem:[%s3 + $0x14] sm:$0xf]
      %v7117 = vld [vmem:[%s3 + $0x18] sm:$0xf]
      %v7118 = vld [vmem:[%s3 + $0x1c] sm:$0xf]
      %v7119 = vld [vmem:[%s3 + $0x20] sm:$0xf]
      %v7120 = vld [vmem:[%s3 + $0x24] sm:$0xf]
      %v7121 = vld [vmem:[%s3 + $0x28] sm:$0xf]
      %v7122 = vld [vmem:[%s3 + $0x2c] sm:$0xf]
      %v7123 = vld [vmem:[%s3 + $0x30] sm:$0xf]
      %v7124 = vld [vmem:[%s3 + $0x34] sm:$0xf]
      %v7125 = vld [vmem:[%s3 + $0x38] sm:$0xf]
      %v7126 = vld [vmem:[%s3 + $0x3c] sm:$0xf]
      %v7127 = vld [vmem:[%s3 + $0x40] sm:$0xf]
      %v7128 = vld [vmem:[%s3 + $0x44] sm:$0xf]
      %v7129 = vld [vmem:[%s3 + $0x48] sm:$0xf]
      %v7130 = vld [vmem:[%s3 + $0x4c] sm:$0xf]
      %v7131 = vld [vmem:[%s3 + $0x50] sm:$0xf]
      %v7132 = vld [vmem:[%s3 + $0x54] sm:$0xf]
      %v7133 = vld [vmem:[%s3 + $0x58] sm:$0xf]
      %v7134 = vld [vmem:[%s3 + $0x5c] sm:$0xf]
      %v7135 = vld [vmem:[%s3 + $0x60] sm:$0xf]
      %v7136 = vld [vmem:[%s3 + $0x64] sm:$0xf]
      %v7137 = vld [vmem:[%s3 + $0x68] sm:$0xf]
      %v7138 = vld [vmem:[%s3 + $0x6c] sm:$0xf]
      %v7139 = vld [vmem:[%s3 + $0x70] sm:$0xf]
      %v7140 = vld [vmem:[%s3 + $0x74] sm:$0xf]
      %v7141 = vld [vmem:[%s3 + $0x78] sm:$0xf]
      %v7142 = vld [vmem:[%s3 + $0x7c] sm:$0xf]
      %v7143 = vld [vmem:[%s3 + $0x80] sm:$0xf]
      %v7144 = vld [vmem:[%s3 + $0x84] sm:$0xf]
      %v7145 = vld [vmem:[%s3 + $0x88] sm:$0xf]
      %v7146 = vld [vmem:[%s3 + $0x8c] sm:$0xf]
      %v7183 = vunpack.c.l.b16 %v7111
      %v7184 = vunpack.c.l.b16 %v7112
      %v7185 = vunpack.c.l.b16 %v7113
      %v7186 = vunpack.c.l.b16 %v7114
      %v7187 = vunpack.c.l.b16 %v7115
      %v7188 = vunpack.c.l.b16 %v7116
      %v7189 = vunpack.c.l.b16 %v7117
      %v7190 = vunpack.c.l.b16 %v7118
      %v7191 = vunpack.c.l.b16 %v7119
      %v7192 = vunpack.c.l.b16 %v7120
      %v7193 = vunpack.c.l.b16 %v7121
      %v7194 = vunpack.c.l.b16 %v7122
      %v7195 = vunpack.c.l.b16 %v7123
      %v7196 = vunpack.c.l.b16 %v7124
      %v7197 = vunpack.c.l.b16 %v7125
      %v7198 = vunpack.c.l.b16 %v7126
      %v7199 = vunpack.c.l.b16 %v7127
      %v7200 = vunpack.c.l.b16 %v7128
      %v7201 = vunpack.c.l.b16 %v7129
      %v7202 = vunpack.c.l.b16 %v7130
      %v7203 = vunpack.c.l.b16 %v7131
      %v7204 = vunpack.c.l.b16 %v7132
      %v7205 = vunpack.c.l.b16 %v7133
      %v7206 = vunpack.c.l.b16 %v7134
      %v7207 = vunpack.c.l.b16 %v7135
      %v7208 = vunpack.c.l.b16 %v7136
      %v7209 = vunpack.c.l.b16 %v7137
      %v7210 = vunpack.c.l.b16 %v7138
      %v7211 = vunpack.c.l.b16 %v7139
      %v7212 = vunpack.c.l.b16 %v7140
      %v7213 = vunpack.c.l.b16 %v7141
      %v7214 = vunpack.c.l.b16 %v7142
      %v7215 = vunpack.c.l.b16 %v7143
      %v7216 = vunpack.c.l.b16 %v7144
      %v7217 = vunpack.c.l.b16 %v7145
      %v7218 = vunpack.c.l.b16 %v7146
      %v7219 = vpack.c.b16 %v7184, %v7183
      %v7220 = vpack.c.b16 %v7186, %v7185
      %v7221 = vpack.c.b16 %v7188, %v7187
      %v7222 = vpack.c.b16 %v7190, %v7189
      %v7223 = vpack.c.b16 %v7192, %v7191
      %v7224 = vpack.c.b16 %v7194, %v7193
      %v7225 = vpack.c.b16 %v7196, %v7195
      %v7226 = vpack.c.b16 %v7198, %v7197
      %v7227 = vpack.c.b16 %v7200, %v7199
      %v7228 = vpack.c.b16 %v7202, %v7201
      %v7229 = vpack.c.b16 %v7204, %v7203
      %v7230 = vpack.c.b16 %v7206, %v7205
      %v7231 = vpack.c.b16 %v7208, %v7207
      %v7232 = vpack.c.b16 %v7210, %v7209
      %v7233 = vpack.c.b16 %v7212, %v7211
      %v7234 = vpack.c.b16 %v7214, %v7213
      %v7235 = vpack.c.b16 %v7216, %v7215
      %v7236 = vpack.c.b16 %v7218, %v7217
      %v7256 = vsel %vm232, %v7071, 0
      %v7259 = vsel %vm232, %v7074, 0
      %v7262 = vsel %vm232, %v7077, 0
      %v7265 = vsel %vm232, %v7080, 0
      %v7268 = vsel %vm232, %v7083, 0
      %v7271 = vsel %vm232, %v7086, 0
      %v7274 = vsel %vm232, %v7089, 0
      %v7277 = vsel %vm232, %v7092, 0
      %v7280 = vsel %vm232, %v7095, 0
      %v7283 = vsel %vm232, %v7098, 0
      %v7286 = vsel %vm232, %v7101, 0
      %v7289 = vsel %vm232, %v7104, 0
      %v7292 = vsel %vm232, %v7107, 0
      %v7295 = vsel %vm232, %v7110, 0
      %7297 = vmatprep.subr.bf16.mxu0 0
      %7298 = vmatpush1.bf16.msra.mxu0 %v7226
      %7299 = vmatprep.subr.bf16.mxu0 0
      %7300 = vmatpush1.bf16.msra.mxu0 %v7225
      %7301 = vmatprep.subr.bf16.mxu0 0
      %7302 = vmatpush1.bf16.msra.mxu0 %v7224
      %7303 = vmatprep.subr.bf16.mxu0 0
      %7304 = vmatpush1.bf16.msra.mxu0 %v7223
      %7305 = vmatprep.subr.bf16.mxu0 0
      %7306 = vmatpush1.bf16.msra.mxu0 %v7222
      %7307 = vmatprep.subr.bf16.mxu0 0
      %7308 = vmatpush1.bf16.msra.mxu0 %v7221
      %7309 = vmatprep.subr.bf16.mxu0 0
      %7310 = vmatpush1.bf16.msra.mxu0 %v7220
      %7311 = vmatprep.subr.bf16.mxu0 0
      %7312 = vmatpush1.bf16.msra.mxu0 %v7219
      %7313 = vmatprep.subr.bf16.mxu0 0
      %7314 = vmatpush2.bf16.msra.mxu0 %v7234
      %7315 = vmatprep.subr.bf16.mxu0 0
      %7316 = vmatpush2.bf16.msra.mxu0 %v7233
      %7317 = vmatprep.subr.bf16.mxu0 0
      %7318 = vmatpush2.bf16.msra.mxu0 %v7232
      %7319 = vmatprep.subr.bf16.mxu0 0
      %7320 = vmatpush2.bf16.msra.mxu0 %v7231
      %7321 = vmatprep.subr.bf16.mxu0 0
      %7322 = vmatpush2.bf16.msra.mxu0 %v7230
      %7323 = vmatprep.subr.bf16.mxu0 0
      %7324 = vmatpush2.bf16.msra.mxu0 %v7229
      %7325 = vmatprep.subr.bf16.mxu0 0
      %7326 = vmatpush2.bf16.msra.mxu0 %v7228
      %7327 = vmatprep.subr.bf16.mxu0 0
      %7328 = vmatpush2.bf16.msra.mxu0 %v7227
      %7329 = vmatprep.mubr.bf16.mxu0 %v7070
      %7330 = vmatmul.mubr.bf16.gmra.mxu0 %v7069
      %v7331 = vpop.f32.mrf.mxu0
      %v7332 = vadd.f32 0.0, %v7331
      %v7333 = vpop.f32.mrf.mxu0
      %v7334 = vpop.f32.mrf.mxu0
      %v7335 = vadd.f32 0.0, %v7334
      %v7336 = vpop.f32.mrf.mxu0
      %7337 = vmatprep.mubr.bf16.mxu0 %v7073
      %7338 = vmatmul.mubr.bf16.gmra.mxu0 %v7072
      %v7339 = vpop.f32.mrf.mxu0
      %v7340 = vadd.f32 0.0, %v7339
      %v7341 = vpop.f32.mrf.mxu0
      %v7342 = vpop.f32.mrf.mxu0
      %v7343 = vadd.f32 0.0, %v7342
      %v7344 = vpop.f32.mrf.mxu0
      %7345 = vmatprep.mubr.bf16.mxu0 %v7076
      %7346 = vmatmul.mubr.bf16.gmra.mxu0 %v7075
      %v7347 = vpop.f32.mrf.mxu0
      %v7348 = vadd.f32 0.0, %v7347
      %v7349 = vpop.f32.mrf.mxu0
      %v7350 = vpop.f32.mrf.mxu0
      %v7351 = vadd.f32 0.0, %v7350
      %v7352 = vpop.f32.mrf.mxu0
      %7353 = vmatprep.mubr.bf16.mxu0 %v7079
      %7354 = vmatmul.mubr.bf16.gmra.mxu0 %v7078
      %v7355 = vpop.f32.mrf.mxu0
      %v7356 = vadd.f32 0.0, %v7355
      %v7357 = vpop.f32.mrf.mxu0
      %v7358 = vpop.f32.mrf.mxu0
      %v7359 = vadd.f32 0.0, %v7358
      %v7360 = vpop.f32.mrf.mxu0
      %7361 = vmatprep.mubr.bf16.mxu0 %v7082
      %7362 = vmatmul.mubr.bf16.gmra.mxu0 %v7081
      %v7363 = vpop.f32.mrf.mxu0
      %v7364 = vadd.f32 0.0, %v7363
      %v7365 = vpop.f32.mrf.mxu0
      %v7366 = vpop.f32.mrf.mxu0
      %v7367 = vadd.f32 0.0, %v7366
      %v7368 = vpop.f32.mrf.mxu0
      %7369 = vmatprep.mubr.bf16.mxu0 %v7085
      %7370 = vmatmul.mubr.bf16.gmra.mxu0 %v7084
      %v7371 = vpop.f32.mrf.mxu0
      %v7372 = vadd.f32 0.0, %v7371
      %v7373 = vpop.f32.mrf.mxu0
      %v7374 = vpop.f32.mrf.mxu0
      %v7375 = vadd.f32 0.0, %v7374
      %v7376 = vpop.f32.mrf.mxu0
      %7377 = vmatprep.mubr.bf16.mxu0 %v7088
      %7378 = vmatmul.mubr.bf16.gmra.mxu0 %v7087
      %v7379 = vpop.f32.mrf.mxu0
      %v7380 = vadd.f32 0.0, %v7379
      %v7381 = vpop.f32.mrf.mxu0
      %v7382 = vpop.f32.mrf.mxu0
      %v7383 = vadd.f32 0.0, %v7382
      %v7384 = vpop.f32.mrf.mxu0
      %7385 = vmatprep.mubr.bf16.mxu0 %v7091
      %7386 = vmatmul.mubr.bf16.gmra.mxu0 %v7090
      %v7387 = vpop.f32.mrf.mxu0
      %v7388 = vadd.f32 0.0, %v7387
      %v7389 = vpop.f32.mrf.mxu0
      %v7390 = vpop.f32.mrf.mxu0
      %v7391 = vadd.f32 0.0, %v7390
      %v7392 = vpop.f32.mrf.mxu0
      %7393 = vmatprep.mubr.bf16.mxu0 %v7094
      %7394 = vmatmul.mubr.bf16.gmra.mxu0 %v7093
      %v7395 = vpop.f32.mrf.mxu0
      %v7396 = vadd.f32 0.0, %v7395
      %v7397 = vpop.f32.mrf.mxu0
      %v7398 = vpop.f32.mrf.mxu0
      %v7399 = vadd.f32 0.0, %v7398
      %v7400 = vpop.f32.mrf.mxu0
      %7401 = vmatprep.mubr.bf16.mxu0 %v7097
      %7402 = vmatmul.mubr.bf16.gmra.mxu0 %v7096
      %v7403 = vpop.f32.mrf.mxu0
      %v7404 = vadd.f32 0.0, %v7403
      %v7405 = vpop.f32.mrf.mxu0
      %v7406 = vpop.f32.mrf.mxu0
      %v7407 = vadd.f32 0.0, %v7406
      %v7408 = vpop.f32.mrf.mxu0
      %7409 = vmatprep.mubr.bf16.mxu0 %v7100
      %7410 = vmatmul.mubr.bf16.gmra.mxu0 %v7099
      %v7411 = vpop.f32.mrf.mxu0
      %v7412 = vadd.f32 0.0, %v7411
      %v7413 = vpop.f32.mrf.mxu0
      %v7414 = vpop.f32.mrf.mxu0
      %v7415 = vadd.f32 0.0, %v7414
      %v7416 = vpop.f32.mrf.mxu0
      %7417 = vmatprep.mubr.bf16.mxu0 %v7103
      %7418 = vmatmul.mubr.bf16.gmra.mxu0 %v7102
      %v7419 = vpop.f32.mrf.mxu0
      %v7420 = vadd.f32 0.0, %v7419
      %v7421 = vpop.f32.mrf.mxu0
      %v7422 = vpop.f32.mrf.mxu0
      %v7423 = vadd.f32 0.0, %v7422
      %v7424 = vpop.f32.mrf.mxu0
      %7425 = vmatprep.mubr.bf16.mxu0 %v7106
      %7426 = vmatmul.mubr.bf16.gmra.mxu0 %v7105
      %v7427 = vpop.f32.mrf.mxu0
      %v7428 = vadd.f32 0.0, %v7427
      %v7429 = vpop.f32.mrf.mxu0
      %v7430 = vpop.f32.mrf.mxu0
      %v7431 = vadd.f32 0.0, %v7430
      %v7432 = vpop.f32.mrf.mxu0
      %7433 = vmatprep.mubr.bf16.mxu0 %v7109
      %7434 = vmatmul.mubr.bf16.gmra.mxu0 %v7108
      %v7435 = vpop.f32.mrf.mxu0
      %v7436 = vadd.f32 0.0, %v7435
      %v7437 = vpop.f32.mrf.mxu0
      %v7438 = vpop.f32.mrf.mxu0
      %v7439 = vadd.f32 0.0, %v7438
      %v7440 = vpop.f32.mrf.mxu0
      %7441 = vdwg.mxu0
      %7442 = vmatprep.subr.bf16.mxu0 0
      %7443 = vmatpush1.bf16.msra.mxu0 0
      %7444 = vmatprep.subr.bf16.mxu0 0
      %7445 = vmatpush1.bf16.msra.mxu0 0
      %7446 = vmatprep.subr.bf16.mxu0 0
      %7447 = vmatpush1.bf16.msra.mxu0 0
      %7448 = vmatprep.subr.bf16.mxu0 0
      %7449 = vmatpush1.bf16.msra.mxu0 0
      %7450 = vmatprep.subr.bf16.mxu0 0
      %7451 = vmatpush1.bf16.msra.mxu0 0
      %7452 = vmatprep.subr.bf16.mxu0 0
      %7453 = vmatpush1.bf16.msra.mxu0 0
      %7454 = vmatprep.subr.bf16.mxu0 0
      %7455 = vmatpush1.bf16.msra.mxu0 %v7236
      %7456 = vmatprep.subr.bf16.mxu0 0
      %7457 = vmatpush1.bf16.msra.mxu0 %v7235
      %7458 = vmatprep.subr.bf16.mxu0 0
      %7459 = vmatpush2.bf16.msra.mxu0 0
      %7460 = vmatprep.subr.bf16.mxu0 0
      %7461 = vmatpush2.bf16.msra.mxu0 0
      %7462 = vmatprep.subr.bf16.mxu0 0
      %7463 = vmatpush2.bf16.msra.mxu0 0
      %7464 = vmatprep.subr.bf16.mxu0 0
      %7465 = vmatpush2.bf16.msra.mxu0 0
      %7466 = vmatprep.subr.bf16.mxu0 0
      %7467 = vmatpush2.bf16.msra.mxu0 0
      %7468 = vmatprep.subr.bf16.mxu0 0
      %7469 = vmatpush2.bf16.msra.mxu0 0
      %7470 = vmatprep.subr.bf16.mxu0 0
      %7471 = vmatpush2.bf16.msra.mxu0 0
      %7472 = vmatprep.subr.bf16.mxu0 0
      %7473 = vmatpush2.bf16.msra.mxu0 0
      %7474 = vmatprep.mubr.bf16.mxu0 0
      %7475 = vmatmul.mubr.bf16.gmra.mxu0 %v7256
      %v7476 = vpop.f32.mrf.mxu0
      %v7477 = vadd.f32 %v7332, %v7476
      %v7478 = vpop.f32.mrf.mxu0
      %v7479 = vpop.f32.mrf.mxu0
      %v7480 = vadd.f32 %v7335, %v7479
      %v7481 = vpop.f32.mrf.mxu0
      %7482 = vmatprep.mubr.bf16.mxu0 0
      %7483 = vmatmul.mubr.bf16.gmra.mxu0 %v7259
      %v7484 = vpop.f32.mrf.mxu0
      %v7485 = vadd.f32 %v7340, %v7484
      %v7486 = vpop.f32.mrf.mxu0
      %v7487 = vpop.f32.mrf.mxu0
      %v7488 = vadd.f32 %v7343, %v7487
      %v7489 = vpop.f32.mrf.mxu0
      %7490 = vmatprep.mubr.bf16.mxu0 0
      %7491 = vmatmul.mubr.bf16.gmra.mxu0 %v7262
      %v7492 = vpop.f32.mrf.mxu0
      %v7493 = vadd.f32 %v7348, %v7492
      %v7494 = vpop.f32.mrf.mxu0
      %v7495 = vpop.f32.mrf.mxu0
      %v7496 = vadd.f32 %v7351, %v7495
      %v7497 = vpop.f32.mrf.mxu0
      %7498 = vmatprep.mubr.bf16.mxu0 0
      %7499 = vmatmul.mubr.bf16.gmra.mxu0 %v7265
      %v7500 = vpop.f32.mrf.mxu0
      %v7501 = vadd.f32 %v7356, %v7500
      %v7502 = vpop.f32.mrf.mxu0
      %v7503 = vpop.f32.mrf.mxu0
      %v7504 = vadd.f32 %v7359, %v7503
      %v7505 = vpop.f32.mrf.mxu0
      %7506 = vmatprep.mubr.bf16.mxu0 0
      %7507 = vmatmul.mubr.bf16.gmra.mxu0 %v7268
      %v7508 = vpop.f32.mrf.mxu0
      %v7509 = vadd.f32 %v7364, %v7508
      %v7510 = vpop.f32.mrf.mxu0
      %v7511 = vpop.f32.mrf.mxu0
      %v7512 = vadd.f32 %v7367, %v7511
      %v7513 = vpop.f32.mrf.mxu0
      %7514 = vmatprep.mubr.bf16.mxu0 0
      %7515 = vmatmul.mubr.bf16.gmra.mxu0 %v7271
      %v7516 = vpop.f32.mrf.mxu0
      %v7517 = vadd.f32 %v7372, %v7516
      %v7518 = vpop.f32.mrf.mxu0
      %v7519 = vpop.f32.mrf.mxu0
      %v7520 = vadd.f32 %v7375, %v7519
      %v7521 = vpop.f32.mrf.mxu0
      %7522 = vmatprep.mubr.bf16.mxu0 0
      %7523 = vmatmul.mubr.bf16.gmra.mxu0 %v7274
      %v7524 = vpop.f32.mrf.mxu0
      %v7525 = vadd.f32 %v7380, %v7524
      %v7526 = vpop.f32.mrf.mxu0
      %v7527 = vpop.f32.mrf.mxu0
      %v7528 = vadd.f32 %v7383, %v7527
      %v7529 = vpop.f32.mrf.mxu0
      %7530 = vmatprep.mubr.bf16.mxu0 0
      %7531 = vmatmul.mubr.bf16.gmra.mxu0 %v7277
      %v7532 = vpop.f32.mrf.mxu0
      %v7533 = vadd.f32 %v7388, %v7532
      %v7534 = vpop.f32.mrf.mxu0
      %v7535 = vpop.f32.mrf.mxu0
      %v7536 = vadd.f32 %v7391, %v7535
      %v7537 = vpop.f32.mrf.mxu0
      %7538 = vmatprep.mubr.bf16.mxu0 0
      %7539 = vmatmul.mubr.bf16.gmra.mxu0 %v7280
      %v7540 = vpop.f32.mrf.mxu0
      %v7541 = vadd.f32 %v7396, %v7540
      %v7542 = vpop.f32.mrf.mxu0
      %v7543 = vpop.f32.mrf.mxu0
      %v7544 = vadd.f32 %v7399, %v7543
      %v7545 = vpop.f32.mrf.mxu0
      %7546 = vmatprep.mubr.bf16.mxu0 0
      %7547 = vmatmul.mubr.bf16.gmra.mxu0 %v7283
      %v7548 = vpop.f32.mrf.mxu0
      %v7549 = vadd.f32 %v7404, %v7548
      %v7550 = vpop.f32.mrf.mxu0
      %v7551 = vpop.f32.mrf.mxu0
      %v7552 = vadd.f32 %v7407, %v7551
      %v7553 = vpop.f32.mrf.mxu0
      %7554 = vmatprep.mubr.bf16.mxu0 0
      %7555 = vmatmul.mubr.bf16.gmra.mxu0 %v7286
      %v7556 = vpop.f32.mrf.mxu0
      %v7557 = vadd.f32 %v7412, %v7556
      %v7558 = vpop.f32.mrf.mxu0
      %v7559 = vpop.f32.mrf.mxu0
      %v7560 = vadd.f32 %v7415, %v7559
      %v7561 = vpop.f32.mrf.mxu0
      %7562 = vmatprep.mubr.bf16.mxu0 0
      %7563 = vmatmul.mubr.bf16.gmra.mxu0 %v7289
      %v7564 = vpop.f32.mrf.mxu0
      %v7565 = vadd.f32 %v7420, %v7564
      %v7566 = vpop.f32.mrf.mxu0
      %v7567 = vpop.f32.mrf.mxu0
      %v7568 = vadd.f32 %v7423, %v7567
      %v7569 = vpop.f32.mrf.mxu0
      %7570 = vmatprep.mubr.bf16.mxu0 0
      %7571 = vmatmul.mubr.bf16.gmra.mxu0 %v7292
      %v7572 = vpop.f32.mrf.mxu0
      %v7573 = vadd.f32 %v7428, %v7572
      %v7574 = vpop.f32.mrf.mxu0
      %v7575 = vpop.f32.mrf.mxu0
      %v7576 = vadd.f32 %v7431, %v7575
      %v7577 = vpop.f32.mrf.mxu0
      %7578 = vmatprep.mubr.bf16.mxu0 0
      %7579 = vmatmul.mubr.bf16.gmra.mxu0 %v7295
      %v7580 = vpop.f32.mrf.mxu0
      %v7581 = vadd.f32 %v7436, %v7580
      %v7582 = vpop.f32.mrf.mxu0
      %v7583 = vpop.f32.mrf.mxu0
      %v7584 = vadd.f32 %v7439, %v7583
      %v7585 = vpop.f32.mrf.mxu0
      %7586 = vdwg.mxu0
      %v7587 = vld [vmem:[%s4] sm:$0x1]
      %v7589 = vlaneseq
      %v7590 = vshrl.u32 %v7589, 7
      %v7591 = vsub.s32 0, %v7590
      %v7592 = vrot.slane %v7587, %v7591
      %v7594 = vadd.f32 %v7477, %v7592
      %v7595 = vadd.f32 %v7480, %v7592
      %v7596 = vadd.f32 %v7485, %v7592
      %v7597 = vadd.f32 %v7488, %v7592
      %v7598 = vadd.f32 %v7493, %v7592
      %v7599 = vadd.f32 %v7496, %v7592
      %v7600 = vadd.f32 %v7501, %v7592
      %v7601 = vadd.f32 %v7504, %v7592
      %v7602 = vadd.f32 %v7509, %v7592
      %v7603 = vadd.f32 %v7512, %v7592
      %v7604 = vadd.f32 %v7517, %v7592
      %v7605 = vadd.f32 %v7520, %v7592
      %v7606 = vadd.f32 %v7525, %v7592
      %v7607 = vadd.f32 %v7528, %v7592
      %v7608 = vadd.f32 %v7533, %v7592
      %v7609 = vadd.f32 %v7536, %v7592
      %v7610 = vadd.f32 %v7541, %v7592
      %v7611 = vadd.f32 %v7544, %v7592
      %v7612 = vadd.f32 %v7549, %v7592
      %v7613 = vadd.f32 %v7552, %v7592
      %v7614 = vadd.f32 %v7557, %v7592
      %v7615 = vadd.f32 %v7560, %v7592
      %v7616 = vadd.f32 %v7565, %v7592
      %v7617 = vadd.f32 %v7568, %v7592
      %v7618 = vadd.f32 %v7573, %v7592
      %v7619 = vadd.f32 %v7576, %v7592
      %v7620 = vadd.f32 %v7581, %v7592
      %v7621 = vadd.f32 %v7584, %v7592
      %v7622 = vmax.f32 %v7594, 0.0
      %v7623 = vmax.f32 %v7595, 0.0
      %v7624 = vmax.f32 %v7596, 0.0
      %v7625 = vmax.f32 %v7597, 0.0
      %v7626 = vmax.f32 %v7598, 0.0
      %v7627 = vmax.f32 %v7599, 0.0
      %v7628 = vmax.f32 %v7600, 0.0
      %v7629 = vmax.f32 %v7601, 0.0
      %v7630 = vmax.f32 %v7602, 0.0
      %v7631 = vmax.f32 %v7603, 0.0
      %v7632 = vmax.f32 %v7604, 0.0
      %v7633 = vmax.f32 %v7605, 0.0
      %v7634 = vmax.f32 %v7606, 0.0
      %v7635 = vmax.f32 %v7607, 0.0
      %v7636 = vmax.f32 %v7608, 0.0
      %v7637 = vmax.f32 %v7609, 0.0
      %v7638 = vmax.f32 %v7610, 0.0
      %v7639 = vmax.f32 %v7611, 0.0
      %v7640 = vmax.f32 %v7612, 0.0
      %v7641 = vmax.f32 %v7613, 0.0
      %v7642 = vmax.f32 %v7614, 0.0
      %v7643 = vmax.f32 %v7615, 0.0
      %v7644 = vmax.f32 %v7616, 0.0
      %v7645 = vmax.f32 %v7617, 0.0
      %v7646 = vmax.f32 %v7618, 0.0
      %v7647 = vmax.f32 %v7619, 0.0
      %v7648 = vmax.f32 %v7620, 0.0
      %v7649 = vmax.f32 %v7621, 0.0
      %v7650 = vsel %vm6927, %v7622, -inf
      %v7651 = vsel %vm6927, %v7624, -inf
      %v7652 = vmax.f32 %v7650, %v7651
      %v7653 = vsel %vm6927, %v7623, -inf
      %v7654 = vsel %vm6927, %v7625, -inf
      %v7655 = vmax.f32 %v7653, %v7654
      %v7656 = vsel %vm6927, %v7626, -inf
      %v7657 = vsel %vm6927, %v7628, -inf
      %v7658 = vmax.f32 %v7656, %v7657
      %v7659 = vsel %vm6927, %v7627, -inf
      %v7660 = vsel %vm6927, %v7629, -inf
      %v7661 = vmax.f32 %v7659, %v7660
      %v7662 = vsel %vm6927, %v7630, -inf
      %v7663 = vsel %vm6927, %v7632, -inf
      %v7664 = vmax.f32 %v7662, %v7663
      %v7665 = vsel %vm6927, %v7631, -inf
      %v7666 = vsel %vm6927, %v7633, -inf
      %v7667 = vmax.f32 %v7665, %v7666
      %v7668 = vsel %vm6927, %v7634, -inf
      %v7669 = vsel %vm6927, %v7636, -inf
      %v7670 = vmax.f32 %v7668, %v7669
      %v7671 = vsel %vm6927, %v7635, -inf
      %v7672 = vsel %vm6927, %v7637, -inf
      %v7673 = vmax.f32 %v7671, %v7672
      %v7674 = vsel %vm6927, %v7638, -inf
      %v7675 = vsel %vm6927, %v7640, -inf
      %v7676 = vmax.f32 %v7674, %v7675
      %v7677 = vsel %vm6927, %v7639, -inf
      %v7678 = vsel %vm6927, %v7641, -inf
      %v7679 = vmax.f32 %v7677, %v7678
      %v7680 = vsel %vm6927, %v7642, -inf
      %v7681 = vsel %vm6927, %v7644, -inf
      %v7682 = vmax.f32 %v7680, %v7681
      %v7683 = vsel %vm6927, %v7643, -inf
      %v7684 = vsel %vm6927, %v7645, -inf
      %v7685 = vmax.f32 %v7683, %v7684
      %v7686 = vsel %vm6927, %v7646, -inf
      %v7687 = vsel %vm6927, %v7648, -inf
      %v7688 = vmax.f32 %v7686, %v7687
      %v7689 = vsel %vm6927, %v7647, -inf
      %v7690 = vsel %vm6927, %v7649, -inf
      %v7691 = vmax.f32 %v7689, %v7690
      %7692 = vst.msk [vmem:[#allocation5] sm:$0xff] %vm6927, %v7652
      %7693 = vst.msk [vmem:[#allocation5 + $0x8] sm:$0xff] %vm6927, %v7655
      %7694 = vst.msk [vmem:[#allocation5 + $0x10] sm:$0xff] %vm6927, %v7658
      %7695 = vst.msk [vmem:[#allocation5 + $0x18] sm:$0xff] %vm6927, %v7661
      %7696 = vst.msk [vmem:[#allocation5 + $0x20] sm:$0xff] %vm6927, %v7664
      %7697 = vst.msk [vmem:[#allocation5 + $0x28] sm:$0xff] %vm6927, %v7667
      %7698 = vst.msk [vmem:[#allocation5 + $0x30] sm:$0xff] %vm6927, %v7670
      %7699 = vst.msk [vmem:[#allocation5 + $0x38] sm:$0xff] %vm6927, %v7673
      %7700 = vst.msk [vmem:[#allocation5 + $0x40] sm:$0xff] %vm6927, %v7676
      %7701 = vst.msk [vmem:[#allocation5 + $0x48] sm:$0xff] %vm6927, %v7679
      %7702 = vst.msk [vmem:[#allocation5 + $0x50] sm:$0xff] %vm6927, %v7682
      %7703 = vst.msk [vmem:[#allocation5 + $0x58] sm:$0xff] %vm6927, %v7685
      %7704 = vst.msk [vmem:[#allocation5 + $0x60] sm:$0xff] %vm6927, %v7688
      %7705 = vst.msk [vmem:[#allocation5 + $0x68] sm:$0xff] %vm6927, %v7691
      %v7706 = vld [vmem:[#allocation5] ss:$2 sm:$0x7f]
      %s7707 = scalar_lea.vmem [#allocation5], 16
      %v7708 = vld [vmem:[%s7707] ss:$2 sm:$0x7f]
      %s7709 = scalar_lea.vmem [#allocation5], 32
      %v7710 = vld [vmem:[%s7709] ss:$2 sm:$0x7f]
      %s7711 = scalar_lea.vmem [#allocation5], 48
      %v7712 = vld [vmem:[%s7711] ss:$2 sm:$0x7f]
      %s7713 = scalar_lea.vmem [#allocation5], 64
      %v7714 = vld [vmem:[%s7713] ss:$2 sm:$0x7f]
      %s7715 = scalar_lea.vmem [#allocation5], 80
      %v7716 = vld [vmem:[%s7715] ss:$2 sm:$0x7f]
      %s7717 = scalar_lea.vmem [#allocation5], 96
      %v7718 = vld [vmem:[%s7717] ss:$2 sm:$0x7f]
      %s7719 = scalar_lea.vmem [#allocation5], 1
      %v7720 = vld [vmem:[%s7719] ss:$2 sm:$0x7f]
      %s7721 = scalar_lea.vmem [#allocation5], 17
      %v7722 = vld [vmem:[%s7721] ss:$2 sm:$0x7f]
      %s7723 = scalar_lea.vmem [#allocation5], 33
      %v7724 = vld [vmem:[%s7723] ss:$2 sm:$0x7f]
      %s7725 = scalar_lea.vmem [#allocation5], 49
      %v7726 = vld [vmem:[%s7725] ss:$2 sm:$0x7f]
      %s7727 = scalar_lea.vmem [#allocation5], 65
      %v7728 = vld [vmem:[%s7727] ss:$2 sm:$0x7f]
      %s7729 = scalar_lea.vmem [#allocation5], 81
      %v7730 = vld [vmem:[%s7729] ss:$2 sm:$0x7f]
      %s7731 = scalar_lea.vmem [#allocation5], 97
      %v7732 = vld [vmem:[%s7731] ss:$2 sm:$0x7f]
      %v7733 = vmax.f32 %v7706, %v7720
      %v7734 = vmax.f32 %v7708, %v7722
      %v7735 = vmax.f32 %v7710, %v7724
      %v7736 = vmax.f32 %v7712, %v7726
      %v7737 = vmax.f32 %v7714, %v7728
      %v7738 = vmax.f32 %v7716, %v7730
      %v7739 = vmax.f32 %v7718, %v7732
      %v7740 = vpack.c.bf16 %v7733, %v7733
      %v7741 = vpack.c.bf16 %v7734, %v7734
      %v7742 = vpack.c.bf16 %v7735, %v7735
      %v7743 = vpack.c.bf16 %v7736, %v7736
      %v7744 = vpack.c.bf16 %v7737, %v7737
      %v7745 = vpack.c.bf16 %v7738, %v7738
      %v7746 = vpack.c.bf16 %v7739, %v7739
      %vm7747 = vcmask 519168
      %vm7748 = vsmask.f32 3328
      %vm7749 = vmand %vm7747, %vm7748
      %v7750 = vld [vmem:[%s224] sm:$0xf]
      %v7751 = vsel %vm7749, %v7740, %v7750
      %7752 = vst [vmem:[%s224] sm:$0xf] %v7751
      %v7753 = vld [vmem:[%s224 + $0x4] sm:$0xf]
      %v7754 = vsel %vm7749, %v7741, %v7753
      %7755 = vst [vmem:[%s224 + $0x4] sm:$0xf] %v7754
      %v7756 = vld [vmem:[%s224 + $0x8] sm:$0xf]
      %v7757 = vsel %vm7749, %v7742, %v7756
      %7758 = vst [vmem:[%s224 + $0x8] sm:$0xf] %v7757
      %v7759 = vld [vmem:[%s224 + $0xc] sm:$0xf]
      %v7760 = vsel %vm7749, %v7743, %v7759
      %7761 = vst [vmem:[%s224 + $0xc] sm:$0xf] %v7760
      %v7762 = vld [vmem:[%s224 + $0x10] sm:$0xf]
      %v7763 = vsel %vm7749, %v7744, %v7762
      %7764 = vst [vmem:[%s224 + $0x10] sm:$0xf] %v7763
      %v7765 = vld [vmem:[%s224 + $0x14] sm:$0xf]
      %v7766 = vsel %vm7749, %v7745, %v7765
      %7767 = vst [vmem:[%s224 + $0x14] sm:$0xf] %v7766
      %v7768 = vld [vmem:[%s224 + $0x18] sm:$0xf]
      %v7769 = vsel %vm7749, %v7746, %v7768
      %7770 = vst [vmem:[%s224 + $0x18] sm:$0xf] %v7769
      %p7771 = scmp.lt.s32.totalorder %s16, 1
      %s7772 = scalar_select %p7771, %s16, 1
      %s7773 = smul.addr %s7772, 7
      %s7774 = smul.addr %s7773, 4
      %s7775 = scalar_lea.vmem %s5, %s7774
      // Predicated region
      $region41: #{cnn_forward.2} parent=39 // pred_check
        %p7776 = pneg %p144
      $region42: #{cnn_forward.2} parent=39 // pred_check_branch
        %7778 = sbr.rel (%p7776) target = $region44
      $region43: #{cnn_forward.2} parent=39 // pred_region
        _
      $region44: #{cnn_forward.2} parent=39 // pred_fallthru
        _
    $region40: #{cnn_forward.2} parent=5 // pred_fallthru
      _
    %p7779 = scmp.le.s32.totalorder 2, %s11
    // Predicated region
    $region45: #{cnn_forward.2} parent=5 // pred_check
      %p7780 = pneg %p7779
    $region46: #{cnn_forward.2} parent=5 // pred_check_branch
      %7782 = sbr.rel (%p7780) target = $region48
    $region47: #{cnn_forward.2} parent=5 // pred_region
      %s7783 = ssub.s32 %s11, 2
      // Predicated region
      $region49: #{cnn_forward.2} parent=47 // pred_check
        %p7784 = pneg %p150
      $region50: #{cnn_forward.2} parent=47 // pred_check_branch
        %7786 = sbr.rel (%p7784) target = $region52
      $region51: #{cnn_forward.2} parent=47 // pred_region
        %p7787 = scmp.lt.s32.totalorder %s17, 1
        %s7788 = scalar_select %p7787, %s17, 1
        %s7789 = smul.addr %s7788, 7
        %s7790 = smul.addr %s7789, 4
        %s7791 = scalar_lea.vmem %s5, %s7790
      $region52: #{cnn_forward.2} parent=47 // pred_fallthru
        _
    $region48: #{cnn_forward.2} parent=5 // pred_fallthru
      _
  $region6: #{cnn_forward.2} parent=0 // loop_footer
    %s15 = sadd.s32 1, %s11
  $region7: #{cnn_forward.2} parent=0 // loop_footer_branch
    %10 = sbr.rel target = $region3
  $region8: #{cnn_forward.2} parent=0 // loop_exit
    _

</llo_original>
